<compile_context>
chip_gen: v7x
topology: tpu7x:2x2x1
jax: 0.10.0
libtpu: 0.0.40
codegen_flags: <defaults>
</compile_context>

<pallas_src>
import functools

import jax
import jax.numpy as jnp
from jax.experimental import pallas as pl
from jax.experimental.pallas import tpu as pltpu

EPS = 1e-5  # nn.GroupNorm default eps

# Columns of the packed per-channel parameter array `pvec` (rows = channels).
_G1, _B1, _G2, _B2, _G3, _B3, _G4, _B4, _BI11, _BI31, _BI32, _BI12 = range(12)
_NCOL = 16


# ---------------------------------------------------------------- helpers ---
def _hardswish(x):
    return x * jnp.clip(x + 3.0, 0.0, 6.0) * (1.0 / 6.0)


def _gn_hswish(x, gamma, beta):
    # Single-pass GroupNorm(num_groups=1) over the whole (C, N) sample fused
    # with the per-channel affine (one scale+bias FMA) and hardswish.
    # gamma/beta: (C, 1), broadcast along lanes.
    n = x.shape[0] * x.shape[1]
    s1 = jnp.sum(x)
    s2 = jnp.sum(x * x)
    mu = s1 / n
    var = s2 / n - mu * mu
    inv = jax.lax.rsqrt(var + EPS)
    scale = gamma * inv
    bias = beta - mu * scale
    return _hardswish(x * scale + bias)


def _conv3x3_flat(h, wflat, bias, w2, not_left, not_right):
    # 3x3 "same" conv on a row-major flattened (H2, W2=w2) image.
    #   h      : (Fin, N2) f32
    #   wflat  : (Fout, 9*Fin) bf16, tap-major:
    #            wflat[co, k*Fin + ci] == torch_w[co, ci, k // 3, k % 3]
    #   bias   : (Fout, 1) f32
    #   not_left / not_right : (1, N2) bf16 {0,1} column-edge masks.
    fin, n2 = h.shape
    p = w2 + 1  # flat zero padding on each side (covers top/bottom rows)
    hb = h.astype(jnp.bfloat16)
    zp = jnp.zeros((fin, p), jnp.bfloat16)
    hp = jnp.concatenate([zp, hb, zp], axis=1)          # (Fin, N2 + 2*(W2+1))

    taps = []
    for dy in (-1, 0, 1):
        for dx in (-1, 0, 1):
            start = p + dy * w2 + dx                    # static lane shift
            t = hp[:, start:start + n2]
            if dx == -1:
                t = t * not_left                        # zero column x == 0
            elif dx == 1:
                t = t * not_right                       # zero column x == W2-1
            taps.append(t)
    im2col = jnp.concatenate(taps, axis=0)              # (9*Fin, N2) bf16
    out = jnp.dot(wflat, im2col, preferred_element_type=jnp.float32)
    return out + bias


# ----------------------------------------------------------------- kernels ---
def _pre_kernel(x_ref, pvec_ref, w11_ref, o_ref):
    x = x_ref[0]                                        # (Cin, N) f32
    cin = x.shape[0]
    feat = o_ref.shape[1]

    g1 = pvec_ref[:cin, _G1:_G1 + 1]
    b1 = pvec_ref[:cin, _B1:_B1 + 1]
    h = _gn_hswish(x, g1, b1)                           # norm1 + hardswish

    # conv1_1 (1x1): (F, N) = (F, Cin) @ (Cin, N), bf16 operands on the MXU.
    h = jnp.dot(w11_ref[...], h.astype(jnp.bfloat16),
                preferred_element_type=jnp.float32)
    h = h + pvec_ref[:feat, _BI11:_BI11 + 1]

    g2 = pvec_ref[:feat, _G2:_G2 + 1]
    b2 = pvec_ref[:feat, _B2:_B2 + 1]
    o_ref[0] = _gn_hswish(h, g2, b2)                    # norm2 + hardswish


def _post_kernel(y_ref, skip_ref, emask_ref, pvec_ref,
                 w31_ref, w32_ref, w12_ref, o_ref, *, w2):
    y = y_ref[0]                                        # (F, N2) f32
    feat = y.shape[0]
    cin = o_ref.shape[1]

    not_left = emask_ref[0:1, :]                        # (1, N2) bf16
    not_right = emask_ref[1:2, :]

    bi31 = pvec_ref[:feat, _BI31:_BI31 + 1]
    bi32 = pvec_ref[:feat, _BI32:_BI32 + 1]
    bi12 = pvec_ref[:cin, _BI12:_BI12 + 1]

    h = _conv3x3_flat(y, w31_ref[...], bi31, w2, not_left, not_right)   # conv3_1
    h = _gn_hswish(h, pvec_ref[:feat, _G3:_G3 + 1],
                   pvec_ref[:feat, _B3:_B3 + 1])                        # norm3
    h = _conv3x3_flat(h, w32_ref[...], bi32, w2, not_left, not_right)   # conv3_2
    h = _gn_hswish(h, pvec_ref[:feat, _G4:_G4 + 1],
                   pvec_ref[:feat, _B4:_B4 + 1])                        # norm4

    # conv1_2 (1x1): (Cin, N2) = (Cin, F) @ (F, N2)
    out = jnp.dot(w12_ref[...], h.astype(jnp.bfloat16),
                  preferred_element_type=jnp.float32)
    o_ref[0] = out + bi12 + skip_ref[0]                 # + _x (residual)


# ---------------------------------------------------------------- wrappers ---
def deepres_pre(x_flat, p):
    B, Cin, N = x_flat.shape
    F = p["w11"].shape[0]
    R = p["pvec"].shape[0]
    return pl.pallas_call(
        _pre_kernel,
        out_shape=jax.ShapeDtypeStruct((B, F, N), jnp.float32),
        grid=(B,),
        in_specs=[
            pl.BlockSpec((1, Cin, N), lambda b: (b, 0, 0)),
            pl.BlockSpec((R, _NCOL), lambda b: (0, 0)),
            pl.BlockSpec((F, Cin), lambda b: (0, 0)),
        ],
        out_specs=pl.BlockSpec((1, F, N), lambda b: (b, 0, 0)),
        compiler_params=pltpu.CompilerParams(dimension_semantics=("parallel",)),
    )(x_flat, p["pvec"], p["w11"])


def deepres_post(y_flat, skip_flat, p, w2):
    B, F, N2 = y_flat.shape
    Cin = skip_flat.shape[1]
    R = p["pvec"].shape[0]

    # Column-edge masks (0 on the boundary column, 1 elsewhere), built once in
    # XLA and constant-folded under jit.
    col = jnp.arange(N2, dtype=jnp.int32) % w2
    emask = jnp.stack([(col != 0), (col != (w2 - 1))]).astype(jnp.bfloat16)

    kern = functools.partial(_post_kernel, w2=w2)
    return pl.pallas_call(
        kern,
        out_shape=jax.ShapeDtypeStruct((B, Cin, N2), jnp.float32),
        grid=(B,),
        in_specs=[
            pl.BlockSpec((1, F, N2), lambda b: (b, 0, 0)),
            pl.BlockSpec((1, Cin, N2), lambda b: (b, 0, 0)),
            pl.BlockSpec((2, N2), lambda b: (0, 0)),
            pl.BlockSpec((R, _NCOL), lambda b: (0, 0)),
            pl.BlockSpec((F, 9 * F), lambda b: (0, 0)),
            pl.BlockSpec((F, 9 * F), lambda b: (0, 0)),
            pl.BlockSpec((Cin, F), lambda b: (0, 0)),
        ],
        out_specs=pl.BlockSpec((1, Cin, N2), lambda b: (b, 0, 0)),
        compiler_params=pltpu.CompilerParams(dimension_semantics=("parallel",)),
    )(y_flat, skip_flat, emask, p["pvec"], p["w31"], p["w32"], p["w12"])


def _upsample2_flat(x_flat, H, W):
    # F.interpolate(x, scale_factor=2) (default 'nearest') on the flat layout.
    # Pure index shuffle -> XLA glue between the two kernels.
    B, C, _ = x_flat.shape
    x = x_flat.reshape(B, C, H, W)
    x = jnp.repeat(jnp.repeat(x, 2, axis=2), 2, axis=3)
    return x.reshape(B, C, 4 * H * W)


def deepres_forward(x_flat, p, H, W):
    skip = _upsample2_flat(x_flat, H, W)        # _x = F.interpolate(x, 2)
    h = deepres_pre(x_flat, p)                  # norm1->hswish->1x1->norm2->hswish
    h = _upsample2_flat(h, H, W)                # F.interpolate(x, 2)
    out = deepres_post(h, skip, p, 2 * W)       # 3x3 -> ... -> 1x1 -> + skip
    return out, 2 * H, 2 * W


def hopper_forward(x_nchw, params_list):
    B, C, H, W = x_nchw.shape
    x = x_nchw.reshape(B, C, H * W)             # NCHW -> lane-dense flat (free)
    for p in params_list:
        x, H, W = deepres_forward(x, p, H, W)
    return x.reshape(B, C, H, W)                # back to NCHW (free)


# -------------------------------------------------------------- param init ---
def init_deepres_params(key, in_ch, feature):
    ks = jax.random.split(key, 8)

    def u(k, shape, fan_in):
        bound = 1.0 / float(fan_in) ** 0.5
        return jax.random.uniform(k, shape, jnp.float32, -bound, bound)

    rows = max(in_ch, feature)
    pvec = jnp.zeros((rows, _NCOL), jnp.float32)
    # GroupNorm affine defaults: weight = 1, bias = 0.
    pvec = pvec.at[:in_ch, _G1].set(1.0)
    pvec = pvec.at[:feature, _G2].set(1.0)
    pvec = pvec.at[:feature, _G3].set(1.0)
    pvec = pvec.at[:feature, _G4].set(1.0)
    # Conv biases (PyTorch default U(-1/sqrt(fan_in), +1/sqrt(fan_in))).
    pvec = pvec.at[:feature, _BI11].set(u(ks[1], (feature,), in_ch))
    pvec = pvec.at[:feature, _BI31].set(u(ks[3], (feature,), 9 * feature))
    pvec = pvec.at[:feature, _BI32].set(u(ks[5], (feature,), 9 * feature))
    pvec = pvec.at[:in_ch, _BI12].set(u(ks[7], (in_ch,), feature))

    return dict(
        pvec=pvec,
        # conv1_1: torch (F, Cin, 1, 1) -> (F, Cin)
        w11=u(ks[0], (feature, in_ch), in_ch).astype(jnp.bfloat16),
        # conv3_x: torch (F, F, 3, 3) -> permute(0, 2, 3, 1).reshape(F, 9*F)
        w31=u(ks[2], (feature, 9 * feature), 9 * feature).astype(jnp.bfloat16),
        w32=u(ks[4], (feature, 9 * feature), 9 * feature).astype(jnp.bfloat16),
        # conv1_2: torch (Cin, F, 1, 1) -> (Cin, F)
        w12=u(ks[6], (in_ch, feature), feature).astype(jnp.bfloat16),
    )


# -------------------------------------------------------------------- main ---
if __name__ == "__main__":
    key = jax.random.PRNGKey(0)
    B, in_ch, feature, H = 2, 4, 8, 16
    times, scale = 2, 2   # Hopper(times=2, in_ch=4, feature=8, scale=2)

    key, kx = jax.random.split(key)
    x_nchw = jax.random.normal(kx, (B, in_ch, H, H), jnp.float32)

    params_list = []
    for _ in range(times):
        key, kp = jax.random.split(key)
        params_list.append(init_deepres_params(kp, in_ch, feature))

    out_nchw = jax.jit(hopper_forward)(x_nchw, params_list)
    jax.block_until_ready(out_nchw)

    assert out_nchw.shape == (B, in_ch, H * scale ** times, H * scale ** times)
    print("KERNEL_OK")
</pallas_src>

<mosaic_0001>
module attributes {stable_mosaic.version = 11 : i64} {
  func.func @_pre_kernel(%arg0: i32, %arg1: memref<1x4x256xf32, #tpu.memory_space<vmem>>, %arg2: memref<8x16xf32, #tpu.memory_space<vmem>>, %arg3: memref<8x4xbf16, #tpu.memory_space<vmem>>, %arg4: memref<1x8x256xf32, #tpu.memory_space<vmem>>) attributes {dimension_semantics = [#tpu.dimension_semantics<parallel>], iteration_bounds = array<i64: 2>, scalar_prefetch = 0 : i64, scratch_operands = 0 : i64, tpu.core_type = #tpu.core_type<tc>, window_params = [{transform_indices = @transform_0, window_bounds = array<i64: 1, 4, 256>}, {pipeline_mode = #tpu.pipeline_mode<synchronous>, transform_indices = @transform_1, window_bounds = array<i64: 8, 16>}, {pipeline_mode = #tpu.pipeline_mode<synchronous>, transform_indices = @transform_2, window_bounds = array<i64: 8, 4>}, {transform_indices = @transform_3, window_bounds = array<i64: 1, 8, 256>}]} {
    %c0 = arith.constant 0 : index
    %c0_0 = arith.constant 0 : index
    %c0_1 = arith.constant 0 : index
    %0 = vector.load %arg1[%c0, %c0_0, %c0_1] : memref<1x4x256xf32, #tpu.memory_space<vmem>>, vector<1x4x256xf32>
    %1 = vector.shape_cast %0 : vector<1x4x256xf32> to vector<4x256xf32>
    %c0_2 = arith.constant 0 : index
    %c0_3 = arith.constant 0 : index
    %2 = vector.load %arg2[%c0_2, %c0_3] : memref<8x16xf32, #tpu.memory_space<vmem>>, vector<4x1xf32>
    %c0_4 = arith.constant 0 : index
    %c1 = arith.constant 1 : index
    %3 = vector.load %arg2[%c0_4, %c1] : memref<8x16xf32, #tpu.memory_space<vmem>>, vector<4x1xf32>
    %4 = vector.shape_cast %1 : vector<4x256xf32> to vector<1x4x256xf32>
    %cst = arith.constant dense<0.000000e+00> : vector<1xf32>
    %5 = vector.multi_reduction <add>, %4, %cst [1, 2] : vector<1x4x256xf32> to vector<1xf32>
    %6 = vector.shape_cast %5 : vector<1xf32> to vector<1x1x1xf32>
    %7 = vector.extract %6[0, 0, 0] : f32 from vector<1x1x1xf32>
    %8 = arith.mulf %1, %1 : vector<4x256xf32>
    %9 = vector.shape_cast %8 : vector<4x256xf32> to vector<1x4x256xf32>
    %cst_5 = arith.constant dense<0.000000e+00> : vector<1xf32>
    %10 = vector.multi_reduction <add>, %9, %cst_5 [1, 2] : vector<1x4x256xf32> to vector<1xf32>
    %11 = vector.shape_cast %10 : vector<1xf32> to vector<1x1x1xf32>
    %12 = vector.extract %11[0, 0, 0] : f32 from vector<1x1x1xf32>
    %cst_6 = arith.constant 1.024000e+03 : f32
    %13 = arith.divf %7, %cst_6 : f32
    %cst_7 = arith.constant 1.024000e+03 : f32
    %14 = arith.divf %12, %cst_7 : f32
    %15 = arith.mulf %13, %13 : f32
    %16 = arith.subf %14, %15 : f32
    %cst_8 = arith.constant 9.99999974E-6 : f32
    %17 = arith.addf %16, %cst_8 : f32
    %18 = math.rsqrt %17 : f32
    %19 = vector.broadcast %18 : f32 to vector<4x1xf32>
    %20 = arith.mulf %2, %19 : vector<4x1xf32>
    %21 = vector.broadcast %13 : f32 to vector<4x1xf32>
    %22 = arith.mulf %21, %20 : vector<4x1xf32>
    %23 = arith.subf %3, %22 : vector<4x1xf32>
    %24 = vector.broadcast %20 : vector<4x1xf32> to vector<4x256xf32>
    %25 = arith.mulf %1, %24 : vector<4x256xf32>
    %26 = vector.broadcast %23 : vector<4x1xf32> to vector<4x256xf32>
    %27 = arith.addf %25, %26 : vector<4x256xf32>
    %cst_9 = arith.constant 3.000000e+00 : f32
    %28 = vector.broadcast %cst_9 : f32 to vector<4x256xf32>
    %29 = arith.addf %27, %28 : vector<4x256xf32>
    %cst_10 = arith.constant 0.000000e+00 : f32
    %cst_11 = arith.constant 6.000000e+00 : f32
    %30 = vector.broadcast %cst_10 : f32 to vector<4x256xf32>
    %31 = arith.maximumf %30, %29 : vector<4x256xf32>
    %32 = vector.broadcast %cst_11 : f32 to vector<4x256xf32>
    %33 = arith.minimumf %32, %31 : vector<4x256xf32>
    %34 = arith.mulf %27, %33 : vector<4x256xf32>
    %cst_12 = arith.constant 0.166666672 : f32
    %35 = vector.broadcast %cst_12 : f32 to vector<4x256xf32>
    %36 = arith.mulf %34, %35 : vector<4x256xf32>
    %c0_13 = arith.constant 0 : index
    %c0_14 = arith.constant 0 : index
    %37 = vector.load %arg3[%c0_13, %c0_14] : memref<8x4xbf16, #tpu.memory_space<vmem>>, vector<8x4xbf16>
    %38 = arith.truncf %36 : vector<4x256xf32> to vector<4x256xbf16>
    %cst_15 = arith.constant dense<0.000000e+00> : vector<8x256xf32>
    %39 = tpu.matmul %37, %38, %cst_15 {dimension_numbers = #tpu.dot_dimension_numbers<[1], [0], [0], [1], [0, 0, 1, 1], [], []>} : vector<8x4xbf16>, vector<4x256xbf16>, vector<8x256xf32> -> vector<8x256xf32>
    %c0_16 = arith.constant 0 : index
    %c8 = arith.constant 8 : index
    %40 = vector.load %arg2[%c0_16, %c8] : memref<8x16xf32, #tpu.memory_space<vmem>>, vector<8x1xf32>
    %41 = vector.broadcast %40 : vector<8x1xf32> to vector<8x256xf32>
    %42 = arith.addf %39, %41 : vector<8x256xf32>
    %c0_17 = arith.constant 0 : index
    %c2 = arith.constant 2 : index
    %43 = vector.load %arg2[%c0_17, %c2] : memref<8x16xf32, #tpu.memory_space<vmem>>, vector<8x1xf32>
    %c0_18 = arith.constant 0 : index
    %c3 = arith.constant 3 : index
    %44 = vector.load %arg2[%c0_18, %c3] : memref<8x16xf32, #tpu.memory_space<vmem>>, vector<8x1xf32>
    %45 = vector.shape_cast %42 : vector<8x256xf32> to vector<1x8x256xf32>
    %cst_19 = arith.constant dense<0.000000e+00> : vector<1xf32>
    %46 = vector.multi_reduction <add>, %45, %cst_19 [1, 2] : vector<1x8x256xf32> to vector<1xf32>
    %47 = vector.shape_cast %46 : vector<1xf32> to vector<1x1x1xf32>
    %48 = vector.extract %47[0, 0, 0] : f32 from vector<1x1x1xf32>
    %49 = arith.mulf %42, %42 : vector<8x256xf32>
    %50 = vector.shape_cast %49 : vector<8x256xf32> to vector<1x8x256xf32>
    %cst_20 = arith.constant dense<0.000000e+00> : vector<1xf32>
    %51 = vector.multi_reduction <add>, %50, %cst_20 [1, 2] : vector<1x8x256xf32> to vector<1xf32>
    %52 = vector.shape_cast %51 : vector<1xf32> to vector<1x1x1xf32>
    %53 = vector.extract %52[0, 0, 0] : f32 from vector<1x1x1xf32>
    %cst_21 = arith.constant 2.048000e+03 : f32
    %54 = arith.divf %48, %cst_21 : f32
    %cst_22 = arith.constant 2.048000e+03 : f32
    %55 = arith.divf %53, %cst_22 : f32
    %56 = arith.mulf %54, %54 : f32
    %57 = arith.subf %55, %56 : f32
    %cst_23 = arith.constant 9.99999974E-6 : f32
    %58 = arith.addf %57, %cst_23 : f32
    %59 = math.rsqrt %58 : f32
    %60 = vector.broadcast %59 : f32 to vector<8x1xf32>
    %61 = arith.mulf %43, %60 : vector<8x1xf32>
    %62 = vector.broadcast %54 : f32 to vector<8x1xf32>
    %63 = arith.mulf %62, %61 : vector<8x1xf32>
    %64 = arith.subf %44, %63 : vector<8x1xf32>
    %65 = vector.broadcast %61 : vector<8x1xf32> to vector<8x256xf32>
    %66 = arith.mulf %42, %65 : vector<8x256xf32>
    %67 = vector.broadcast %64 : vector<8x1xf32> to vector<8x256xf32>
    %68 = arith.addf %66, %67 : vector<8x256xf32>
    %cst_24 = arith.constant 3.000000e+00 : f32
    %69 = vector.broadcast %cst_24 : f32 to vector<8x256xf32>
    %70 = arith.addf %68, %69 : vector<8x256xf32>
    %cst_25 = arith.constant 0.000000e+00 : f32
    %cst_26 = arith.constant 6.000000e+00 : f32
    %71 = vector.broadcast %cst_25 : f32 to vector<8x256xf32>
    %72 = arith.maximumf %71, %70 : vector<8x256xf32>
    %73 = vector.broadcast %cst_26 : f32 to vector<8x256xf32>
    %74 = arith.minimumf %73, %72 : vector<8x256xf32>
    %75 = arith.mulf %68, %74 : vector<8x256xf32>
    %cst_27 = arith.constant 0.166666672 : f32
    %76 = vector.broadcast %cst_27 : f32 to vector<8x256xf32>
    %77 = arith.mulf %75, %76 : vector<8x256xf32>
    %c0_28 = arith.constant 0 : index
    %c0_29 = arith.constant 0 : index
    %c0_30 = arith.constant 0 : index
    %78 = vector.load %arg4[%c0_28, %c0_29, %c0_30] : memref<1x8x256xf32, #tpu.memory_space<vmem>>, vector<1x8x256xf32>
    %79 = vector.shape_cast %78 : vector<1x8x256xf32> to vector<8x256xf32>
    %80 = vector.shape_cast %77 : vector<8x256xf32> to vector<1x8x256xf32>
    tpu.vector_store %arg4[%c0_28, %c0_29, %c0_30], %80 {strides = array<i32>} : memref<1x8x256xf32, #tpu.memory_space<vmem>>, vector<1x8x256xf32>,
    return
  }
  func.func @transform_0(%arg0: i32) -> (i32, i32, i32) {
    %c0_i32 = arith.constant 0 : i32
    %c0_i32_0 = arith.constant 0 : i32
    %c0_i32_1 = arith.constant 0 : i32
    return %arg0, %c0_i32, %c0_i32_0 : i32, i32, i32
  }
  func.func @transform_1(%arg0: i32) -> (i32, i32) {
    %c0_i32 = arith.constant 0 : i32
    %c0_i32_0 = arith.constant 0 : i32
    %c0_i32_1 = arith.constant 0 : i32
    return %c0_i32, %c0_i32_0 : i32, i32
  }
  func.func @transform_2(%arg0: i32) -> (i32, i32) {
    %c0_i32 = arith.constant 0 : i32
    %c0_i32_0 = arith.constant 0 : i32
    %c0_i32_1 = arith.constant 0 : i32
    return %c0_i32, %c0_i32_0 : i32, i32
  }
  func.func @transform_3(%arg0: i32) -> (i32, i32, i32) {
    %c0_i32 = arith.constant 0 : i32
    %c0_i32_0 = arith.constant 0 : i32
    %c0_i32_1 = arith.constant 0 : i32
    return %arg0, %c0_i32, %c0_i32_0 : i32, i32, i32
  }
}

module attributes {stable_mosaic.version = 11 : i64} {
  func.func @_post_kernel(%arg0: i32, %arg1: memref<1x8x1024xf32, #tpu.memory_space<vmem>>, %arg2: memref<1x4x1024xf32, #tpu.memory_space<vmem>>, %arg3: memref<2x1024xbf16, #tpu.memory_space<vmem>>, %arg4: memref<8x16xf32, #tpu.memory_space<vmem>>, %arg5: memref<8x72xbf16, #tpu.memory_space<vmem>>, %arg6: memref<8x72xbf16, #tpu.memory_space<vmem>>, %arg7: memref<4x8xbf16, #tpu.memory_space<vmem>>, %arg8: memref<1x4x1024xf32, #tpu.memory_space<vmem>>) attributes {dimension_semantics = [#tpu.dimension_semantics<parallel>], iteration_bounds = array<i64: 2>, scalar_prefetch = 0 : i64, scratch_operands = 0 : i64, tpu.core_type = #tpu.core_type<tc>, window_params = [{transform_indices = @transform_0, window_bounds = array<i64: 1, 8, 1024>}, {transform_indices = @transform_1, window_bounds = array<i64: 1, 4, 1024>}, {pipeline_mode = #tpu.pipeline_mode<synchronous>, transform_indices = @transform_2, window_bounds = array<i64: 2, 1024>}, {pipeline_mode = #tpu.pipeline_mode<synchronous>, transform_indices = @transform_3, window_bounds = array<i64: 8, 16>}, {pipeline_mode = #tpu.pipeline_mode<synchronous>, transform_indices = @transform_4, window_bounds = array<i64: 8, 72>}, {pipeline_mode = #tpu.pipeline_mode<synchronous>, transform_indices = @transform_5, window_bounds = array<i64: 8, 72>}, {pipeline_mode = #tpu.pipeline_mode<synchronous>, transform_indices = @transform_6, window_bounds = array<i64: 4, 8>}, {transform_indices = @transform_7, window_bounds = array<i64: 1, 4, 1024>}]} {
    %c0 = arith.constant 0 : index
    %c0_0 = arith.constant 0 : index
    %c0_1 = arith.constant 0 : index
    %0 = vector.load %arg1[%c0, %c0_0, %c0_1] : memref<1x8x1024xf32, #tpu.memory_space<vmem>>, vector<1x8x1024xf32>
    %1 = vector.shape_cast %0 : vector<1x8x1024xf32> to vector<8x1024xf32>
    %c0_2 = arith.constant 0 : index
    %c0_3 = arith.constant 0 : index
    %2 = vector.load %arg3[%c0_2, %c0_3] : memref<2x1024xbf16, #tpu.memory_space<vmem>>, vector<1x1024xbf16>
    %c1 = arith.constant 1 : index
    %c0_4 = arith.constant 0 : index
    %3 = vector.load %arg3[%c1, %c0_4] : memref<2x1024xbf16, #tpu.memory_space<vmem>>, vector<1x1024xbf16>
    %c0_5 = arith.constant 0 : index
    %c9 = arith.constant 9 : index
    %4 = vector.load %arg4[%c0_5, %c9] : memref<8x16xf32, #tpu.memory_space<vmem>>, vector<8x1xf32>
    %c0_6 = arith.constant 0 : index
    %c10 = arith.constant 10 : index
    %5 = vector.load %arg4[%c0_6, %c10] : memref<8x16xf32, #tpu.memory_space<vmem>>, vector<8x1xf32>
    %c0_7 = arith.constant 0 : index
    %c11 = arith.constant 11 : index
    %6 = vector.load %arg4[%c0_7, %c11] : memref<8x16xf32, #tpu.memory_space<vmem>>, vector<4x1xf32>
    %c0_8 = arith.constant 0 : index
    %c0_9 = arith.constant 0 : index
    %7 = vector.load %arg5[%c0_8, %c0_9] : memref<8x72xbf16, #tpu.memory_space<vmem>>, vector<8x72xbf16>
    %8 = arith.truncf %1 : vector<8x1024xf32> to vector<8x1024xbf16>
    %cst = arith.constant 0.000000e+00 : bf16
    %9 = vector.broadcast %cst : bf16 to vector<8x33xbf16>
    %10 = tpu.concatenate %9, %8, %9 in 1 : vector<8x33xbf16>, vector<8x1024xbf16>, vector<8x33xbf16> -> vector<8x1090xbf16>
    %11 = vector.extract_strided_slice %10 {offsets = [0, 0], sizes = [8, 1024], strides = [1, 1]} : vector<8x1090xbf16> to vector<8x1024xbf16>
    %12 = vector.broadcast %2 : vector<1x1024xbf16> to vector<8x1024xbf16>
    %13 = arith.mulf %11, %12 : vector<8x1024xbf16>
    %14 = vector.extract_strided_slice %10 {offsets = [0, 1], sizes = [8, 1024], strides = [1, 1]} : vector<8x1090xbf16> to vector<8x1024xbf16>
    %15 = vector.extract_strided_slice %10 {offsets = [0, 2], sizes = [8, 1024], strides = [1, 1]} : vector<8x1090xbf16> to vector<8x1024xbf16>
    %16 = vector.broadcast %3 : vector<1x1024xbf16> to vector<8x1024xbf16>
    %17 = arith.mulf %15, %16 : vector<8x1024xbf16>
    %18 = vector.extract_strided_slice %10 {offsets = [0, 32], sizes = [8, 1024], strides = [1, 1]} : vector<8x1090xbf16> to vector<8x1024xbf16>
    %19 = vector.broadcast %2 : vector<1x1024xbf16> to vector<8x1024xbf16>
    %20 = arith.mulf %18, %19 : vector<8x1024xbf16>
    %21 = vector.extract_strided_slice %10 {offsets = [0, 33], sizes = [8, 1024], strides = [1, 1]} : vector<8x1090xbf16> to vector<8x1024xbf16>
    %22 = vector.extract_strided_slice %10 {offsets = [0, 34], sizes = [8, 1024], strides = [1, 1]} : vector<8x1090xbf16> to vector<8x1024xbf16>
    %23 = vector.broadcast %3 : vector<1x1024xbf16> to vector<8x1024xbf16>
    %24 = arith.mulf %22, %23 : vector<8x1024xbf16>
    %25 = vector.extract_strided_slice %10 {offsets = [0, 64], sizes = [8, 1024], strides = [1, 1]} : vector<8x1090xbf16> to vector<8x1024xbf16>
    %26 = vector.broadcast %2 : vector<1x1024xbf16> to vector<8x1024xbf16>
    %27 = arith.mulf %25, %26 : vector<8x1024xbf16>
    %28 = vector.extract_strided_slice %10 {offsets = [0, 65], sizes = [8, 1024], strides = [1, 1]} : vector<8x1090xbf16> to vector<8x1024xbf16>
    %29 = vector.extract_strided_slice %10 {offsets = [0, 66], sizes = [8, 1024], strides = [1, 1]} : vector<8x1090xbf16> to vector<8x1024xbf16>
    %30 = vector.broadcast %3 : vector<1x1024xbf16> to vector<8x1024xbf16>
    %31 = arith.mulf %29, %30 : vector<8x1024xbf16>
    %32 = tpu.concatenate %13, %14, %17, %20, %21, %24, %27, %28, %31 in 0 : vector<8x1024xbf16>, vector<8x1024xbf16>, vector<8x1024xbf16>, vector<8x1024xbf16>, vector<8x1024xbf16>, vector<8x1024xbf16>, vector<8x1024xbf16>, vector<8x1024xbf16>, vector<8x1024xbf16> -> vector<72x1024xbf16>
    %cst_10 = arith.constant dense<0.000000e+00> : vector<8x1024xf32>
    %33 = tpu.matmul %7, %32, %cst_10 {dimension_numbers = #tpu.dot_dimension_numbers<[1], [0], [0], [1], [0, 0, 1, 1], [], []>} : vector<8x72xbf16>, vector<72x1024xbf16>, vector<8x1024xf32> -> vector<8x1024xf32>
    %34 = vector.broadcast %4 : vector<8x1xf32> to vector<8x1024xf32>
    %35 = arith.addf %33, %34 : vector<8x1024xf32>
    %c0_11 = arith.constant 0 : index
    %c4 = arith.constant 4 : index
    %36 = vector.load %arg4[%c0_11, %c4] : memref<8x16xf32, #tpu.memory_space<vmem>>, vector<8x1xf32>
    %c0_12 = arith.constant 0 : index
    %c5 = arith.constant 5 : index
    %37 = vector.load %arg4[%c0_12, %c5] : memref<8x16xf32, #tpu.memory_space<vmem>>, vector<8x1xf32>
    %38 = vector.shape_cast %35 : vector<8x1024xf32> to vector<1x8x1024xf32>
    %cst_13 = arith.constant dense<0.000000e+00> : vector<1xf32>
    %39 = vector.multi_reduction <add>, %38, %cst_13 [1, 2] : vector<1x8x1024xf32> to vector<1xf32>
    %40 = vector.shape_cast %39 : vector<1xf32> to vector<1x1x1xf32>
    %41 = vector.extract %40[0, 0, 0] : f32 from vector<1x1x1xf32>
    %42 = arith.mulf %35, %35 : vector<8x1024xf32>
    %43 = vector.shape_cast %42 : vector<8x1024xf32> to vector<1x8x1024xf32>
    %cst_14 = arith.constant dense<0.000000e+00> : vector<1xf32>
    %44 = vector.multi_reduction <add>, %43, %cst_14 [1, 2] : vector<1x8x1024xf32> to vector<1xf32>
    %45 = vector.shape_cast %44 : vector<1xf32> to vector<1x1x1xf32>
    %46 = vector.extract %45[0, 0, 0] : f32 from vector<1x1x1xf32>
    %cst_15 = arith.constant 8.192000e+03 : f32
    %47 = arith.divf %41, %cst_15 : f32
    %cst_16 = arith.constant 8.192000e+03 : f32
    %48 = arith.divf %46, %cst_16 : f32
    %49 = arith.mulf %47, %47 : f32
    %50 = arith.subf %48, %49 : f32
    %cst_17 = arith.constant 9.99999974E-6 : f32
    %51 = arith.addf %50, %cst_17 : f32
    %52 = math.rsqrt %51 : f32
    %53 = vector.broadcast %52 : f32 to vector<8x1xf32>
    %54 = arith.mulf %36, %53 : vector<8x1xf32>
    %55 = vector.broadcast %47 : f32 to vector<8x1xf32>
    %56 = arith.mulf %55, %54 : vector<8x1xf32>
    %57 = arith.subf %37, %56 : vector<8x1xf32>
    %58 = vector.broadcast %54 : vector<8x1xf32> to vector<8x1024xf32>
    %59 = arith.mulf %35, %58 : vector<8x1024xf32>
    %60 = vector.broadcast %57 : vector<8x1xf32> to vector<8x1024xf32>
    %61 = arith.addf %59, %60 : vector<8x1024xf32>
    %cst_18 = arith.constant 3.000000e+00 : f32
    %62 = vector.broadcast %cst_18 : f32 to vector<8x1024xf32>
    %63 = arith.addf %61, %62 : vector<8x1024xf32>
    %cst_19 = arith.constant 0.000000e+00 : f32
    %cst_20 = arith.constant 6.000000e+00 : f32
    %64 = vector.broadcast %cst_19 : f32 to vector<8x1024xf32>
    %65 = arith.maximumf %64, %63 : vector<8x1024xf32>
    %66 = vector.broadcast %cst_20 : f32 to vector<8x1024xf32>
    %67 = arith.minimumf %66, %65 : vector<8x1024xf32>
    %68 = arith.mulf %61, %67 : vector<8x1024xf32>
    %cst_21 = arith.constant 0.166666672 : f32
    %69 = vector.broadcast %cst_21 : f32 to vector<8x1024xf32>
    %70 = arith.mulf %68, %69 : vector<8x1024xf32>
    %c0_22 = arith.constant 0 : index
    %c0_23 = arith.constant 0 : index
    %71 = vector.load %arg6[%c0_22, %c0_23] : memref<8x72xbf16, #tpu.memory_space<vmem>>, vector<8x72xbf16>
    %72 = arith.truncf %70 : vector<8x1024xf32> to vector<8x1024xbf16>
    %cst_24 = arith.constant 0.000000e+00 : bf16
    %73 = vector.broadcast %cst_24 : bf16 to vector<8x33xbf16>
    %74 = tpu.concatenate %73, %72, %73 in 1 : vector<8x33xbf16>, vector<8x1024xbf16>, vector<8x33xbf16> -> vector<8x1090xbf16>
    %75 = vector.extract_strided_slice %74 {offsets = [0, 0], sizes = [8, 1024], strides = [1, 1]} : vector<8x1090xbf16> to vector<8x1024xbf16>
    %76 = vector.broadcast %2 : vector<1x1024xbf16> to vector<8x1024xbf16>
    %77 = arith.mulf %75, %76 : vector<8x1024xbf16>
    %78 = vector.extract_strided_slice %74 {offsets = [0, 1], sizes = [8, 1024], strides = [1, 1]} : vector<8x1090xbf16> to vector<8x1024xbf16>
    %79 = vector.extract_strided_slice %74 {offsets = [0, 2], sizes = [8, 1024], strides = [1, 1]} : vector<8x1090xbf16> to vector<8x1024xbf16>
    %80 = vector.broadcast %3 : vector<1x1024xbf16> to vector<8x1024xbf16>
    %81 = arith.mulf %79, %80 : vector<8x1024xbf16>
    %82 = vector.extract_strided_slice %74 {offsets = [0, 32], sizes = [8, 1024], strides = [1, 1]} : vector<8x1090xbf16> to vector<8x1024xbf16>
    %83 = vector.broadcast %2 : vector<1x1024xbf16> to vector<8x1024xbf16>
    %84 = arith.mulf %82, %83 : vector<8x1024xbf16>
    %85 = vector.extract_strided_slice %74 {offsets = [0, 33], sizes = [8, 1024], strides = [1, 1]} : vector<8x1090xbf16> to vector<8x1024xbf16>
    %86 = vector.extract_strided_slice %74 {offsets = [0, 34], sizes = [8, 1024], strides = [1, 1]} : vector<8x1090xbf16> to vector<8x1024xbf16>
    %87 = vector.broadcast %3 : vector<1x1024xbf16> to vector<8x1024xbf16>
    %88 = arith.mulf %86, %87 : vector<8x1024xbf16>
    %89 = vector.extract_strided_slice %74 {offsets = [0, 64], sizes = [8, 1024], strides = [1, 1]} : vector<8x1090xbf16> to vector<8x1024xbf16>
    %90 = vector.broadcast %2 : vector<1x1024xbf16> to vector<8x1024xbf16>
    %91 = arith.mulf %89, %90 : vector<8x1024xbf16>
    %92 = vector.extract_strided_slice %74 {offsets = [0, 65], sizes = [8, 1024], strides = [1, 1]} : vector<8x1090xbf16> to vector<8x1024xbf16>
    %93 = vector.extract_strided_slice %74 {offsets = [0, 66], sizes = [8, 1024], strides = [1, 1]} : vector<8x1090xbf16> to vector<8x1024xbf16>
    %94 = vector.broadcast %3 : vector<1x1024xbf16> to vector<8x1024xbf16>
    %95 = arith.mulf %93, %94 : vector<8x1024xbf16>
    %96 = tpu.concatenate %77, %78, %81, %84, %85, %88, %91, %92, %95 in 0 : vector<8x1024xbf16>, vector<8x1024xbf16>, vector<8x1024xbf16>, vector<8x1024xbf16>, vector<8x1024xbf16>, vector<8x1024xbf16>, vector<8x1024xbf16>, vector<8x1024xbf16>, vector<8x1024xbf16> -> vector<72x1024xbf16>
    %cst_25 = arith.constant dense<0.000000e+00> : vector<8x1024xf32>
    %97 = tpu.matmul %71, %96, %cst_25 {dimension_numbers = #tpu.dot_dimension_numbers<[1], [0], [0], [1], [0, 0, 1, 1], [], []>} : vector<8x72xbf16>, vector<72x1024xbf16>, vector<8x1024xf32> -> vector<8x1024xf32>
    %98 = vector.broadcast %5 : vector<8x1xf32> to vector<8x1024xf32>
    %99 = arith.addf %97, %98 : vector<8x1024xf32>
    %c0_26 = arith.constant 0 : index
    %c6 = arith.constant 6 : index
    %100 = vector.load %arg4[%c0_26, %c6] : memref<8x16xf32, #tpu.memory_space<vmem>>, vector<8x1xf32>
    %c0_27 = arith.constant 0 : index
    %c7 = arith.constant 7 : index
    %101 = vector.load %arg4[%c0_27, %c7] : memref<8x16xf32, #tpu.memory_space<vmem>>, vector<8x1xf32>
    %102 = vector.shape_cast %99 : vector<8x1024xf32> to vector<1x8x1024xf32>
    %cst_28 = arith.constant dense<0.000000e+00> : vector<1xf32>
    %103 = vector.multi_reduction <add>, %102, %cst_28 [1, 2] : vector<1x8x1024xf32> to vector<1xf32>
    %104 = vector.shape_cast %103 : vector<1xf32> to vector<1x1x1xf32>
    %105 = vector.extract %104[0, 0, 0] : f32 from vector<1x1x1xf32>
    %106 = arith.mulf %99, %99 : vector<8x1024xf32>
    %107 = vector.shape_cast %106 : vector<8x1024xf32> to vector<1x8x1024xf32>
    %cst_29 = arith.constant dense<0.000000e+00> : vector<1xf32>
    %108 = vector.multi_reduction <add>, %107, %cst_29 [1, 2] : vector<1x8x1024xf32> to vector<1xf32>
    %109 = vector.shape_cast %108 : vector<1xf32> to vector<1x1x1xf32>
    %110 = vector.extract %109[0, 0, 0] : f32 from vector<1x1x1xf32>
    %cst_30 = arith.constant 8.192000e+03 : f32
    %111 = arith.divf %105, %cst_30 : f32
    %cst_31 = arith.constant 8.192000e+03 : f32
    %112 = arith.divf %110, %cst_31 : f32
    %113 = arith.mulf %111, %111 : f32
    %114 = arith.subf %112, %113 : f32
    %cst_32 = arith.constant 9.99999974E-6 : f32
    %115 = arith.addf %114, %cst_32 : f32
    %116 = math.rsqrt %115 : f32
    %117 = vector.broadcast %116 : f32 to vector<8x1xf32>
    %118 = arith.mulf %100, %117 : vector<8x1xf32>
    %119 = vector.broadcast %111 : f32 to vector<8x1xf32>
    %120 = arith.mulf %119, %118 : vector<8x1xf32>
    %121 = arith.subf %101, %120 : vector<8x1xf32>
    %122 = vector.broadcast %118 : vector<8x1xf32> to vector<8x1024xf32>
    %123 = arith.mulf %99, %122 : vector<8x1024xf32>
    %124 = vector.broadcast %121 : vector<8x1xf32> to vector<8x1024xf32>
    %125 = arith.addf %123, %124 : vector<8x1024xf32>
    %cst_33 = arith.constant 3.000000e+00 : f32
    %126 = vector.broadcast %cst_33 : f32 to vector<8x1024xf32>
    %127 = arith.addf %125, %126 : vector<8x1024xf32>
    %cst_34 = arith.constant 0.000000e+00 : f32
    %cst_35 = arith.constant 6.000000e+00 : f32
    %128 = vector.broadcast %cst_34 : f32 to vector<8x1024xf32>
    %129 = arith.maximumf %128, %127 : vector<8x1024xf32>
    %130 = vector.broadcast %cst_35 : f32 to vector<8x1024xf32>
    %131 = arith.minimumf %130, %129 : vector<8x1024xf32>
    %132 = arith.mulf %125, %131 : vector<8x1024xf32>
    %cst_36 = arith.constant 0.166666672 : f32
    %133 = vector.broadcast %cst_36 : f32 to vector<8x1024xf32>
    %134 = arith.mulf %132, %133 : vector<8x1024xf32>
    %c0_37 = arith.constant 0 : index
    %c0_38 = arith.constant 0 : index
    %135 = vector.load %arg7[%c0_37, %c0_38] : memref<4x8xbf16, #tpu.memory_space<vmem>>, vector<4x8xbf16>
    %136 = arith.truncf %134 : vector<8x1024xf32> to vector<8x1024xbf16>
    %cst_39 = arith.constant dense<0.000000e+00> : vector<4x1024xf32>
    %137 = tpu.matmul %135, %136, %cst_39 {dimension_numbers = #tpu.dot_dimension_numbers<[1], [0], [0], [1], [0, 0, 1, 1], [], []>} : vector<4x8xbf16>, vector<8x1024xbf16>, vector<4x1024xf32> -> vector<4x1024xf32>
    %138 = vector.broadcast %6 : vector<4x1xf32> to vector<4x1024xf32>
    %139 = arith.addf %137, %138 : vector<4x1024xf32>
    %c0_40 = arith.constant 0 : index
    %c0_41 = arith.constant 0 : index
    %c0_42 = arith.constant 0 : index
    %140 = vector.load %arg2[%c0_40, %c0_41, %c0_42] : memref<1x4x1024xf32, #tpu.memory_space<vmem>>, vector<1x4x1024xf32>
    %141 = vector.shape_cast %140 : vector<1x4x1024xf32> to vector<4x1024xf32>
    %142 = arith.addf %139, %141 : vector<4x1024xf32>
    %c0_43 = arith.constant 0 : index
    %c0_44 = arith.constant 0 : index
    %c0_45 = arith.constant 0 : index
    %143 = vector.load %arg8[%c0_43, %c0_44, %c0_45] : memref<1x4x1024xf32, #tpu.memory_space<vmem>>, vector<1x4x1024xf32>
    %144 = vector.shape_cast %143 : vector<1x4x1024xf32> to vector<4x1024xf32>
    %145 = vector.shape_cast %142 : vector<4x1024xf32> to vector<1x4x1024xf32>
    tpu.vector_store %arg8[%c0_43, %c0_44, %c0_45], %145 {strides = array<i32>} : memref<1x4x1024xf32, #tpu.memory_space<vmem>>, vector<1x4x1024xf32>,
    return
  }
  func.func @transform_0(%arg0: i32) -> (i32, i32, i32) {
    %c0_i32 = arith.constant 0 : i32
    %c0_i32_0 = arith.constant 0 : i32
    %c0_i32_1 = arith.constant 0 : i32
    return %arg0, %c0_i32, %c0_i32_0 : i32, i32, i32
  }
  func.func @transform_1(%arg0: i32) -> (i32, i32, i32) {
    %c0_i32 = arith.constant 0 : i32
    %c0_i32_0 = arith.constant 0 : i32
    %c0_i32_1 = arith.constant 0 : i32
    return %arg0, %c0_i32, %c0_i32_0 : i32, i32, i32
  }
  func.func @transform_2(%arg0: i32) -> (i32, i32) {
    %c0_i32 = arith.constant 0 : i32
    %c0_i32_0 = arith.constant 0 : i32
    %c0_i32_1 = arith.constant 0 : i32
    return %c0_i32, %c0_i32_0 : i32, i32
  }
  func.func @transform_3(%arg0: i32) -> (i32, i32) {
    %c0_i32 = arith.constant 0 : i32
    %c0_i32_0 = arith.constant 0 : i32
    %c0_i32_1 = arith.constant 0 : i32
    return %c0_i32, %c0_i32_0 : i32, i32
  }
  func.func @transform_4(%arg0: i32) -> (i32, i32) {
    %c0_i32 = arith.constant 0 : i32
    %c0_i32_0 = arith.constant 0 : i32
    %c0_i32_1 = arith.constant 0 : i32
    return %c0_i32, %c0_i32_0 : i32, i32
  }
  func.func @transform_5(%arg0: i32) -> (i32, i32) {
    %c0_i32 = arith.constant 0 : i32
    %c0_i32_0 = arith.constant 0 : i32
    %c0_i32_1 = arith.constant 0 : i32
    return %c0_i32, %c0_i32_0 : i32, i32
  }
  func.func @transform_6(%arg0: i32) -> (i32, i32) {
    %c0_i32 = arith.constant 0 : i32
    %c0_i32_0 = arith.constant 0 : i32
    %c0_i32_1 = arith.constant 0 : i32
    return %c0_i32, %c0_i32_0 : i32, i32
  }
  func.func @transform_7(%arg0: i32) -> (i32, i32, i32) {
    %c0_i32 = arith.constant 0 : i32
    %c0_i32_0 = arith.constant 0 : i32
    %c0_i32_1 = arith.constant 0 : i32
    return %arg0, %c0_i32, %c0_i32_0 : i32, i32, i32
  }
}

module attributes {stable_mosaic.version = 11 : i64} {
  func.func @_pre_kernel(%arg0: i32, %arg1: memref<1x4x1024xf32, #tpu.memory_space<vmem>>, %arg2: memref<8x16xf32, #tpu.memory_space<vmem>>, %arg3: memref<8x4xbf16, #tpu.memory_space<vmem>>, %arg4: memref<1x8x1024xf32, #tpu.memory_space<vmem>>) attributes {dimension_semantics = [#tpu.dimension_semantics<parallel>], iteration_bounds = array<i64: 2>, scalar_prefetch = 0 : i64, scratch_operands = 0 : i64, tpu.core_type = #tpu.core_type<tc>, window_params = [{transform_indices = @transform_0, window_bounds = array<i64: 1, 4, 1024>}, {pipeline_mode = #tpu.pipeline_mode<synchronous>, transform_indices = @transform_1, window_bounds = array<i64: 8, 16>}, {pipeline_mode = #tpu.pipeline_mode<synchronous>, transform_indices = @transform_2, window_bounds = array<i64: 8, 4>}, {transform_indices = @transform_3, window_bounds = array<i64: 1, 8, 1024>}]} {
    %c0 = arith.constant 0 : index
    %c0_0 = arith.constant 0 : index
    %c0_1 = arith.constant 0 : index
    %0 = vector.load %arg1[%c0, %c0_0, %c0_1] : memref<1x4x1024xf32, #tpu.memory_space<vmem>>, vector<1x4x1024xf32>
    %1 = vector.shape_cast %0 : vector<1x4x1024xf32> to vector<4x1024xf32>
    %c0_2 = arith.constant 0 : index
    %c0_3 = arith.constant 0 : index
    %2 = vector.load %arg2[%c0_2, %c0_3] : memref<8x16xf32, #tpu.memory_space<vmem>>, vector<4x1xf32>
    %c0_4 = arith.constant 0 : index
    %c1 = arith.constant 1 : index
    %3 = vector.load %arg2[%c0_4, %c1] : memref<8x16xf32, #tpu.memory_space<vmem>>, vector<4x1xf32>
    %4 = vector.shape_cast %1 : vector<4x1024xf32> to vector<1x4x1024xf32>
    %cst = arith.constant dense<0.000000e+00> : vector<1xf32>
    %5 = vector.multi_reduction <add>, %4, %cst [1, 2] : vector<1x4x1024xf32> to vector<1xf32>
    %6 = vector.shape_cast %5 : vector<1xf32> to vector<1x1x1xf32>
    %7 = vector.extract %6[0, 0, 0] : f32 from vector<1x1x1xf32>
    %8 = arith.mulf %1, %1 : vector<4x1024xf32>
    %9 = vector.shape_cast %8 : vector<4x1024xf32> to vector<1x4x1024xf32>
    %cst_5 = arith.constant dense<0.000000e+00> : vector<1xf32>
    %10 = vector.multi_reduction <add>, %9, %cst_5 [1, 2] : vector<1x4x1024xf32> to vector<1xf32>
    %11 = vector.shape_cast %10 : vector<1xf32> to vector<1x1x1xf32>
    %12 = vector.extract %11[0, 0, 0] : f32 from vector<1x1x1xf32>
    %cst_6 = arith.constant 4.096000e+03 : f32
    %13 = arith.divf %7, %cst_6 : f32
    %cst_7 = arith.constant 4.096000e+03 : f32
    %14 = arith.divf %12, %cst_7 : f32
    %15 = arith.mulf %13, %13 : f32
    %16 = arith.subf %14, %15 : f32
    %cst_8 = arith.constant 9.99999974E-6 : f32
    %17 = arith.addf %16, %cst_8 : f32
    %18 = math.rsqrt %17 : f32
    %19 = vector.broadcast %18 : f32 to vector<4x1xf32>
    %20 = arith.mulf %2, %19 : vector<4x1xf32>
    %21 = vector.broadcast %13 : f32 to vector<4x1xf32>
    %22 = arith.mulf %21, %20 : vector<4x1xf32>
    %23 = arith.subf %3, %22 : vector<4x1xf32>
    %24 = vector.broadcast %20 : vector<4x1xf32> to vector<4x1024xf32>
    %25 = arith.mulf %1, %24 : vector<4x1024xf32>
    %26 = vector.broadcast %23 : vector<4x1xf32> to vector<4x1024xf32>
    %27 = arith.addf %25, %26 : vector<4x1024xf32>
    %cst_9 = arith.constant 3.000000e+00 : f32
    %28 = vector.broadcast %cst_9 : f32 to vector<4x1024xf32>
    %29 = arith.addf %27, %28 : vector<4x1024xf32>
    %cst_10 = arith.constant 0.000000e+00 : f32
    %cst_11 = arith.constant 6.000000e+00 : f32
    %30 = vector.broadcast %cst_10 : f32 to vector<4x1024xf32>
    %31 = arith.maximumf %30, %29 : vector<4x1024xf32>
    %32 = vector.broadcast %cst_11 : f32 to vector<4x1024xf32>
    %33 = arith.minimumf %32, %31 : vector<4x1024xf32>
    %34 = arith.mulf %27, %33 : vector<4x1024xf32>
    %cst_12 = arith.constant 0.166666672 : f32
    %35 = vector.broadcast %cst_12 : f32 to vector<4x1024xf32>
    %36 = arith.mulf %34, %35 : vector<4x1024xf32>
    %c0_13 = arith.constant 0 : index
    %c0_14 = arith.constant 0 : index
    %37 = vector.load %arg3[%c0_13, %c0_14] : memref<8x4xbf16, #tpu.memory_space<vmem>>, vector<8x4xbf16>
    %38 = arith.truncf %36 : vector<4x1024xf32> to vector<4x1024xbf16>
    %cst_15 = arith.constant dense<0.000000e+00> : vector<8x1024xf32>
    %39 = tpu.matmul %37, %38, %cst_15 {dimension_numbers = #tpu.dot_dimension_numbers<[1], [0], [0], [1], [0, 0, 1, 1], [], []>} : vector<8x4xbf16>, vector<4x1024xbf16>, vector<8x1024xf32> -> vector<8x1024xf32>
    %c0_16 = arith.constant 0 : index
    %c8 = arith.constant 8 : index
    %40 = vector.load %arg2[%c0_16, %c8] : memref<8x16xf32, #tpu.memory_space<vmem>>, vector<8x1xf32>
    %41 = vector.broadcast %40 : vector<8x1xf32> to vector<8x1024xf32>
    %42 = arith.addf %39, %41 : vector<8x1024xf32>
    %c0_17 = arith.constant 0 : index
    %c2 = arith.constant 2 : index
    %43 = vector.load %arg2[%c0_17, %c2] : memref<8x16xf32, #tpu.memory_space<vmem>>, vector<8x1xf32>
    %c0_18 = arith.constant 0 : index
    %c3 = arith.constant 3 : index
    %44 = vector.load %arg2[%c0_18, %c3] : memref<8x16xf32, #tpu.memory_space<vmem>>, vector<8x1xf32>
    %45 = vector.shape_cast %42 : vector<8x1024xf32> to vector<1x8x1024xf32>
    %cst_19 = arith.constant dense<0.000000e+00> : vector<1xf32>
    %46 = vector.multi_reduction <add>, %45, %cst_19 [1, 2] : vector<1x8x1024xf32> to vector<1xf32>
    %47 = vector.shape_cast %46 : vector<1xf32> to vector<1x1x1xf32>
    %48 = vector.extract %47[0, 0, 0] : f32 from vector<1x1x1xf32>
    %49 = arith.mulf %42, %42 : vector<8x1024xf32>
    %50 = vector.shape_cast %49 : vector<8x1024xf32> to vector<1x8x1024xf32>
    %cst_20 = arith.constant dense<0.000000e+00> : vector<1xf32>
    %51 = vector.multi_reduction <add>, %50, %cst_20 [1, 2] : vector<1x8x1024xf32> to vector<1xf32>
    %52 = vector.shape_cast %51 : vector<1xf32> to vector<1x1x1xf32>
    %53 = vector.extract %52[0, 0, 0] : f32 from vector<1x1x1xf32>
    %cst_21 = arith.constant 8.192000e+03 : f32
    %54 = arith.divf %48, %cst_21 : f32
    %cst_22 = arith.constant 8.192000e+03 : f32
    %55 = arith.divf %53, %cst_22 : f32
    %56 = arith.mulf %54, %54 : f32
    %57 = arith.subf %55, %56 : f32
    %cst_23 = arith.constant 9.99999974E-6 : f32
    %58 = arith.addf %57, %cst_23 : f32
    %59 = math.rsqrt %58 : f32
    %60 = vector.broadcast %59 : f32 to vector<8x1xf32>
    %61 = arith.mulf %43, %60 : vector<8x1xf32>
    %62 = vector.broadcast %54 : f32 to vector<8x1xf32>
    %63 = arith.mulf %62, %61 : vector<8x1xf32>
    %64 = arith.subf %44, %63 : vector<8x1xf32>
    %65 = vector.broadcast %61 : vector<8x1xf32> to vector<8x1024xf32>
    %66 = arith.mulf %42, %65 : vector<8x1024xf32>
    %67 = vector.broadcast %64 : vector<8x1xf32> to vector<8x1024xf32>
    %68 = arith.addf %66, %67 : vector<8x1024xf32>
    %cst_24 = arith.constant 3.000000e+00 : f32
    %69 = vector.broadcast %cst_24 : f32 to vector<8x1024xf32>
    %70 = arith.addf %68, %69 : vector<8x1024xf32>
    %cst_25 = arith.constant 0.000000e+00 : f32
    %cst_26 = arith.constant 6.000000e+00 : f32
    %71 = vector.broadcast %cst_25 : f32 to vector<8x1024xf32>
    %72 = arith.maximumf %71, %70 : vector<8x1024xf32>
    %73 = vector.broadcast %cst_26 : f32 to vector<8x1024xf32>
    %74 = arith.minimumf %73, %72 : vector<8x1024xf32>
    %75 = arith.mulf %68, %74 : vector<8x1024xf32>
    %cst_27 = arith.constant 0.166666672 : f32
    %76 = vector.broadcast %cst_27 : f32 to vector<8x1024xf32>
    %77 = arith.mulf %75, %76 : vector<8x1024xf32>
    %c0_28 = arith.constant 0 : index
    %c0_29 = arith.constant 0 : index
    %c0_30 = arith.constant 0 : index
    %78 = vector.load %arg4[%c0_28, %c0_29, %c0_30] : memref<1x8x1024xf32, #tpu.memory_space<vmem>>, vector<1x8x1024xf32>
    %79 = vector.shape_cast %78 : vector<1x8x1024xf32> to vector<8x1024xf32>
    %80 = vector.shape_cast %77 : vector<8x1024xf32> to vector<1x8x1024xf32>
    tpu.vector_store %arg4[%c0_28, %c0_29, %c0_30], %80 {strides = array<i32>} : memref<1x8x1024xf32, #tpu.memory_space<vmem>>, vector<1x8x1024xf32>,
    return
  }
  func.func @transform_0(%arg0: i32) -> (i32, i32, i32) {
    %c0_i32 = arith.constant 0 : i32
    %c0_i32_0 = arith.constant 0 : i32
    %c0_i32_1 = arith.constant 0 : i32
    return %arg0, %c0_i32, %c0_i32_0 : i32, i32, i32
  }
  func.func @transform_1(%arg0: i32) -> (i32, i32) {
    %c0_i32 = arith.constant 0 : i32
    %c0_i32_0 = arith.constant 0 : i32
    %c0_i32_1 = arith.constant 0 : i32
    return %c0_i32, %c0_i32_0 : i32, i32
  }
  func.func @transform_2(%arg0: i32) -> (i32, i32) {
    %c0_i32 = arith.constant 0 : i32
    %c0_i32_0 = arith.constant 0 : i32
    %c0_i32_1 = arith.constant 0 : i32
    return %c0_i32, %c0_i32_0 : i32, i32
  }
  func.func @transform_3(%arg0: i32) -> (i32, i32, i32) {
    %c0_i32 = arith.constant 0 : i32
    %c0_i32_0 = arith.constant 0 : i32
    %c0_i32_1 = arith.constant 0 : i32
    return %arg0, %c0_i32, %c0_i32_0 : i32, i32, i32
  }
}

module attributes {stable_mosaic.version = 11 : i64} {
  func.func @_post_kernel(%arg0: i32, %arg1: memref<1x8x4096xf32, #tpu.memory_space<vmem>>, %arg2: memref<1x4x4096xf32, #tpu.memory_space<vmem>>, %arg3: memref<2x4096xbf16, #tpu.memory_space<vmem>>, %arg4: memref<8x16xf32, #tpu.memory_space<vmem>>, %arg5: memref<8x72xbf16, #tpu.memory_space<vmem>>, %arg6: memref<8x72xbf16, #tpu.memory_space<vmem>>, %arg7: memref<4x8xbf16, #tpu.memory_space<vmem>>, %arg8: memref<1x4x4096xf32, #tpu.memory_space<vmem>>) attributes {dimension_semantics = [#tpu.dimension_semantics<parallel>], iteration_bounds = array<i64: 2>, scalar_prefetch = 0 : i64, scratch_operands = 0 : i64, tpu.core_type = #tpu.core_type<tc>, window_params = [{transform_indices = @transform_0, window_bounds = array<i64: 1, 8, 4096>}, {transform_indices = @transform_1, window_bounds = array<i64: 1, 4, 4096>}, {pipeline_mode = #tpu.pipeline_mode<synchronous>, transform_indices = @transform_2, window_bounds = array<i64: 2, 4096>}, {pipeline_mode = #tpu.pipeline_mode<synchronous>, transform_indices = @transform_3, window_bounds = array<i64: 8, 16>}, {pipeline_mode = #tpu.pipeline_mode<synchronous>, transform_indices = @transform_4, window_bounds = array<i64: 8, 72>}, {pipeline_mode = #tpu.pipeline_mode<synchronous>, transform_indices = @transform_5, window_bounds = array<i64: 8, 72>}, {pipeline_mode = #tpu.pipeline_mode<synchronous>, transform_indices = @transform_6, window_bounds = array<i64: 4, 8>}, {transform_indices = @transform_7, window_bounds = array<i64: 1, 4, 4096>}]} {
    %c0 = arith.constant 0 : index
    %c0_0 = arith.constant 0 : index
    %c0_1 = arith.constant 0 : index
    %0 = vector.load %arg1[%c0, %c0_0, %c0_1] : memref<1x8x4096xf32, #tpu.memory_space<vmem>>, vector<1x8x4096xf32>
    %1 = vector.shape_cast %0 : vector<1x8x4096xf32> to vector<8x4096xf32>
    %c0_2 = arith.constant 0 : index
    %c0_3 = arith.constant 0 : index
    %2 = vector.load %arg3[%c0_2, %c0_3] : memref<2x4096xbf16, #tpu.memory_space<vmem>>, vector<1x4096xbf16>
    %c1 = arith.constant 1 : index
    %c0_4 = arith.constant 0 : index
    %3 = vector.load %arg3[%c1, %c0_4] : memref<2x4096xbf16, #tpu.memory_space<vmem>>, vector<1x4096xbf16>
    %c0_5 = arith.constant 0 : index
    %c9 = arith.constant 9 : index
    %4 = vector.load %arg4[%c0_5, %c9] : memref<8x16xf32, #tpu.memory_space<vmem>>, vector<8x1xf32>
    %c0_6 = arith.constant 0 : index
    %c10 = arith.constant 10 : index
    %5 = vector.load %arg4[%c0_6, %c10] : memref<8x16xf32, #tpu.memory_space<vmem>>, vector<8x1xf32>
    %c0_7 = arith.constant 0 : index
    %c11 = arith.constant 11 : index
    %6 = vector.load %arg4[%c0_7, %c11] : memref<8x16xf32, #tpu.memory_space<vmem>>, vector<4x1xf32>
    %c0_8 = arith.constant 0 : index
    %c0_9 = arith.constant 0 : index
    %7 = vector.load %arg5[%c0_8, %c0_9] : memref<8x72xbf16, #tpu.memory_space<vmem>>, vector<8x72xbf16>
    %8 = arith.truncf %1 : vector<8x4096xf32> to vector<8x4096xbf16>
    %cst = arith.constant 0.000000e+00 : bf16
    %9 = vector.broadcast %cst : bf16 to vector<8x65xbf16>
    %10 = tpu.concatenate %9, %8, %9 in 1 : vector<8x65xbf16>, vector<8x4096xbf16>, vector<8x65xbf16> -> vector<8x4226xbf16>
    %11 = vector.extract_strided_slice %10 {offsets = [0, 0], sizes = [8, 4096], strides = [1, 1]} : vector<8x4226xbf16> to vector<8x4096xbf16>
    %12 = vector.broadcast %2 : vector<1x4096xbf16> to vector<8x4096xbf16>
    %13 = arith.mulf %11, %12 : vector<8x4096xbf16>
    %14 = vector.extract_strided_slice %10 {offsets = [0, 1], sizes = [8, 4096], strides = [1, 1]} : vector<8x4226xbf16> to vector<8x4096xbf16>
    %15 = vector.extract_strided_slice %10 {offsets = [0, 2], sizes = [8, 4096], strides = [1, 1]} : vector<8x4226xbf16> to vector<8x4096xbf16>
    %16 = vector.broadcast %3 : vector<1x4096xbf16> to vector<8x4096xbf16>
    %17 = arith.mulf %15, %16 : vector<8x4096xbf16>
    %18 = vector.extract_strided_slice %10 {offsets = [0, 64], sizes = [8, 4096], strides = [1, 1]} : vector<8x4226xbf16> to vector<8x4096xbf16>
    %19 = vector.broadcast %2 : vector<1x4096xbf16> to vector<8x4096xbf16>
    %20 = arith.mulf %18, %19 : vector<8x4096xbf16>
    %21 = vector.extract_strided_slice %10 {offsets = [0, 65], sizes = [8, 4096], strides = [1, 1]} : vector<8x4226xbf16> to vector<8x4096xbf16>
    %22 = vector.extract_strided_slice %10 {offsets = [0, 66], sizes = [8, 4096], strides = [1, 1]} : vector<8x4226xbf16> to vector<8x4096xbf16>
    %23 = vector.broadcast %3 : vector<1x4096xbf16> to vector<8x4096xbf16>
    %24 = arith.mulf %22, %23 : vector<8x4096xbf16>
    %25 = vector.extract_strided_slice %10 {offsets = [0, 128], sizes = [8, 4096], strides = [1, 1]} : vector<8x4226xbf16> to vector<8x4096xbf16>
    %26 = vector.broadcast %2 : vector<1x4096xbf16> to vector<8x4096xbf16>
    %27 = arith.mulf %25, %26 : vector<8x4096xbf16>
    %28 = vector.extract_strided_slice %10 {offsets = [0, 129], sizes = [8, 4096], strides = [1, 1]} : vector<8x4226xbf16> to vector<8x4096xbf16>
    %29 = vector.extract_strided_slice %10 {offsets = [0, 130], sizes = [8, 4096], strides = [1, 1]} : vector<8x4226xbf16> to vector<8x4096xbf16>
    %30 = vector.broadcast %3 : vector<1x4096xbf16> to vector<8x4096xbf16>
    %31 = arith.mulf %29, %30 : vector<8x4096xbf16>
    %32 = tpu.concatenate %13, %14, %17, %20, %21, %24, %27, %28, %31 in 0 : vector<8x4096xbf16>, vector<8x4096xbf16>, vector<8x4096xbf16>, vector<8x4096xbf16>, vector<8x4096xbf16>, vector<8x4096xbf16>, vector<8x4096xbf16>, vector<8x4096xbf16>, vector<8x4096xbf16> -> vector<72x4096xbf16>
    %cst_10 = arith.constant dense<0.000000e+00> : vector<8x4096xf32>
    %33 = tpu.matmul %7, %32, %cst_10 {dimension_numbers = #tpu.dot_dimension_numbers<[1], [0], [0], [1], [0, 0, 1, 1], [], []>} : vector<8x72xbf16>, vector<72x4096xbf16>, vector<8x4096xf32> -> vector<8x4096xf32>
    %34 = vector.broadcast %4 : vector<8x1xf32> to vector<8x4096xf32>
    %35 = arith.addf %33, %34 : vector<8x4096xf32>
    %c0_11 = arith.constant 0 : index
    %c4 = arith.constant 4 : index
    %36 = vector.load %arg4[%c0_11, %c4] : memref<8x16xf32, #tpu.memory_space<vmem>>, vector<8x1xf32>
    %c0_12 = arith.constant 0 : index
    %c5 = arith.constant 5 : index
    %37 = vector.load %arg4[%c0_12, %c5] : memref<8x16xf32, #tpu.memory_space<vmem>>, vector<8x1xf32>
    %38 = vector.shape_cast %35 : vector<8x4096xf32> to vector<1x8x4096xf32>
    %cst_13 = arith.constant dense<0.000000e+00> : vector<1xf32>
    %39 = vector.multi_reduction <add>, %38, %cst_13 [1, 2] : vector<1x8x4096xf32> to vector<1xf32>
    %40 = vector.shape_cast %39 : vector<1xf32> to vector<1x1x1xf32>
    %41 = vector.extract %40[0, 0, 0] : f32 from vector<1x1x1xf32>
    %42 = arith.mulf %35, %35 : vector<8x4096xf32>
    %43 = vector.shape_cast %42 : vector<8x4096xf32> to vector<1x8x4096xf32>
    %cst_14 = arith.constant dense<0.000000e+00> : vector<1xf32>
    %44 = vector.multi_reduction <add>, %43, %cst_14 [1, 2] : vector<1x8x4096xf32> to vector<1xf32>
    %45 = vector.shape_cast %44 : vector<1xf32> to vector<1x1x1xf32>
    %46 = vector.extract %45[0, 0, 0] : f32 from vector<1x1x1xf32>
    %cst_15 = arith.constant 3.276800e+04 : f32
    %47 = arith.divf %41, %cst_15 : f32
    %cst_16 = arith.constant 3.276800e+04 : f32
    %48 = arith.divf %46, %cst_16 : f32
    %49 = arith.mulf %47, %47 : f32
    %50 = arith.subf %48, %49 : f32
    %cst_17 = arith.constant 9.99999974E-6 : f32
    %51 = arith.addf %50, %cst_17 : f32
    %52 = math.rsqrt %51 : f32
    %53 = vector.broadcast %52 : f32 to vector<8x1xf32>
    %54 = arith.mulf %36, %53 : vector<8x1xf32>
    %55 = vector.broadcast %47 : f32 to vector<8x1xf32>
    %56 = arith.mulf %55, %54 : vector<8x1xf32>
    %57 = arith.subf %37, %56 : vector<8x1xf32>
    %58 = vector.broadcast %54 : vector<8x1xf32> to vector<8x4096xf32>
    %59 = arith.mulf %35, %58 : vector<8x4096xf32>
    %60 = vector.broadcast %57 : vector<8x1xf32> to vector<8x4096xf32>
    %61 = arith.addf %59, %60 : vector<8x4096xf32>
    %cst_18 = arith.constant 3.000000e+00 : f32
    %62 = vector.broadcast %cst_18 : f32 to vector<8x4096xf32>
    %63 = arith.addf %61, %62 : vector<8x4096xf32>
    %cst_19 = arith.constant 0.000000e+00 : f32
    %cst_20 = arith.constant 6.000000e+00 : f32
    %64 = vector.broadcast %cst_19 : f32 to vector<8x4096xf32>
    %65 = arith.maximumf %64, %63 : vector<8x4096xf32>
    %66 = vector.broadcast %cst_20 : f32 to vector<8x4096xf32>
    %67 = arith.minimumf %66, %65 : vector<8x4096xf32>
    %68 = arith.mulf %61, %67 : vector<8x4096xf32>
    %cst_21 = arith.constant 0.166666672 : f32
    %69 = vector.broadcast %cst_21 : f32 to vector<8x4096xf32>
    %70 = arith.mulf %68, %69 : vector<8x4096xf32>
    %c0_22 = arith.constant 0 : index
    %c0_23 = arith.constant 0 : index
    %71 = vector.load %arg6[%c0_22, %c0_23] : memref<8x72xbf16, #tpu.memory_space<vmem>>, vector<8x72xbf16>
    %72 = arith.truncf %70 : vector<8x4096xf32> to vector<8x4096xbf16>
    %cst_24 = arith.constant 0.000000e+00 : bf16
    %73 = vector.broadcast %cst_24 : bf16 to vector<8x65xbf16>
    %74 = tpu.concatenate %73, %72, %73 in 1 : vector<8x65xbf16>, vector<8x4096xbf16>, vector<8x65xbf16> -> vector<8x4226xbf16>
    %75 = vector.extract_strided_slice %74 {offsets = [0, 0], sizes = [8, 4096], strides = [1, 1]} : vector<8x4226xbf16> to vector<8x4096xbf16>
    %76 = vector.broadcast %2 : vector<1x4096xbf16> to vector<8x4096xbf16>
    %77 = arith.mulf %75, %76 : vector<8x4096xbf16>
    %78 = vector.extract_strided_slice %74 {offsets = [0, 1], sizes = [8, 4096], strides = [1, 1]} : vector<8x4226xbf16> to vector<8x4096xbf16>
    %79 = vector.extract_strided_slice %74 {offsets = [0, 2], sizes = [8, 4096], strides = [1, 1]} : vector<8x4226xbf16> to vector<8x4096xbf16>
    %80 = vector.broadcast %3 : vector<1x4096xbf16> to vector<8x4096xbf16>
    %81 = arith.mulf %79, %80 : vector<8x4096xbf16>
    %82 = vector.extract_strided_slice %74 {offsets = [0, 64], sizes = [8, 4096], strides = [1, 1]} : vector<8x4226xbf16> to vector<8x4096xbf16>
    %83 = vector.broadcast %2 : vector<1x4096xbf16> to vector<8x4096xbf16>
    %84 = arith.mulf %82, %83 : vector<8x4096xbf16>
    %85 = vector.extract_strided_slice %74 {offsets = [0, 65], sizes = [8, 4096], strides = [1, 1]} : vector<8x4226xbf16> to vector<8x4096xbf16>
    %86 = vector.extract_strided_slice %74 {offsets = [0, 66], sizes = [8, 4096], strides = [1, 1]} : vector<8x4226xbf16> to vector<8x4096xbf16>
    %87 = vector.broadcast %3 : vector<1x4096xbf16> to vector<8x4096xbf16>
    %88 = arith.mulf %86, %87 : vector<8x4096xbf16>
    %89 = vector.extract_strided_slice %74 {offsets = [0, 128], sizes = [8, 4096], strides = [1, 1]} : vector<8x4226xbf16> to vector<8x4096xbf16>
    %90 = vector.broadcast %2 : vector<1x4096xbf16> to vector<8x4096xbf16>
    %91 = arith.mulf %89, %90 : vector<8x4096xbf16>
    %92 = vector.extract_strided_slice %74 {offsets = [0, 129], sizes = [8, 4096], strides = [1, 1]} : vector<8x4226xbf16> to vector<8x4096xbf16>
    %93 = vector.extract_strided_slice %74 {offsets = [0, 130], sizes = [8, 4096], strides = [1, 1]} : vector<8x4226xbf16> to vector<8x4096xbf16>
    %94 = vector.broadcast %3 : vector<1x4096xbf16> to vector<8x4096xbf16>
    %95 = arith.mulf %93, %94 : vector<8x4096xbf16>
    %96 = tpu.concatenate %77, %78, %81, %84, %85, %88, %91, %92, %95 in 0 : vector<8x4096xbf16>, vector<8x4096xbf16>, vector<8x4096xbf16>, vector<8x4096xbf16>, vector<8x4096xbf16>, vector<8x4096xbf16>, vector<8x4096xbf16>, vector<8x4096xbf16>, vector<8x4096xbf16> -> vector<72x4096xbf16>
    %cst_25 = arith.constant dense<0.000000e+00> : vector<8x4096xf32>
    %97 = tpu.matmul %71, %96, %cst_25 {dimension_numbers = #tpu.dot_dimension_numbers<[1], [0], [0], [1], [0, 0, 1, 1], [], []>} : vector<8x72xbf16>, vector<72x4096xbf16>, vector<8x4096xf32> -> vector<8x4096xf32>
    %98 = vector.broadcast %5 : vector<8x1xf32> to vector<8x4096xf32>
    %99 = arith.addf %97, %98 : vector<8x4096xf32>
    %c0_26 = arith.constant 0 : index
    %c6 = arith.constant 6 : index
    %100 = vector.load %arg4[%c0_26, %c6] : memref<8x16xf32, #tpu.memory_space<vmem>>, vector<8x1xf32>
    %c0_27 = arith.constant 0 : index
    %c7 = arith.constant 7 : index
    %101 = vector.load %arg4[%c0_27, %c7] : memref<8x16xf32, #tpu.memory_space<vmem>>, vector<8x1xf32>
    %102 = vector.shape_cast %99 : vector<8x4096xf32> to vector<1x8x4096xf32>
    %cst_28 = arith.constant dense<0.000000e+00> : vector<1xf32>
    %103 = vector.multi_reduction <add>, %102, %cst_28 [1, 2] : vector<1x8x4096xf32> to vector<1xf32>
    %104 = vector.shape_cast %103 : vector<1xf32> to vector<1x1x1xf32>
    %105 = vector.extract %104[0, 0, 0] : f32 from vector<1x1x1xf32>
    %106 = arith.mulf %99, %99 : vector<8x4096xf32>
    %107 = vector.shape_cast %106 : vector<8x4096xf32> to vector<1x8x4096xf32>
    %cst_29 = arith.constant dense<0.000000e+00> : vector<1xf32>
    %108 = vector.multi_reduction <add>, %107, %cst_29 [1, 2] : vector<1x8x4096xf32> to vector<1xf32>
    %109 = vector.shape_cast %108 : vector<1xf32> to vector<1x1x1xf32>
    %110 = vector.extract %109[0, 0, 0] : f32 from vector<1x1x1xf32>
    %cst_30 = arith.constant 3.276800e+04 : f32
    %111 = arith.divf %105, %cst_30 : f32
    %cst_31 = arith.constant 3.276800e+04 : f32
    %112 = arith.divf %110, %cst_31 : f32
    %113 = arith.mulf %111, %111 : f32
    %114 = arith.subf %112, %113 : f32
    %cst_32 = arith.constant 9.99999974E-6 : f32
    %115 = arith.addf %114, %cst_32 : f32
    %116 = math.rsqrt %115 : f32
    %117 = vector.broadcast %116 : f32 to vector<8x1xf32>
    %118 = arith.mulf %100, %117 : vector<8x1xf32>
    %119 = vector.broadcast %111 : f32 to vector<8x1xf32>
    %120 = arith.mulf %119, %118 : vector<8x1xf32>
    %121 = arith.subf %101, %120 : vector<8x1xf32>
    %122 = vector.broadcast %118 : vector<8x1xf32> to vector<8x4096xf32>
    %123 = arith.mulf %99, %122 : vector<8x4096xf32>
    %124 = vector.broadcast %121 : vector<8x1xf32> to vector<8x4096xf32>
    %125 = arith.addf %123, %124 : vector<8x4096xf32>
    %cst_33 = arith.constant 3.000000e+00 : f32
    %126 = vector.broadcast %cst_33 : f32 to vector<8x4096xf32>
    %127 = arith.addf %125, %126 : vector<8x4096xf32>
    %cst_34 = arith.constant 0.000000e+00 : f32
    %cst_35 = arith.constant 6.000000e+00 : f32
    %128 = vector.broadcast %cst_34 : f32 to vector<8x4096xf32>
    %129 = arith.maximumf %128, %127 : vector<8x4096xf32>
    %130 = vector.broadcast %cst_35 : f32 to vector<8x4096xf32>
    %131 = arith.minimumf %130, %129 : vector<8x4096xf32>
    %132 = arith.mulf %125, %131 : vector<8x4096xf32>
    %cst_36 = arith.constant 0.166666672 : f32
    %133 = vector.broadcast %cst_36 : f32 to vector<8x4096xf32>
    %134 = arith.mulf %132, %133 : vector<8x4096xf32>
    %c0_37 = arith.constant 0 : index
    %c0_38 = arith.constant 0 : index
    %135 = vector.load %arg7[%c0_37, %c0_38] : memref<4x8xbf16, #tpu.memory_space<vmem>>, vector<4x8xbf16>
    %136 = arith.truncf %134 : vector<8x4096xf32> to vector<8x4096xbf16>
    %cst_39 = arith.constant dense<0.000000e+00> : vector<4x4096xf32>
    %137 = tpu.matmul %135, %136, %cst_39 {dimension_numbers = #tpu.dot_dimension_numbers<[1], [0], [0], [1], [0, 0, 1, 1], [], []>} : vector<4x8xbf16>, vector<8x4096xbf16>, vector<4x4096xf32> -> vector<4x4096xf32>
    %138 = vector.broadcast %6 : vector<4x1xf32> to vector<4x4096xf32>
    %139 = arith.addf %137, %138 : vector<4x4096xf32>
    %c0_40 = arith.constant 0 : index
    %c0_41 = arith.constant 0 : index
    %c0_42 = arith.constant 0 : index
    %140 = vector.load %arg2[%c0_40, %c0_41, %c0_42] : memref<1x4x4096xf32, #tpu.memory_space<vmem>>, vector<1x4x4096xf32>
    %141 = vector.shape_cast %140 : vector<1x4x4096xf32> to vector<4x4096xf32>
    %142 = arith.addf %139, %141 : vector<4x4096xf32>
    %c0_43 = arith.constant 0 : index
    %c0_44 = arith.constant 0 : index
    %c0_45 = arith.constant 0 : index
    %143 = vector.load %arg8[%c0_43, %c0_44, %c0_45] : memref<1x4x4096xf32, #tpu.memory_space<vmem>>, vector<1x4x4096xf32>
    %144 = vector.shape_cast %143 : vector<1x4x4096xf32> to vector<4x4096xf32>
    %145 = vector.shape_cast %142 : vector<4x4096xf32> to vector<1x4x4096xf32>
    tpu.vector_store %arg8[%c0_43, %c0_44, %c0_45], %145 {strides = array<i32>} : memref<1x4x4096xf32, #tpu.memory_space<vmem>>, vector<1x4x4096xf32>,
    return
  }
  func.func @transform_0(%arg0: i32) -> (i32, i32, i32) {
    %c0_i32 = arith.constant 0 : i32
    %c0_i32_0 = arith.constant 0 : i32
    %c0_i32_1 = arith.constant 0 : i32
    return %arg0, %c0_i32, %c0_i32_0 : i32, i32, i32
  }
  func.func @transform_1(%arg0: i32) -> (i32, i32, i32) {
    %c0_i32 = arith.constant 0 : i32
    %c0_i32_0 = arith.constant 0 : i32
    %c0_i32_1 = arith.constant 0 : i32
    return %arg0, %c0_i32, %c0_i32_0 : i32, i32, i32
  }
  func.func @transform_2(%arg0: i32) -> (i32, i32) {
    %c0_i32 = arith.constant 0 : i32
    %c0_i32_0 = arith.constant 0 : i32
    %c0_i32_1 = arith.constant 0 : i32
    return %c0_i32, %c0_i32_0 : i32, i32
  }
  func.func @transform_3(%arg0: i32) -> (i32, i32) {
    %c0_i32 = arith.constant 0 : i32
    %c0_i32_0 = arith.constant 0 : i32
    %c0_i32_1 = arith.constant 0 : i32
    return %c0_i32, %c0_i32_0 : i32, i32
  }
  func.func @transform_4(%arg0: i32) -> (i32, i32) {
    %c0_i32 = arith.constant 0 : i32
    %c0_i32_0 = arith.constant 0 : i32
    %c0_i32_1 = arith.constant 0 : i32
    return %c0_i32, %c0_i32_0 : i32, i32
  }
  func.func @transform_5(%arg0: i32) -> (i32, i32) {
    %c0_i32 = arith.constant 0 : i32
    %c0_i32_0 = arith.constant 0 : i32
    %c0_i32_1 = arith.constant 0 : i32
    return %c0_i32, %c0_i32_0 : i32, i32
  }
  func.func @transform_6(%arg0: i32) -> (i32, i32) {
    %c0_i32 = arith.constant 0 : i32
    %c0_i32_0 = arith.constant 0 : i32
    %c0_i32_1 = arith.constant 0 : i32
    return %c0_i32, %c0_i32_0 : i32, i32
  }
  func.func @transform_7(%arg0: i32) -> (i32, i32, i32) {
    %c0_i32 = arith.constant 0 : i32
    %c0_i32_0 = arith.constant 0 : i32
    %c0_i32_1 = arith.constant 0 : i32
    return %arg0, %c0_i32, %c0_i32_0 : i32, i32, i32
  }
}

</mosaic_0001>

<llo_original>
// kernel: hopper_forward.4
$region0: #{hopper_forward.4}
  #allocation0 [shape = 'u32[]', space=smem, size = 0x4, offset = 0x4, fixed_abs, tag = 'smem constant byte address 0x4 - core index']
  #allocation1 [shape = 'u32[144,128]{1,0:T(1,128)}', space=vmem, size = 0x12000, scoped, tag = 'internal scratch']
  %s0 = inlined_call_operand.vmem [shape: f32[2,4,256], index: 0, kind: input, shape index: {}]
  %s1 = inlined_call_operand.hbm [shape: f32[8,16], index: 1, kind: input, shape index: {}]
  %s2 = inlined_call_operand.vmem [shape: bf16[8,4], index: 2, kind: input, shape index: {}]
  %s3 = inlined_call_operand.vmem [shape: f32[2,8,256], index: 3, kind: output, shape index: {}]
  %s4 = sld [smem:[#allocation0]]
  $region49: #{hopper_forward.4} parent=0
    _
  %s6 = ssub.s32 1, %s4
  %s7 = scalar_select 0, %s6, %s4
  $region1: #{hopper_forward.4} parent=0
    #allocation2 [shape = 'u8[4096]{0}', space=vmem, size = 0x1000, scoped, tag = 'input window, operand 1, single buffered']
    #allocation3 [shape = 's32[2]{0}', space=sflag, size = 0x8, scoped, tag = 'scoped memory for hopper_forward.4']
    %8 = vsyncpa [#allocation3], 0
    loop: start=0, step=1, limit=4
    $region2: #{hopper_forward.4} parent=1 // loop_pre_header
      _
    $region3: #{hopper_forward.4} parent=1 // loop_header
      %s10 = sphi 0, %s14
      %p11 = scmp.ge.s32.totalorder %s10, 4
      %s20 = sphi 0, %s22
      %s23 = sphi 0, %s20
      %s24 = sphi 0, %s23
      %s40 = sphi 0, %s24
      %s44 = sphi 0, %s44
      %s46 = sphi 0, %s44
      %s47 = sphi 0, %s46
      %s61 = sphi 0, %s47
      %s65 = sphi 0, %s65
      %s67 = sphi 0, %s65
      %s68 = sphi 0, %s67
      %s82 = sphi 0, %s68
      %s88 = sphi 0, %s90
      %s91 = sphi 0, %s88
      %s92 = sphi 0, %s91
      %s108 = sphi 0, %s92
    $region4: #{hopper_forward.4} parent=1 // loop_header_branch
      %13 = sbr.rel (%p11) target = $region8
    $region5: #{hopper_forward.4} parent=1 // loop_body
      %s15 = ssub.s32 %s10, 1
      %s16 = ssub.s32 %s10, 2
      %s17 = sadd.s32 %s10, 1
      %s18 = ssub.s32 %s10, %s17
      %p19 = scmp.eq.s32.totalorder %s18, 0
      %s21 = sadd.s32 %s20, 1
      %s22 = scalar_select %p19, %s20, %s21
      %p25 = pneg %p19
      %p26 = scmp.eq.s32.totalorder %s10, 1
      %p27 = por %p25, %p26
      %p28 = scmp.ne.s32.totalorder %s20, %s23
      %p29 = scmp.eq.s32.totalorder %s10, 0
      %p30 = por %p28, %p29
      %p31 = scmp.ne.s32.totalorder %s20, %s23
      %p32 = scmp.eq.s32.totalorder %s15, 1
      %p33 = por %p31, %p32
      %p34 = scmp.ne.s32.totalorder %s23, %s24
      %p35 = scmp.eq.s32.totalorder %s15, 0
      %p36 = por %p34, %p35
      %p37 = scmp.ne.s32.totalorder %s23, %s24
      %p38 = scmp.eq.s32.totalorder %s16, 1
      %p39 = por %p37, %p38
      %p41 = scmp.ne.s32.totalorder %s24, %s40
      %p42 = scmp.eq.s32.totalorder %s16, 0
      %p43 = por %p41, %p42
      %s45 = sadd.s32 %s44, 1
      %p48 = scmp.eq.s32.totalorder %s10, 1
      %p49 = scmp.ne.s32.totalorder %s44, %s46
      %p50 = scmp.eq.s32.totalorder %s10, 0
      %p51 = por %p49, %p50
      %p52 = scmp.ne.s32.totalorder %s44, %s46
      %p53 = scmp.eq.s32.totalorder %s15, 1
      %p54 = por %p52, %p53
      %p55 = scmp.ne.s32.totalorder %s46, %s47
      %p56 = scmp.eq.s32.totalorder %s15, 0
      %p57 = por %p55, %p56
      %p58 = scmp.ne.s32.totalorder %s46, %s47
      %p59 = scmp.eq.s32.totalorder %s16, 1
      %p60 = por %p58, %p59
      %p62 = scmp.ne.s32.totalorder %s47, %s61
      %p63 = scmp.eq.s32.totalorder %s16, 0
      %p64 = por %p62, %p63
      %s66 = sadd.s32 %s65, 1
      %p69 = scmp.eq.s32.totalorder %s10, 1
      %p70 = scmp.ne.s32.totalorder %s65, %s67
      %p71 = scmp.eq.s32.totalorder %s10, 0
      %p72 = por %p70, %p71
      %p73 = scmp.ne.s32.totalorder %s65, %s67
      %p74 = scmp.eq.s32.totalorder %s15, 1
      %p75 = por %p73, %p74
      %p76 = scmp.ne.s32.totalorder %s67, %s68
      %p77 = scmp.eq.s32.totalorder %s15, 0
      %p78 = por %p76, %p77
      %p79 = scmp.ne.s32.totalorder %s67, %s68
      %p80 = scmp.eq.s32.totalorder %s16, 1
      %p81 = por %p79, %p80
      %p83 = scmp.ne.s32.totalorder %s68, %s82
      %p84 = scmp.eq.s32.totalorder %s16, 0
      %p85 = por %p83, %p84
      %s86 = ssub.s32 %s10, %s17
      %p87 = scmp.eq.s32.totalorder %s86, 0
      %s89 = sadd.s32 %s88, 1
      %s90 = scalar_select %p87, %s88, %s89
      %p93 = pneg %p87
      %p94 = scmp.eq.s32.totalorder %s10, 1
      %p95 = por %p93, %p94
      %p96 = scmp.ne.s32.totalorder %s88, %s91
      %p97 = scmp.eq.s32.totalorder %s10, 0
      %p98 = por %p96, %p97
      %p99 = scmp.ne.s32.totalorder %s88, %s91
      %p100 = scmp.eq.s32.totalorder %s15, 1
      %p101 = por %p99, %p100
      %p102 = scmp.ne.s32.totalorder %s91, %s92
      %p103 = scmp.eq.s32.totalorder %s15, 0
      %p104 = por %p102, %p103
      %p105 = scmp.ne.s32.totalorder %s91, %s92
      %p106 = scmp.eq.s32.totalorder %s16, 1
      %p107 = por %p105, %p106
      %p109 = scmp.ne.s32.totalorder %s92, %s108
      %p110 = scmp.eq.s32.totalorder %s16, 0
      %p111 = por %p109, %p110
      %p112 = scmp.le.s32.totalorder 1, %s10
      %p113 = scmp.lt.s32.totalorder %s10, 3
      %p114 = pnand %p112, %p113
      %p115 = pneg %p114
      // Predicated region
      $region9: #{hopper_forward.4} parent=5 // pred_check
        _
      $region10: #{hopper_forward.4} parent=5 // pred_check_branch
        %117 = sbr.rel (%p114) target = $region12
      $region11: #{hopper_forward.4} parent=5 // pred_region
        %s118 = ssub.s32 %s10, 1
        // Predicated region
        $region13: #{hopper_forward.4} parent=11 // pred_check
          %p119 = pneg %p57
        $region14: #{hopper_forward.4} parent=11 // pred_check_branch
          %121 = sbr.rel (%p119) target = $region16
        $region15: #{hopper_forward.4} parent=11 // pred_region
          %s123 = ssub.s32 128, 128
          %124 = vsyncadd [#allocation3], %s123
          %s126 = sshll.u32 [#allocation2], 4
          %s127 = int_to_ptr.vmem [resolvable:$true] %s126
          %129 = dma.hbm_to_vmem [thread:$0]  %s1, 128, %s127, [#allocation3]
        $region16: #{hopper_forward.4} parent=11 // pred_fallthru
          _
        // Predicated region
        $region17: #{hopper_forward.4} parent=11 // pred_check
          %p130 = pneg %p78
        $region18: #{hopper_forward.4} parent=11 // pred_check_branch
          %132 = sbr.rel (%p130) target = $region20
        $region19: #{hopper_forward.4} parent=11 // pred_region
          _
        $region20: #{hopper_forward.4} parent=11 // pred_fallthru
          _
      $region12: #{hopper_forward.4} parent=5 // pred_fallthru
        _
      %p133 = scmp.lt.s32.totalorder %s10, 2
      // Predicated region
      $region21: #{hopper_forward.4} parent=5 // pred_check
        %p134 = pneg %p133
      $region22: #{hopper_forward.4} parent=5 // pred_check_branch
        %136 = sbr.rel (%p134) target = $region24
      $region23: #{hopper_forward.4} parent=5 // pred_region
        // Predicated region
        $region25: #{hopper_forward.4} parent=23 // pred_check
          %p137 = pneg %p30
        $region26: #{hopper_forward.4} parent=23 // pred_check_branch
          %139 = sbr.rel (%p137) target = $region28
        $region27: #{hopper_forward.4} parent=23 // pred_region
          %p140 = scmp.lt.s32.totalorder %s10, 1
          %s141 = scalar_select %p140, %s10, 1
          %s142 = smul.addr %s141, 2
          %s143 = smul.addr %s142, 4
          %s144 = scalar_lea.vmem %s0, %s143
        $region28: #{hopper_forward.4} parent=23 // pred_fallthru
          _
      $region24: #{hopper_forward.4} parent=5 // pred_fallthru
        _
      %p145 = scmp.le.s32.totalorder 1, %s10
      %p146 = scmp.lt.s32.totalorder %s10, 3
      %p147 = pnand %p145, %p146
      %p148 = pneg %p147
      // Predicated region
      $region29: #{hopper_forward.4} parent=5 // pred_check
        _
      $region30: #{hopper_forward.4} parent=5 // pred_check_branch
        %150 = sbr.rel (%p147) target = $region32
      $region31: #{hopper_forward.4} parent=5 // pred_region
        %s151 = ssub.s32 %s10, 1
        // Predicated region
        $region33: #{hopper_forward.4} parent=31 // pred_check
          %p152 = pneg %p57
        $region34: #{hopper_forward.4} parent=31 // pred_check_branch
          %154 = sbr.rel (%p152) target = $region36
        $region35: #{hopper_forward.4} parent=31 // pred_region
          %155 = dma.done [#allocation3], 128
        $region36: #{hopper_forward.4} parent=31 // pred_fallthru
          _
        %p156 = scmp.lt.s32.totalorder %s15, 1
        %s157 = scalar_select %p156, %s15, 1
        %s158 = smul.addr %s157, 2
        %s159 = smul.addr %s158, 4
        %s160 = scalar_lea.vmem %s0, %s159
        %p161 = pneg %p36
        %p162 = pneg %p33
        %p163 = pneg %p57
        %p164 = pneg %p54
        %p165 = pneg %p78
        %p166 = pneg %p75
        %p167 = pneg %p104
        %p168 = pneg %p101
        %p169 = scmp.lt.s32.totalorder %s15, 1
        %s170 = scalar_select %p169, %s15, 1
        %s171 = smul.addr %s170, 2
        %s172 = smul.addr %s171, 8
        %s173 = scalar_lea.vmem %s3, %s172
        %p174 = scmp.lt.s32.totalorder %s15, 1
        %s175 = scalar_select %p174, %s15, 1
        %s176 = smul.addr %s175, 2
        %s177 = smul.addr %s176, 4
        %s178 = scalar_lea.vmem %s0, %s177
        %p179 = scmp.lt.s32.totalorder %s15, 1
        %s180 = scalar_select %p179, %s15, 1
        %s181 = smul.addr %s180, 2
        %s182 = smul.addr %s181, 8
        %s183 = scalar_lea.vmem %s3, %s182
        %v185 = vld [vmem:[%s178] sm:$0xff]
        %v186 = vld [vmem:[#allocation2] sm:$0xf]
        %v188 = vcombine.high %v185, %v185
        %vm190 = vcmask 1043456
        %v191 = vsel %vm190, %v185, 0.0
        %v192 = vsel %vm190, %v188, 0.0
        %v193 = vadd.f32 %v191, %v192
        %194 = vadd.xlane.f32.xlu0 %v193
        %v195 = vpop.xlane.xlu0 %194
        %v196 = vrot.slane %v195, 4
        %v197 = vadd.f32 %v195, %v196
        %v198 = vrot.slane %v197, 2
        %v199 = vadd.f32 %v197, %v198
        %v200 = vrot.slane %v199, 1
        %v201 = vadd.f32 %v199, %v200
        %s202 = vtos %v201
        %v203 = vmul.f32 %v185, %v185
        %v205 = vcombine.high %v203, %v203
        %v207 = vsel %vm190, %v203, 0.0
        %v208 = vsel %vm190, %v205, 0.0
        %v209 = vadd.f32 %v207, %v208
        %210 = vadd.xlane.f32.xlu0 %v209
        %v211 = vpop.xlane.xlu0 %210
        %v212 = vrot.slane %v211, 4
        %v213 = vadd.f32 %v211, %v212
        %v214 = vrot.slane %v213, 2
        %v215 = vadd.f32 %v213, %v214
        %v216 = vrot.slane %v215, 1
        %v217 = vadd.f32 %v215, %v216
        %s218 = vtos %v217
        %v219 = vrcp.pop 1024.0
        %s220 = vtos %v219
        %s221 = smul.f32 %s202, %s220
        %v222 = vrcp.pop 1024.0
        %s223 = vtos %v222
        %s224 = smul.f32 %s218, %s223
        %s225 = smul.f32 %s221, %s221
        %s226 = ssub.f32 %s224, %s225
        %s227 = sadd.f32 %s226, 1e-05
        %v228 = vstv %s227
        %v229 = vrsqrt.pop %v228
        %s230 = vtos %v229
        %v231 = vstv %s230
        %v232 = vmul.f32 %v186, %v231
        %v233 = vstv %s221
        %v234 = vmul.f32 %v233, %v232
        %236 = vrot.lane.b32.xlu0 %v234, 1
        %v237 = vpop.permute.xlu0 %236
        %v239 = vsub.f32 %v186, %v237
        %241 = vset.pattern.permute.xlu0 0
        %242 = vperm.xlu0 %241, %v232
        %v243 = vpop.permute.xlu0 %242
        %v245 = vunpack.c.l.s4 839922192
        %v246 = vunpack.c.0.s8 %v245
        %v247 = vlaneseq
        %v248 = vshrl.u32 %v247, 7
        %v249 = vsub.s32 %v246, %v248
        %v250 = vrot.slane %v243, %v249
        %v252 = vmul.f32 %v185, %v250
        %254 = vset.pattern.permute.xlu0 1
        %255 = vperm.xlu0 %254, %v239
        %v256 = vpop.permute.xlu0 %255
        %v258 = vunpack.c.l.s4 839922192
        %v259 = vunpack.c.0.s8 %v258
        %v260 = vlaneseq
        %v261 = vshrl.u32 %v260, 7
        %v262 = vsub.s32 %v259, %v261
        %v263 = vrot.slane %v256, %v262
        %v265 = vadd.f32 %v252, %v263
        %v266 = vadd.f32 %v265, 3.0
        %v267 = vmax.f32 %v266, 0.0
        %v268 = vmin.f32 %v267, 6.0
        %v269 = vmul.f32 %v265, %v268
        %v270 = vmul.f32 %v269, 0.16666667
        %v271 = vld [vmem:[%s2] sm:$0xf]
        %v273 = vcombine.high %v270, %v270
        %v275 = vpack.c.bf16 %v270, %v270
        %v276 = vpack.c.bf16 %v273, %v273
        %v277 = vld [vmem:[#allocation2] sm:$0xff]
        %279 = vset.pattern.permute.xlu0 8
        %280 = vperm.xlu0 %279, %v277
        %v281 = vpop.permute.xlu0 %280
        %vm283 = vcmask 31744
        %v285 = vsel %vm283, %v271, 0
        %vm287 = vcmask 1041408
        %v289 = vsel %vm287, %v275, 0
        %v292 = vsel %vm287, %v276, 0
        %294 = vmatprep.subr.bf16.mxu0 %v292
        %295 = vmatpush1.bf16.msra.mxu0 %v289
        %296 = vmatprep.subr.bf16.mxu0 0
        %297 = vmatpush1.bf16.msra.mxu0 0
        %298 = vmatprep.subr.bf16.mxu0 0
        %299 = vmatpush1.bf16.msra.mxu0 0
        %300 = vmatprep.subr.bf16.mxu0 0
        %301 = vmatpush1.bf16.msra.mxu0 0
        %302 = vmatprep.subr.bf16.mxu0 0
        %303 = vmatpush1.bf16.msra.mxu0 0
        %304 = vmatprep.subr.bf16.mxu0 0
        %305 = vmatpush1.bf16.msra.mxu0 0
        %306 = vmatprep.subr.bf16.mxu0 0
        %307 = vmatpush1.bf16.msra.mxu0 0
        %308 = vmatprep.subr.bf16.mxu0 0
        %309 = vmatpush1.bf16.msra.mxu0 0
        %310 = vmatprep.subr.bf16.mxu0 0
        %311 = vmatpush1.bf16.msra.mxu0 0
        %312 = vmatprep.subr.bf16.mxu0 0
        %313 = vmatpush1.bf16.msra.mxu0 0
        %314 = vmatprep.subr.bf16.mxu0 0
        %315 = vmatpush1.bf16.msra.mxu0 0
        %316 = vmatprep.subr.bf16.mxu0 0
        %317 = vmatpush1.bf16.msra.mxu0 0
        %318 = vmatprep.subr.bf16.mxu0 0
        %319 = vmatpush1.bf16.msra.mxu0 0
        %320 = vmatprep.subr.bf16.mxu0 0
        %321 = vmatpush1.bf16.msra.mxu0 0
        %322 = vmatprep.subr.bf16.mxu0 0
        %323 = vmatpush1.bf16.msra.mxu0 0
        %324 = vmatprep.subr.bf16.mxu0 0
        %325 = vmatpush1.bf16.msra.mxu0 0
        %326 = vmatprep.mubr.bf16.mxu0 0
        %327 = vmatmul.mubr.bf16.gmra.mrb[0].mxu0 %v285
        %v328 = vpop.f32.mrb[0].mxu0
        %v329 = vadd.f32 %v281, %v328
        %v330 = vpop.f32.mrb[0].mxu0
        %v331 = vadd.f32 %v281, %v330
        %v332 = vpop.f32.mrb[0].mxu0
        %v333 = vpop.f32.mrb[0].mxu0
        %334 = vdwg.mxu0
        %v335 = vadd.f32 %v329, %v331
        %336 = vadd.xlane.f32.xlu0 %v335
        %v337 = vpop.xlane.xlu0 %336
        %v338 = vrot.slane %v337, 4
        %v339 = vadd.f32 %v337, %v338
        %v340 = vrot.slane %v339, 2
        %v341 = vadd.f32 %v339, %v340
        %v342 = vrot.slane %v341, 1
        %v343 = vadd.f32 %v341, %v342
        %s344 = vtos %v343
        %v345 = vmul.f32 %v329, %v329
        %v346 = vmul.f32 %v331, %v331
        %v347 = vadd.f32 %v345, %v346
        %348 = vadd.xlane.f32.xlu0 %v347
        %v349 = vpop.xlane.xlu0 %348
        %v350 = vrot.slane %v349, 4
        %v351 = vadd.f32 %v349, %v350
        %v352 = vrot.slane %v351, 2
        %v353 = vadd.f32 %v351, %v352
        %v354 = vrot.slane %v353, 1
        %v355 = vadd.f32 %v353, %v354
        %s356 = vtos %v355
        %v357 = vrcp.pop 2048.0
        %s358 = vtos %v357
        %s359 = smul.f32 %s344, %s358
        %v360 = vrcp.pop 2048.0
        %s361 = vtos %v360
        %s362 = smul.f32 %s356, %s361
        %s363 = smul.f32 %s359, %s359
        %s364 = ssub.f32 %s362, %s363
        %s365 = sadd.f32 %s364, 1e-05
        %v366 = vstv %s365
        %v367 = vrsqrt.pop %v366
        %s368 = vtos %v367
        %v369 = vstv %s368
        %v370 = vmul.f32 %v277, %v369
        %v371 = vstv %s359
        %v372 = vmul.f32 %v371, %v370
        %374 = vrot.lane.b32.xlu0 %v372, 1
        %v375 = vpop.permute.xlu0 %374
        %v377 = vsub.f32 %v277, %v375
        %379 = vset.pattern.permute.xlu0 2
        %380 = vperm.xlu0 %379, %v370
        %v381 = vpop.permute.xlu0 %380
        %v383 = vmul.f32 %v329, %v381
        %v384 = vmul.f32 %v331, %v381
        %386 = vset.pattern.permute.xlu0 3
        %387 = vperm.xlu0 %386, %v377
        %v388 = vpop.permute.xlu0 %387
        %v390 = vadd.f32 %v383, %v388
        %v391 = vadd.f32 %v384, %v388
        %v392 = vadd.f32 %v390, 3.0
        %v393 = vadd.f32 %v391, 3.0
        %v394 = vmax.f32 %v392, 0.0
        %v395 = vmax.f32 %v393, 0.0
        %v396 = vmin.f32 %v394, 6.0
        %v397 = vmin.f32 %v395, 6.0
        %v398 = vmul.f32 %v390, %v396
        %v399 = vmul.f32 %v391, %v397
        %v400 = vmul.f32 %v398, 0.16666667
        %v401 = vmul.f32 %v399, 0.16666667
        %402 = vst [vmem:[%s183] sm:$0xff] %v400
        %403 = vst [vmem:[%s183 + $0x8] sm:$0xff] %v401
        %p404 = scmp.lt.s32.totalorder %s15, 1
        %s405 = scalar_select %p404, %s15, 1
        %s406 = smul.addr %s405, 2
        %s407 = smul.addr %s406, 8
        %s408 = scalar_lea.vmem %s3, %s407
        // Predicated region
        $region37: #{hopper_forward.4} parent=31 // pred_check
          %p409 = pneg %p101
        $region38: #{hopper_forward.4} parent=31 // pred_check_branch
          %411 = sbr.rel (%p409) target = $region40
        $region39: #{hopper_forward.4} parent=31 // pred_region
          _
        $region40: #{hopper_forward.4} parent=31 // pred_fallthru
          _
      $region32: #{hopper_forward.4} parent=5 // pred_fallthru
        _
      %p412 = scmp.le.s32.totalorder 2, %s10
      // Predicated region
      $region41: #{hopper_forward.4} parent=5 // pred_check
        %p413 = pneg %p412
      $region42: #{hopper_forward.4} parent=5 // pred_check_branch
        %415 = sbr.rel (%p413) target = $region44
      $region43: #{hopper_forward.4} parent=5 // pred_region
        %s416 = ssub.s32 %s10, 2
        // Predicated region
        $region45: #{hopper_forward.4} parent=43 // pred_check
          %p417 = pneg %p107
        $region46: #{hopper_forward.4} parent=43 // pred_check_branch
          %419 = sbr.rel (%p417) target = $region48
        $region47: #{hopper_forward.4} parent=43 // pred_region
          %p420 = scmp.lt.s32.totalorder %s16, 1
          %s421 = scalar_select %p420, %s16, 1
          %s422 = smul.addr %s421, 2
          %s423 = smul.addr %s422, 8
          %s424 = scalar_lea.vmem %s3, %s423
        $region48: #{hopper_forward.4} parent=43 // pred_fallthru
          _
      $region44: #{hopper_forward.4} parent=5 // pred_fallthru
        _
    $region6: #{hopper_forward.4} parent=1 // loop_footer
      %s14 = sadd.s32 1, %s10
    $region7: #{hopper_forward.4} parent=1 // loop_footer_branch
      %9 = sbr.rel target = $region3
    $region8: #{hopper_forward.4} parent=1 // loop_exit
      _
    %425 = vsyncpa [#allocation3], 1
    %s426 = scalar_lea.sflag [#allocation3], 1
    %427 = vsyncpa %s426, 1

// kernel: hopper_forward.6
$region0: #{hopper_forward.6}
  #allocation0 [shape = 'u32[]', space=smem, size = 0x4, offset = 0x4, fixed_abs, tag = 'smem constant byte address 0x4 - core index']
  #allocation1 [shape = 'u32[144,128]{1,0:T(1,128)}', space=vmem, size = 0x12000, scoped, tag = 'internal scratch']
  %s0 = inlined_call_operand.vmem [shape: f32[2,4,1024], index: 0, kind: input, shape index: {}]
  %s1 = inlined_call_operand.vmem [shape: f32[8,16], index: 1, kind: input, shape index: {}]
  %s2 = inlined_call_operand.vmem [shape: bf16[8,4], index: 2, kind: input, shape index: {}]
  %s3 = inlined_call_operand.vmem [shape: f32[2,8,1024], index: 3, kind: output, shape index: {}]
  %s4 = sld [smem:[#allocation0]]
  $region45: #{hopper_forward.6} parent=0
    _
  %s6 = ssub.s32 1, %s4
  %s7 = scalar_select 0, %s6, %s4
  loop: start=0, step=1, limit=4
  $region2: #{hopper_forward.6} parent=0 // loop_pre_header
    _
  $region3: #{hopper_forward.6} parent=0 // loop_header
    %s9 = sphi 0, %s13
    %p10 = scmp.ge.s32.totalorder %s9, 4
    %s19 = sphi 0, %s21
    %s22 = sphi 0, %s19
    %s23 = sphi 0, %s22
    %s39 = sphi 0, %s23
    %s43 = sphi 0, %s43
    %s45 = sphi 0, %s43
    %s46 = sphi 0, %s45
    %s60 = sphi 0, %s46
    %s64 = sphi 0, %s64
    %s66 = sphi 0, %s64
    %s67 = sphi 0, %s66
    %s81 = sphi 0, %s67
    %s87 = sphi 0, %s89
    %s90 = sphi 0, %s87
    %s91 = sphi 0, %s90
    %s107 = sphi 0, %s91
  $region4: #{hopper_forward.6} parent=0 // loop_header_branch
    %12 = sbr.rel (%p10) target = $region8
  $region5: #{hopper_forward.6} parent=0 // loop_body
    %s14 = ssub.s32 %s9, 1
    %s15 = ssub.s32 %s9, 2
    %s16 = sadd.s32 %s9, 1
    %s17 = ssub.s32 %s9, %s16
    %p18 = scmp.eq.s32.totalorder %s17, 0
    %s20 = sadd.s32 %s19, 1
    %s21 = scalar_select %p18, %s19, %s20
    %p24 = pneg %p18
    %p25 = scmp.eq.s32.totalorder %s9, 1
    %p26 = por %p24, %p25
    %p27 = scmp.ne.s32.totalorder %s19, %s22
    %p28 = scmp.eq.s32.totalorder %s9, 0
    %p29 = por %p27, %p28
    %p30 = scmp.ne.s32.totalorder %s19, %s22
    %p31 = scmp.eq.s32.totalorder %s14, 1
    %p32 = por %p30, %p31
    %p33 = scmp.ne.s32.totalorder %s22, %s23
    %p34 = scmp.eq.s32.totalorder %s14, 0
    %p35 = por %p33, %p34
    %p36 = scmp.ne.s32.totalorder %s22, %s23
    %p37 = scmp.eq.s32.totalorder %s15, 1
    %p38 = por %p36, %p37
    %p40 = scmp.ne.s32.totalorder %s23, %s39
    %p41 = scmp.eq.s32.totalorder %s15, 0
    %p42 = por %p40, %p41
    %s44 = sadd.s32 %s43, 1
    %p47 = scmp.eq.s32.totalorder %s9, 1
    %p48 = scmp.ne.s32.totalorder %s43, %s45
    %p49 = scmp.eq.s32.totalorder %s9, 0
    %p50 = por %p48, %p49
    %p51 = scmp.ne.s32.totalorder %s43, %s45
    %p52 = scmp.eq.s32.totalorder %s14, 1
    %p53 = por %p51, %p52
    %p54 = scmp.ne.s32.totalorder %s45, %s46
    %p55 = scmp.eq.s32.totalorder %s14, 0
    %p56 = por %p54, %p55
    %p57 = scmp.ne.s32.totalorder %s45, %s46
    %p58 = scmp.eq.s32.totalorder %s15, 1
    %p59 = por %p57, %p58
    %p61 = scmp.ne.s32.totalorder %s46, %s60
    %p62 = scmp.eq.s32.totalorder %s15, 0
    %p63 = por %p61, %p62
    %s65 = sadd.s32 %s64, 1
    %p68 = scmp.eq.s32.totalorder %s9, 1
    %p69 = scmp.ne.s32.totalorder %s64, %s66
    %p70 = scmp.eq.s32.totalorder %s9, 0
    %p71 = por %p69, %p70
    %p72 = scmp.ne.s32.totalorder %s64, %s66
    %p73 = scmp.eq.s32.totalorder %s14, 1
    %p74 = por %p72, %p73
    %p75 = scmp.ne.s32.totalorder %s66, %s67
    %p76 = scmp.eq.s32.totalorder %s14, 0
    %p77 = por %p75, %p76
    %p78 = scmp.ne.s32.totalorder %s66, %s67
    %p79 = scmp.eq.s32.totalorder %s15, 1
    %p80 = por %p78, %p79
    %p82 = scmp.ne.s32.totalorder %s67, %s81
    %p83 = scmp.eq.s32.totalorder %s15, 0
    %p84 = por %p82, %p83
    %s85 = ssub.s32 %s9, %s16
    %p86 = scmp.eq.s32.totalorder %s85, 0
    %s88 = sadd.s32 %s87, 1
    %s89 = scalar_select %p86, %s87, %s88
    %p92 = pneg %p86
    %p93 = scmp.eq.s32.totalorder %s9, 1
    %p94 = por %p92, %p93
    %p95 = scmp.ne.s32.totalorder %s87, %s90
    %p96 = scmp.eq.s32.totalorder %s9, 0
    %p97 = por %p95, %p96
    %p98 = scmp.ne.s32.totalorder %s87, %s90
    %p99 = scmp.eq.s32.totalorder %s14, 1
    %p100 = por %p98, %p99
    %p101 = scmp.ne.s32.totalorder %s90, %s91
    %p102 = scmp.eq.s32.totalorder %s14, 0
    %p103 = por %p101, %p102
    %p104 = scmp.ne.s32.totalorder %s90, %s91
    %p105 = scmp.eq.s32.totalorder %s15, 1
    %p106 = por %p104, %p105
    %p108 = scmp.ne.s32.totalorder %s91, %s107
    %p109 = scmp.eq.s32.totalorder %s15, 0
    %p110 = por %p108, %p109
    %p111 = scmp.le.s32.totalorder 1, %s9
    %p112 = scmp.lt.s32.totalorder %s9, 3
    %p113 = pnand %p111, %p112
    %p114 = pneg %p113
    // Predicated region
    $region9: #{hopper_forward.6} parent=5 // pred_check
      _
    $region10: #{hopper_forward.6} parent=5 // pred_check_branch
      %116 = sbr.rel (%p113) target = $region12
    $region11: #{hopper_forward.6} parent=5 // pred_region
      %s117 = ssub.s32 %s9, 1
      // Predicated region
      $region13: #{hopper_forward.6} parent=11 // pred_check
        %p118 = pneg %p56
      $region14: #{hopper_forward.6} parent=11 // pred_check_branch
        %120 = sbr.rel (%p118) target = $region16
      $region15: #{hopper_forward.6} parent=11 // pred_region
        _
      $region16: #{hopper_forward.6} parent=11 // pred_fallthru
        _
      // Predicated region
      $region17: #{hopper_forward.6} parent=11 // pred_check
        %p121 = pneg %p77
      $region18: #{hopper_forward.6} parent=11 // pred_check_branch
        %123 = sbr.rel (%p121) target = $region20
      $region19: #{hopper_forward.6} parent=11 // pred_region
        _
      $region20: #{hopper_forward.6} parent=11 // pred_fallthru
        _
    $region12: #{hopper_forward.6} parent=5 // pred_fallthru
      _
    %p124 = scmp.lt.s32.totalorder %s9, 2
    // Predicated region
    $region21: #{hopper_forward.6} parent=5 // pred_check
      %p125 = pneg %p124
    $region22: #{hopper_forward.6} parent=5 // pred_check_branch
      %127 = sbr.rel (%p125) target = $region24
    $region23: #{hopper_forward.6} parent=5 // pred_region
      // Predicated region
      $region25: #{hopper_forward.6} parent=23 // pred_check
        %p128 = pneg %p29
      $region26: #{hopper_forward.6} parent=23 // pred_check_branch
        %130 = sbr.rel (%p128) target = $region28
      $region27: #{hopper_forward.6} parent=23 // pred_region
        %p131 = scmp.lt.s32.totalorder %s9, 1
        %s132 = scalar_select %p131, %s9, 1
        %s133 = smul.addr %s132, 8
        %s134 = smul.addr %s133, 4
        %s135 = scalar_lea.vmem %s0, %s134
      $region28: #{hopper_forward.6} parent=23 // pred_fallthru
        _
    $region24: #{hopper_forward.6} parent=5 // pred_fallthru
      _
    %p136 = scmp.le.s32.totalorder 1, %s9
    %p137 = scmp.lt.s32.totalorder %s9, 3
    %p138 = pnand %p136, %p137
    %p139 = pneg %p138
    // Predicated region
    $region29: #{hopper_forward.6} parent=5 // pred_check
      _
    $region30: #{hopper_forward.6} parent=5 // pred_check_branch
      %141 = sbr.rel (%p138) target = $region32
    $region31: #{hopper_forward.6} parent=5 // pred_region
      %s142 = ssub.s32 %s9, 1
      %p143 = scmp.lt.s32.totalorder %s14, 1
      %s144 = scalar_select %p143, %s14, 1
      %s145 = smul.addr %s144, 8
      %s146 = smul.addr %s145, 4
      %s147 = scalar_lea.vmem %s0, %s146
      %p148 = pneg %p35
      %p149 = pneg %p32
      %p150 = pneg %p56
      %p151 = pneg %p53
      %p152 = pneg %p77
      %p153 = pneg %p74
      %p154 = pneg %p103
      %p155 = pneg %p100
      %p156 = scmp.lt.s32.totalorder %s14, 1
      %s157 = scalar_select %p156, %s14, 1
      %s158 = smul.addr %s157, 8
      %s159 = smul.addr %s158, 8
      %s160 = scalar_lea.vmem %s3, %s159
      %p161 = scmp.lt.s32.totalorder %s14, 1
      %s162 = scalar_select %p161, %s14, 1
      %s163 = smul.addr %s162, 8
      %s164 = smul.addr %s163, 4
      %s165 = scalar_lea.vmem %s0, %s164
      %p166 = scmp.lt.s32.totalorder %s14, 1
      %s167 = scalar_select %p166, %s14, 1
      %s168 = smul.addr %s167, 8
      %s169 = smul.addr %s168, 8
      %s170 = scalar_lea.vmem %s3, %s169
      %v172 = vld [vmem:[%s165] sm:$0xff]
      %v173 = vld [vmem:[%s165 + $0x8] sm:$0xff]
      %v174 = vld [vmem:[%s165 + $0x10] sm:$0xff]
      %v175 = vld [vmem:[%s165 + $0x18] sm:$0xff]
      %v176 = vld [vmem:[%s1] sm:$0xf]
      %v181 = vcombine.high %v172, %v172
      %v182 = vcombine.high %v173, %v173
      %v183 = vcombine.high %v174, %v174
      %v184 = vcombine.high %v175, %v175
      %vm189 = vcmask 1043456
      %v190 = vsel %vm189, %v172, 0.0
      %v191 = vsel %vm189, %v181, 0.0
      %v192 = vadd.f32 %v190, %v191
      %v193 = vsel %vm189, %v173, 0.0
      %v194 = vadd.f32 %v192, %v193
      %v195 = vsel %vm189, %v182, 0.0
      %v196 = vadd.f32 %v194, %v195
      %v197 = vsel %vm189, %v174, 0.0
      %v198 = vadd.f32 %v196, %v197
      %v199 = vsel %vm189, %v183, 0.0
      %v200 = vadd.f32 %v198, %v199
      %v201 = vsel %vm189, %v175, 0.0
      %v202 = vadd.f32 %v200, %v201
      %v203 = vsel %vm189, %v184, 0.0
      %v204 = vadd.f32 %v202, %v203
      %205 = vadd.xlane.f32.xlu0 %v204
      %v206 = vpop.xlane.xlu0 %205
      %v207 = vrot.slane %v206, 4
      %v208 = vadd.f32 %v206, %v207
      %v209 = vrot.slane %v208, 2
      %v210 = vadd.f32 %v208, %v209
      %v211 = vrot.slane %v210, 1
      %v212 = vadd.f32 %v210, %v211
      %s213 = vtos %v212
      %v214 = vmul.f32 %v172, %v172
      %v215 = vmul.f32 %v173, %v173
      %v216 = vmul.f32 %v174, %v174
      %v217 = vmul.f32 %v175, %v175
      %v222 = vcombine.high %v214, %v214
      %v223 = vcombine.high %v215, %v215
      %v224 = vcombine.high %v216, %v216
      %v225 = vcombine.high %v217, %v217
      %v230 = vsel %vm189, %v214, 0.0
      %v231 = vsel %vm189, %v222, 0.0
      %v232 = vadd.f32 %v230, %v231
      %v233 = vsel %vm189, %v215, 0.0
      %v234 = vadd.f32 %v232, %v233
      %v235 = vsel %vm189, %v223, 0.0
      %v236 = vadd.f32 %v234, %v235
      %v237 = vsel %vm189, %v216, 0.0
      %v238 = vadd.f32 %v236, %v237
      %v239 = vsel %vm189, %v224, 0.0
      %v240 = vadd.f32 %v238, %v239
      %v241 = vsel %vm189, %v217, 0.0
      %v242 = vadd.f32 %v240, %v241
      %v243 = vsel %vm189, %v225, 0.0
      %v244 = vadd.f32 %v242, %v243
      %245 = vadd.xlane.f32.xlu0 %v244
      %v246 = vpop.xlane.xlu0 %245
      %v247 = vrot.slane %v246, 4
      %v248 = vadd.f32 %v246, %v247
      %v249 = vrot.slane %v248, 2
      %v250 = vadd.f32 %v248, %v249
      %v251 = vrot.slane %v250, 1
      %v252 = vadd.f32 %v250, %v251
      %s253 = vtos %v252
      %v254 = vrcp.pop 4096.0
      %s255 = vtos %v254
      %s256 = smul.f32 %s213, %s255
      %v257 = vrcp.pop 4096.0
      %s258 = vtos %v257
      %s259 = smul.f32 %s253, %s258
      %s260 = smul.f32 %s256, %s256
      %s261 = ssub.f32 %s259, %s260
      %s262 = sadd.f32 %s261, 1e-05
      %v263 = vstv %s262
      %v264 = vrsqrt.pop %v263
      %s265 = vtos %v264
      %v266 = vstv %s265
      %v267 = vmul.f32 %v176, %v266
      %v268 = vstv %s256
      %v269 = vmul.f32 %v268, %v267
      %271 = vrot.lane.b32.xlu0 %v269, 1
      %v272 = vpop.permute.xlu0 %271
      %v274 = vsub.f32 %v176, %v272
      %276 = vset.pattern.permute.xlu0 0
      %277 = vperm.xlu0 %276, %v267
      %v278 = vpop.permute.xlu0 %277
      %v280 = vunpack.c.l.s4 839922192
      %v281 = vunpack.c.0.s8 %v280
      %v282 = vlaneseq
      %v283 = vshrl.u32 %v282, 7
      %v284 = vsub.s32 %v281, %v283
      %v285 = vrot.slane %v278, %v284
      %v287 = vmul.f32 %v172, %v285
      %v288 = vmul.f32 %v173, %v285
      %v289 = vmul.f32 %v174, %v285
      %v290 = vmul.f32 %v175, %v285
      %292 = vset.pattern.permute.xlu0 1
      %293 = vperm.xlu0 %292, %v274
      %v294 = vpop.permute.xlu0 %293
      %v296 = vunpack.c.l.s4 839922192
      %v297 = vunpack.c.0.s8 %v296
      %v298 = vlaneseq
      %v299 = vshrl.u32 %v298, 7
      %v300 = vsub.s32 %v297, %v299
      %v301 = vrot.slane %v294, %v300
      %v303 = vadd.f32 %v287, %v301
      %v304 = vadd.f32 %v288, %v301
      %v305 = vadd.f32 %v289, %v301
      %v306 = vadd.f32 %v290, %v301
      %v307 = vadd.f32 %v303, 3.0
      %v308 = vadd.f32 %v304, 3.0
      %v309 = vadd.f32 %v305, 3.0
      %v310 = vadd.f32 %v306, 3.0
      %v311 = vmax.f32 %v307, 0.0
      %v312 = vmax.f32 %v308, 0.0
      %v313 = vmax.f32 %v309, 0.0
      %v314 = vmax.f32 %v310, 0.0
      %v315 = vmin.f32 %v311, 6.0
      %v316 = vmin.f32 %v312, 6.0
      %v317 = vmin.f32 %v313, 6.0
      %v318 = vmin.f32 %v314, 6.0
      %v319 = vmul.f32 %v303, %v315
      %v320 = vmul.f32 %v304, %v316
      %v321 = vmul.f32 %v305, %v317
      %v322 = vmul.f32 %v306, %v318
      %v323 = vmul.f32 %v319, 0.16666667
      %v324 = vmul.f32 %v320, 0.16666667
      %v325 = vmul.f32 %v321, 0.16666667
      %v326 = vmul.f32 %v322, 0.16666667
      %v327 = vld [vmem:[%s2] sm:$0xf]
      %v332 = vcombine.high %v323, %v323
      %v333 = vcombine.high %v324, %v324
      %v334 = vcombine.high %v325, %v325
      %v335 = vcombine.high %v326, %v326
      %v340 = vpack.c.bf16 %v323, %v323
      %v341 = vpack.c.bf16 %v332, %v332
      %v342 = vpack.c.bf16 %v324, %v324
      %v343 = vpack.c.bf16 %v333, %v333
      %v344 = vpack.c.bf16 %v325, %v325
      %v345 = vpack.c.bf16 %v334, %v334
      %v346 = vpack.c.bf16 %v326, %v326
      %v347 = vpack.c.bf16 %v335, %v335
      %v348 = vld [vmem:[%s1] sm:$0xff]
      %350 = vset.pattern.permute.xlu0 8
      %351 = vperm.xlu0 %350, %v348
      %v352 = vpop.permute.xlu0 %351
      %vm354 = vcmask 31744
      %v356 = vsel %vm354, %v327, 0
      %vm358 = vcmask 1041408
      %v360 = vsel %vm358, %v340, 0
      %v363 = vsel %vm358, %v341, 0
      %v366 = vsel %vm358, %v342, 0
      %v369 = vsel %vm358, %v343, 0
      %v372 = vsel %vm358, %v344, 0
      %v375 = vsel %vm358, %v345, 0
      %v378 = vsel %vm358, %v346, 0
      %v381 = vsel %vm358, %v347, 0
      %383 = vmatprep.subr.bf16.mxu0 %v363
      %384 = vmatpush1.bf16.msra.mxu0 %v360
      %385 = vmatprep.subr.bf16.mxu0 0
      %386 = vmatpush1.bf16.msra.mxu0 0
      %387 = vmatprep.subr.bf16.mxu0 0
      %388 = vmatpush1.bf16.msra.mxu0 0
      %389 = vmatprep.subr.bf16.mxu0 0
      %390 = vmatpush1.bf16.msra.mxu0 0
      %391 = vmatprep.subr.bf16.mxu0 0
      %392 = vmatpush1.bf16.msra.mxu0 0
      %393 = vmatprep.subr.bf16.mxu0 0
      %394 = vmatpush1.bf16.msra.mxu0 0
      %395 = vmatprep.subr.bf16.mxu0 0
      %396 = vmatpush1.bf16.msra.mxu0 0
      %397 = vmatprep.subr.bf16.mxu0 0
      %398 = vmatpush1.bf16.msra.mxu0 0
      %399 = vmatprep.subr.bf16.mxu0 0
      %400 = vmatpush1.bf16.msra.mxu0 0
      %401 = vmatprep.subr.bf16.mxu0 0
      %402 = vmatpush1.bf16.msra.mxu0 0
      %403 = vmatprep.subr.bf16.mxu0 0
      %404 = vmatpush1.bf16.msra.mxu0 0
      %405 = vmatprep.subr.bf16.mxu0 0
      %406 = vmatpush1.bf16.msra.mxu0 0
      %407 = vmatprep.subr.bf16.mxu0 0
      %408 = vmatpush1.bf16.msra.mxu0 0
      %409 = vmatprep.subr.bf16.mxu0 0
      %410 = vmatpush1.bf16.msra.mxu0 0
      %411 = vmatprep.subr.bf16.mxu0 0
      %412 = vmatpush1.bf16.msra.mxu0 0
      %413 = vmatprep.subr.bf16.mxu0 0
      %414 = vmatpush1.bf16.msra.mxu0 0
      %415 = vmatprep.mubr.bf16.mxu0 0
      %416 = vmatmul.mubr.bf16.gmra.mrb[0].mxu0 %v356
      %v417 = vpop.f32.mrb[0].mxu0
      %v418 = vadd.f32 %v352, %v417
      %v419 = vpop.f32.mrb[0].mxu0
      %v420 = vadd.f32 %v352, %v419
      %v421 = vpop.f32.mrb[0].mxu0
      %v422 = vpop.f32.mrb[0].mxu0
      %423 = vdwg.mxu0
      %424 = vmatprep.subr.bf16.mxu0 %v369
      %425 = vmatpush1.bf16.msra.mxu0 %v366
      %426 = vmatprep.subr.bf16.mxu0 0
      %427 = vmatpush1.bf16.msra.mxu0 0
      %428 = vmatprep.subr.bf16.mxu0 0
      %429 = vmatpush1.bf16.msra.mxu0 0
      %430 = vmatprep.subr.bf16.mxu0 0
      %431 = vmatpush1.bf16.msra.mxu0 0
      %432 = vmatprep.subr.bf16.mxu0 0
      %433 = vmatpush1.bf16.msra.mxu0 0
      %434 = vmatprep.subr.bf16.mxu0 0
      %435 = vmatpush1.bf16.msra.mxu0 0
      %436 = vmatprep.subr.bf16.mxu0 0
      %437 = vmatpush1.bf16.msra.mxu0 0
      %438 = vmatprep.subr.bf16.mxu0 0
      %439 = vmatpush1.bf16.msra.mxu0 0
      %440 = vmatprep.subr.bf16.mxu0 0
      %441 = vmatpush1.bf16.msra.mxu0 0
      %442 = vmatprep.subr.bf16.mxu0 0
      %443 = vmatpush1.bf16.msra.mxu0 0
      %444 = vmatprep.subr.bf16.mxu0 0
      %445 = vmatpush1.bf16.msra.mxu0 0
      %446 = vmatprep.subr.bf16.mxu0 0
      %447 = vmatpush1.bf16.msra.mxu0 0
      %448 = vmatprep.subr.bf16.mxu0 0
      %449 = vmatpush1.bf16.msra.mxu0 0
      %450 = vmatprep.subr.bf16.mxu0 0
      %451 = vmatpush1.bf16.msra.mxu0 0
      %452 = vmatprep.subr.bf16.mxu0 0
      %453 = vmatpush1.bf16.msra.mxu0 0
      %454 = vmatprep.subr.bf16.mxu0 0
      %455 = vmatpush1.bf16.msra.mxu0 0
      %456 = vmatprep.mubr.bf16.mxu0 0
      %457 = vmatmul.mubr.bf16.gmra.mrb[0].mxu0 %v356
      %v458 = vpop.f32.mrb[0].mxu0
      %v459 = vadd.f32 %v352, %v458
      %v460 = vpop.f32.mrb[0].mxu0
      %v461 = vadd.f32 %v352, %v460
      %v462 = vpop.f32.mrb[0].mxu0
      %v463 = vpop.f32.mrb[0].mxu0
      %464 = vdwg.mxu0
      %465 = vmatprep.subr.bf16.mxu0 %v375
      %466 = vmatpush1.bf16.msra.mxu0 %v372
      %467 = vmatprep.subr.bf16.mxu0 0
      %468 = vmatpush1.bf16.msra.mxu0 0
      %469 = vmatprep.subr.bf16.mxu0 0
      %470 = vmatpush1.bf16.msra.mxu0 0
      %471 = vmatprep.subr.bf16.mxu0 0
      %472 = vmatpush1.bf16.msra.mxu0 0
      %473 = vmatprep.subr.bf16.mxu0 0
      %474 = vmatpush1.bf16.msra.mxu0 0
      %475 = vmatprep.subr.bf16.mxu0 0
      %476 = vmatpush1.bf16.msra.mxu0 0
      %477 = vmatprep.subr.bf16.mxu0 0
      %478 = vmatpush1.bf16.msra.mxu0 0
      %479 = vmatprep.subr.bf16.mxu0 0
      %480 = vmatpush1.bf16.msra.mxu0 0
      %481 = vmatprep.subr.bf16.mxu0 0
      %482 = vmatpush1.bf16.msra.mxu0 0
      %483 = vmatprep.subr.bf16.mxu0 0
      %484 = vmatpush1.bf16.msra.mxu0 0
      %485 = vmatprep.subr.bf16.mxu0 0
      %486 = vmatpush1.bf16.msra.mxu0 0
      %487 = vmatprep.subr.bf16.mxu0 0
      %488 = vmatpush1.bf16.msra.mxu0 0
      %489 = vmatprep.subr.bf16.mxu0 0
      %490 = vmatpush1.bf16.msra.mxu0 0
      %491 = vmatprep.subr.bf16.mxu0 0
      %492 = vmatpush1.bf16.msra.mxu0 0
      %493 = vmatprep.subr.bf16.mxu0 0
      %494 = vmatpush1.bf16.msra.mxu0 0
      %495 = vmatprep.subr.bf16.mxu0 0
      %496 = vmatpush1.bf16.msra.mxu0 0
      %497 = vmatprep.mubr.bf16.mxu0 0
      %498 = vmatmul.mubr.bf16.gmra.mrb[0].mxu0 %v356
      %v499 = vpop.f32.mrb[0].mxu0
      %v500 = vadd.f32 %v352, %v499
      %v501 = vpop.f32.mrb[0].mxu0
      %v502 = vadd.f32 %v352, %v501
      %v503 = vpop.f32.mrb[0].mxu0
      %v504 = vpop.f32.mrb[0].mxu0
      %505 = vdwg.mxu0
      %506 = vmatprep.subr.bf16.mxu0 %v381
      %507 = vmatpush1.bf16.msra.mxu0 %v378
      %508 = vmatprep.subr.bf16.mxu0 0
      %509 = vmatpush1.bf16.msra.mxu0 0
      %510 = vmatprep.subr.bf16.mxu0 0
      %511 = vmatpush1.bf16.msra.mxu0 0
      %512 = vmatprep.subr.bf16.mxu0 0
      %513 = vmatpush1.bf16.msra.mxu0 0
      %514 = vmatprep.subr.bf16.mxu0 0
      %515 = vmatpush1.bf16.msra.mxu0 0
      %516 = vmatprep.subr.bf16.mxu0 0
      %517 = vmatpush1.bf16.msra.mxu0 0
      %518 = vmatprep.subr.bf16.mxu0 0
      %519 = vmatpush1.bf16.msra.mxu0 0
      %520 = vmatprep.subr.bf16.mxu0 0
      %521 = vmatpush1.bf16.msra.mxu0 0
      %522 = vmatprep.subr.bf16.mxu0 0
      %523 = vmatpush1.bf16.msra.mxu0 0
      %524 = vmatprep.subr.bf16.mxu0 0
      %525 = vmatpush1.bf16.msra.mxu0 0
      %526 = vmatprep.subr.bf16.mxu0 0
      %527 = vmatpush1.bf16.msra.mxu0 0
      %528 = vmatprep.subr.bf16.mxu0 0
      %529 = vmatpush1.bf16.msra.mxu0 0
      %530 = vmatprep.subr.bf16.mxu0 0
      %531 = vmatpush1.bf16.msra.mxu0 0
      %532 = vmatprep.subr.bf16.mxu0 0
      %533 = vmatpush1.bf16.msra.mxu0 0
      %534 = vmatprep.subr.bf16.mxu0 0
      %535 = vmatpush1.bf16.msra.mxu0 0
      %536 = vmatprep.subr.bf16.mxu0 0
      %537 = vmatpush1.bf16.msra.mxu0 0
      %538 = vmatprep.mubr.bf16.mxu0 0
      %539 = vmatmul.mubr.bf16.gmra.mrb[0].mxu0 %v356
      %v540 = vpop.f32.mrb[0].mxu0
      %v541 = vadd.f32 %v352, %v540
      %v542 = vpop.f32.mrb[0].mxu0
      %v543 = vadd.f32 %v352, %v542
      %v544 = vpop.f32.mrb[0].mxu0
      %v545 = vpop.f32.mrb[0].mxu0
      %546 = vdwg.mxu0
      %v547 = vadd.f32 %v418, %v420
      %v548 = vadd.f32 %v547, %v459
      %v549 = vadd.f32 %v548, %v461
      %v550 = vadd.f32 %v549, %v500
      %v551 = vadd.f32 %v550, %v502
      %v552 = vadd.f32 %v551, %v541
      %v553 = vadd.f32 %v552, %v543
      %554 = vadd.xlane.f32.xlu0 %v553
      %v555 = vpop.xlane.xlu0 %554
      %v556 = vrot.slane %v555, 4
      %v557 = vadd.f32 %v555, %v556
      %v558 = vrot.slane %v557, 2
      %v559 = vadd.f32 %v557, %v558
      %v560 = vrot.slane %v559, 1
      %v561 = vadd.f32 %v559, %v560
      %s562 = vtos %v561
      %v563 = vmul.f32 %v418, %v418
      %v564 = vmul.f32 %v420, %v420
      %v565 = vmul.f32 %v459, %v459
      %v566 = vmul.f32 %v461, %v461
      %v567 = vmul.f32 %v500, %v500
      %v568 = vmul.f32 %v502, %v502
      %v569 = vmul.f32 %v541, %v541
      %v570 = vmul.f32 %v543, %v543
      %v571 = vadd.f32 %v563, %v564
      %v572 = vadd.f32 %v571, %v565
      %v573 = vadd.f32 %v572, %v566
      %v574 = vadd.f32 %v573, %v567
      %v575 = vadd.f32 %v574, %v568
      %v576 = vadd.f32 %v575, %v569
      %v577 = vadd.f32 %v576, %v570
      %578 = vadd.xlane.f32.xlu0 %v577
      %v579 = vpop.xlane.xlu0 %578
      %v580 = vrot.slane %v579, 4
      %v581 = vadd.f32 %v579, %v580
      %v582 = vrot.slane %v581, 2
      %v583 = vadd.f32 %v581, %v582
      %v584 = vrot.slane %v583, 1
      %v585 = vadd.f32 %v583, %v584
      %s586 = vtos %v585
      %v587 = vrcp.pop 8192.0
      %s588 = vtos %v587
      %s589 = smul.f32 %s562, %s588
      %v590 = vrcp.pop 8192.0
      %s591 = vtos %v590
      %s592 = smul.f32 %s586, %s591
      %s593 = smul.f32 %s589, %s589
      %s594 = ssub.f32 %s592, %s593
      %s595 = sadd.f32 %s594, 1e-05
      %v596 = vstv %s595
      %v597 = vrsqrt.pop %v596
      %s598 = vtos %v597
      %v599 = vstv %s598
      %v600 = vmul.f32 %v348, %v599
      %v601 = vstv %s589
      %v602 = vmul.f32 %v601, %v600
      %604 = vrot.lane.b32.xlu0 %v602, 1
      %v605 = vpop.permute.xlu0 %604
      %v607 = vsub.f32 %v348, %v605
      %609 = vset.pattern.permute.xlu0 2
      %610 = vperm.xlu0 %609, %v600
      %v611 = vpop.permute.xlu0 %610
      %v613 = vmul.f32 %v418, %v611
      %v614 = vmul.f32 %v420, %v611
      %v615 = vmul.f32 %v459, %v611
      %v616 = vmul.f32 %v461, %v611
      %v617 = vmul.f32 %v500, %v611
      %v618 = vmul.f32 %v502, %v611
      %v619 = vmul.f32 %v541, %v611
      %v620 = vmul.f32 %v543, %v611
      %622 = vset.pattern.permute.xlu0 3
      %623 = vperm.xlu0 %622, %v607
      %v624 = vpop.permute.xlu0 %623
      %v626 = vadd.f32 %v613, %v624
      %v627 = vadd.f32 %v614, %v624
      %v628 = vadd.f32 %v615, %v624
      %v629 = vadd.f32 %v616, %v624
      %v630 = vadd.f32 %v617, %v624
      %v631 = vadd.f32 %v618, %v624
      %v632 = vadd.f32 %v619, %v624
      %v633 = vadd.f32 %v620, %v624
      %v634 = vadd.f32 %v626, 3.0
      %v635 = vadd.f32 %v627, 3.0
      %v636 = vadd.f32 %v628, 3.0
      %v637 = vadd.f32 %v629, 3.0
      %v638 = vadd.f32 %v630, 3.0
      %v639 = vadd.f32 %v631, 3.0
      %v640 = vadd.f32 %v632, 3.0
      %v641 = vadd.f32 %v633, 3.0
      %v642 = vmax.f32 %v634, 0.0
      %v643 = vmax.f32 %v635, 0.0
      %v644 = vmax.f32 %v636, 0.0
      %v645 = vmax.f32 %v637, 0.0
      %v646 = vmax.f32 %v638, 0.0
      %v647 = vmax.f32 %v639, 0.0
      %v648 = vmax.f32 %v640, 0.0
      %v649 = vmax.f32 %v641, 0.0
      %v650 = vmin.f32 %v642, 6.0
      %v651 = vmin.f32 %v643, 6.0
      %v652 = vmin.f32 %v644, 6.0
      %v653 = vmin.f32 %v645, 6.0
      %v654 = vmin.f32 %v646, 6.0
      %v655 = vmin.f32 %v647, 6.0
      %v656 = vmin.f32 %v648, 6.0
      %v657 = vmin.f32 %v649, 6.0
      %v658 = vmul.f32 %v626, %v650
      %v659 = vmul.f32 %v627, %v651
      %v660 = vmul.f32 %v628, %v652
      %v661 = vmul.f32 %v629, %v653
      %v662 = vmul.f32 %v630, %v654
      %v663 = vmul.f32 %v631, %v655
      %v664 = vmul.f32 %v632, %v656
      %v665 = vmul.f32 %v633, %v657
      %v666 = vmul.f32 %v658, 0.16666667
      %v667 = vmul.f32 %v659, 0.16666667
      %v668 = vmul.f32 %v660, 0.16666667
      %v669 = vmul.f32 %v661, 0.16666667
      %v670 = vmul.f32 %v662, 0.16666667
      %v671 = vmul.f32 %v663, 0.16666667
      %v672 = vmul.f32 %v664, 0.16666667
      %v673 = vmul.f32 %v665, 0.16666667
      %674 = vst [vmem:[%s170] sm:$0xff] %v666
      %675 = vst [vmem:[%s170 + $0x8] sm:$0xff] %v667
      %676 = vst [vmem:[%s170 + $0x10] sm:$0xff] %v668
      %677 = vst [vmem:[%s170 + $0x18] sm:$0xff] %v669
      %678 = vst [vmem:[%s170 + $0x20] sm:$0xff] %v670
      %679 = vst [vmem:[%s170 + $0x28] sm:$0xff] %v671
      %680 = vst [vmem:[%s170 + $0x30] sm:$0xff] %v672
      %681 = vst [vmem:[%s170 + $0x38] sm:$0xff] %v673
      %p682 = scmp.lt.s32.totalorder %s14, 1
      %s683 = scalar_select %p682, %s14, 1
      %s684 = smul.addr %s683, 8
      %s685 = smul.addr %s684, 8
      %s686 = scalar_lea.vmem %s3, %s685
      // Predicated region
      $region33: #{hopper_forward.6} parent=31 // pred_check
        %p687 = pneg %p100
      $region34: #{hopper_forward.6} parent=31 // pred_check_branch
        %689 = sbr.rel (%p687) target = $region36
      $region35: #{hopper_forward.6} parent=31 // pred_region
        _
      $region36: #{hopper_forward.6} parent=31 // pred_fallthru
        _
    $region32: #{hopper_forward.6} parent=5 // pred_fallthru
      _
    %p690 = scmp.le.s32.totalorder 2, %s9
    // Predicated region
    $region37: #{hopper_forward.6} parent=5 // pred_check
      %p691 = pneg %p690
    $region38: #{hopper_forward.6} parent=5 // pred_check_branch
      %693 = sbr.rel (%p691) target = $region40
    $region39: #{hopper_forward.6} parent=5 // pred_region
      %s694 = ssub.s32 %s9, 2
      // Predicated region
      $region41: #{hopper_forward.6} parent=39 // pred_check
        %p695 = pneg %p106
      $region42: #{hopper_forward.6} parent=39 // pred_check_branch
        %697 = sbr.rel (%p695) target = $region44
      $region43: #{hopper_forward.6} parent=39 // pred_region
        %p698 = scmp.lt.s32.totalorder %s15, 1
        %s699 = scalar_select %p698, %s15, 1
        %s700 = smul.addr %s699, 8
        %s701 = smul.addr %s700, 8
        %s702 = scalar_lea.vmem %s3, %s701
      $region44: #{hopper_forward.6} parent=39 // pred_fallthru
        _
    $region40: #{hopper_forward.6} parent=5 // pred_fallthru
      _
  $region6: #{hopper_forward.6} parent=0 // loop_footer
    %s13 = sadd.s32 1, %s9
  $region7: #{hopper_forward.6} parent=0 // loop_footer_branch
    %8 = sbr.rel target = $region3
  $region8: #{hopper_forward.6} parent=0 // loop_exit
    _

// kernel: hopper_forward.5
$region0: #{hopper_forward.5}
  #allocation0 [shape = 'u32[]', space=smem, size = 0x4, offset = 0x4, fixed_abs, tag = 'smem constant byte address 0x4 - core index']
  #allocation1 [shape = 'u32[144,128]{1,0:T(1,128)}', space=vmem, size = 0x12000, scoped, tag = 'internal scratch']
  %s0 = inlined_call_operand.vmem [shape: f32[2,8,1024], index: 0, kind: input, shape index: {}]
  %s1 = inlined_call_operand.vmem [shape: f32[2,4,1024], index: 1, kind: input, shape index: {}]
  %s2 = inlined_call_operand.vmem [shape: bf16[2,1024], index: 2, kind: input, shape index: {}]
  %s3 = inlined_call_operand.vmem [shape: f32[8,16], index: 3, kind: input, shape index: {}]
  %s4 = inlined_call_operand.vmem [shape: bf16[8,72], index: 4, kind: input, shape index: {}]
  %s5 = inlined_call_operand.vmem [shape: bf16[8,72], index: 5, kind: input, shape index: {}]
  %s6 = inlined_call_operand.vmem [shape: bf16[4,8], index: 6, kind: input, shape index: {}]
  %s7 = inlined_call_operand.vmem [shape: f32[2,4,1024], index: 7, kind: output, shape index: {}]
  %s8 = sld [smem:[#allocation0]]
  $region61: #{hopper_forward.5} parent=0
    _
  %s10 = ssub.s32 1, %s8
  %s11 = scalar_select 0, %s10, %s8
  loop: start=0, step=1, limit=4
  $region2: #{hopper_forward.5} parent=0 // loop_pre_header
    _
  $region3: #{hopper_forward.5} parent=0 // loop_header
    %s13 = sphi 0, %s17
    %p14 = scmp.ge.s32.totalorder %s13, 4
    %s23 = sphi 0, %s25
    %s26 = sphi 0, %s23
    %s27 = sphi 0, %s26
    %s43 = sphi 0, %s27
    %s49 = sphi 0, %s51
    %s52 = sphi 0, %s49
    %s53 = sphi 0, %s52
    %s69 = sphi 0, %s53
    %s73 = sphi 0, %s73
    %s75 = sphi 0, %s73
    %s76 = sphi 0, %s75
    %s90 = sphi 0, %s76
    %s94 = sphi 0, %s94
    %s96 = sphi 0, %s94
    %s97 = sphi 0, %s96
    %s111 = sphi 0, %s97
    %s115 = sphi 0, %s115
    %s117 = sphi 0, %s115
    %s118 = sphi 0, %s117
    %s132 = sphi 0, %s118
    %s136 = sphi 0, %s136
    %s138 = sphi 0, %s136
    %s139 = sphi 0, %s138
    %s153 = sphi 0, %s139
    %s157 = sphi 0, %s157
    %s159 = sphi 0, %s157
    %s160 = sphi 0, %s159
    %s174 = sphi 0, %s160
    %s180 = sphi 0, %s182
    %s183 = sphi 0, %s180
    %s184 = sphi 0, %s183
    %s200 = sphi 0, %s184
  $region4: #{hopper_forward.5} parent=0 // loop_header_branch
    %16 = sbr.rel (%p14) target = $region8
  $region5: #{hopper_forward.5} parent=0 // loop_body
    %s18 = ssub.s32 %s13, 1
    %s19 = ssub.s32 %s13, 2
    %s20 = sadd.s32 %s13, 1
    %s21 = ssub.s32 %s13, %s20
    %p22 = scmp.eq.s32.totalorder %s21, 0
    %s24 = sadd.s32 %s23, 1
    %s25 = scalar_select %p22, %s23, %s24
    %p28 = pneg %p22
    %p29 = scmp.eq.s32.totalorder %s13, 1
    %p30 = por %p28, %p29
    %p31 = scmp.ne.s32.totalorder %s23, %s26
    %p32 = scmp.eq.s32.totalorder %s13, 0
    %p33 = por %p31, %p32
    %p34 = scmp.ne.s32.totalorder %s23, %s26
    %p35 = scmp.eq.s32.totalorder %s18, 1
    %p36 = por %p34, %p35
    %p37 = scmp.ne.s32.totalorder %s26, %s27
    %p38 = scmp.eq.s32.totalorder %s18, 0
    %p39 = por %p37, %p38
    %p40 = scmp.ne.s32.totalorder %s26, %s27
    %p41 = scmp.eq.s32.totalorder %s19, 1
    %p42 = por %p40, %p41
    %p44 = scmp.ne.s32.totalorder %s27, %s43
    %p45 = scmp.eq.s32.totalorder %s19, 0
    %p46 = por %p44, %p45
    %s47 = ssub.s32 %s13, %s20
    %p48 = scmp.eq.s32.totalorder %s47, 0
    %s50 = sadd.s32 %s49, 1
    %s51 = scalar_select %p48, %s49, %s50
    %p54 = pneg %p48
    %p55 = scmp.eq.s32.totalorder %s13, 1
    %p56 = por %p54, %p55
    %p57 = scmp.ne.s32.totalorder %s49, %s52
    %p58 = scmp.eq.s32.totalorder %s13, 0
    %p59 = por %p57, %p58
    %p60 = scmp.ne.s32.totalorder %s49, %s52
    %p61 = scmp.eq.s32.totalorder %s18, 1
    %p62 = por %p60, %p61
    %p63 = scmp.ne.s32.totalorder %s52, %s53
    %p64 = scmp.eq.s32.totalorder %s18, 0
    %p65 = por %p63, %p64
    %p66 = scmp.ne.s32.totalorder %s52, %s53
    %p67 = scmp.eq.s32.totalorder %s19, 1
    %p68 = por %p66, %p67
    %p70 = scmp.ne.s32.totalorder %s53, %s69
    %p71 = scmp.eq.s32.totalorder %s19, 0
    %p72 = por %p70, %p71
    %s74 = sadd.s32 %s73, 1
    %p77 = scmp.eq.s32.totalorder %s13, 1
    %p78 = scmp.ne.s32.totalorder %s73, %s75
    %p79 = scmp.eq.s32.totalorder %s13, 0
    %p80 = por %p78, %p79
    %p81 = scmp.ne.s32.totalorder %s73, %s75
    %p82 = scmp.eq.s32.totalorder %s18, 1
    %p83 = por %p81, %p82
    %p84 = scmp.ne.s32.totalorder %s75, %s76
    %p85 = scmp.eq.s32.totalorder %s18, 0
    %p86 = por %p84, %p85
    %p87 = scmp.ne.s32.totalorder %s75, %s76
    %p88 = scmp.eq.s32.totalorder %s19, 1
    %p89 = por %p87, %p88
    %p91 = scmp.ne.s32.totalorder %s76, %s90
    %p92 = scmp.eq.s32.totalorder %s19, 0
    %p93 = por %p91, %p92
    %s95 = sadd.s32 %s94, 1
    %p98 = scmp.eq.s32.totalorder %s13, 1
    %p99 = scmp.ne.s32.totalorder %s94, %s96
    %p100 = scmp.eq.s32.totalorder %s13, 0
    %p101 = por %p99, %p100
    %p102 = scmp.ne.s32.totalorder %s94, %s96
    %p103 = scmp.eq.s32.totalorder %s18, 1
    %p104 = por %p102, %p103
    %p105 = scmp.ne.s32.totalorder %s96, %s97
    %p106 = scmp.eq.s32.totalorder %s18, 0
    %p107 = por %p105, %p106
    %p108 = scmp.ne.s32.totalorder %s96, %s97
    %p109 = scmp.eq.s32.totalorder %s19, 1
    %p110 = por %p108, %p109
    %p112 = scmp.ne.s32.totalorder %s97, %s111
    %p113 = scmp.eq.s32.totalorder %s19, 0
    %p114 = por %p112, %p113
    %s116 = sadd.s32 %s115, 1
    %p119 = scmp.eq.s32.totalorder %s13, 1
    %p120 = scmp.ne.s32.totalorder %s115, %s117
    %p121 = scmp.eq.s32.totalorder %s13, 0
    %p122 = por %p120, %p121
    %p123 = scmp.ne.s32.totalorder %s115, %s117
    %p124 = scmp.eq.s32.totalorder %s18, 1
    %p125 = por %p123, %p124
    %p126 = scmp.ne.s32.totalorder %s117, %s118
    %p127 = scmp.eq.s32.totalorder %s18, 0
    %p128 = por %p126, %p127
    %p129 = scmp.ne.s32.totalorder %s117, %s118
    %p130 = scmp.eq.s32.totalorder %s19, 1
    %p131 = por %p129, %p130
    %p133 = scmp.ne.s32.totalorder %s118, %s132
    %p134 = scmp.eq.s32.totalorder %s19, 0
    %p135 = por %p133, %p134
    %s137 = sadd.s32 %s136, 1
    %p140 = scmp.eq.s32.totalorder %s13, 1
    %p141 = scmp.ne.s32.totalorder %s136, %s138
    %p142 = scmp.eq.s32.totalorder %s13, 0
    %p143 = por %p141, %p142
    %p144 = scmp.ne.s32.totalorder %s136, %s138
    %p145 = scmp.eq.s32.totalorder %s18, 1
    %p146 = por %p144, %p145
    %p147 = scmp.ne.s32.totalorder %s138, %s139
    %p148 = scmp.eq.s32.totalorder %s18, 0
    %p149 = por %p147, %p148
    %p150 = scmp.ne.s32.totalorder %s138, %s139
    %p151 = scmp.eq.s32.totalorder %s19, 1
    %p152 = por %p150, %p151
    %p154 = scmp.ne.s32.totalorder %s139, %s153
    %p155 = scmp.eq.s32.totalorder %s19, 0
    %p156 = por %p154, %p155
    %s158 = sadd.s32 %s157, 1
    %p161 = scmp.eq.s32.totalorder %s13, 1
    %p162 = scmp.ne.s32.totalorder %s157, %s159
    %p163 = scmp.eq.s32.totalorder %s13, 0
    %p164 = por %p162, %p163
    %p165 = scmp.ne.s32.totalorder %s157, %s159
    %p166 = scmp.eq.s32.totalorder %s18, 1
    %p167 = por %p165, %p166
    %p168 = scmp.ne.s32.totalorder %s159, %s160
    %p169 = scmp.eq.s32.totalorder %s18, 0
    %p170 = por %p168, %p169
    %p171 = scmp.ne.s32.totalorder %s159, %s160
    %p172 = scmp.eq.s32.totalorder %s19, 1
    %p173 = por %p171, %p172
    %p175 = scmp.ne.s32.totalorder %s160, %s174
    %p176 = scmp.eq.s32.totalorder %s19, 0
    %p177 = por %p175, %p176
    %s178 = ssub.s32 %s13, %s20
    %p179 = scmp.eq.s32.totalorder %s178, 0
    %s181 = sadd.s32 %s180, 1
    %s182 = scalar_select %p179, %s180, %s181
    %p185 = pneg %p179
    %p186 = scmp.eq.s32.totalorder %s13, 1
    %p187 = por %p185, %p186
    %p188 = scmp.ne.s32.totalorder %s180, %s183
    %p189 = scmp.eq.s32.totalorder %s13, 0
    %p190 = por %p188, %p189
    %p191 = scmp.ne.s32.totalorder %s180, %s183
    %p192 = scmp.eq.s32.totalorder %s18, 1
    %p193 = por %p191, %p192
    %p194 = scmp.ne.s32.totalorder %s183, %s184
    %p195 = scmp.eq.s32.totalorder %s18, 0
    %p196 = por %p194, %p195
    %p197 = scmp.ne.s32.totalorder %s183, %s184
    %p198 = scmp.eq.s32.totalorder %s19, 1
    %p199 = por %p197, %p198
    %p201 = scmp.ne.s32.totalorder %s184, %s200
    %p202 = scmp.eq.s32.totalorder %s19, 0
    %p203 = por %p201, %p202
    %p204 = scmp.le.s32.totalorder 1, %s13
    %p205 = scmp.lt.s32.totalorder %s13, 3
    %p206 = pnand %p204, %p205
    %p207 = pneg %p206
    // Predicated region
    $region9: #{hopper_forward.5} parent=5 // pred_check
      _
    $region10: #{hopper_forward.5} parent=5 // pred_check_branch
      %209 = sbr.rel (%p206) target = $region12
    $region11: #{hopper_forward.5} parent=5 // pred_region
      %s210 = ssub.s32 %s13, 1
      // Predicated region
      $region13: #{hopper_forward.5} parent=11 // pred_check
        %p211 = pneg %p86
      $region14: #{hopper_forward.5} parent=11 // pred_check_branch
        %213 = sbr.rel (%p211) target = $region16
      $region15: #{hopper_forward.5} parent=11 // pred_region
        _
      $region16: #{hopper_forward.5} parent=11 // pred_fallthru
        _
      // Predicated region
      $region17: #{hopper_forward.5} parent=11 // pred_check
        %p214 = pneg %p107
      $region18: #{hopper_forward.5} parent=11 // pred_check_branch
        %216 = sbr.rel (%p214) target = $region20
      $region19: #{hopper_forward.5} parent=11 // pred_region
        _
      $region20: #{hopper_forward.5} parent=11 // pred_fallthru
        _
      // Predicated region
      $region21: #{hopper_forward.5} parent=11 // pred_check
        %p217 = pneg %p128
      $region22: #{hopper_forward.5} parent=11 // pred_check_branch
        %219 = sbr.rel (%p217) target = $region24
      $region23: #{hopper_forward.5} parent=11 // pred_region
        _
      $region24: #{hopper_forward.5} parent=11 // pred_fallthru
        _
      // Predicated region
      $region25: #{hopper_forward.5} parent=11 // pred_check
        %p220 = pneg %p149
      $region26: #{hopper_forward.5} parent=11 // pred_check_branch
        %222 = sbr.rel (%p220) target = $region28
      $region27: #{hopper_forward.5} parent=11 // pred_region
        _
      $region28: #{hopper_forward.5} parent=11 // pred_fallthru
        _
      // Predicated region
      $region29: #{hopper_forward.5} parent=11 // pred_check
        %p223 = pneg %p170
      $region30: #{hopper_forward.5} parent=11 // pred_check_branch
        %225 = sbr.rel (%p223) target = $region32
      $region31: #{hopper_forward.5} parent=11 // pred_region
        _
      $region32: #{hopper_forward.5} parent=11 // pred_fallthru
        _
    $region12: #{hopper_forward.5} parent=5 // pred_fallthru
      _
    %p226 = scmp.lt.s32.totalorder %s13, 2
    // Predicated region
    $region33: #{hopper_forward.5} parent=5 // pred_check
      %p227 = pneg %p226
    $region34: #{hopper_forward.5} parent=5 // pred_check_branch
      %229 = sbr.rel (%p227) target = $region36
    $region35: #{hopper_forward.5} parent=5 // pred_region
      // Predicated region
      $region37: #{hopper_forward.5} parent=35 // pred_check
        %p230 = pneg %p33
      $region38: #{hopper_forward.5} parent=35 // pred_check_branch
        %232 = sbr.rel (%p230) target = $region40
      $region39: #{hopper_forward.5} parent=35 // pred_region
        %p233 = scmp.lt.s32.totalorder %s13, 1
        %s234 = scalar_select %p233, %s13, 1
        %s235 = smul.addr %s234, 8
        %s236 = smul.addr %s235, 8
        %s237 = scalar_lea.vmem %s0, %s236
      $region40: #{hopper_forward.5} parent=35 // pred_fallthru
        _
      // Predicated region
      $region41: #{hopper_forward.5} parent=35 // pred_check
        %p238 = pneg %p59
      $region42: #{hopper_forward.5} parent=35 // pred_check_branch
        %240 = sbr.rel (%p238) target = $region44
      $region43: #{hopper_forward.5} parent=35 // pred_region
        %p241 = scmp.lt.s32.totalorder %s13, 1
        %s242 = scalar_select %p241, %s13, 1
        %s243 = smul.addr %s242, 8
        %s244 = smul.addr %s243, 4
        %s245 = scalar_lea.vmem %s1, %s244
      $region44: #{hopper_forward.5} parent=35 // pred_fallthru
        _
    $region36: #{hopper_forward.5} parent=5 // pred_fallthru
      _
    %p246 = scmp.le.s32.totalorder 1, %s13
    %p247 = scmp.lt.s32.totalorder %s13, 3
    %p248 = pnand %p246, %p247
    %p249 = pneg %p248
    // Predicated region
    $region45: #{hopper_forward.5} parent=5 // pred_check
      _
    $region46: #{hopper_forward.5} parent=5 // pred_check_branch
      %251 = sbr.rel (%p248) target = $region48
    $region47: #{hopper_forward.5} parent=5 // pred_region
      %s252 = ssub.s32 %s13, 1
      %p253 = scmp.lt.s32.totalorder %s18, 1
      %s254 = scalar_select %p253, %s18, 1
      %s255 = smul.addr %s254, 8
      %s256 = smul.addr %s255, 8
      %s257 = scalar_lea.vmem %s0, %s256
      %p258 = pneg %p39
      %p259 = pneg %p36
      %p260 = scmp.lt.s32.totalorder %s18, 1
      %s261 = scalar_select %p260, %s18, 1
      %s262 = smul.addr %s261, 8
      %s263 = smul.addr %s262, 4
      %s264 = scalar_lea.vmem %s1, %s263
      %p265 = pneg %p65
      %p266 = pneg %p62
      %p267 = pneg %p86
      %p268 = pneg %p83
      %p269 = pneg %p107
      %p270 = pneg %p104
      %p271 = pneg %p128
      %p272 = pneg %p125
      %p273 = pneg %p149
      %p274 = pneg %p146
      %p275 = pneg %p170
      %p276 = pneg %p167
      %p277 = pneg %p196
      %p278 = pneg %p193
      %p279 = scmp.lt.s32.totalorder %s18, 1
      %s280 = scalar_select %p279, %s18, 1
      %s281 = smul.addr %s280, 8
      %s282 = smul.addr %s281, 4
      %s283 = scalar_lea.vmem %s7, %s282
      %p284 = scmp.lt.s32.totalorder %s18, 1
      %s285 = scalar_select %p284, %s18, 1
      %s286 = smul.addr %s285, 8
      %s287 = smul.addr %s286, 8
      %s288 = scalar_lea.vmem %s0, %s287
      %p289 = scmp.lt.s32.totalorder %s18, 1
      %s290 = scalar_select %p289, %s18, 1
      %s291 = smul.addr %s290, 8
      %s292 = smul.addr %s291, 4
      %s293 = scalar_lea.vmem %s1, %s292
      %p294 = scmp.lt.s32.totalorder %s18, 1
      %s295 = scalar_select %p294, %s18, 1
      %s296 = smul.addr %s295, 8
      %s297 = smul.addr %s296, 4
      %s298 = scalar_lea.vmem %s7, %s297
      %v300 = vld [vmem:[%s288] sm:$0xff]
      %v301 = vld [vmem:[%s288 + $0x8] sm:$0xff]
      %v302 = vld [vmem:[%s288 + $0x10] sm:$0xff]
      %v303 = vld [vmem:[%s288 + $0x18] sm:$0xff]
      %v304 = vld [vmem:[%s288 + $0x20] sm:$0xff]
      %v305 = vld [vmem:[%s288 + $0x28] sm:$0xff]
      %v306 = vld [vmem:[%s288 + $0x30] sm:$0xff]
      %v307 = vld [vmem:[%s288 + $0x38] sm:$0xff]
      %v308 = vld [vmem:[%s2] sm:$0xff]
      %v309 = vld [vmem:[%s3] sm:$0xff]
      %v310 = vld [vmem:[%s3] sm:$0xf]
      %v311 = vld [vmem:[%s4] sm:$0xf]
      %v312 = vpack.c.bf16 %v300, %v300
      %v313 = vpack.c.bf16 %v301, %v301
      %v314 = vpack.c.bf16 %v302, %v302
      %v315 = vpack.c.bf16 %v303, %v303
      %v316 = vpack.c.bf16 %v304, %v304
      %v317 = vpack.c.bf16 %v305, %v305
      %v318 = vpack.c.bf16 %v306, %v306
      %v319 = vpack.c.bf16 %v307, %v307
      %328 = vrot.lane.b32.xlu0 %v312, 33
      %v329 = vpop.permute.xlu0 %328
      %330 = vrot.lane.b32.xlu0 %v313, 33
      %v331 = vpop.permute.xlu0 %330
      %332 = vrot.lane.b32.xlu0 %v314, 33
      %v333 = vpop.permute.xlu0 %332
      %334 = vrot.lane.b32.xlu0 %v315, 33
      %v335 = vpop.permute.xlu0 %334
      %336 = vrot.lane.b32.xlu0 %v316, 33
      %v337 = vpop.permute.xlu0 %336
      %338 = vrot.lane.b32.xlu0 %v317, 33
      %v339 = vpop.permute.xlu0 %338
      %340 = vrot.lane.b32.xlu0 %v318, 33
      %v341 = vpop.permute.xlu0 %340
      %342 = vrot.lane.b32.xlu0 %v319, 33
      %v343 = vpop.permute.xlu0 %342
      %vm344 = vcmask 269312
      %v345 = vsel %vm344, %v329, %v331
      %v346 = vsel %vm344, %v331, %v333
      %v347 = vsel %vm344, %v333, %v335
      %v348 = vsel %vm344, %v335, %v337
      %v349 = vsel %vm344, %v337, %v339
      %v350 = vsel %vm344, %v339, %v341
      %v351 = vsel %vm344, %v341, %v343
      %vm359 = vcmask 269312
      %v362 = vsel %vm359, 0, %v329
      %v365 = vsel %vm359, %v343, 0
      %v368 = vcombine.high %v308, %v308
      %v370 = vunpack.c.l.s4 1966171168
      %v371 = vunpack.c.0.s8 %v370
      %v372 = vlaneseq
      %v373 = vshrl.u32 %v372, 7
      %v374 = vsub.s32 %v371, %v373
      %v375 = vrot.slane %v308, %v374
      %v377 = vunpack.c.l.s4 1966171168
      %v378 = vunpack.c.0.s8 %v377
      %v379 = vlaneseq
      %v380 = vshrl.u32 %v379, 7
      %v381 = vsub.s32 %v378, %v380
      %v382 = vrot.slane %v368, %v381
      %v383 = vcombine.high %v375, %v375
      %v384 = vcombine.high %v382, %v382
      %v386 = vunpack.c.l.s4 1966171168
      %v387 = vunpack.c.0.s8 %v386
      %v388 = vlaneseq
      %v389 = vshrl.u32 %v388, 7
      %v390 = vsub.s32 %v387, %v389
      %v391 = vrot.slane %v375, %v390
      %v393 = vunpack.c.l.s4 1966171168
      %v394 = vunpack.c.0.s8 %v393
      %v395 = vlaneseq
      %v396 = vshrl.u32 %v395, 7
      %v397 = vsub.s32 %v394, %v396
      %v398 = vrot.slane %v382, %v397
      %v400 = vunpack.c.l.s4 1966171168
      %v401 = vunpack.c.0.s8 %v400
      %v402 = vlaneseq
      %v403 = vshrl.u32 %v402, 7
      %v404 = vsub.s32 %v401, %v403
      %v405 = vrot.slane %v383, %v404
      %v407 = vunpack.c.l.s4 1966171168
      %v408 = vunpack.c.0.s8 %v407
      %v409 = vlaneseq
      %v410 = vshrl.u32 %v409, 7
      %v411 = vsub.s32 %v408, %v410
      %v412 = vrot.slane %v384, %v411
      %v413 = vcombine.high %v391, %v391
      %v414 = vcombine.high %v398, %v398
      %v415 = vcombine.high %v405, %v405
      %v416 = vcombine.high %v412, %v412
      %v418 = vpack.i.b16 %v391, %v391
      %v420 = vlaneseq
      %v421 = vshrl.u32 %v420, 7
      %v422 = vsub.s32 0, %v421
      %v423 = vrot.slane %v418, %v422
      %v425 = vpack.i.b16 %v405, %v405
      %v427 = vlaneseq
      %v428 = vshrl.u32 %v427, 7
      %v429 = vsub.s32 0, %v428
      %v430 = vrot.slane %v425, %v429
      %v432 = vpack.i.b16 %v413, %v413
      %v434 = vlaneseq
      %v435 = vshrl.u32 %v434, 7
      %v436 = vsub.s32 0, %v435
      %v437 = vrot.slane %v432, %v436
      %v439 = vpack.i.b16 %v415, %v415
      %v441 = vlaneseq
      %v442 = vshrl.u32 %v441, 7
      %v443 = vsub.s32 0, %v442
      %v444 = vrot.slane %v439, %v443
      %v446 = vpack.i.b16 %v398, %v398
      %v448 = vlaneseq
      %v449 = vshrl.u32 %v448, 7
      %v450 = vsub.s32 0, %v449
      %v451 = vrot.slane %v446, %v450
      %v453 = vpack.i.b16 %v412, %v412
      %v455 = vlaneseq
      %v456 = vshrl.u32 %v455, 7
      %v457 = vsub.s32 0, %v456
      %v458 = vrot.slane %v453, %v457
      %v460 = vpack.i.b16 %v414, %v414
      %v462 = vlaneseq
      %v463 = vshrl.u32 %v462, 7
      %v464 = vsub.s32 0, %v463
      %v465 = vrot.slane %v460, %v464
      %v467 = vpack.i.b16 %v416, %v416
      %v469 = vlaneseq
      %v470 = vshrl.u32 %v469, 7
      %v471 = vsub.s32 0, %v470
      %v472 = vrot.slane %v467, %v471
      %v473 = vmul.bf16 %v362, %v423
      %v474 = vmul.bf16 %v345, %v430
      %v475 = vmul.bf16 %v346, %v437
      %v476 = vmul.bf16 %v347, %v444
      %v477 = vmul.bf16 %v348, %v451
      %v478 = vmul.bf16 %v349, %v458
      %v479 = vmul.bf16 %v350, %v465
      %v480 = vmul.bf16 %v351, %v472
      %v481 = vshrl.u32 %v391, 16
      %v482 = vpack.i.b16 %v481, %v481
      %v484 = vlaneseq
      %v485 = vshrl.u32 %v484, 7
      %v486 = vsub.s32 0, %v485
      %v487 = vrot.slane %v482, %v486
      %v488 = vshrl.u32 %v405, 16
      %v489 = vpack.i.b16 %v488, %v488
      %v491 = vlaneseq
      %v492 = vshrl.u32 %v491, 7
      %v493 = vsub.s32 0, %v492
      %v494 = vrot.slane %v489, %v493
      %v495 = vshrl.u32 %v413, 16
      %v496 = vpack.i.b16 %v495, %v495
      %v498 = vlaneseq
      %v499 = vshrl.u32 %v498, 7
      %v500 = vsub.s32 0, %v499
      %v501 = vrot.slane %v496, %v500
      %v502 = vshrl.u32 %v415, 16
      %v503 = vpack.i.b16 %v502, %v502
      %v505 = vlaneseq
      %v506 = vshrl.u32 %v505, 7
      %v507 = vsub.s32 0, %v506
      %v508 = vrot.slane %v503, %v507
      %v509 = vshrl.u32 %v398, 16
      %v510 = vpack.i.b16 %v509, %v509
      %v512 = vlaneseq
      %v513 = vshrl.u32 %v512, 7
      %v514 = vsub.s32 0, %v513
      %v515 = vrot.slane %v510, %v514
      %v516 = vshrl.u32 %v412, 16
      %v517 = vpack.i.b16 %v516, %v516
      %v519 = vlaneseq
      %v520 = vshrl.u32 %v519, 7
      %v521 = vsub.s32 0, %v520
      %v522 = vrot.slane %v517, %v521
      %v523 = vshrl.u32 %v414, 16
      %v524 = vpack.i.b16 %v523, %v523
      %v526 = vlaneseq
      %v527 = vshrl.u32 %v526, 7
      %v528 = vsub.s32 0, %v527
      %v529 = vrot.slane %v524, %v528
      %v530 = vshrl.u32 %v416, 16
      %v531 = vpack.i.b16 %v530, %v530
      %v533 = vlaneseq
      %v534 = vshrl.u32 %v533, 7
      %v535 = vsub.s32 0, %v534
      %v536 = vrot.slane %v531, %v535
      %545 = vrot.lane.b32.xlu0 %v487, 2
      %v546 = vpop.permute.xlu0 %545
      %547 = vrot.lane.b32.xlu0 %v494, 2
      %v548 = vpop.permute.xlu0 %547
      %549 = vrot.lane.b32.xlu0 %v501, 2
      %v550 = vpop.permute.xlu0 %549
      %551 = vrot.lane.b32.xlu0 %v508, 2
      %v552 = vpop.permute.xlu0 %551
      %553 = vrot.lane.b32.xlu0 %v515, 2
      %v554 = vpop.permute.xlu0 %553
      %555 = vrot.lane.b32.xlu0 %v522, 2
      %v556 = vpop.permute.xlu0 %555
      %557 = vrot.lane.b32.xlu0 %v529, 2
      %v558 = vpop.permute.xlu0 %557
      %559 = vrot.lane.b32.xlu0 %v536, 2
      %v560 = vpop.permute.xlu0 %559
      %vm561 = vcmask 15360
      %v562 = vsel %vm561, %v546, %v548
      %v563 = vsel %vm561, %v548, %v550
      %v564 = vsel %vm561, %v550, %v552
      %v565 = vsel %vm561, %v552, %v554
      %v566 = vsel %vm561, %v554, %v556
      %v567 = vsel %vm561, %v556, %v558
      %v568 = vsel %vm561, %v558, %v560
      %v578 = vmul.bf16 %v362, %v546
      %v579 = vmul.bf16 %v345, %v562
      %v580 = vmul.bf16 %v346, %v563
      %v581 = vmul.bf16 %v347, %v564
      %v582 = vmul.bf16 %v348, %v565
      %v583 = vmul.bf16 %v349, %v566
      %v584 = vmul.bf16 %v350, %v567
      %v585 = vmul.bf16 %v351, %v568
      %v586 = vmul.bf16 %v365, %v560
      %595 = vrot.lane.b32.xlu0 %v423, 32
      %v596 = vpop.permute.xlu0 %595
      %597 = vrot.lane.b32.xlu0 %v430, 32
      %v598 = vpop.permute.xlu0 %597
      %599 = vrot.lane.b32.xlu0 %v437, 32
      %v600 = vpop.permute.xlu0 %599
      %601 = vrot.lane.b32.xlu0 %v444, 32
      %v602 = vpop.permute.xlu0 %601
      %603 = vrot.lane.b32.xlu0 %v451, 32
      %v604 = vpop.permute.xlu0 %603
      %605 = vrot.lane.b32.xlu0 %v458, 32
      %v606 = vpop.permute.xlu0 %605
      %607 = vrot.lane.b32.xlu0 %v465, 32
      %v608 = vpop.permute.xlu0 %607
      %609 = vrot.lane.b32.xlu0 %v472, 32
      %v610 = vpop.permute.xlu0 %609
      %vm611 = vcmask 261120
      %v612 = vsel %vm611, %v596, %v598
      %v613 = vsel %vm611, %v598, %v600
      %v614 = vsel %vm611, %v600, %v602
      %v615 = vsel %vm611, %v602, %v604
      %v616 = vsel %vm611, %v604, %v606
      %v617 = vsel %vm611, %v606, %v608
      %v618 = vsel %vm611, %v608, %v610
      %v628 = vmul.bf16 %v362, %v596
      %v629 = vmul.bf16 %v345, %v612
      %v630 = vmul.bf16 %v346, %v613
      %v631 = vmul.bf16 %v347, %v614
      %v632 = vmul.bf16 %v348, %v615
      %v633 = vmul.bf16 %v349, %v616
      %v634 = vmul.bf16 %v350, %v617
      %v635 = vmul.bf16 %v351, %v618
      %v636 = vmul.bf16 %v365, %v610
      %637 = vrot.lane.b32.xlu0 %v487, 34
      %v638 = vpop.permute.xlu0 %637
      %639 = vrot.lane.b32.xlu0 %v494, 34
      %v640 = vpop.permute.xlu0 %639
      %641 = vrot.lane.b32.xlu0 %v501, 34
      %v642 = vpop.permute.xlu0 %641
      %643 = vrot.lane.b32.xlu0 %v508, 34
      %v644 = vpop.permute.xlu0 %643
      %645 = vrot.lane.b32.xlu0 %v515, 34
      %v646 = vpop.permute.xlu0 %645
      %647 = vrot.lane.b32.xlu0 %v522, 34
      %v648 = vpop.permute.xlu0 %647
      %649 = vrot.lane.b32.xlu0 %v529, 34
      %v650 = vpop.permute.xlu0 %649
      %651 = vrot.lane.b32.xlu0 %v536, 34
      %v652 = vpop.permute.xlu0 %651
      %vm653 = vcmask 277504
      %v654 = vsel %vm653, %v638, %v640
      %v655 = vsel %vm653, %v640, %v642
      %v656 = vsel %vm653, %v642, %v644
      %v657 = vsel %vm653, %v644, %v646
      %v658 = vsel %vm653, %v646, %v648
      %v659 = vsel %vm653, %v648, %v650
      %v660 = vsel %vm653, %v650, %v652
      %v670 = vmul.bf16 %v362, %v638
      %v671 = vmul.bf16 %v345, %v654
      %v672 = vmul.bf16 %v346, %v655
      %v673 = vmul.bf16 %v347, %v656
      %v674 = vmul.bf16 %v348, %v657
      %v675 = vmul.bf16 %v349, %v658
      %v676 = vmul.bf16 %v350, %v659
      %v677 = vmul.bf16 %v351, %v660
      %v678 = vmul.bf16 %v365, %v652
      %679 = vrot.lane.b32.xlu0 %v423, 64
      %v680 = vpop.permute.xlu0 %679
      %681 = vrot.lane.b32.xlu0 %v430, 64
      %v682 = vpop.permute.xlu0 %681
      %683 = vrot.lane.b32.xlu0 %v437, 64
      %v684 = vpop.permute.xlu0 %683
      %685 = vrot.lane.b32.xlu0 %v444, 64
      %v686 = vpop.permute.xlu0 %685
      %687 = vrot.lane.b32.xlu0 %v451, 64
      %v688 = vpop.permute.xlu0 %687
      %689 = vrot.lane.b32.xlu0 %v458, 64
      %v690 = vpop.permute.xlu0 %689
      %691 = vrot.lane.b32.xlu0 %v465, 64
      %v692 = vpop.permute.xlu0 %691
      %693 = vrot.lane.b32.xlu0 %v472, 64
      %v694 = vpop.permute.xlu0 %693
      %vm695 = vcmask 523264
      %v696 = vsel %vm695, %v680, %v682
      %v697 = vsel %vm695, %v682, %v684
      %v698 = vsel %vm695, %v684, %v686
      %v699 = vsel %vm695, %v686, %v688
      %v700 = vsel %vm695, %v688, %v690
      %v701 = vsel %vm695, %v690, %v692
      %v702 = vsel %vm695, %v692, %v694
      %v712 = vmul.bf16 %v362, %v680
      %v713 = vmul.bf16 %v345, %v696
      %v714 = vmul.bf16 %v346, %v697
      %v715 = vmul.bf16 %v347, %v698
      %v716 = vmul.bf16 %v348, %v699
      %v717 = vmul.bf16 %v349, %v700
      %v718 = vmul.bf16 %v350, %v701
      %v719 = vmul.bf16 %v351, %v702
      %v720 = vmul.bf16 %v365, %v694
      %721 = vrot.lane.b32.xlu0 %v487, 66
      %v722 = vpop.permute.xlu0 %721
      %723 = vrot.lane.b32.xlu0 %v494, 66
      %v724 = vpop.permute.xlu0 %723
      %725 = vrot.lane.b32.xlu0 %v501, 66
      %v726 = vpop.permute.xlu0 %725
      %727 = vrot.lane.b32.xlu0 %v508, 66
      %v728 = vpop.permute.xlu0 %727
      %729 = vrot.lane.b32.xlu0 %v515, 66
      %v730 = vpop.permute.xlu0 %729
      %731 = vrot.lane.b32.xlu0 %v522, 66
      %v732 = vpop.permute.xlu0 %731
      %733 = vrot.lane.b32.xlu0 %v529, 66
      %v734 = vpop.permute.xlu0 %733
      %735 = vrot.lane.b32.xlu0 %v536, 66
      %v736 = vpop.permute.xlu0 %735
      %vm737 = vcmask 539648
      %v738 = vsel %vm737, %v722, %v724
      %v739 = vsel %vm737, %v724, %v726
      %v740 = vsel %vm737, %v726, %v728
      %v741 = vsel %vm737, %v728, %v730
      %v742 = vsel %vm737, %v730, %v732
      %v743 = vsel %vm737, %v732, %v734
      %v744 = vsel %vm737, %v734, %v736
      %v754 = vmul.bf16 %v362, %v722
      %v755 = vmul.bf16 %v345, %v738
      %v756 = vmul.bf16 %v346, %v739
      %v757 = vmul.bf16 %v347, %v740
      %v758 = vmul.bf16 %v348, %v741
      %v759 = vmul.bf16 %v349, %v742
      %v760 = vmul.bf16 %v350, %v743
      %v761 = vmul.bf16 %v351, %v744
      %v762 = vmul.bf16 %v365, %v736
      %v765 = vrot.slane %v362, 4
      %v766 = vrot.slane %v345, 4
      %v767 = vrot.slane %v346, 4
      %v768 = vrot.slane %v347, 4
      %v769 = vrot.slane %v348, 4
      %v770 = vrot.slane %v349, 4
      %v771 = vrot.slane %v350, 4
      %v772 = vrot.slane %v351, 4
      %v773 = vrot.slane %v365, 4
      %774 = vrot.lane.b32.xlu0 %v765, 127
      %v775 = vpop.permute.xlu0 %774
      %776 = vrot.lane.b32.xlu0 %v766, 127
      %v777 = vpop.permute.xlu0 %776
      %778 = vrot.lane.b32.xlu0 %v767, 127
      %v779 = vpop.permute.xlu0 %778
      %780 = vrot.lane.b32.xlu0 %v768, 127
      %v781 = vpop.permute.xlu0 %780
      %782 = vrot.lane.b32.xlu0 %v769, 127
      %v783 = vpop.permute.xlu0 %782
      %784 = vrot.lane.b32.xlu0 %v770, 127
      %v785 = vpop.permute.xlu0 %784
      %786 = vrot.lane.b32.xlu0 %v771, 127
      %v787 = vpop.permute.xlu0 %786
      %788 = vrot.lane.b32.xlu0 %v772, 127
      %v789 = vpop.permute.xlu0 %788
      %790 = vrot.lane.b32.xlu0 %v773, 127
      %v791 = vpop.permute.xlu0 %790
      %vm792 = vcmask 1039360
      %v793 = vsel %vm792, %v775, %v777
      %v794 = vsel %vm792, %v777, %v779
      %v795 = vsel %vm792, %v779, %v781
      %v796 = vsel %vm792, %v781, %v783
      %v797 = vsel %vm792, %v783, %v785
      %v798 = vsel %vm792, %v785, %v787
      %v799 = vsel %vm792, %v787, %v789
      %v800 = vsel %vm792, %v789, %v791
      %810 = vrot.lane.b32.xlu0 %v578, 126
      %v811 = vpop.permute.xlu0 %810
      %812 = vrot.lane.b32.xlu0 %v579, 126
      %v813 = vpop.permute.xlu0 %812
      %814 = vrot.lane.b32.xlu0 %v580, 126
      %v815 = vpop.permute.xlu0 %814
      %816 = vrot.lane.b32.xlu0 %v581, 126
      %v817 = vpop.permute.xlu0 %816
      %818 = vrot.lane.b32.xlu0 %v582, 126
      %v819 = vpop.permute.xlu0 %818
      %820 = vrot.lane.b32.xlu0 %v583, 126
      %v821 = vpop.permute.xlu0 %820
      %822 = vrot.lane.b32.xlu0 %v584, 126
      %v823 = vpop.permute.xlu0 %822
      %824 = vrot.lane.b32.xlu0 %v585, 126
      %v825 = vpop.permute.xlu0 %824
      %826 = vrot.lane.b32.xlu0 %v586, 126
      %v827 = vpop.permute.xlu0 %826
      %vm828 = vcmask 1031168
      %v829 = vsel %vm828, %v811, %v813
      %v830 = vsel %vm828, %v813, %v815
      %v831 = vsel %vm828, %v815, %v817
      %v832 = vsel %vm828, %v817, %v819
      %v833 = vsel %vm828, %v819, %v821
      %v834 = vsel %vm828, %v821, %v823
      %v835 = vsel %vm828, %v823, %v825
      %v836 = vsel %vm828, %v825, %v827
      %v846 = vrot.slane %v628, 4
      %v847 = vrot.slane %v629, 4
      %v848 = vrot.slane %v630, 4
      %v849 = vrot.slane %v631, 4
      %v850 = vrot.slane %v632, 4
      %v851 = vrot.slane %v633, 4
      %v852 = vrot.slane %v634, 4
      %v853 = vrot.slane %v635, 4
      %v854 = vrot.slane %v636, 4
      %855 = vrot.lane.b32.xlu0 %v846, 96
      %v856 = vpop.permute.xlu0 %855
      %857 = vrot.lane.b32.xlu0 %v847, 96
      %v858 = vpop.permute.xlu0 %857
      %859 = vrot.lane.b32.xlu0 %v848, 96
      %v860 = vpop.permute.xlu0 %859
      %861 = vrot.lane.b32.xlu0 %v849, 96
      %v862 = vpop.permute.xlu0 %861
      %863 = vrot.lane.b32.xlu0 %v850, 96
      %v864 = vpop.permute.xlu0 %863
      %865 = vrot.lane.b32.xlu0 %v851, 96
      %v866 = vpop.permute.xlu0 %865
      %867 = vrot.lane.b32.xlu0 %v852, 96
      %v868 = vpop.permute.xlu0 %867
      %869 = vrot.lane.b32.xlu0 %v853, 96
      %v870 = vpop.permute.xlu0 %869
      %871 = vrot.lane.b32.xlu0 %v854, 96
      %v872 = vpop.permute.xlu0 %871
      %vm873 = vcmask 785408
      %v874 = vsel %vm873, %v856, %v858
      %v875 = vsel %vm873, %v858, %v860
      %v876 = vsel %vm873, %v860, %v862
      %v877 = vsel %vm873, %v862, %v864
      %v878 = vsel %vm873, %v864, %v866
      %v879 = vsel %vm873, %v866, %v868
      %v880 = vsel %vm873, %v868, %v870
      %v881 = vsel %vm873, %v870, %v872
      %882 = vrot.lane.b32.xlu0 %v362, 95
      %v883 = vpop.permute.xlu0 %882
      %884 = vrot.lane.b32.xlu0 %v345, 95
      %v885 = vpop.permute.xlu0 %884
      %886 = vrot.lane.b32.xlu0 %v346, 95
      %v887 = vpop.permute.xlu0 %886
      %888 = vrot.lane.b32.xlu0 %v347, 95
      %v889 = vpop.permute.xlu0 %888
      %890 = vrot.lane.b32.xlu0 %v348, 95
      %v891 = vpop.permute.xlu0 %890
      %892 = vrot.lane.b32.xlu0 %v349, 95
      %v893 = vpop.permute.xlu0 %892
      %894 = vrot.lane.b32.xlu0 %v350, 95
      %v895 = vpop.permute.xlu0 %894
      %896 = vrot.lane.b32.xlu0 %v351, 95
      %v897 = vpop.permute.xlu0 %896
      %898 = vrot.lane.b32.xlu0 %v365, 95
      %v899 = vpop.permute.xlu0 %898
      %vm900 = vcmask 777216
      %v901 = vsel %vm900, %v883, %v885
      %v902 = vsel %vm900, %v885, %v887
      %v903 = vsel %vm900, %v887, %v889
      %v904 = vsel %vm900, %v889, %v891
      %v905 = vsel %vm900, %v891, %v893
      %v906 = vsel %vm900, %v893, %v895
      %v907 = vsel %vm900, %v895, %v897
      %v908 = vsel %vm900, %v897, %v899
      %v918 = vrot.slane %v670, 4
      %v919 = vrot.slane %v671, 4
      %v920 = vrot.slane %v672, 4
      %v921 = vrot.slane %v673, 4
      %v922 = vrot.slane %v674, 4
      %v923 = vrot.slane %v675, 4
      %v924 = vrot.slane %v676, 4
      %v925 = vrot.slane %v677, 4
      %v926 = vrot.slane %v678, 4
      %927 = vrot.lane.b32.xlu0 %v918, 94
      %v928 = vpop.permute.xlu0 %927
      %929 = vrot.lane.b32.xlu0 %v919, 94
      %v930 = vpop.permute.xlu0 %929
      %931 = vrot.lane.b32.xlu0 %v920, 94
      %v932 = vpop.permute.xlu0 %931
      %933 = vrot.lane.b32.xlu0 %v921, 94
      %v934 = vpop.permute.xlu0 %933
      %935 = vrot.lane.b32.xlu0 %v922, 94
      %v936 = vpop.permute.xlu0 %935
      %937 = vrot.lane.b32.xlu0 %v923, 94
      %v938 = vpop.permute.xlu0 %937
      %939 = vrot.lane.b32.xlu0 %v924, 94
      %v940 = vpop.permute.xlu0 %939
      %941 = vrot.lane.b32.xlu0 %v925, 94
      %v942 = vpop.permute.xlu0 %941
      %943 = vrot.lane.b32.xlu0 %v926, 94
      %v944 = vpop.permute.xlu0 %943
      %vm945 = vcmask 769024
      %v946 = vsel %vm945, %v928, %v930
      %v947 = vsel %vm945, %v930, %v932
      %v948 = vsel %vm945, %v932, %v934
      %v949 = vsel %vm945, %v934, %v936
      %v950 = vsel %vm945, %v936, %v938
      %v951 = vsel %vm945, %v938, %v940
      %v952 = vsel %vm945, %v940, %v942
      %v953 = vsel %vm945, %v942, %v944
      %963 = vrot.lane.b32.xlu0 %v712, 64
      %v964 = vpop.permute.xlu0 %963
      %965 = vrot.lane.b32.xlu0 %v713, 64
      %v966 = vpop.permute.xlu0 %965
      %967 = vrot.lane.b32.xlu0 %v714, 64
      %v968 = vpop.permute.xlu0 %967
      %969 = vrot.lane.b32.xlu0 %v715, 64
      %v970 = vpop.permute.xlu0 %969
      %971 = vrot.lane.b32.xlu0 %v716, 64
      %v972 = vpop.permute.xlu0 %971
      %973 = vrot.lane.b32.xlu0 %v717, 64
      %v974 = vpop.permute.xlu0 %973
      %975 = vrot.lane.b32.xlu0 %v718, 64
      %v976 = vpop.permute.xlu0 %975
      %977 = vrot.lane.b32.xlu0 %v719, 64
      %v978 = vpop.permute.xlu0 %977
      %979 = vrot.lane.b32.xlu0 %v720, 64
      %v980 = vpop.permute.xlu0 %979
      %v981 = vsel %vm695, %v964, %v966
      %v982 = vsel %vm695, %v966, %v968
      %v983 = vsel %vm695, %v968, %v970
      %v984 = vsel %vm695, %v970, %v972
      %v985 = vsel %vm695, %v972, %v974
      %v986 = vsel %vm695, %v974, %v976
      %v987 = vsel %vm695, %v976, %v978
      %v988 = vsel %vm695, %v978, %v980
      %989 = vrot.lane.b32.xlu0 %v765, 63
      %v990 = vpop.permute.xlu0 %989
      %991 = vrot.lane.b32.xlu0 %v766, 63
      %v992 = vpop.permute.xlu0 %991
      %993 = vrot.lane.b32.xlu0 %v767, 63
      %v994 = vpop.permute.xlu0 %993
      %995 = vrot.lane.b32.xlu0 %v768, 63
      %v996 = vpop.permute.xlu0 %995
      %997 = vrot.lane.b32.xlu0 %v769, 63
      %v998 = vpop.permute.xlu0 %997
      %999 = vrot.lane.b32.xlu0 %v770, 63
      %v1000 = vpop.permute.xlu0 %999
      %1001 = vrot.lane.b32.xlu0 %v771, 63
      %v1002 = vpop.permute.xlu0 %1001
      %1003 = vrot.lane.b32.xlu0 %v772, 63
      %v1004 = vpop.permute.xlu0 %1003
      %1005 = vrot.lane.b32.xlu0 %v773, 63
      %v1006 = vpop.permute.xlu0 %1005
      %vm1007 = vcmask 515072
      %v1008 = vsel %vm1007, %v990, %v992
      %v1009 = vsel %vm1007, %v992, %v994
      %v1010 = vsel %vm1007, %v994, %v996
      %v1011 = vsel %vm1007, %v996, %v998
      %v1012 = vsel %vm1007, %v998, %v1000
      %v1013 = vsel %vm1007, %v1000, %v1002
      %v1014 = vsel %vm1007, %v1002, %v1004
      %v1015 = vsel %vm1007, %v1004, %v1006
      %1025 = vrot.lane.b32.xlu0 %v754, 62
      %v1026 = vpop.permute.xlu0 %1025
      %1027 = vrot.lane.b32.xlu0 %v755, 62
      %v1028 = vpop.permute.xlu0 %1027
      %1029 = vrot.lane.b32.xlu0 %v756, 62
      %v1030 = vpop.permute.xlu0 %1029
      %1031 = vrot.lane.b32.xlu0 %v757, 62
      %v1032 = vpop.permute.xlu0 %1031
      %1033 = vrot.lane.b32.xlu0 %v758, 62
      %v1034 = vpop.permute.xlu0 %1033
      %1035 = vrot.lane.b32.xlu0 %v759, 62
      %v1036 = vpop.permute.xlu0 %1035
      %1037 = vrot.lane.b32.xlu0 %v760, 62
      %v1038 = vpop.permute.xlu0 %1037
      %1039 = vrot.lane.b32.xlu0 %v761, 62
      %v1040 = vpop.permute.xlu0 %1039
      %1041 = vrot.lane.b32.xlu0 %v762, 62
      %v1042 = vpop.permute.xlu0 %1041
      %vm1043 = vcmask 506880
      %v1044 = vsel %vm1043, %v1026, %v1028
      %v1045 = vsel %vm1043, %v1028, %v1030
      %v1046 = vsel %vm1043, %v1030, %v1032
      %v1047 = vsel %vm1043, %v1032, %v1034
      %v1048 = vsel %vm1043, %v1034, %v1036
      %v1049 = vsel %vm1043, %v1036, %v1038
      %v1050 = vsel %vm1043, %v1038, %v1040
      %v1051 = vsel %vm1043, %v1040, %v1042
      %vm1052 = vcmask 1043456
      %v1055 = vsel %vm1052, %v473, %v793
      %v1059 = vsel %vm1052, %v474, %v794
      %v1063 = vsel %vm1052, %v475, %v795
      %v1067 = vsel %vm1052, %v476, %v796
      %v1071 = vsel %vm1052, %v477, %v797
      %v1075 = vsel %vm1052, %v478, %v798
      %v1079 = vsel %vm1052, %v479, %v799
      %v1083 = vsel %vm1052, %v480, %v800
      %v1087 = vsel %vm1052, %v829, %v874
      %v1091 = vsel %vm1052, %v830, %v875
      %v1095 = vsel %vm1052, %v831, %v876
      %v1099 = vsel %vm1052, %v832, %v877
      %v1103 = vsel %vm1052, %v833, %v878
      %v1107 = vsel %vm1052, %v834, %v879
      %v1111 = vsel %vm1052, %v835, %v880
      %v1115 = vsel %vm1052, %v836, %v881
      %v1119 = vsel %vm1052, %v901, %v946
      %v1123 = vsel %vm1052, %v902, %v947
      %v1127 = vsel %vm1052, %v903, %v948
      %v1131 = vsel %vm1052, %v904, %v949
      %v1135 = vsel %vm1052, %v905, %v950
      %v1139 = vsel %vm1052, %v906, %v951
      %v1143 = vsel %vm1052, %v907, %v952
      %v1147 = vsel %vm1052, %v908, %v953
      %v1151 = vsel %vm1052, %v981, %v1008
      %v1155 = vsel %vm1052, %v982, %v1009
      %v1159 = vsel %vm1052, %v983, %v1010
      %v1163 = vsel %vm1052, %v984, %v1011
      %v1167 = vsel %vm1052, %v985, %v1012
      %v1171 = vsel %vm1052, %v986, %v1013
      %v1175 = vsel %vm1052, %v987, %v1014
      %v1179 = vsel %vm1052, %v988, %v1015
      %1182 = vset.pattern.permute.xlu0 9
      %1183 = vperm.xlu0 %1182, %v309
      %v1184 = vpop.permute.xlu0 %1183
      %vm1186 = vcmask 588800
      %v1188 = vsel %vm1186, %v311, 0
      %v1191 = vsel %vm1052, %v1044, 0
      %v1194 = vsel %vm1052, %v1045, 0
      %v1197 = vsel %vm1052, %v1046, 0
      %v1200 = vsel %vm1052, %v1047, 0
      %v1203 = vsel %vm1052, %v1048, 0
      %v1206 = vsel %vm1052, %v1049, 0
      %v1209 = vsel %vm1052, %v1050, 0
      %v1212 = vsel %vm1052, %v1051, 0
      %1214 = vmatprep.subr.bf16.mxu0 %v1059
      %1215 = vmatpush1.bf16.msra.mxu0 %v1055
      %1216 = vmatprep.subr.bf16.mxu0 %v1091
      %1217 = vmatpush1.bf16.msra.mxu0 %v1087
      %1218 = vmatprep.subr.bf16.mxu0 %v1123
      %1219 = vmatpush1.bf16.msra.mxu0 %v1119
      %1220 = vmatprep.subr.bf16.mxu0 %v1155
      %1221 = vmatpush1.bf16.msra.mxu0 %v1151
      %1222 = vmatprep.subr.bf16.mxu0 %v1194
      %1223 = vmatpush1.bf16.msra.mxu0 %v1191
      %1224 = vmatprep.subr.bf16.mxu0 0
      %1225 = vmatpush1.bf16.msra.mxu0 0
      %1226 = vmatprep.subr.bf16.mxu0 0
      %1227 = vmatpush1.bf16.msra.mxu0 0
      %1228 = vmatprep.subr.bf16.mxu0 0
      %1229 = vmatpush1.bf16.msra.mxu0 0
      %1230 = vmatprep.subr.bf16.mxu0 0
      %1231 = vmatpush1.bf16.msra.mxu0 0
      %1232 = vmatprep.subr.bf16.mxu0 0
      %1233 = vmatpush1.bf16.msra.mxu0 0
      %1234 = vmatprep.subr.bf16.mxu0 0
      %1235 = vmatpush1.bf16.msra.mxu0 0
      %1236 = vmatprep.subr.bf16.mxu0 0
      %1237 = vmatpush1.bf16.msra.mxu0 0
      %1238 = vmatprep.subr.bf16.mxu0 0
      %1239 = vmatpush1.bf16.msra.mxu0 0
      %1240 = vmatprep.subr.bf16.mxu0 0
      %1241 = vmatpush1.bf16.msra.mxu0 0
      %1242 = vmatprep.subr.bf16.mxu0 0
      %1243 = vmatpush1.bf16.msra.mxu0 0
      %1244 = vmatprep.subr.bf16.mxu0 0
      %1245 = vmatpush1.bf16.msra.mxu0 0
      %1246 = vmatprep.mubr.bf16.mxu0 0
      %1247 = vmatmul.mubr.bf16.gmra.mrb[0].mxu0 %v1188
      %v1248 = vpop.f32.mrb[0].mxu0
      %v1249 = vadd.f32 %v1184, %v1248
      %v1250 = vpop.f32.mrb[0].mxu0
      %v1251 = vadd.f32 %v1184, %v1250
      %v1252 = vpop.f32.mrb[0].mxu0
      %v1253 = vpop.f32.mrb[0].mxu0
      %1254 = vdwg.mxu0
      %1255 = vmatprep.subr.bf16.mxu0 %v1067
      %1256 = vmatpush1.bf16.msra.mxu0 %v1063
      %1257 = vmatprep.subr.bf16.mxu0 %v1099
      %1258 = vmatpush1.bf16.msra.mxu0 %v1095
      %1259 = vmatprep.subr.bf16.mxu0 %v1131
      %1260 = vmatpush1.bf16.msra.mxu0 %v1127
      %1261 = vmatprep.subr.bf16.mxu0 %v1163
      %1262 = vmatpush1.bf16.msra.mxu0 %v1159
      %1263 = vmatprep.subr.bf16.mxu0 %v1200
      %1264 = vmatpush1.bf16.msra.mxu0 %v1197
      %1265 = vmatprep.subr.bf16.mxu0 0
      %1266 = vmatpush1.bf16.msra.mxu0 0
      %1267 = vmatprep.subr.bf16.mxu0 0
      %1268 = vmatpush1.bf16.msra.mxu0 0
      %1269 = vmatprep.subr.bf16.mxu0 0
      %1270 = vmatpush1.bf16.msra.mxu0 0
      %1271 = vmatprep.subr.bf16.mxu0 0
      %1272 = vmatpush1.bf16.msra.mxu0 0
      %1273 = vmatprep.subr.bf16.mxu0 0
      %1274 = vmatpush1.bf16.msra.mxu0 0
      %1275 = vmatprep.subr.bf16.mxu0 0
      %1276 = vmatpush1.bf16.msra.mxu0 0
      %1277 = vmatprep.subr.bf16.mxu0 0
      %1278 = vmatpush1.bf16.msra.mxu0 0
      %1279 = vmatprep.subr.bf16.mxu0 0
      %1280 = vmatpush1.bf16.msra.mxu0 0
      %1281 = vmatprep.subr.bf16.mxu0 0
      %1282 = vmatpush1.bf16.msra.mxu0 0
      %1283 = vmatprep.subr.bf16.mxu0 0
      %1284 = vmatpush1.bf16.msra.mxu0 0
      %1285 = vmatprep.subr.bf16.mxu0 0
      %1286 = vmatpush1.bf16.msra.mxu0 0
      %1287 = vmatprep.mubr.bf16.mxu0 0
      %1288 = vmatmul.mubr.bf16.gmra.mrb[0].mxu0 %v1188
      %v1289 = vpop.f32.mrb[0].mxu0
      %v1290 = vadd.f32 %v1184, %v1289
      %v1291 = vpop.f32.mrb[0].mxu0
      %v1292 = vadd.f32 %v1184, %v1291
      %v1293 = vpop.f32.mrb[0].mxu0
      %v1294 = vpop.f32.mrb[0].mxu0
      %1295 = vdwg.mxu0
      %1296 = vmatprep.subr.bf16.mxu0 %v1075
      %1297 = vmatpush1.bf16.msra.mxu0 %v1071
      %1298 = vmatprep.subr.bf16.mxu0 %v1107
      %1299 = vmatpush1.bf16.msra.mxu0 %v1103
      %1300 = vmatprep.subr.bf16.mxu0 %v1139
      %1301 = vmatpush1.bf16.msra.mxu0 %v1135
      %1302 = vmatprep.subr.bf16.mxu0 %v1171
      %1303 = vmatpush1.bf16.msra.mxu0 %v1167
      %1304 = vmatprep.subr.bf16.mxu0 %v1206
      %1305 = vmatpush1.bf16.msra.mxu0 %v1203
      %1306 = vmatprep.subr.bf16.mxu0 0
      %1307 = vmatpush1.bf16.msra.mxu0 0
      %1308 = vmatprep.subr.bf16.mxu0 0
      %1309 = vmatpush1.bf16.msra.mxu0 0
      %1310 = vmatprep.subr.bf16.mxu0 0
      %1311 = vmatpush1.bf16.msra.mxu0 0
      %1312 = vmatprep.subr.bf16.mxu0 0
      %1313 = vmatpush1.bf16.msra.mxu0 0
      %1314 = vmatprep.subr.bf16.mxu0 0
      %1315 = vmatpush1.bf16.msra.mxu0 0
      %1316 = vmatprep.subr.bf16.mxu0 0
      %1317 = vmatpush1.bf16.msra.mxu0 0
      %1318 = vmatprep.subr.bf16.mxu0 0
      %1319 = vmatpush1.bf16.msra.mxu0 0
      %1320 = vmatprep.subr.bf16.mxu0 0
      %1321 = vmatpush1.bf16.msra.mxu0 0
      %1322 = vmatprep.subr.bf16.mxu0 0
      %1323 = vmatpush1.bf16.msra.mxu0 0
      %1324 = vmatprep.subr.bf16.mxu0 0
      %1325 = vmatpush1.bf16.msra.mxu0 0
      %1326 = vmatprep.subr.bf16.mxu0 0
      %1327 = vmatpush1.bf16.msra.mxu0 0
      %1328 = vmatprep.mubr.bf16.mxu0 0
      %1329 = vmatmul.mubr.bf16.gmra.mrb[0].mxu0 %v1188
      %v1330 = vpop.f32.mrb[0].mxu0
      %v1331 = vadd.f32 %v1184, %v1330
      %v1332 = vpop.f32.mrb[0].mxu0
      %v1333 = vadd.f32 %v1184, %v1332
      %v1334 = vpop.f32.mrb[0].mxu0
      %v1335 = vpop.f32.mrb[0].mxu0
      %1336 = vdwg.mxu0
      %1337 = vmatprep.subr.bf16.mxu0 %v1083
      %1338 = vmatpush1.bf16.msra.mxu0 %v1079
      %1339 = vmatprep.subr.bf16.mxu0 %v1115
      %1340 = vmatpush1.bf16.msra.mxu0 %v1111
      %1341 = vmatprep.subr.bf16.mxu0 %v1147
      %1342 = vmatpush1.bf16.msra.mxu0 %v1143
      %1343 = vmatprep.subr.bf16.mxu0 %v1179
      %1344 = vmatpush1.bf16.msra.mxu0 %v1175
      %1345 = vmatprep.subr.bf16.mxu0 %v1212
      %1346 = vmatpush1.bf16.msra.mxu0 %v1209
      %1347 = vmatprep.subr.bf16.mxu0 0
      %1348 = vmatpush1.bf16.msra.mxu0 0
      %1349 = vmatprep.subr.bf16.mxu0 0
      %1350 = vmatpush1.bf16.msra.mxu0 0
      %1351 = vmatprep.subr.bf16.mxu0 0
      %1352 = vmatpush1.bf16.msra.mxu0 0
      %1353 = vmatprep.subr.bf16.mxu0 0
      %1354 = vmatpush1.bf16.msra.mxu0 0
      %1355 = vmatprep.subr.bf16.mxu0 0
      %1356 = vmatpush1.bf16.msra.mxu0 0
      %1357 = vmatprep.subr.bf16.mxu0 0
      %1358 = vmatpush1.bf16.msra.mxu0 0
      %1359 = vmatprep.subr.bf16.mxu0 0
      %1360 = vmatpush1.bf16.msra.mxu0 0
      %1361 = vmatprep.subr.bf16.mxu0 0
      %1362 = vmatpush1.bf16.msra.mxu0 0
      %1363 = vmatprep.subr.bf16.mxu0 0
      %1364 = vmatpush1.bf16.msra.mxu0 0
      %1365 = vmatprep.subr.bf16.mxu0 0
      %1366 = vmatpush1.bf16.msra.mxu0 0
      %1367 = vmatprep.subr.bf16.mxu0 0
      %1368 = vmatpush1.bf16.msra.mxu0 0
      %1369 = vmatprep.mubr.bf16.mxu0 0
      %1370 = vmatmul.mubr.bf16.gmra.mrb[0].mxu0 %v1188
      %v1371 = vpop.f32.mrb[0].mxu0
      %v1372 = vadd.f32 %v1184, %v1371
      %v1373 = vpop.f32.mrb[0].mxu0
      %v1374 = vadd.f32 %v1184, %v1373
      %v1375 = vpop.f32.mrb[0].mxu0
      %v1376 = vpop.f32.mrb[0].mxu0
      %1377 = vdwg.mxu0
      %v1378 = vld [vmem:[%s3] sm:$0xff]
      %v1379 = vadd.f32 %v1249, %v1251
      %v1380 = vadd.f32 %v1379, %v1290
      %v1381 = vadd.f32 %v1380, %v1292
      %v1382 = vadd.f32 %v1381, %v1331
      %v1383 = vadd.f32 %v1382, %v1333
      %v1384 = vadd.f32 %v1383, %v1372
      %v1385 = vadd.f32 %v1384, %v1374
      %1386 = vadd.xlane.f32.xlu0 %v1385
      %v1387 = vpop.xlane.xlu0 %1386
      %v1388 = vrot.slane %v1387, 4
      %v1389 = vadd.f32 %v1387, %v1388
      %v1390 = vrot.slane %v1389, 2
      %v1391 = vadd.f32 %v1389, %v1390
      %v1392 = vrot.slane %v1391, 1
      %v1393 = vadd.f32 %v1391, %v1392
      %s1394 = vtos %v1393
      %v1395 = vmul.f32 %v1249, %v1249
      %v1396 = vmul.f32 %v1251, %v1251
      %v1397 = vmul.f32 %v1290, %v1290
      %v1398 = vmul.f32 %v1292, %v1292
      %v1399 = vmul.f32 %v1331, %v1331
      %v1400 = vmul.f32 %v1333, %v1333
      %v1401 = vmul.f32 %v1372, %v1372
      %v1402 = vmul.f32 %v1374, %v1374
      %v1403 = vadd.f32 %v1395, %v1396
      %v1404 = vadd.f32 %v1403, %v1397
      %v1405 = vadd.f32 %v1404, %v1398
      %v1406 = vadd.f32 %v1405, %v1399
      %v1407 = vadd.f32 %v1406, %v1400
      %v1408 = vadd.f32 %v1407, %v1401
      %v1409 = vadd.f32 %v1408, %v1402
      %1410 = vadd.xlane.f32.xlu0 %v1409
      %v1411 = vpop.xlane.xlu0 %1410
      %v1412 = vrot.slane %v1411, 4
      %v1413 = vadd.f32 %v1411, %v1412
      %v1414 = vrot.slane %v1413, 2
      %v1415 = vadd.f32 %v1413, %v1414
      %v1416 = vrot.slane %v1415, 1
      %v1417 = vadd.f32 %v1415, %v1416
      %s1418 = vtos %v1417
      %v1419 = vrcp.pop 8192.0
      %s1420 = vtos %v1419
      %s1421 = smul.f32 %s1394, %s1420
      %v1422 = vrcp.pop 8192.0
      %s1423 = vtos %v1422
      %s1424 = smul.f32 %s1418, %s1423
      %s1425 = smul.f32 %s1421, %s1421
      %s1426 = ssub.f32 %s1424, %s1425
      %s1427 = sadd.f32 %s1426, 1e-05
      %v1428 = vstv %s1427
      %v1429 = vrsqrt.pop %v1428
      %s1430 = vtos %v1429
      %v1431 = vstv %s1430
      %v1432 = vmul.f32 %v1378, %v1431
      %v1433 = vstv %s1421
      %v1434 = vmul.f32 %v1433, %v1432
      %1436 = vrot.lane.b32.xlu0 %v1434, 1
      %v1437 = vpop.permute.xlu0 %1436
      %v1439 = vsub.f32 %v1378, %v1437
      %1441 = vset.pattern.permute.xlu0 4
      %1442 = vperm.xlu0 %1441, %v1432
      %v1443 = vpop.permute.xlu0 %1442
      %v1445 = vmul.f32 %v1249, %v1443
      %v1446 = vmul.f32 %v1251, %v1443
      %v1447 = vmul.f32 %v1290, %v1443
      %v1448 = vmul.f32 %v1292, %v1443
      %v1449 = vmul.f32 %v1331, %v1443
      %v1450 = vmul.f32 %v1333, %v1443
      %v1451 = vmul.f32 %v1372, %v1443
      %v1452 = vmul.f32 %v1374, %v1443
      %1454 = vset.pattern.permute.xlu0 5
      %1455 = vperm.xlu0 %1454, %v1439
      %v1456 = vpop.permute.xlu0 %1455
      %v1458 = vadd.f32 %v1445, %v1456
      %v1459 = vadd.f32 %v1446, %v1456
      %v1460 = vadd.f32 %v1447, %v1456
      %v1461 = vadd.f32 %v1448, %v1456
      %v1462 = vadd.f32 %v1449, %v1456
      %v1463 = vadd.f32 %v1450, %v1456
      %v1464 = vadd.f32 %v1451, %v1456
      %v1465 = vadd.f32 %v1452, %v1456
      %v1466 = vadd.f32 %v1458, 3.0
      %v1467 = vadd.f32 %v1459, 3.0
      %v1468 = vadd.f32 %v1460, 3.0
      %v1469 = vadd.f32 %v1461, 3.0
      %v1470 = vadd.f32 %v1462, 3.0
      %v1471 = vadd.f32 %v1463, 3.0
      %v1472 = vadd.f32 %v1464, 3.0
      %v1473 = vadd.f32 %v1465, 3.0
      %v1474 = vmax.f32 %v1466, 0.0
      %v1475 = vmax.f32 %v1467, 0.0
      %v1476 = vmax.f32 %v1468, 0.0
      %v1477 = vmax.f32 %v1469, 0.0
      %v1478 = vmax.f32 %v1470, 0.0
      %v1479 = vmax.f32 %v1471, 0.0
      %v1480 = vmax.f32 %v1472, 0.0
      %v1481 = vmax.f32 %v1473, 0.0
      %v1482 = vmin.f32 %v1474, 6.0
      %v1483 = vmin.f32 %v1475, 6.0
      %v1484 = vmin.f32 %v1476, 6.0
      %v1485 = vmin.f32 %v1477, 6.0
      %v1486 = vmin.f32 %v1478, 6.0
      %v1487 = vmin.f32 %v1479, 6.0
      %v1488 = vmin.f32 %v1480, 6.0
      %v1489 = vmin.f32 %v1481, 6.0
      %v1490 = vmul.f32 %v1458, %v1482
      %v1491 = vmul.f32 %v1459, %v1483
      %v1492 = vmul.f32 %v1460, %v1484
      %v1493 = vmul.f32 %v1461, %v1485
      %v1494 = vmul.f32 %v1462, %v1486
      %v1495 = vmul.f32 %v1463, %v1487
      %v1496 = vmul.f32 %v1464, %v1488
      %v1497 = vmul.f32 %v1465, %v1489
      %v1498 = vmul.f32 %v1490, 0.16666667
      %v1499 = vmul.f32 %v1491, 0.16666667
      %v1500 = vmul.f32 %v1492, 0.16666667
      %v1501 = vmul.f32 %v1493, 0.16666667
      %v1502 = vmul.f32 %v1494, 0.16666667
      %v1503 = vmul.f32 %v1495, 0.16666667
      %v1504 = vmul.f32 %v1496, 0.16666667
      %v1505 = vmul.f32 %v1497, 0.16666667
      %v1506 = vld [vmem:[%s5] sm:$0xf]
      %v1507 = vpack.c.bf16 %v1498, %v1498
      %v1508 = vpack.c.bf16 %v1499, %v1499
      %v1509 = vpack.c.bf16 %v1500, %v1500
      %v1510 = vpack.c.bf16 %v1501, %v1501
      %v1511 = vpack.c.bf16 %v1502, %v1502
      %v1512 = vpack.c.bf16 %v1503, %v1503
      %v1513 = vpack.c.bf16 %v1504, %v1504
      %v1514 = vpack.c.bf16 %v1505, %v1505
      %1523 = vrot.lane.b32.xlu0 %v1507, 33
      %v1524 = vpop.permute.xlu0 %1523
      %1525 = vrot.lane.b32.xlu0 %v1508, 33
      %v1526 = vpop.permute.xlu0 %1525
      %1527 = vrot.lane.b32.xlu0 %v1509, 33
      %v1528 = vpop.permute.xlu0 %1527
      %1529 = vrot.lane.b32.xlu0 %v1510, 33
      %v1530 = vpop.permute.xlu0 %1529
      %1531 = vrot.lane.b32.xlu0 %v1511, 33
      %v1532 = vpop.permute.xlu0 %1531
      %1533 = vrot.lane.b32.xlu0 %v1512, 33
      %v1534 = vpop.permute.xlu0 %1533
      %1535 = vrot.lane.b32.xlu0 %v1513, 33
      %v1536 = vpop.permute.xlu0 %1535
      %1537 = vrot.lane.b32.xlu0 %v1514, 33
      %v1538 = vpop.permute.xlu0 %1537
      %v1539 = vsel %vm344, %v1524, %v1526
      %v1540 = vsel %vm344, %v1526, %v1528
      %v1541 = vsel %vm344, %v1528, %v1530
      %v1542 = vsel %vm344, %v1530, %v1532
      %v1543 = vsel %vm344, %v1532, %v1534
      %v1544 = vsel %vm344, %v1534, %v1536
      %v1545 = vsel %vm344, %v1536, %v1538
      %v1554 = vsel %vm359, 0, %v1524
      %v1557 = vsel %vm359, %v1538, 0
      %v1559 = vmul.bf16 %v1554, %v423
      %v1560 = vmul.bf16 %v1539, %v430
      %v1561 = vmul.bf16 %v1540, %v437
      %v1562 = vmul.bf16 %v1541, %v444
      %v1563 = vmul.bf16 %v1542, %v451
      %v1564 = vmul.bf16 %v1543, %v458
      %v1565 = vmul.bf16 %v1544, %v465
      %v1566 = vmul.bf16 %v1545, %v472
      %v1567 = vmul.bf16 %v1554, %v546
      %v1568 = vmul.bf16 %v1539, %v562
      %v1569 = vmul.bf16 %v1540, %v563
      %v1570 = vmul.bf16 %v1541, %v564
      %v1571 = vmul.bf16 %v1542, %v565
      %v1572 = vmul.bf16 %v1543, %v566
      %v1573 = vmul.bf16 %v1544, %v567
      %v1574 = vmul.bf16 %v1545, %v568
      %v1575 = vmul.bf16 %v1557, %v560
      %v1576 = vmul.bf16 %v1554, %v596
      %v1577 = vmul.bf16 %v1539, %v612
      %v1578 = vmul.bf16 %v1540, %v613
      %v1579 = vmul.bf16 %v1541, %v614
      %v1580 = vmul.bf16 %v1542, %v615
      %v1581 = vmul.bf16 %v1543, %v616
      %v1582 = vmul.bf16 %v1544, %v617
      %v1583 = vmul.bf16 %v1545, %v618
      %v1584 = vmul.bf16 %v1557, %v610
      %v1585 = vmul.bf16 %v1554, %v638
      %v1586 = vmul.bf16 %v1539, %v654
      %v1587 = vmul.bf16 %v1540, %v655
      %v1588 = vmul.bf16 %v1541, %v656
      %v1589 = vmul.bf16 %v1542, %v657
      %v1590 = vmul.bf16 %v1543, %v658
      %v1591 = vmul.bf16 %v1544, %v659
      %v1592 = vmul.bf16 %v1545, %v660
      %v1593 = vmul.bf16 %v1557, %v652
      %v1594 = vmul.bf16 %v1554, %v680
      %v1595 = vmul.bf16 %v1539, %v696
      %v1596 = vmul.bf16 %v1540, %v697
      %v1597 = vmul.bf16 %v1541, %v698
      %v1598 = vmul.bf16 %v1542, %v699
      %v1599 = vmul.bf16 %v1543, %v700
      %v1600 = vmul.bf16 %v1544, %v701
      %v1601 = vmul.bf16 %v1545, %v702
      %v1602 = vmul.bf16 %v1557, %v694
      %v1603 = vmul.bf16 %v1554, %v722
      %v1604 = vmul.bf16 %v1539, %v738
      %v1605 = vmul.bf16 %v1540, %v739
      %v1606 = vmul.bf16 %v1541, %v740
      %v1607 = vmul.bf16 %v1542, %v741
      %v1608 = vmul.bf16 %v1543, %v742
      %v1609 = vmul.bf16 %v1544, %v743
      %v1610 = vmul.bf16 %v1545, %v744
      %v1611 = vmul.bf16 %v1557, %v736
      %v1614 = vrot.slane %v1554, 4
      %v1615 = vrot.slane %v1539, 4
      %v1616 = vrot.slane %v1540, 4
      %v1617 = vrot.slane %v1541, 4
      %v1618 = vrot.slane %v1542, 4
      %v1619 = vrot.slane %v1543, 4
      %v1620 = vrot.slane %v1544, 4
      %v1621 = vrot.slane %v1545, 4
      %v1622 = vrot.slane %v1557, 4
      %1623 = vrot.lane.b32.xlu0 %v1614, 127
      %v1624 = vpop.permute.xlu0 %1623
      %1625 = vrot.lane.b32.xlu0 %v1615, 127
      %v1626 = vpop.permute.xlu0 %1625
      %1627 = vrot.lane.b32.xlu0 %v1616, 127
      %v1628 = vpop.permute.xlu0 %1627
      %1629 = vrot.lane.b32.xlu0 %v1617, 127
      %v1630 = vpop.permute.xlu0 %1629
      %1631 = vrot.lane.b32.xlu0 %v1618, 127
      %v1632 = vpop.permute.xlu0 %1631
      %1633 = vrot.lane.b32.xlu0 %v1619, 127
      %v1634 = vpop.permute.xlu0 %1633
      %1635 = vrot.lane.b32.xlu0 %v1620, 127
      %v1636 = vpop.permute.xlu0 %1635
      %1637 = vrot.lane.b32.xlu0 %v1621, 127
      %v1638 = vpop.permute.xlu0 %1637
      %1639 = vrot.lane.b32.xlu0 %v1622, 127
      %v1640 = vpop.permute.xlu0 %1639
      %v1641 = vsel %vm792, %v1624, %v1626
      %v1642 = vsel %vm792, %v1626, %v1628
      %v1643 = vsel %vm792, %v1628, %v1630
      %v1644 = vsel %vm792, %v1630, %v1632
      %v1645 = vsel %vm792, %v1632, %v1634
      %v1646 = vsel %vm792, %v1634, %v1636
      %v1647 = vsel %vm792, %v1636, %v1638
      %v1648 = vsel %vm792, %v1638, %v1640
      %1658 = vrot.lane.b32.xlu0 %v1567, 126
      %v1659 = vpop.permute.xlu0 %1658
      %1660 = vrot.lane.b32.xlu0 %v1568, 126
      %v1661 = vpop.permute.xlu0 %1660
      %1662 = vrot.lane.b32.xlu0 %v1569, 126
      %v1663 = vpop.permute.xlu0 %1662
      %1664 = vrot.lane.b32.xlu0 %v1570, 126
      %v1665 = vpop.permute.xlu0 %1664
      %1666 = vrot.lane.b32.xlu0 %v1571, 126
      %v1667 = vpop.permute.xlu0 %1666
      %1668 = vrot.lane.b32.xlu0 %v1572, 126
      %v1669 = vpop.permute.xlu0 %1668
      %1670 = vrot.lane.b32.xlu0 %v1573, 126
      %v1671 = vpop.permute.xlu0 %1670
      %1672 = vrot.lane.b32.xlu0 %v1574, 126
      %v1673 = vpop.permute.xlu0 %1672
      %1674 = vrot.lane.b32.xlu0 %v1575, 126
      %v1675 = vpop.permute.xlu0 %1674
      %v1676 = vsel %vm828, %v1659, %v1661
      %v1677 = vsel %vm828, %v1661, %v1663
      %v1678 = vsel %vm828, %v1663, %v1665
      %v1679 = vsel %vm828, %v1665, %v1667
      %v1680 = vsel %vm828, %v1667, %v1669
      %v1681 = vsel %vm828, %v1669, %v1671
      %v1682 = vsel %vm828, %v1671, %v1673
      %v1683 = vsel %vm828, %v1673, %v1675
      %v1693 = vrot.slane %v1576, 4
      %v1694 = vrot.slane %v1577, 4
      %v1695 = vrot.slane %v1578, 4
      %v1696 = vrot.slane %v1579, 4
      %v1697 = vrot.slane %v1580, 4
      %v1698 = vrot.slane %v1581, 4
      %v1699 = vrot.slane %v1582, 4
      %v1700 = vrot.slane %v1583, 4
      %v1701 = vrot.slane %v1584, 4
      %1702 = vrot.lane.b32.xlu0 %v1693, 96
      %v1703 = vpop.permute.xlu0 %1702
      %1704 = vrot.lane.b32.xlu0 %v1694, 96
      %v1705 = vpop.permute.xlu0 %1704
      %1706 = vrot.lane.b32.xlu0 %v1695, 96
      %v1707 = vpop.permute.xlu0 %1706
      %1708 = vrot.lane.b32.xlu0 %v1696, 96
      %v1709 = vpop.permute.xlu0 %1708
      %1710 = vrot.lane.b32.xlu0 %v1697, 96
      %v1711 = vpop.permute.xlu0 %1710
      %1712 = vrot.lane.b32.xlu0 %v1698, 96
      %v1713 = vpop.permute.xlu0 %1712
      %1714 = vrot.lane.b32.xlu0 %v1699, 96
      %v1715 = vpop.permute.xlu0 %1714
      %1716 = vrot.lane.b32.xlu0 %v1700, 96
      %v1717 = vpop.permute.xlu0 %1716
      %1718 = vrot.lane.b32.xlu0 %v1701, 96
      %v1719 = vpop.permute.xlu0 %1718
      %v1720 = vsel %vm873, %v1703, %v1705
      %v1721 = vsel %vm873, %v1705, %v1707
      %v1722 = vsel %vm873, %v1707, %v1709
      %v1723 = vsel %vm873, %v1709, %v1711
      %v1724 = vsel %vm873, %v1711, %v1713
      %v1725 = vsel %vm873, %v1713, %v1715
      %v1726 = vsel %vm873, %v1715, %v1717
      %v1727 = vsel %vm873, %v1717, %v1719
      %1728 = vrot.lane.b32.xlu0 %v1554, 95
      %v1729 = vpop.permute.xlu0 %1728
      %1730 = vrot.lane.b32.xlu0 %v1539, 95
      %v1731 = vpop.permute.xlu0 %1730
      %1732 = vrot.lane.b32.xlu0 %v1540, 95
      %v1733 = vpop.permute.xlu0 %1732
      %1734 = vrot.lane.b32.xlu0 %v1541, 95
      %v1735 = vpop.permute.xlu0 %1734
      %1736 = vrot.lane.b32.xlu0 %v1542, 95
      %v1737 = vpop.permute.xlu0 %1736
      %1738 = vrot.lane.b32.xlu0 %v1543, 95
      %v1739 = vpop.permute.xlu0 %1738
      %1740 = vrot.lane.b32.xlu0 %v1544, 95
      %v1741 = vpop.permute.xlu0 %1740
      %1742 = vrot.lane.b32.xlu0 %v1545, 95
      %v1743 = vpop.permute.xlu0 %1742
      %1744 = vrot.lane.b32.xlu0 %v1557, 95
      %v1745 = vpop.permute.xlu0 %1744
      %v1746 = vsel %vm900, %v1729, %v1731
      %v1747 = vsel %vm900, %v1731, %v1733
      %v1748 = vsel %vm900, %v1733, %v1735
      %v1749 = vsel %vm900, %v1735, %v1737
      %v1750 = vsel %vm900, %v1737, %v1739
      %v1751 = vsel %vm900, %v1739, %v1741
      %v1752 = vsel %vm900, %v1741, %v1743
      %v1753 = vsel %vm900, %v1743, %v1745
      %v1763 = vrot.slane %v1585, 4
      %v1764 = vrot.slane %v1586, 4
      %v1765 = vrot.slane %v1587, 4
      %v1766 = vrot.slane %v1588, 4
      %v1767 = vrot.slane %v1589, 4
      %v1768 = vrot.slane %v1590, 4
      %v1769 = vrot.slane %v1591, 4
      %v1770 = vrot.slane %v1592, 4
      %v1771 = vrot.slane %v1593, 4
      %1772 = vrot.lane.b32.xlu0 %v1763, 94
      %v1773 = vpop.permute.xlu0 %1772
      %1774 = vrot.lane.b32.xlu0 %v1764, 94
      %v1775 = vpop.permute.xlu0 %1774
      %1776 = vrot.lane.b32.xlu0 %v1765, 94
      %v1777 = vpop.permute.xlu0 %1776
      %1778 = vrot.lane.b32.xlu0 %v1766, 94
      %v1779 = vpop.permute.xlu0 %1778
      %1780 = vrot.lane.b32.xlu0 %v1767, 94
      %v1781 = vpop.permute.xlu0 %1780
      %1782 = vrot.lane.b32.xlu0 %v1768, 94
      %v1783 = vpop.permute.xlu0 %1782
      %1784 = vrot.lane.b32.xlu0 %v1769, 94
      %v1785 = vpop.permute.xlu0 %1784
      %1786 = vrot.lane.b32.xlu0 %v1770, 94
      %v1787 = vpop.permute.xlu0 %1786
      %1788 = vrot.lane.b32.xlu0 %v1771, 94
      %v1789 = vpop.permute.xlu0 %1788
      %v1790 = vsel %vm945, %v1773, %v1775
      %v1791 = vsel %vm945, %v1775, %v1777
      %v1792 = vsel %vm945, %v1777, %v1779
      %v1793 = vsel %vm945, %v1779, %v1781
      %v1794 = vsel %vm945, %v1781, %v1783
      %v1795 = vsel %vm945, %v1783, %v1785
      %v1796 = vsel %vm945, %v1785, %v1787
      %v1797 = vsel %vm945, %v1787, %v1789
      %1807 = vrot.lane.b32.xlu0 %v1594, 64
      %v1808 = vpop.permute.xlu0 %1807
      %1809 = vrot.lane.b32.xlu0 %v1595, 64
      %v1810 = vpop.permute.xlu0 %1809
      %1811 = vrot.lane.b32.xlu0 %v1596, 64
      %v1812 = vpop.permute.xlu0 %1811
      %1813 = vrot.lane.b32.xlu0 %v1597, 64
      %v1814 = vpop.permute.xlu0 %1813
      %1815 = vrot.lane.b32.xlu0 %v1598, 64
      %v1816 = vpop.permute.xlu0 %1815
      %1817 = vrot.lane.b32.xlu0 %v1599, 64
      %v1818 = vpop.permute.xlu0 %1817
      %1819 = vrot.lane.b32.xlu0 %v1600, 64
      %v1820 = vpop.permute.xlu0 %1819
      %1821 = vrot.lane.b32.xlu0 %v1601, 64
      %v1822 = vpop.permute.xlu0 %1821
      %1823 = vrot.lane.b32.xlu0 %v1602, 64
      %v1824 = vpop.permute.xlu0 %1823
      %v1825 = vsel %vm695, %v1808, %v1810
      %v1826 = vsel %vm695, %v1810, %v1812
      %v1827 = vsel %vm695, %v1812, %v1814
      %v1828 = vsel %vm695, %v1814, %v1816
      %v1829 = vsel %vm695, %v1816, %v1818
      %v1830 = vsel %vm695, %v1818, %v1820
      %v1831 = vsel %vm695, %v1820, %v1822
      %v1832 = vsel %vm695, %v1822, %v1824
      %1833 = vrot.lane.b32.xlu0 %v1614, 63
      %v1834 = vpop.permute.xlu0 %1833
      %1835 = vrot.lane.b32.xlu0 %v1615, 63
      %v1836 = vpop.permute.xlu0 %1835
      %1837 = vrot.lane.b32.xlu0 %v1616, 63
      %v1838 = vpop.permute.xlu0 %1837
      %1839 = vrot.lane.b32.xlu0 %v1617, 63
      %v1840 = vpop.permute.xlu0 %1839
      %1841 = vrot.lane.b32.xlu0 %v1618, 63
      %v1842 = vpop.permute.xlu0 %1841
      %1843 = vrot.lane.b32.xlu0 %v1619, 63
      %v1844 = vpop.permute.xlu0 %1843
      %1845 = vrot.lane.b32.xlu0 %v1620, 63
      %v1846 = vpop.permute.xlu0 %1845
      %1847 = vrot.lane.b32.xlu0 %v1621, 63
      %v1848 = vpop.permute.xlu0 %1847
      %1849 = vrot.lane.b32.xlu0 %v1622, 63
      %v1850 = vpop.permute.xlu0 %1849
      %v1851 = vsel %vm1007, %v1834, %v1836
      %v1852 = vsel %vm1007, %v1836, %v1838
      %v1853 = vsel %vm1007, %v1838, %v1840
      %v1854 = vsel %vm1007, %v1840, %v1842
      %v1855 = vsel %vm1007, %v1842, %v1844
      %v1856 = vsel %vm1007, %v1844, %v1846
      %v1857 = vsel %vm1007, %v1846, %v1848
      %v1858 = vsel %vm1007, %v1848, %v1850
      %1868 = vrot.lane.b32.xlu0 %v1603, 62
      %v1869 = vpop.permute.xlu0 %1868
      %1870 = vrot.lane.b32.xlu0 %v1604, 62
      %v1871 = vpop.permute.xlu0 %1870
      %1872 = vrot.lane.b32.xlu0 %v1605, 62
      %v1873 = vpop.permute.xlu0 %1872
      %1874 = vrot.lane.b32.xlu0 %v1606, 62
      %v1875 = vpop.permute.xlu0 %1874
      %1876 = vrot.lane.b32.xlu0 %v1607, 62
      %v1877 = vpop.permute.xlu0 %1876
      %1878 = vrot.lane.b32.xlu0 %v1608, 62
      %v1879 = vpop.permute.xlu0 %1878
      %1880 = vrot.lane.b32.xlu0 %v1609, 62
      %v1881 = vpop.permute.xlu0 %1880
      %1882 = vrot.lane.b32.xlu0 %v1610, 62
      %v1883 = vpop.permute.xlu0 %1882
      %1884 = vrot.lane.b32.xlu0 %v1611, 62
      %v1885 = vpop.permute.xlu0 %1884
      %v1886 = vsel %vm1043, %v1869, %v1871
      %v1887 = vsel %vm1043, %v1871, %v1873
      %v1888 = vsel %vm1043, %v1873, %v1875
      %v1889 = vsel %vm1043, %v1875, %v1877
      %v1890 = vsel %vm1043, %v1877, %v1879
      %v1891 = vsel %vm1043, %v1879, %v1881
      %v1892 = vsel %vm1043, %v1881, %v1883
      %v1893 = vsel %vm1043, %v1883, %v1885
      %v1896 = vsel %vm1052, %v1559, %v1641
      %v1900 = vsel %vm1052, %v1560, %v1642
      %v1904 = vsel %vm1052, %v1561, %v1643
      %v1908 = vsel %vm1052, %v1562, %v1644
      %v1912 = vsel %vm1052, %v1563, %v1645
      %v1916 = vsel %vm1052, %v1564, %v1646
      %v1920 = vsel %vm1052, %v1565, %v1647
      %v1924 = vsel %vm1052, %v1566, %v1648
      %v1928 = vsel %vm1052, %v1676, %v1720
      %v1932 = vsel %vm1052, %v1677, %v1721
      %v1936 = vsel %vm1052, %v1678, %v1722
      %v1940 = vsel %vm1052, %v1679, %v1723
      %v1944 = vsel %vm1052, %v1680, %v1724
      %v1948 = vsel %vm1052, %v1681, %v1725
      %v1952 = vsel %vm1052, %v1682, %v1726
      %v1956 = vsel %vm1052, %v1683, %v1727
      %v1960 = vsel %vm1052, %v1746, %v1790
      %v1964 = vsel %vm1052, %v1747, %v1791
      %v1968 = vsel %vm1052, %v1748, %v1792
      %v1972 = vsel %vm1052, %v1749, %v1793
      %v1976 = vsel %vm1052, %v1750, %v1794
      %v1980 = vsel %vm1052, %v1751, %v1795
      %v1984 = vsel %vm1052, %v1752, %v1796
      %v1988 = vsel %vm1052, %v1753, %v1797
      %v1992 = vsel %vm1052, %v1825, %v1851
      %v1996 = vsel %vm1052, %v1826, %v1852
      %v2000 = vsel %vm1052, %v1827, %v1853
      %v2004 = vsel %vm1052, %v1828, %v1854
      %v2008 = vsel %vm1052, %v1829, %v1855
      %v2012 = vsel %vm1052, %v1830, %v1856
      %v2016 = vsel %vm1052, %v1831, %v1857
      %v2020 = vsel %vm1052, %v1832, %v1858
      %2022 = vset.pattern.permute.xlu0 10
      %2023 = vperm.xlu0 %2022, %v309
      %v2024 = vpop.permute.xlu0 %2023
      %v2027 = vsel %vm1186, %v1506, 0
      %v2030 = vsel %vm1052, %v1886, 0
      %v2033 = vsel %vm1052, %v1887, 0
      %v2036 = vsel %vm1052, %v1888, 0
      %v2039 = vsel %vm1052, %v1889, 0
      %v2042 = vsel %vm1052, %v1890, 0
      %v2045 = vsel %vm1052, %v1891, 0
      %v2048 = vsel %vm1052, %v1892, 0
      %v2051 = vsel %vm1052, %v1893, 0
      %2053 = vmatprep.subr.bf16.mxu0 %v1900
      %2054 = vmatpush1.bf16.msra.mxu0 %v1896
      %2055 = vmatprep.subr.bf16.mxu0 %v1932
      %2056 = vmatpush1.bf16.msra.mxu0 %v1928
      %2057 = vmatprep.subr.bf16.mxu0 %v1964
      %2058 = vmatpush1.bf16.msra.mxu0 %v1960
      %2059 = vmatprep.subr.bf16.mxu0 %v1996
      %2060 = vmatpush1.bf16.msra.mxu0 %v1992
      %2061 = vmatprep.subr.bf16.mxu0 %v2033
      %2062 = vmatpush1.bf16.msra.mxu0 %v2030
      %2063 = vmatprep.subr.bf16.mxu0 0
      %2064 = vmatpush1.bf16.msra.mxu0 0
      %2065 = vmatprep.subr.bf16.mxu0 0
      %2066 = vmatpush1.bf16.msra.mxu0 0
      %2067 = vmatprep.subr.bf16.mxu0 0
      %2068 = vmatpush1.bf16.msra.mxu0 0
      %2069 = vmatprep.subr.bf16.mxu0 0
      %2070 = vmatpush1.bf16.msra.mxu0 0
      %2071 = vmatprep.subr.bf16.mxu0 0
      %2072 = vmatpush1.bf16.msra.mxu0 0
      %2073 = vmatprep.subr.bf16.mxu0 0
      %2074 = vmatpush1.bf16.msra.mxu0 0
      %2075 = vmatprep.subr.bf16.mxu0 0
      %2076 = vmatpush1.bf16.msra.mxu0 0
      %2077 = vmatprep.subr.bf16.mxu0 0
      %2078 = vmatpush1.bf16.msra.mxu0 0
      %2079 = vmatprep.subr.bf16.mxu0 0
      %2080 = vmatpush1.bf16.msra.mxu0 0
      %2081 = vmatprep.subr.bf16.mxu0 0
      %2082 = vmatpush1.bf16.msra.mxu0 0
      %2083 = vmatprep.subr.bf16.mxu0 0
      %2084 = vmatpush1.bf16.msra.mxu0 0
      %2085 = vmatprep.mubr.bf16.mxu0 0
      %2086 = vmatmul.mubr.bf16.gmra.mrb[0].mxu0 %v2027
      %v2087 = vpop.f32.mrb[0].mxu0
      %v2088 = vadd.f32 %v2024, %v2087
      %v2089 = vpop.f32.mrb[0].mxu0
      %v2090 = vadd.f32 %v2024, %v2089
      %v2091 = vpop.f32.mrb[0].mxu0
      %v2092 = vpop.f32.mrb[0].mxu0
      %2093 = vdwg.mxu0
      %2094 = vmatprep.subr.bf16.mxu0 %v1908
      %2095 = vmatpush1.bf16.msra.mxu0 %v1904
      %2096 = vmatprep.subr.bf16.mxu0 %v1940
      %2097 = vmatpush1.bf16.msra.mxu0 %v1936
      %2098 = vmatprep.subr.bf16.mxu0 %v1972
      %2099 = vmatpush1.bf16.msra.mxu0 %v1968
      %2100 = vmatprep.subr.bf16.mxu0 %v2004
      %2101 = vmatpush1.bf16.msra.mxu0 %v2000
      %2102 = vmatprep.subr.bf16.mxu0 %v2039
      %2103 = vmatpush1.bf16.msra.mxu0 %v2036
      %2104 = vmatprep.subr.bf16.mxu0 0
      %2105 = vmatpush1.bf16.msra.mxu0 0
      %2106 = vmatprep.subr.bf16.mxu0 0
      %2107 = vmatpush1.bf16.msra.mxu0 0
      %2108 = vmatprep.subr.bf16.mxu0 0
      %2109 = vmatpush1.bf16.msra.mxu0 0
      %2110 = vmatprep.subr.bf16.mxu0 0
      %2111 = vmatpush1.bf16.msra.mxu0 0
      %2112 = vmatprep.subr.bf16.mxu0 0
      %2113 = vmatpush1.bf16.msra.mxu0 0
      %2114 = vmatprep.subr.bf16.mxu0 0
      %2115 = vmatpush1.bf16.msra.mxu0 0
      %2116 = vmatprep.subr.bf16.mxu0 0
      %2117 = vmatpush1.bf16.msra.mxu0 0
      %2118 = vmatprep.subr.bf16.mxu0 0
      %2119 = vmatpush1.bf16.msra.mxu0 0
      %2120 = vmatprep.subr.bf16.mxu0 0
      %2121 = vmatpush1.bf16.msra.mxu0 0
      %2122 = vmatprep.subr.bf16.mxu0 0
      %2123 = vmatpush1.bf16.msra.mxu0 0
      %2124 = vmatprep.subr.bf16.mxu0 0
      %2125 = vmatpush1.bf16.msra.mxu0 0
      %2126 = vmatprep.mubr.bf16.mxu0 0
      %2127 = vmatmul.mubr.bf16.gmra.mrb[0].mxu0 %v2027
      %v2128 = vpop.f32.mrb[0].mxu0
      %v2129 = vadd.f32 %v2024, %v2128
      %v2130 = vpop.f32.mrb[0].mxu0
      %v2131 = vadd.f32 %v2024, %v2130
      %v2132 = vpop.f32.mrb[0].mxu0
      %v2133 = vpop.f32.mrb[0].mxu0
      %2134 = vdwg.mxu0
      %2135 = vmatprep.subr.bf16.mxu0 %v1916
      %2136 = vmatpush1.bf16.msra.mxu0 %v1912
      %2137 = vmatprep.subr.bf16.mxu0 %v1948
      %2138 = vmatpush1.bf16.msra.mxu0 %v1944
      %2139 = vmatprep.subr.bf16.mxu0 %v1980
      %2140 = vmatpush1.bf16.msra.mxu0 %v1976
      %2141 = vmatprep.subr.bf16.mxu0 %v2012
      %2142 = vmatpush1.bf16.msra.mxu0 %v2008
      %2143 = vmatprep.subr.bf16.mxu0 %v2045
      %2144 = vmatpush1.bf16.msra.mxu0 %v2042
      %2145 = vmatprep.subr.bf16.mxu0 0
      %2146 = vmatpush1.bf16.msra.mxu0 0
      %2147 = vmatprep.subr.bf16.mxu0 0
      %2148 = vmatpush1.bf16.msra.mxu0 0
      %2149 = vmatprep.subr.bf16.mxu0 0
      %2150 = vmatpush1.bf16.msra.mxu0 0
      %2151 = vmatprep.subr.bf16.mxu0 0
      %2152 = vmatpush1.bf16.msra.mxu0 0
      %2153 = vmatprep.subr.bf16.mxu0 0
      %2154 = vmatpush1.bf16.msra.mxu0 0
      %2155 = vmatprep.subr.bf16.mxu0 0
      %2156 = vmatpush1.bf16.msra.mxu0 0
      %2157 = vmatprep.subr.bf16.mxu0 0
      %2158 = vmatpush1.bf16.msra.mxu0 0
      %2159 = vmatprep.subr.bf16.mxu0 0
      %2160 = vmatpush1.bf16.msra.mxu0 0
      %2161 = vmatprep.subr.bf16.mxu0 0
      %2162 = vmatpush1.bf16.msra.mxu0 0
      %2163 = vmatprep.subr.bf16.mxu0 0
      %2164 = vmatpush1.bf16.msra.mxu0 0
      %2165 = vmatprep.subr.bf16.mxu0 0
      %2166 = vmatpush1.bf16.msra.mxu0 0
      %2167 = vmatprep.mubr.bf16.mxu0 0
      %2168 = vmatmul.mubr.bf16.gmra.mrb[0].mxu0 %v2027
      %v2169 = vpop.f32.mrb[0].mxu0
      %v2170 = vadd.f32 %v2024, %v2169
      %v2171 = vpop.f32.mrb[0].mxu0
      %v2172 = vadd.f32 %v2024, %v2171
      %v2173 = vpop.f32.mrb[0].mxu0
      %v2174 = vpop.f32.mrb[0].mxu0
      %2175 = vdwg.mxu0
      %2176 = vmatprep.subr.bf16.mxu0 %v1924
      %2177 = vmatpush1.bf16.msra.mxu0 %v1920
      %2178 = vmatprep.subr.bf16.mxu0 %v1956
      %2179 = vmatpush1.bf16.msra.mxu0 %v1952
      %2180 = vmatprep.subr.bf16.mxu0 %v1988
      %2181 = vmatpush1.bf16.msra.mxu0 %v1984
      %2182 = vmatprep.subr.bf16.mxu0 %v2020
      %2183 = vmatpush1.bf16.msra.mxu0 %v2016
      %2184 = vmatprep.subr.bf16.mxu0 %v2051
      %2185 = vmatpush1.bf16.msra.mxu0 %v2048
      %2186 = vmatprep.subr.bf16.mxu0 0
      %2187 = vmatpush1.bf16.msra.mxu0 0
      %2188 = vmatprep.subr.bf16.mxu0 0
      %2189 = vmatpush1.bf16.msra.mxu0 0
      %2190 = vmatprep.subr.bf16.mxu0 0
      %2191 = vmatpush1.bf16.msra.mxu0 0
      %2192 = vmatprep.subr.bf16.mxu0 0
      %2193 = vmatpush1.bf16.msra.mxu0 0
      %2194 = vmatprep.subr.bf16.mxu0 0
      %2195 = vmatpush1.bf16.msra.mxu0 0
      %2196 = vmatprep.subr.bf16.mxu0 0
      %2197 = vmatpush1.bf16.msra.mxu0 0
      %2198 = vmatprep.subr.bf16.mxu0 0
      %2199 = vmatpush1.bf16.msra.mxu0 0
      %2200 = vmatprep.subr.bf16.mxu0 0
      %2201 = vmatpush1.bf16.msra.mxu0 0
      %2202 = vmatprep.subr.bf16.mxu0 0
      %2203 = vmatpush1.bf16.msra.mxu0 0
      %2204 = vmatprep.subr.bf16.mxu0 0
      %2205 = vmatpush1.bf16.msra.mxu0 0
      %2206 = vmatprep.subr.bf16.mxu0 0
      %2207 = vmatpush1.bf16.msra.mxu0 0
      %2208 = vmatprep.mubr.bf16.mxu0 0
      %2209 = vmatmul.mubr.bf16.gmra.mrb[0].mxu0 %v2027
      %v2210 = vpop.f32.mrb[0].mxu0
      %v2211 = vadd.f32 %v2024, %v2210
      %v2212 = vpop.f32.mrb[0].mxu0
      %v2213 = vadd.f32 %v2024, %v2212
      %v2214 = vpop.f32.mrb[0].mxu0
      %v2215 = vpop.f32.mrb[0].mxu0
      %2216 = vdwg.mxu0
      %v2217 = vadd.f32 %v2088, %v2090
      %v2218 = vadd.f32 %v2217, %v2129
      %v2219 = vadd.f32 %v2218, %v2131
      %v2220 = vadd.f32 %v2219, %v2170
      %v2221 = vadd.f32 %v2220, %v2172
      %v2222 = vadd.f32 %v2221, %v2211
      %v2223 = vadd.f32 %v2222, %v2213
      %2224 = vadd.xlane.f32.xlu0 %v2223
      %v2225 = vpop.xlane.xlu0 %2224
      %v2226 = vrot.slane %v2225, 4
      %v2227 = vadd.f32 %v2225, %v2226
      %v2228 = vrot.slane %v2227, 2
      %v2229 = vadd.f32 %v2227, %v2228
      %v2230 = vrot.slane %v2229, 1
      %v2231 = vadd.f32 %v2229, %v2230
      %s2232 = vtos %v2231
      %v2233 = vmul.f32 %v2088, %v2088
      %v2234 = vmul.f32 %v2090, %v2090
      %v2235 = vmul.f32 %v2129, %v2129
      %v2236 = vmul.f32 %v2131, %v2131
      %v2237 = vmul.f32 %v2170, %v2170
      %v2238 = vmul.f32 %v2172, %v2172
      %v2239 = vmul.f32 %v2211, %v2211
      %v2240 = vmul.f32 %v2213, %v2213
      %v2241 = vadd.f32 %v2233, %v2234
      %v2242 = vadd.f32 %v2241, %v2235
      %v2243 = vadd.f32 %v2242, %v2236
      %v2244 = vadd.f32 %v2243, %v2237
      %v2245 = vadd.f32 %v2244, %v2238
      %v2246 = vadd.f32 %v2245, %v2239
      %v2247 = vadd.f32 %v2246, %v2240
      %2248 = vadd.xlane.f32.xlu0 %v2247
      %v2249 = vpop.xlane.xlu0 %2248
      %v2250 = vrot.slane %v2249, 4
      %v2251 = vadd.f32 %v2249, %v2250
      %v2252 = vrot.slane %v2251, 2
      %v2253 = vadd.f32 %v2251, %v2252
      %v2254 = vrot.slane %v2253, 1
      %v2255 = vadd.f32 %v2253, %v2254
      %s2256 = vtos %v2255
      %v2257 = vrcp.pop 8192.0
      %s2258 = vtos %v2257
      %s2259 = smul.f32 %s2232, %s2258
      %v2260 = vrcp.pop 8192.0
      %s2261 = vtos %v2260
      %s2262 = smul.f32 %s2256, %s2261
      %s2263 = smul.f32 %s2259, %s2259
      %s2264 = ssub.f32 %s2262, %s2263
      %s2265 = sadd.f32 %s2264, 1e-05
      %v2266 = vstv %s2265
      %v2267 = vrsqrt.pop %v2266
      %s2268 = vtos %v2267
      %v2269 = vstv %s2268
      %v2270 = vmul.f32 %v1378, %v2269
      %v2271 = vstv %s2259
      %v2272 = vmul.f32 %v2271, %v2270
      %2274 = vrot.lane.b32.xlu0 %v2272, 1
      %v2275 = vpop.permute.xlu0 %2274
      %v2277 = vsub.f32 %v1378, %v2275
      %2279 = vset.pattern.permute.xlu0 6
      %2280 = vperm.xlu0 %2279, %v2270
      %v2281 = vpop.permute.xlu0 %2280
      %v2283 = vmul.f32 %v2088, %v2281
      %v2284 = vmul.f32 %v2090, %v2281
      %v2285 = vmul.f32 %v2129, %v2281
      %v2286 = vmul.f32 %v2131, %v2281
      %v2287 = vmul.f32 %v2170, %v2281
      %v2288 = vmul.f32 %v2172, %v2281
      %v2289 = vmul.f32 %v2211, %v2281
      %v2290 = vmul.f32 %v2213, %v2281
      %2292 = vset.pattern.permute.xlu0 7
      %2293 = vperm.xlu0 %2292, %v2277
      %v2294 = vpop.permute.xlu0 %2293
      %v2296 = vadd.f32 %v2283, %v2294
      %v2297 = vadd.f32 %v2284, %v2294
      %v2298 = vadd.f32 %v2285, %v2294
      %v2299 = vadd.f32 %v2286, %v2294
      %v2300 = vadd.f32 %v2287, %v2294
      %v2301 = vadd.f32 %v2288, %v2294
      %v2302 = vadd.f32 %v2289, %v2294
      %v2303 = vadd.f32 %v2290, %v2294
      %v2304 = vadd.f32 %v2296, 3.0
      %v2305 = vadd.f32 %v2297, 3.0
      %v2306 = vadd.f32 %v2298, 3.0
      %v2307 = vadd.f32 %v2299, 3.0
      %v2308 = vadd.f32 %v2300, 3.0
      %v2309 = vadd.f32 %v2301, 3.0
      %v2310 = vadd.f32 %v2302, 3.0
      %v2311 = vadd.f32 %v2303, 3.0
      %v2312 = vmax.f32 %v2304, 0.0
      %v2313 = vmax.f32 %v2305, 0.0
      %v2314 = vmax.f32 %v2306, 0.0
      %v2315 = vmax.f32 %v2307, 0.0
      %v2316 = vmax.f32 %v2308, 0.0
      %v2317 = vmax.f32 %v2309, 0.0
      %v2318 = vmax.f32 %v2310, 0.0
      %v2319 = vmax.f32 %v2311, 0.0
      %v2320 = vmin.f32 %v2312, 6.0
      %v2321 = vmin.f32 %v2313, 6.0
      %v2322 = vmin.f32 %v2314, 6.0
      %v2323 = vmin.f32 %v2315, 6.0
      %v2324 = vmin.f32 %v2316, 6.0
      %v2325 = vmin.f32 %v2317, 6.0
      %v2326 = vmin.f32 %v2318, 6.0
      %v2327 = vmin.f32 %v2319, 6.0
      %v2328 = vmul.f32 %v2296, %v2320
      %v2329 = vmul.f32 %v2297, %v2321
      %v2330 = vmul.f32 %v2298, %v2322
      %v2331 = vmul.f32 %v2299, %v2323
      %v2332 = vmul.f32 %v2300, %v2324
      %v2333 = vmul.f32 %v2301, %v2325
      %v2334 = vmul.f32 %v2302, %v2326
      %v2335 = vmul.f32 %v2303, %v2327
      %v2336 = vmul.f32 %v2328, 0.16666667
      %v2337 = vmul.f32 %v2329, 0.16666667
      %v2338 = vmul.f32 %v2330, 0.16666667
      %v2339 = vmul.f32 %v2331, 0.16666667
      %v2340 = vmul.f32 %v2332, 0.16666667
      %v2341 = vmul.f32 %v2333, 0.16666667
      %v2342 = vmul.f32 %v2334, 0.16666667
      %v2343 = vmul.f32 %v2335, 0.16666667
      %v2344 = vld [vmem:[%s6] sm:$0x3]
      %v2345 = vpack.c.bf16 %v2336, %v2336
      %v2346 = vpack.c.bf16 %v2337, %v2337
      %v2347 = vpack.c.bf16 %v2338, %v2338
      %v2348 = vpack.c.bf16 %v2339, %v2339
      %v2349 = vpack.c.bf16 %v2340, %v2340
      %v2350 = vpack.c.bf16 %v2341, %v2341
      %v2351 = vpack.c.bf16 %v2342, %v2342
      %v2352 = vpack.c.bf16 %v2343, %v2343
      %2354 = vset.pattern.permute.xlu0 11
      %2355 = vperm.xlu0 %2354, %v310
      %v2356 = vpop.permute.xlu0 %2355
      %vm2358 = vcmask 64512
      %v2360 = vsel %vm2358, %v2344, 0
      %v2363 = vsel %vm1052, %v2345, 0
      %v2366 = vsel %vm1052, %v2346, 0
      %v2369 = vsel %vm1052, %v2347, 0
      %v2372 = vsel %vm1052, %v2348, 0
      %v2375 = vsel %vm1052, %v2349, 0
      %v2378 = vsel %vm1052, %v2350, 0
      %v2381 = vsel %vm1052, %v2351, 0
      %v2384 = vsel %vm1052, %v2352, 0
      %2386 = vmatprep.subr.bf16.mxu0 %v2366
      %2387 = vmatpush1.bf16.msra.mxu0 %v2363
      %2388 = vmatprep.subr.bf16.mxu0 0
      %2389 = vmatpush1.bf16.msra.mxu0 0
      %2390 = vmatprep.subr.bf16.mxu0 0
      %2391 = vmatpush1.bf16.msra.mxu0 0
      %2392 = vmatprep.subr.bf16.mxu0 0
      %2393 = vmatpush1.bf16.msra.mxu0 0
      %2394 = vmatprep.subr.bf16.mxu0 0
      %2395 = vmatpush1.bf16.msra.mxu0 0
      %2396 = vmatprep.subr.bf16.mxu0 0
      %2397 = vmatpush1.bf16.msra.mxu0 0
      %2398 = vmatprep.subr.bf16.mxu0 0
      %2399 = vmatpush1.bf16.msra.mxu0 0
      %2400 = vmatprep.subr.bf16.mxu0 0
      %2401 = vmatpush1.bf16.msra.mxu0 0
      %2402 = vmatprep.subr.bf16.mxu0 0
      %2403 = vmatpush1.bf16.msra.mxu0 0
      %2404 = vmatprep.subr.bf16.mxu0 0
      %2405 = vmatpush1.bf16.msra.mxu0 0
      %2406 = vmatprep.subr.bf16.mxu0 0
      %2407 = vmatpush1.bf16.msra.mxu0 0
      %2408 = vmatprep.subr.bf16.mxu0 0
      %2409 = vmatpush1.bf16.msra.mxu0 0
      %2410 = vmatprep.subr.bf16.mxu0 0
      %2411 = vmatpush1.bf16.msra.mxu0 0
      %2412 = vmatprep.subr.bf16.mxu0 0
      %2413 = vmatpush1.bf16.msra.mxu0 0
      %2414 = vmatprep.subr.bf16.mxu0 0
      %2415 = vmatpush1.bf16.msra.mxu0 0
      %2416 = vmatprep.subr.bf16.mxu0 0
      %2417 = vmatpush1.bf16.msra.mxu0 0
      %2418 = vmatprep.mubr.bf16.mxu0 0
      %2419 = vmatmul.mubr.bf16.gmra.mrb[0].mxu0 %v2360
      %v2420 = vpop.f32.mrb[0].mxu0
      %v2421 = vadd.f32 %v2356, %v2420
      %v2422 = vpop.f32.mrb[0].mxu0
      %v2423 = vadd.f32 %v2356, %v2422
      %v2424 = vpop.f32.mrb[0].mxu0
      %v2425 = vpop.f32.mrb[0].mxu0
      %2426 = vdwg.mxu0
      %2427 = vmatprep.subr.bf16.mxu0 %v2372
      %2428 = vmatpush1.bf16.msra.mxu0 %v2369
      %2429 = vmatprep.subr.bf16.mxu0 0
      %2430 = vmatpush1.bf16.msra.mxu0 0
      %2431 = vmatprep.subr.bf16.mxu0 0
      %2432 = vmatpush1.bf16.msra.mxu0 0
      %2433 = vmatprep.subr.bf16.mxu0 0
      %2434 = vmatpush1.bf16.msra.mxu0 0
      %2435 = vmatprep.subr.bf16.mxu0 0
      %2436 = vmatpush1.bf16.msra.mxu0 0
      %2437 = vmatprep.subr.bf16.mxu0 0
      %2438 = vmatpush1.bf16.msra.mxu0 0
      %2439 = vmatprep.subr.bf16.mxu0 0
      %2440 = vmatpush1.bf16.msra.mxu0 0
      %2441 = vmatprep.subr.bf16.mxu0 0
      %2442 = vmatpush1.bf16.msra.mxu0 0
      %2443 = vmatprep.subr.bf16.mxu0 0
      %2444 = vmatpush1.bf16.msra.mxu0 0
      %2445 = vmatprep.subr.bf16.mxu0 0
      %2446 = vmatpush1.bf16.msra.mxu0 0
      %2447 = vmatprep.subr.bf16.mxu0 0
      %2448 = vmatpush1.bf16.msra.mxu0 0
      %2449 = vmatprep.subr.bf16.mxu0 0
      %2450 = vmatpush1.bf16.msra.mxu0 0
      %2451 = vmatprep.subr.bf16.mxu0 0
      %2452 = vmatpush1.bf16.msra.mxu0 0
      %2453 = vmatprep.subr.bf16.mxu0 0
      %2454 = vmatpush1.bf16.msra.mxu0 0
      %2455 = vmatprep.subr.bf16.mxu0 0
      %2456 = vmatpush1.bf16.msra.mxu0 0
      %2457 = vmatprep.subr.bf16.mxu0 0
      %2458 = vmatpush1.bf16.msra.mxu0 0
      %2459 = vmatprep.mubr.bf16.mxu0 0
      %2460 = vmatmul.mubr.bf16.gmra.mrb[0].mxu0 %v2360
      %v2461 = vpop.f32.mrb[0].mxu0
      %v2462 = vadd.f32 %v2356, %v2461
      %v2463 = vpop.f32.mrb[0].mxu0
      %v2464 = vadd.f32 %v2356, %v2463
      %v2465 = vpop.f32.mrb[0].mxu0
      %v2466 = vpop.f32.mrb[0].mxu0
      %2467 = vdwg.mxu0
      %2468 = vmatprep.subr.bf16.mxu0 %v2378
      %2469 = vmatpush1.bf16.msra.mxu0 %v2375
      %2470 = vmatprep.subr.bf16.mxu0 0
      %2471 = vmatpush1.bf16.msra.mxu0 0
      %2472 = vmatprep.subr.bf16.mxu0 0
      %2473 = vmatpush1.bf16.msra.mxu0 0
      %2474 = vmatprep.subr.bf16.mxu0 0
      %2475 = vmatpush1.bf16.msra.mxu0 0
      %2476 = vmatprep.subr.bf16.mxu0 0
      %2477 = vmatpush1.bf16.msra.mxu0 0
      %2478 = vmatprep.subr.bf16.mxu0 0
      %2479 = vmatpush1.bf16.msra.mxu0 0
      %2480 = vmatprep.subr.bf16.mxu0 0
      %2481 = vmatpush1.bf16.msra.mxu0 0
      %2482 = vmatprep.subr.bf16.mxu0 0
      %2483 = vmatpush1.bf16.msra.mxu0 0
      %2484 = vmatprep.subr.bf16.mxu0 0
      %2485 = vmatpush1.bf16.msra.mxu0 0
      %2486 = vmatprep.subr.bf16.mxu0 0
      %2487 = vmatpush1.bf16.msra.mxu0 0
      %2488 = vmatprep.subr.bf16.mxu0 0
      %2489 = vmatpush1.bf16.msra.mxu0 0
      %2490 = vmatprep.subr.bf16.mxu0 0
      %2491 = vmatpush1.bf16.msra.mxu0 0
      %2492 = vmatprep.subr.bf16.mxu0 0
      %2493 = vmatpush1.bf16.msra.mxu0 0
      %2494 = vmatprep.subr.bf16.mxu0 0
      %2495 = vmatpush1.bf16.msra.mxu0 0
      %2496 = vmatprep.subr.bf16.mxu0 0
      %2497 = vmatpush1.bf16.msra.mxu0 0
      %2498 = vmatprep.subr.bf16.mxu0 0
      %2499 = vmatpush1.bf16.msra.mxu0 0
      %2500 = vmatprep.mubr.bf16.mxu0 0
      %2501 = vmatmul.mubr.bf16.gmra.mrb[0].mxu0 %v2360
      %v2502 = vpop.f32.mrb[0].mxu0
      %v2503 = vadd.f32 %v2356, %v2502
      %v2504 = vpop.f32.mrb[0].mxu0
      %v2505 = vadd.f32 %v2356, %v2504
      %v2506 = vpop.f32.mrb[0].mxu0
      %v2507 = vpop.f32.mrb[0].mxu0
      %2508 = vdwg.mxu0
      %2509 = vmatprep.subr.bf16.mxu0 %v2384
      %2510 = vmatpush1.bf16.msra.mxu0 %v2381
      %2511 = vmatprep.subr.bf16.mxu0 0
      %2512 = vmatpush1.bf16.msra.mxu0 0
      %2513 = vmatprep.subr.bf16.mxu0 0
      %2514 = vmatpush1.bf16.msra.mxu0 0
      %2515 = vmatprep.subr.bf16.mxu0 0
      %2516 = vmatpush1.bf16.msra.mxu0 0
      %2517 = vmatprep.subr.bf16.mxu0 0
      %2518 = vmatpush1.bf16.msra.mxu0 0
      %2519 = vmatprep.subr.bf16.mxu0 0
      %2520 = vmatpush1.bf16.msra.mxu0 0
      %2521 = vmatprep.subr.bf16.mxu0 0
      %2522 = vmatpush1.bf16.msra.mxu0 0
      %2523 = vmatprep.subr.bf16.mxu0 0
      %2524 = vmatpush1.bf16.msra.mxu0 0
      %2525 = vmatprep.subr.bf16.mxu0 0
      %2526 = vmatpush1.bf16.msra.mxu0 0
      %2527 = vmatprep.subr.bf16.mxu0 0
      %2528 = vmatpush1.bf16.msra.mxu0 0
      %2529 = vmatprep.subr.bf16.mxu0 0
      %2530 = vmatpush1.bf16.msra.mxu0 0
      %2531 = vmatprep.subr.bf16.mxu0 0
      %2532 = vmatpush1.bf16.msra.mxu0 0
      %2533 = vmatprep.subr.bf16.mxu0 0
      %2534 = vmatpush1.bf16.msra.mxu0 0
      %2535 = vmatprep.subr.bf16.mxu0 0
      %2536 = vmatpush1.bf16.msra.mxu0 0
      %2537 = vmatprep.subr.bf16.mxu0 0
      %2538 = vmatpush1.bf16.msra.mxu0 0
      %2539 = vmatprep.subr.bf16.mxu0 0
      %2540 = vmatpush1.bf16.msra.mxu0 0
      %2541 = vmatprep.mubr.bf16.mxu0 0
      %2542 = vmatmul.mubr.bf16.gmra.mrb[0].mxu0 %v2360
      %v2543 = vpop.f32.mrb[0].mxu0
      %v2544 = vadd.f32 %v2356, %v2543
      %v2545 = vpop.f32.mrb[0].mxu0
      %v2546 = vadd.f32 %v2356, %v2545
      %v2547 = vpop.f32.mrb[0].mxu0
      %v2548 = vpop.f32.mrb[0].mxu0
      %2549 = vdwg.mxu0
      %v2550 = vld [vmem:[%s293] sm:$0xff]
      %v2551 = vld [vmem:[%s293 + $0x8] sm:$0xff]
      %v2552 = vld [vmem:[%s293 + $0x10] sm:$0xff]
      %v2553 = vld [vmem:[%s293 + $0x18] sm:$0xff]
      %v2558 = vcombine.high %v2550, %v2550
      %v2559 = vcombine.high %v2551, %v2551
      %v2560 = vcombine.high %v2552, %v2552
      %v2561 = vcombine.high %v2553, %v2553
      %v2566 = vadd.f32 %v2421, %v2550
      %v2567 = vadd.f32 %v2423, %v2558
      %v2568 = vadd.f32 %v2462, %v2551
      %v2569 = vadd.f32 %v2464, %v2559
      %v2570 = vadd.f32 %v2503, %v2552
      %v2571 = vadd.f32 %v2505, %v2560
      %v2572 = vadd.f32 %v2544, %v2553
      %v2573 = vadd.f32 %v2546, %v2561
      %v2582 = vcombine.low %v2566, %v2567
      %v2583 = vcombine.low %v2568, %v2569
      %v2584 = vcombine.low %v2570, %v2571
      %v2585 = vcombine.low %v2572, %v2573
      %2590 = vst [vmem:[%s298] sm:$0xff] %v2582
      %2591 = vst [vmem:[%s298 + $0x8] sm:$0xff] %v2583
      %2592 = vst [vmem:[%s298 + $0x10] sm:$0xff] %v2584
      %2593 = vst [vmem:[%s298 + $0x18] sm:$0xff] %v2585
      %p2594 = scmp.lt.s32.totalorder %s18, 1
      %s2595 = scalar_select %p2594, %s18, 1
      %s2596 = smul.addr %s2595, 8
      %s2597 = smul.addr %s2596, 4
      %s2598 = scalar_lea.vmem %s7, %s2597
      // Predicated region
      $region49: #{hopper_forward.5} parent=47 // pred_check
        %p2599 = pneg %p193
      $region50: #{hopper_forward.5} parent=47 // pred_check_branch
        %2601 = sbr.rel (%p2599) target = $region52
      $region51: #{hopper_forward.5} parent=47 // pred_region
        _
      $region52: #{hopper_forward.5} parent=47 // pred_fallthru
        _
    $region48: #{hopper_forward.5} parent=5 // pred_fallthru
      _
    %p2602 = scmp.le.s32.totalorder 2, %s13
    // Predicated region
    $region53: #{hopper_forward.5} parent=5 // pred_check
      %p2603 = pneg %p2602
    $region54: #{hopper_forward.5} parent=5 // pred_check_branch
      %2605 = sbr.rel (%p2603) target = $region56
    $region55: #{hopper_forward.5} parent=5 // pred_region
      %s2606 = ssub.s32 %s13, 2
      // Predicated region
      $region57: #{hopper_forward.5} parent=55 // pred_check
        %p2607 = pneg %p199
      $region58: #{hopper_forward.5} parent=55 // pred_check_branch
        %2609 = sbr.rel (%p2607) target = $region60
      $region59: #{hopper_forward.5} parent=55 // pred_region
        %p2610 = scmp.lt.s32.totalorder %s19, 1
        %s2611 = scalar_select %p2610, %s19, 1
        %s2612 = smul.addr %s2611, 8
        %s2613 = smul.addr %s2612, 4
        %s2614 = scalar_lea.vmem %s7, %s2613
      $region60: #{hopper_forward.5} parent=55 // pred_fallthru
        _
    $region56: #{hopper_forward.5} parent=5 // pred_fallthru
      _
  $region6: #{hopper_forward.5} parent=0 // loop_footer
    %s17 = sadd.s32 1, %s13
  $region7: #{hopper_forward.5} parent=0 // loop_footer_branch
    %12 = sbr.rel target = $region3
  $region8: #{hopper_forward.5} parent=0 // loop_exit
    _

// kernel: hopper_forward.7
$region0: #{hopper_forward.7}
  #allocation0 [shape = 'u32[]', space=smem, size = 0x4, offset = 0x4, fixed_abs, tag = 'smem constant byte address 0x4 - core index']
  #allocation1 [shape = 'u32[144,128]{1,0:T(1,128)}', space=vmem, size = 0x12000, scoped, tag = 'internal scratch']
  %s0 = inlined_call_operand.vmem [shape: f32[2,8,4096], index: 0, kind: input, shape index: {}]
  %s1 = inlined_call_operand.vmem [shape: f32[2,4,4096], index: 1, kind: input, shape index: {}]
  %s2 = inlined_call_operand.vmem [shape: bf16[2,4096], index: 2, kind: input, shape index: {}]
  %s3 = inlined_call_operand.vmem [shape: f32[8,16], index: 3, kind: input, shape index: {}]
  %s4 = inlined_call_operand.vmem [shape: bf16[8,72], index: 4, kind: input, shape index: {}]
  %s5 = inlined_call_operand.vmem [shape: bf16[8,72], index: 5, kind: input, shape index: {}]
  %s6 = inlined_call_operand.vmem [shape: bf16[4,8], index: 6, kind: input, shape index: {}]
  %s7 = inlined_call_operand.vmem [shape: f32[2,4,4096], index: 7, kind: output, shape index: {}]
  %s8 = sld [smem:[#allocation0]]
  $region61: #{hopper_forward.7} parent=0
    _
  %s10 = ssub.s32 1, %s8
  %s11 = scalar_select 0, %s10, %s8
  loop: start=0, step=1, limit=4
  $region2: #{hopper_forward.7} parent=0 // loop_pre_header
    _
  $region3: #{hopper_forward.7} parent=0 // loop_header
    %s13 = sphi 0, %s17
    %p14 = scmp.ge.s32.totalorder %s13, 4
    %s23 = sphi 0, %s25
    %s26 = sphi 0, %s23
    %s27 = sphi 0, %s26
    %s43 = sphi 0, %s27
    %s49 = sphi 0, %s51
    %s52 = sphi 0, %s49
    %s53 = sphi 0, %s52
    %s69 = sphi 0, %s53
    %s73 = sphi 0, %s73
    %s75 = sphi 0, %s73
    %s76 = sphi 0, %s75
    %s90 = sphi 0, %s76
    %s94 = sphi 0, %s94
    %s96 = sphi 0, %s94
    %s97 = sphi 0, %s96
    %s111 = sphi 0, %s97
    %s115 = sphi 0, %s115
    %s117 = sphi 0, %s115
    %s118 = sphi 0, %s117
    %s132 = sphi 0, %s118
    %s136 = sphi 0, %s136
    %s138 = sphi 0, %s136
    %s139 = sphi 0, %s138
    %s153 = sphi 0, %s139
    %s157 = sphi 0, %s157
    %s159 = sphi 0, %s157
    %s160 = sphi 0, %s159
    %s174 = sphi 0, %s160
    %s180 = sphi 0, %s182
    %s183 = sphi 0, %s180
    %s184 = sphi 0, %s183
    %s200 = sphi 0, %s184
  $region4: #{hopper_forward.7} parent=0 // loop_header_branch
    %16 = sbr.rel (%p14) target = $region8
  $region5: #{hopper_forward.7} parent=0 // loop_body
    %s18 = ssub.s32 %s13, 1
    %s19 = ssub.s32 %s13, 2
    %s20 = sadd.s32 %s13, 1
    %s21 = ssub.s32 %s13, %s20
    %p22 = scmp.eq.s32.totalorder %s21, 0
    %s24 = sadd.s32 %s23, 1
    %s25 = scalar_select %p22, %s23, %s24
    %p28 = pneg %p22
    %p29 = scmp.eq.s32.totalorder %s13, 1
    %p30 = por %p28, %p29
    %p31 = scmp.ne.s32.totalorder %s23, %s26
    %p32 = scmp.eq.s32.totalorder %s13, 0
    %p33 = por %p31, %p32
    %p34 = scmp.ne.s32.totalorder %s23, %s26
    %p35 = scmp.eq.s32.totalorder %s18, 1
    %p36 = por %p34, %p35
    %p37 = scmp.ne.s32.totalorder %s26, %s27
    %p38 = scmp.eq.s32.totalorder %s18, 0
    %p39 = por %p37, %p38
    %p40 = scmp.ne.s32.totalorder %s26, %s27
    %p41 = scmp.eq.s32.totalorder %s19, 1
    %p42 = por %p40, %p41
    %p44 = scmp.ne.s32.totalorder %s27, %s43
    %p45 = scmp.eq.s32.totalorder %s19, 0
    %p46 = por %p44, %p45
    %s47 = ssub.s32 %s13, %s20
    %p48 = scmp.eq.s32.totalorder %s47, 0
    %s50 = sadd.s32 %s49, 1
    %s51 = scalar_select %p48, %s49, %s50
    %p54 = pneg %p48
    %p55 = scmp.eq.s32.totalorder %s13, 1
    %p56 = por %p54, %p55
    %p57 = scmp.ne.s32.totalorder %s49, %s52
    %p58 = scmp.eq.s32.totalorder %s13, 0
    %p59 = por %p57, %p58
    %p60 = scmp.ne.s32.totalorder %s49, %s52
    %p61 = scmp.eq.s32.totalorder %s18, 1
    %p62 = por %p60, %p61
    %p63 = scmp.ne.s32.totalorder %s52, %s53
    %p64 = scmp.eq.s32.totalorder %s18, 0
    %p65 = por %p63, %p64
    %p66 = scmp.ne.s32.totalorder %s52, %s53
    %p67 = scmp.eq.s32.totalorder %s19, 1
    %p68 = por %p66, %p67
    %p70 = scmp.ne.s32.totalorder %s53, %s69
    %p71 = scmp.eq.s32.totalorder %s19, 0
    %p72 = por %p70, %p71
    %s74 = sadd.s32 %s73, 1
    %p77 = scmp.eq.s32.totalorder %s13, 1
    %p78 = scmp.ne.s32.totalorder %s73, %s75
    %p79 = scmp.eq.s32.totalorder %s13, 0
    %p80 = por %p78, %p79
    %p81 = scmp.ne.s32.totalorder %s73, %s75
    %p82 = scmp.eq.s32.totalorder %s18, 1
    %p83 = por %p81, %p82
    %p84 = scmp.ne.s32.totalorder %s75, %s76
    %p85 = scmp.eq.s32.totalorder %s18, 0
    %p86 = por %p84, %p85
    %p87 = scmp.ne.s32.totalorder %s75, %s76
    %p88 = scmp.eq.s32.totalorder %s19, 1
    %p89 = por %p87, %p88
    %p91 = scmp.ne.s32.totalorder %s76, %s90
    %p92 = scmp.eq.s32.totalorder %s19, 0
    %p93 = por %p91, %p92
    %s95 = sadd.s32 %s94, 1
    %p98 = scmp.eq.s32.totalorder %s13, 1
    %p99 = scmp.ne.s32.totalorder %s94, %s96
    %p100 = scmp.eq.s32.totalorder %s13, 0
    %p101 = por %p99, %p100
    %p102 = scmp.ne.s32.totalorder %s94, %s96
    %p103 = scmp.eq.s32.totalorder %s18, 1
    %p104 = por %p102, %p103
    %p105 = scmp.ne.s32.totalorder %s96, %s97
    %p106 = scmp.eq.s32.totalorder %s18, 0
    %p107 = por %p105, %p106
    %p108 = scmp.ne.s32.totalorder %s96, %s97
    %p109 = scmp.eq.s32.totalorder %s19, 1
    %p110 = por %p108, %p109
    %p112 = scmp.ne.s32.totalorder %s97, %s111
    %p113 = scmp.eq.s32.totalorder %s19, 0
    %p114 = por %p112, %p113
    %s116 = sadd.s32 %s115, 1
    %p119 = scmp.eq.s32.totalorder %s13, 1
    %p120 = scmp.ne.s32.totalorder %s115, %s117
    %p121 = scmp.eq.s32.totalorder %s13, 0
    %p122 = por %p120, %p121
    %p123 = scmp.ne.s32.totalorder %s115, %s117
    %p124 = scmp.eq.s32.totalorder %s18, 1
    %p125 = por %p123, %p124
    %p126 = scmp.ne.s32.totalorder %s117, %s118
    %p127 = scmp.eq.s32.totalorder %s18, 0
    %p128 = por %p126, %p127
    %p129 = scmp.ne.s32.totalorder %s117, %s118
    %p130 = scmp.eq.s32.totalorder %s19, 1
    %p131 = por %p129, %p130
    %p133 = scmp.ne.s32.totalorder %s118, %s132
    %p134 = scmp.eq.s32.totalorder %s19, 0
    %p135 = por %p133, %p134
    %s137 = sadd.s32 %s136, 1
    %p140 = scmp.eq.s32.totalorder %s13, 1
    %p141 = scmp.ne.s32.totalorder %s136, %s138
    %p142 = scmp.eq.s32.totalorder %s13, 0
    %p143 = por %p141, %p142
    %p144 = scmp.ne.s32.totalorder %s136, %s138
    %p145 = scmp.eq.s32.totalorder %s18, 1
    %p146 = por %p144, %p145
    %p147 = scmp.ne.s32.totalorder %s138, %s139
    %p148 = scmp.eq.s32.totalorder %s18, 0
    %p149 = por %p147, %p148
    %p150 = scmp.ne.s32.totalorder %s138, %s139
    %p151 = scmp.eq.s32.totalorder %s19, 1
    %p152 = por %p150, %p151
    %p154 = scmp.ne.s32.totalorder %s139, %s153
    %p155 = scmp.eq.s32.totalorder %s19, 0
    %p156 = por %p154, %p155
    %s158 = sadd.s32 %s157, 1
    %p161 = scmp.eq.s32.totalorder %s13, 1
    %p162 = scmp.ne.s32.totalorder %s157, %s159
    %p163 = scmp.eq.s32.totalorder %s13, 0
    %p164 = por %p162, %p163
    %p165 = scmp.ne.s32.totalorder %s157, %s159
    %p166 = scmp.eq.s32.totalorder %s18, 1
    %p167 = por %p165, %p166
    %p168 = scmp.ne.s32.totalorder %s159, %s160
    %p169 = scmp.eq.s32.totalorder %s18, 0
    %p170 = por %p168, %p169
    %p171 = scmp.ne.s32.totalorder %s159, %s160
    %p172 = scmp.eq.s32.totalorder %s19, 1
    %p173 = por %p171, %p172
    %p175 = scmp.ne.s32.totalorder %s160, %s174
    %p176 = scmp.eq.s32.totalorder %s19, 0
    %p177 = por %p175, %p176
    %s178 = ssub.s32 %s13, %s20
    %p179 = scmp.eq.s32.totalorder %s178, 0
    %s181 = sadd.s32 %s180, 1
    %s182 = scalar_select %p179, %s180, %s181
    %p185 = pneg %p179
    %p186 = scmp.eq.s32.totalorder %s13, 1
    %p187 = por %p185, %p186
    %p188 = scmp.ne.s32.totalorder %s180, %s183
    %p189 = scmp.eq.s32.totalorder %s13, 0
    %p190 = por %p188, %p189
    %p191 = scmp.ne.s32.totalorder %s180, %s183
    %p192 = scmp.eq.s32.totalorder %s18, 1
    %p193 = por %p191, %p192
    %p194 = scmp.ne.s32.totalorder %s183, %s184
    %p195 = scmp.eq.s32.totalorder %s18, 0
    %p196 = por %p194, %p195
    %p197 = scmp.ne.s32.totalorder %s183, %s184
    %p198 = scmp.eq.s32.totalorder %s19, 1
    %p199 = por %p197, %p198
    %p201 = scmp.ne.s32.totalorder %s184, %s200
    %p202 = scmp.eq.s32.totalorder %s19, 0
    %p203 = por %p201, %p202
    %p204 = scmp.le.s32.totalorder 1, %s13
    %p205 = scmp.lt.s32.totalorder %s13, 3
    %p206 = pnand %p204, %p205
    %p207 = pneg %p206
    // Predicated region
    $region9: #{hopper_forward.7} parent=5 // pred_check
      _
    $region10: #{hopper_forward.7} parent=5 // pred_check_branch
      %209 = sbr.rel (%p206) target = $region12
    $region11: #{hopper_forward.7} parent=5 // pred_region
      %s210 = ssub.s32 %s13, 1
      // Predicated region
      $region13: #{hopper_forward.7} parent=11 // pred_check
        %p211 = pneg %p86
      $region14: #{hopper_forward.7} parent=11 // pred_check_branch
        %213 = sbr.rel (%p211) target = $region16
      $region15: #{hopper_forward.7} parent=11 // pred_region
        _
      $region16: #{hopper_forward.7} parent=11 // pred_fallthru
        _
      // Predicated region
      $region17: #{hopper_forward.7} parent=11 // pred_check
        %p214 = pneg %p107
      $region18: #{hopper_forward.7} parent=11 // pred_check_branch
        %216 = sbr.rel (%p214) target = $region20
      $region19: #{hopper_forward.7} parent=11 // pred_region
        _
      $region20: #{hopper_forward.7} parent=11 // pred_fallthru
        _
      // Predicated region
      $region21: #{hopper_forward.7} parent=11 // pred_check
        %p217 = pneg %p128
      $region22: #{hopper_forward.7} parent=11 // pred_check_branch
        %219 = sbr.rel (%p217) target = $region24
      $region23: #{hopper_forward.7} parent=11 // pred_region
        _
      $region24: #{hopper_forward.7} parent=11 // pred_fallthru
        _
      // Predicated region
      $region25: #{hopper_forward.7} parent=11 // pred_check
        %p220 = pneg %p149
      $region26: #{hopper_forward.7} parent=11 // pred_check_branch
        %222 = sbr.rel (%p220) target = $region28
      $region27: #{hopper_forward.7} parent=11 // pred_region
        _
      $region28: #{hopper_forward.7} parent=11 // pred_fallthru
        _
      // Predicated region
      $region29: #{hopper_forward.7} parent=11 // pred_check
        %p223 = pneg %p170
      $region30: #{hopper_forward.7} parent=11 // pred_check_branch
        %225 = sbr.rel (%p223) target = $region32
      $region31: #{hopper_forward.7} parent=11 // pred_region
        _
      $region32: #{hopper_forward.7} parent=11 // pred_fallthru
        _
    $region12: #{hopper_forward.7} parent=5 // pred_fallthru
      _
    %p226 = scmp.lt.s32.totalorder %s13, 2
    // Predicated region
    $region33: #{hopper_forward.7} parent=5 // pred_check
      %p227 = pneg %p226
    $region34: #{hopper_forward.7} parent=5 // pred_check_branch
      %229 = sbr.rel (%p227) target = $region36
    $region35: #{hopper_forward.7} parent=5 // pred_region
      // Predicated region
      $region37: #{hopper_forward.7} parent=35 // pred_check
        %p230 = pneg %p33
      $region38: #{hopper_forward.7} parent=35 // pred_check_branch
        %232 = sbr.rel (%p230) target = $region40
      $region39: #{hopper_forward.7} parent=35 // pred_region
        %p233 = scmp.lt.s32.totalorder %s13, 1
        %s234 = scalar_select %p233, %s13, 1
        %s235 = smul.addr %s234, 32
        %s236 = smul.addr %s235, 8
        %s237 = scalar_lea.vmem %s0, %s236
      $region40: #{hopper_forward.7} parent=35 // pred_fallthru
        _
      // Predicated region
      $region41: #{hopper_forward.7} parent=35 // pred_check
        %p238 = pneg %p59
      $region42: #{hopper_forward.7} parent=35 // pred_check_branch
        %240 = sbr.rel (%p238) target = $region44
      $region43: #{hopper_forward.7} parent=35 // pred_region
        %p241 = scmp.lt.s32.totalorder %s13, 1
        %s242 = scalar_select %p241, %s13, 1
        %s243 = smul.addr %s242, 32
        %s244 = smul.addr %s243, 4
        %s245 = scalar_lea.vmem %s1, %s244
      $region44: #{hopper_forward.7} parent=35 // pred_fallthru
        _
    $region36: #{hopper_forward.7} parent=5 // pred_fallthru
      _
    %p246 = scmp.le.s32.totalorder 1, %s13
    %p247 = scmp.lt.s32.totalorder %s13, 3
    %p248 = pnand %p246, %p247
    %p249 = pneg %p248
    // Predicated region
    $region45: #{hopper_forward.7} parent=5 // pred_check
      _
    $region46: #{hopper_forward.7} parent=5 // pred_check_branch
      %251 = sbr.rel (%p248) target = $region48
    $region47: #{hopper_forward.7} parent=5 // pred_region
      %s252 = ssub.s32 %s13, 1
      %p253 = scmp.lt.s32.totalorder %s18, 1
      %s254 = scalar_select %p253, %s18, 1
      %s255 = smul.addr %s254, 32
      %s256 = smul.addr %s255, 8
      %s257 = scalar_lea.vmem %s0, %s256
      %p258 = pneg %p39
      %p259 = pneg %p36
      %p260 = scmp.lt.s32.totalorder %s18, 1
      %s261 = scalar_select %p260, %s18, 1
      %s262 = smul.addr %s261, 32
      %s263 = smul.addr %s262, 4
      %s264 = scalar_lea.vmem %s1, %s263
      %p265 = pneg %p65
      %p266 = pneg %p62
      %p267 = pneg %p86
      %p268 = pneg %p83
      %p269 = pneg %p107
      %p270 = pneg %p104
      %p271 = pneg %p128
      %p272 = pneg %p125
      %p273 = pneg %p149
      %p274 = pneg %p146
      %p275 = pneg %p170
      %p276 = pneg %p167
      %p277 = pneg %p196
      %p278 = pneg %p193
      %p279 = scmp.lt.s32.totalorder %s18, 1
      %s280 = scalar_select %p279, %s18, 1
      %s281 = smul.addr %s280, 32
      %s282 = smul.addr %s281, 4
      %s283 = scalar_lea.vmem %s7, %s282
      %p284 = scmp.lt.s32.totalorder %s18, 1
      %s285 = scalar_select %p284, %s18, 1
      %s286 = smul.addr %s285, 32
      %s287 = smul.addr %s286, 8
      %s288 = scalar_lea.vmem %s0, %s287
      %p289 = scmp.lt.s32.totalorder %s18, 1
      %s290 = scalar_select %p289, %s18, 1
      %s291 = smul.addr %s290, 32
      %s292 = smul.addr %s291, 4
      %s293 = scalar_lea.vmem %s1, %s292
      %p294 = scmp.lt.s32.totalorder %s18, 1
      %s295 = scalar_select %p294, %s18, 1
      %s296 = smul.addr %s295, 32
      %s297 = smul.addr %s296, 4
      %s298 = scalar_lea.vmem %s7, %s297
      %v300 = vld [vmem:[%s288] sm:$0xff]
      %v301 = vld [vmem:[%s288 + $0x8] sm:$0xff]
      %v302 = vld [vmem:[%s288 + $0x10] sm:$0xff]
      %v303 = vld [vmem:[%s288 + $0x18] sm:$0xff]
      %v304 = vld [vmem:[%s288 + $0x20] sm:$0xff]
      %v305 = vld [vmem:[%s288 + $0x28] sm:$0xff]
      %v306 = vld [vmem:[%s288 + $0x30] sm:$0xff]
      %v307 = vld [vmem:[%s288 + $0x38] sm:$0xff]
      %v308 = vld [vmem:[%s288 + $0x40] sm:$0xff]
      %v309 = vld [vmem:[%s288 + $0x48] sm:$0xff]
      %v310 = vld [vmem:[%s288 + $0x50] sm:$0xff]
      %v311 = vld [vmem:[%s288 + $0x58] sm:$0xff]
      %v312 = vld [vmem:[%s288 + $0x60] sm:$0xff]
      %v313 = vld [vmem:[%s288 + $0x68] sm:$0xff]
      %v314 = vld [vmem:[%s288 + $0x70] sm:$0xff]
      %v315 = vld [vmem:[%s288 + $0x78] sm:$0xff]
      %v316 = vld [vmem:[%s288 + $0x80] sm:$0xff]
      %v317 = vld [vmem:[%s288 + $0x88] sm:$0xff]
      %v318 = vld [vmem:[%s288 + $0x90] sm:$0xff]
      %v319 = vld [vmem:[%s288 + $0x98] sm:$0xff]
      %v320 = vld [vmem:[%s288 + $0xa0] sm:$0xff]
      %v321 = vld [vmem:[%s288 + $0xa8] sm:$0xff]
      %v322 = vld [vmem:[%s288 + $0xb0] sm:$0xff]
      %v323 = vld [vmem:[%s288 + $0xb8] sm:$0xff]
      %v324 = vld [vmem:[%s288 + $0xc0] sm:$0xff]
      %v325 = vld [vmem:[%s288 + $0xc8] sm:$0xff]
      %v326 = vld [vmem:[%s288 + $0xd0] sm:$0xff]
      %v327 = vld [vmem:[%s288 + $0xd8] sm:$0xff]
      %v328 = vld [vmem:[%s288 + $0xe0] sm:$0xff]
      %v329 = vld [vmem:[%s288 + $0xe8] sm:$0xff]
      %v330 = vld [vmem:[%s288 + $0xf0] sm:$0xff]
      %v331 = vld [vmem:[%s288 + $0xf8] sm:$0xff]
      %v332 = vld [vmem:[%s2] sm:$0xff]
      %v333 = vld [vmem:[%s2 + $0x8] sm:$0xff]
      %v334 = vld [vmem:[%s2 + $0x10] sm:$0xff]
      %v335 = vld [vmem:[%s2 + $0x18] sm:$0xff]
      %v336 = vld [vmem:[%s3] sm:$0xff]
      %v337 = vld [vmem:[%s3] sm:$0xf]
      %v338 = vld [vmem:[%s4] sm:$0xf]
      %v339 = vpack.c.bf16 %v300, %v300
      %v340 = vpack.c.bf16 %v301, %v301
      %v341 = vpack.c.bf16 %v302, %v302
      %v342 = vpack.c.bf16 %v303, %v303
      %v343 = vpack.c.bf16 %v304, %v304
      %v344 = vpack.c.bf16 %v305, %v305
      %v345 = vpack.c.bf16 %v306, %v306
      %v346 = vpack.c.bf16 %v307, %v307
      %v347 = vpack.c.bf16 %v308, %v308
      %v348 = vpack.c.bf16 %v309, %v309
      %v349 = vpack.c.bf16 %v310, %v310
      %v350 = vpack.c.bf16 %v311, %v311
      %v351 = vpack.c.bf16 %v312, %v312
      %v352 = vpack.c.bf16 %v313, %v313
      %v353 = vpack.c.bf16 %v314, %v314
      %v354 = vpack.c.bf16 %v315, %v315
      %v355 = vpack.c.bf16 %v316, %v316
      %v356 = vpack.c.bf16 %v317, %v317
      %v357 = vpack.c.bf16 %v318, %v318
      %v358 = vpack.c.bf16 %v319, %v319
      %v359 = vpack.c.bf16 %v320, %v320
      %v360 = vpack.c.bf16 %v321, %v321
      %v361 = vpack.c.bf16 %v322, %v322
      %v362 = vpack.c.bf16 %v323, %v323
      %v363 = vpack.c.bf16 %v324, %v324
      %v364 = vpack.c.bf16 %v325, %v325
      %v365 = vpack.c.bf16 %v326, %v326
      %v366 = vpack.c.bf16 %v327, %v327
      %v367 = vpack.c.bf16 %v328, %v328
      %v368 = vpack.c.bf16 %v329, %v329
      %v369 = vpack.c.bf16 %v330, %v330
      %v370 = vpack.c.bf16 %v331, %v331
      %403 = vrot.lane.b32.xlu0 %v339, 65
      %v404 = vpop.permute.xlu0 %403
      %405 = vrot.lane.b32.xlu0 %v340, 65
      %v406 = vpop.permute.xlu0 %405
      %407 = vrot.lane.b32.xlu0 %v341, 65
      %v408 = vpop.permute.xlu0 %407
      %409 = vrot.lane.b32.xlu0 %v342, 65
      %v410 = vpop.permute.xlu0 %409
      %411 = vrot.lane.b32.xlu0 %v343, 65
      %v412 = vpop.permute.xlu0 %411
      %413 = vrot.lane.b32.xlu0 %v344, 65
      %v414 = vpop.permute.xlu0 %413
      %415 = vrot.lane.b32.xlu0 %v345, 65
      %v416 = vpop.permute.xlu0 %415
      %417 = vrot.lane.b32.xlu0 %v346, 65
      %v418 = vpop.permute.xlu0 %417
      %419 = vrot.lane.b32.xlu0 %v347, 65
      %v420 = vpop.permute.xlu0 %419
      %421 = vrot.lane.b32.xlu0 %v348, 65
      %v422 = vpop.permute.xlu0 %421
      %423 = vrot.lane.b32.xlu0 %v349, 65
      %v424 = vpop.permute.xlu0 %423
      %425 = vrot.lane.b32.xlu0 %v350, 65
      %v426 = vpop.permute.xlu0 %425
      %427 = vrot.lane.b32.xlu0 %v351, 65
      %v428 = vpop.permute.xlu0 %427
      %429 = vrot.lane.b32.xlu0 %v352, 65
      %v430 = vpop.permute.xlu0 %429
      %431 = vrot.lane.b32.xlu0 %v353, 65
      %v432 = vpop.permute.xlu0 %431
      %433 = vrot.lane.b32.xlu0 %v354, 65
      %v434 = vpop.permute.xlu0 %433
      %435 = vrot.lane.b32.xlu0 %v355, 65
      %v436 = vpop.permute.xlu0 %435
      %437 = vrot.lane.b32.xlu0 %v356, 65
      %v438 = vpop.permute.xlu0 %437
      %439 = vrot.lane.b32.xlu0 %v357, 65
      %v440 = vpop.permute.xlu0 %439
      %441 = vrot.lane.b32.xlu0 %v358, 65
      %v442 = vpop.permute.xlu0 %441
      %443 = vrot.lane.b32.xlu0 %v359, 65
      %v444 = vpop.permute.xlu0 %443
      %445 = vrot.lane.b32.xlu0 %v360, 65
      %v446 = vpop.permute.xlu0 %445
      %447 = vrot.lane.b32.xlu0 %v361, 65
      %v448 = vpop.permute.xlu0 %447
      %449 = vrot.lane.b32.xlu0 %v362, 65
      %v450 = vpop.permute.xlu0 %449
      %451 = vrot.lane.b32.xlu0 %v363, 65
      %v452 = vpop.permute.xlu0 %451
      %453 = vrot.lane.b32.xlu0 %v364, 65
      %v454 = vpop.permute.xlu0 %453
      %455 = vrot.lane.b32.xlu0 %v365, 65
      %v456 = vpop.permute.xlu0 %455
      %457 = vrot.lane.b32.xlu0 %v366, 65
      %v458 = vpop.permute.xlu0 %457
      %459 = vrot.lane.b32.xlu0 %v367, 65
      %v460 = vpop.permute.xlu0 %459
      %461 = vrot.lane.b32.xlu0 %v368, 65
      %v462 = vpop.permute.xlu0 %461
      %463 = vrot.lane.b32.xlu0 %v369, 65
      %v464 = vpop.permute.xlu0 %463
      %465 = vrot.lane.b32.xlu0 %v370, 65
      %v466 = vpop.permute.xlu0 %465
      %vm467 = vcmask 531456
      %v468 = vsel %vm467, %v404, %v406
      %v469 = vsel %vm467, %v406, %v408
      %v470 = vsel %vm467, %v408, %v410
      %v471 = vsel %vm467, %v410, %v412
      %v472 = vsel %vm467, %v412, %v414
      %v473 = vsel %vm467, %v414, %v416
      %v474 = vsel %vm467, %v416, %v418
      %v475 = vsel %vm467, %v418, %v420
      %v476 = vsel %vm467, %v420, %v422
      %v477 = vsel %vm467, %v422, %v424
      %v478 = vsel %vm467, %v424, %v426
      %v479 = vsel %vm467, %v426, %v428
      %v480 = vsel %vm467, %v428, %v430
      %v481 = vsel %vm467, %v430, %v432
      %v482 = vsel %vm467, %v432, %v434
      %v483 = vsel %vm467, %v434, %v436
      %v484 = vsel %vm467, %v436, %v438
      %v485 = vsel %vm467, %v438, %v440
      %v486 = vsel %vm467, %v440, %v442
      %v487 = vsel %vm467, %v442, %v444
      %v488 = vsel %vm467, %v444, %v446
      %v489 = vsel %vm467, %v446, %v448
      %v490 = vsel %vm467, %v448, %v450
      %v491 = vsel %vm467, %v450, %v452
      %v492 = vsel %vm467, %v452, %v454
      %v493 = vsel %vm467, %v454, %v456
      %v494 = vsel %vm467, %v456, %v458
      %v495 = vsel %vm467, %v458, %v460
      %v496 = vsel %vm467, %v460, %v462
      %v497 = vsel %vm467, %v462, %v464
      %v498 = vsel %vm467, %v464, %v466
      %vm530 = vcmask 531456
      %v533 = vsel %vm530, 0, %v404
      %v536 = vsel %vm530, %v466, 0
      %v542 = vcombine.high %v332, %v332
      %v544 = vunpack.c.l.s4 1966171168
      %v545 = vunpack.c.0.s8 %v544
      %v546 = vlaneseq
      %v547 = vshrl.u32 %v546, 7
      %v548 = vsub.s32 %v545, %v547
      %v549 = vrot.slane %v332, %v548
      %v551 = vunpack.c.l.s4 1966171168
      %v552 = vunpack.c.0.s8 %v551
      %v553 = vlaneseq
      %v554 = vshrl.u32 %v553, 7
      %v555 = vsub.s32 %v552, %v554
      %v556 = vrot.slane %v542, %v555
      %v557 = vcombine.high %v549, %v549
      %v558 = vcombine.high %v556, %v556
      %v560 = vunpack.c.l.s4 1966171168
      %v561 = vunpack.c.0.s8 %v560
      %v562 = vlaneseq
      %v563 = vshrl.u32 %v562, 7
      %v564 = vsub.s32 %v561, %v563
      %v565 = vrot.slane %v549, %v564
      %v567 = vunpack.c.l.s4 1966171168
      %v568 = vunpack.c.0.s8 %v567
      %v569 = vlaneseq
      %v570 = vshrl.u32 %v569, 7
      %v571 = vsub.s32 %v568, %v570
      %v572 = vrot.slane %v556, %v571
      %v574 = vunpack.c.l.s4 1966171168
      %v575 = vunpack.c.0.s8 %v574
      %v576 = vlaneseq
      %v577 = vshrl.u32 %v576, 7
      %v578 = vsub.s32 %v575, %v577
      %v579 = vrot.slane %v557, %v578
      %v581 = vunpack.c.l.s4 1966171168
      %v582 = vunpack.c.0.s8 %v581
      %v583 = vlaneseq
      %v584 = vshrl.u32 %v583, 7
      %v585 = vsub.s32 %v582, %v584
      %v586 = vrot.slane %v558, %v585
      %v587 = vcombine.high %v565, %v565
      %v588 = vcombine.high %v572, %v572
      %v589 = vcombine.high %v579, %v579
      %v590 = vcombine.high %v586, %v586
      %v591 = vcombine.high %v333, %v333
      %v593 = vunpack.c.l.s4 1966171168
      %v594 = vunpack.c.0.s8 %v593
      %v595 = vlaneseq
      %v596 = vshrl.u32 %v595, 7
      %v597 = vsub.s32 %v594, %v596
      %v598 = vrot.slane %v333, %v597
      %v600 = vunpack.c.l.s4 1966171168
      %v601 = vunpack.c.0.s8 %v600
      %v602 = vlaneseq
      %v603 = vshrl.u32 %v602, 7
      %v604 = vsub.s32 %v601, %v603
      %v605 = vrot.slane %v591, %v604
      %v606 = vcombine.high %v598, %v598
      %v607 = vcombine.high %v605, %v605
      %v609 = vunpack.c.l.s4 1966171168
      %v610 = vunpack.c.0.s8 %v609
      %v611 = vlaneseq
      %v612 = vshrl.u32 %v611, 7
      %v613 = vsub.s32 %v610, %v612
      %v614 = vrot.slane %v598, %v613
      %v616 = vunpack.c.l.s4 1966171168
      %v617 = vunpack.c.0.s8 %v616
      %v618 = vlaneseq
      %v619 = vshrl.u32 %v618, 7
      %v620 = vsub.s32 %v617, %v619
      %v621 = vrot.slane %v605, %v620
      %v623 = vunpack.c.l.s4 1966171168
      %v624 = vunpack.c.0.s8 %v623
      %v625 = vlaneseq
      %v626 = vshrl.u32 %v625, 7
      %v627 = vsub.s32 %v624, %v626
      %v628 = vrot.slane %v606, %v627
      %v630 = vunpack.c.l.s4 1966171168
      %v631 = vunpack.c.0.s8 %v630
      %v632 = vlaneseq
      %v633 = vshrl.u32 %v632, 7
      %v634 = vsub.s32 %v631, %v633
      %v635 = vrot.slane %v607, %v634
      %v636 = vcombine.high %v614, %v614
      %v637 = vcombine.high %v621, %v621
      %v638 = vcombine.high %v628, %v628
      %v639 = vcombine.high %v635, %v635
      %v640 = vcombine.high %v334, %v334
      %v642 = vunpack.c.l.s4 1966171168
      %v643 = vunpack.c.0.s8 %v642
      %v644 = vlaneseq
      %v645 = vshrl.u32 %v644, 7
      %v646 = vsub.s32 %v643, %v645
      %v647 = vrot.slane %v334, %v646
      %v649 = vunpack.c.l.s4 1966171168
      %v650 = vunpack.c.0.s8 %v649
      %v651 = vlaneseq
      %v652 = vshrl.u32 %v651, 7
      %v653 = vsub.s32 %v650, %v652
      %v654 = vrot.slane %v640, %v653
      %v655 = vcombine.high %v647, %v647
      %v656 = vcombine.high %v654, %v654
      %v658 = vunpack.c.l.s4 1966171168
      %v659 = vunpack.c.0.s8 %v658
      %v660 = vlaneseq
      %v661 = vshrl.u32 %v660, 7
      %v662 = vsub.s32 %v659, %v661
      %v663 = vrot.slane %v647, %v662
      %v665 = vunpack.c.l.s4 1966171168
      %v666 = vunpack.c.0.s8 %v665
      %v667 = vlaneseq
      %v668 = vshrl.u32 %v667, 7
      %v669 = vsub.s32 %v666, %v668
      %v670 = vrot.slane %v654, %v669
      %v672 = vunpack.c.l.s4 1966171168
      %v673 = vunpack.c.0.s8 %v672
      %v674 = vlaneseq
      %v675 = vshrl.u32 %v674, 7
      %v676 = vsub.s32 %v673, %v675
      %v677 = vrot.slane %v655, %v676
      %v679 = vunpack.c.l.s4 1966171168
      %v680 = vunpack.c.0.s8 %v679
      %v681 = vlaneseq
      %v682 = vshrl.u32 %v681, 7
      %v683 = vsub.s32 %v680, %v682
      %v684 = vrot.slane %v656, %v683
      %v685 = vcombine.high %v663, %v663
      %v686 = vcombine.high %v670, %v670
      %v687 = vcombine.high %v677, %v677
      %v688 = vcombine.high %v684, %v684
      %v689 = vcombine.high %v335, %v335
      %v691 = vunpack.c.l.s4 1966171168
      %v692 = vunpack.c.0.s8 %v691
      %v693 = vlaneseq
      %v694 = vshrl.u32 %v693, 7
      %v695 = vsub.s32 %v692, %v694
      %v696 = vrot.slane %v335, %v695
      %v698 = vunpack.c.l.s4 1966171168
      %v699 = vunpack.c.0.s8 %v698
      %v700 = vlaneseq
      %v701 = vshrl.u32 %v700, 7
      %v702 = vsub.s32 %v699, %v701
      %v703 = vrot.slane %v689, %v702
      %v704 = vcombine.high %v696, %v696
      %v705 = vcombine.high %v703, %v703
      %v707 = vunpack.c.l.s4 1966171168
      %v708 = vunpack.c.0.s8 %v707
      %v709 = vlaneseq
      %v710 = vshrl.u32 %v709, 7
      %v711 = vsub.s32 %v708, %v710
      %v712 = vrot.slane %v696, %v711
      %v714 = vunpack.c.l.s4 1966171168
      %v715 = vunpack.c.0.s8 %v714
      %v716 = vlaneseq
      %v717 = vshrl.u32 %v716, 7
      %v718 = vsub.s32 %v715, %v717
      %v719 = vrot.slane %v703, %v718
      %v721 = vunpack.c.l.s4 1966171168
      %v722 = vunpack.c.0.s8 %v721
      %v723 = vlaneseq
      %v724 = vshrl.u32 %v723, 7
      %v725 = vsub.s32 %v722, %v724
      %v726 = vrot.slane %v704, %v725
      %v728 = vunpack.c.l.s4 1966171168
      %v729 = vunpack.c.0.s8 %v728
      %v730 = vlaneseq
      %v731 = vshrl.u32 %v730, 7
      %v732 = vsub.s32 %v729, %v731
      %v733 = vrot.slane %v705, %v732
      %v734 = vcombine.high %v712, %v712
      %v735 = vcombine.high %v719, %v719
      %v736 = vcombine.high %v726, %v726
      %v737 = vcombine.high %v733, %v733
      %v739 = vpack.i.b16 %v565, %v565
      %v741 = vlaneseq
      %v742 = vshrl.u32 %v741, 7
      %v743 = vsub.s32 0, %v742
      %v744 = vrot.slane %v739, %v743
      %v746 = vpack.i.b16 %v579, %v579
      %v748 = vlaneseq
      %v749 = vshrl.u32 %v748, 7
      %v750 = vsub.s32 0, %v749
      %v751 = vrot.slane %v746, %v750
      %v753 = vpack.i.b16 %v587, %v587
      %v755 = vlaneseq
      %v756 = vshrl.u32 %v755, 7
      %v757 = vsub.s32 0, %v756
      %v758 = vrot.slane %v753, %v757
      %v760 = vpack.i.b16 %v589, %v589
      %v762 = vlaneseq
      %v763 = vshrl.u32 %v762, 7
      %v764 = vsub.s32 0, %v763
      %v765 = vrot.slane %v760, %v764
      %v767 = vpack.i.b16 %v572, %v572
      %v769 = vlaneseq
      %v770 = vshrl.u32 %v769, 7
      %v771 = vsub.s32 0, %v770
      %v772 = vrot.slane %v767, %v771
      %v774 = vpack.i.b16 %v586, %v586
      %v776 = vlaneseq
      %v777 = vshrl.u32 %v776, 7
      %v778 = vsub.s32 0, %v777
      %v779 = vrot.slane %v774, %v778
      %v781 = vpack.i.b16 %v588, %v588
      %v783 = vlaneseq
      %v784 = vshrl.u32 %v783, 7
      %v785 = vsub.s32 0, %v784
      %v786 = vrot.slane %v781, %v785
      %v788 = vpack.i.b16 %v590, %v590
      %v790 = vlaneseq
      %v791 = vshrl.u32 %v790, 7
      %v792 = vsub.s32 0, %v791
      %v793 = vrot.slane %v788, %v792
      %v795 = vpack.i.b16 %v614, %v614
      %v797 = vlaneseq
      %v798 = vshrl.u32 %v797, 7
      %v799 = vsub.s32 0, %v798
      %v800 = vrot.slane %v795, %v799
      %v802 = vpack.i.b16 %v628, %v628
      %v804 = vlaneseq
      %v805 = vshrl.u32 %v804, 7
      %v806 = vsub.s32 0, %v805
      %v807 = vrot.slane %v802, %v806
      %v809 = vpack.i.b16 %v636, %v636
      %v811 = vlaneseq
      %v812 = vshrl.u32 %v811, 7
      %v813 = vsub.s32 0, %v812
      %v814 = vrot.slane %v809, %v813
      %v816 = vpack.i.b16 %v638, %v638
      %v818 = vlaneseq
      %v819 = vshrl.u32 %v818, 7
      %v820 = vsub.s32 0, %v819
      %v821 = vrot.slane %v816, %v820
      %v823 = vpack.i.b16 %v621, %v621
      %v825 = vlaneseq
      %v826 = vshrl.u32 %v825, 7
      %v827 = vsub.s32 0, %v826
      %v828 = vrot.slane %v823, %v827
      %v830 = vpack.i.b16 %v635, %v635
      %v832 = vlaneseq
      %v833 = vshrl.u32 %v832, 7
      %v834 = vsub.s32 0, %v833
      %v835 = vrot.slane %v830, %v834
      %v837 = vpack.i.b16 %v637, %v637
      %v839 = vlaneseq
      %v840 = vshrl.u32 %v839, 7
      %v841 = vsub.s32 0, %v840
      %v842 = vrot.slane %v837, %v841
      %v844 = vpack.i.b16 %v639, %v639
      %v846 = vlaneseq
      %v847 = vshrl.u32 %v846, 7
      %v848 = vsub.s32 0, %v847
      %v849 = vrot.slane %v844, %v848
      %v851 = vpack.i.b16 %v663, %v663
      %v853 = vlaneseq
      %v854 = vshrl.u32 %v853, 7
      %v855 = vsub.s32 0, %v854
      %v856 = vrot.slane %v851, %v855
      %v858 = vpack.i.b16 %v677, %v677
      %v860 = vlaneseq
      %v861 = vshrl.u32 %v860, 7
      %v862 = vsub.s32 0, %v861
      %v863 = vrot.slane %v858, %v862
      %v865 = vpack.i.b16 %v685, %v685
      %v867 = vlaneseq
      %v868 = vshrl.u32 %v867, 7
      %v869 = vsub.s32 0, %v868
      %v870 = vrot.slane %v865, %v869
      %v872 = vpack.i.b16 %v687, %v687
      %v874 = vlaneseq
      %v875 = vshrl.u32 %v874, 7
      %v876 = vsub.s32 0, %v875
      %v877 = vrot.slane %v872, %v876
      %v879 = vpack.i.b16 %v670, %v670
      %v881 = vlaneseq
      %v882 = vshrl.u32 %v881, 7
      %v883 = vsub.s32 0, %v882
      %v884 = vrot.slane %v879, %v883
      %v886 = vpack.i.b16 %v684, %v684
      %v888 = vlaneseq
      %v889 = vshrl.u32 %v888, 7
      %v890 = vsub.s32 0, %v889
      %v891 = vrot.slane %v886, %v890
      %v893 = vpack.i.b16 %v686, %v686
      %v895 = vlaneseq
      %v896 = vshrl.u32 %v895, 7
      %v897 = vsub.s32 0, %v896
      %v898 = vrot.slane %v893, %v897
      %v900 = vpack.i.b16 %v688, %v688
      %v902 = vlaneseq
      %v903 = vshrl.u32 %v902, 7
      %v904 = vsub.s32 0, %v903
      %v905 = vrot.slane %v900, %v904
      %v907 = vpack.i.b16 %v712, %v712
      %v909 = vlaneseq
      %v910 = vshrl.u32 %v909, 7
      %v911 = vsub.s32 0, %v910
      %v912 = vrot.slane %v907, %v911
      %v914 = vpack.i.b16 %v726, %v726
      %v916 = vlaneseq
      %v917 = vshrl.u32 %v916, 7
      %v918 = vsub.s32 0, %v917
      %v919 = vrot.slane %v914, %v918
      %v921 = vpack.i.b16 %v734, %v734
      %v923 = vlaneseq
      %v924 = vshrl.u32 %v923, 7
      %v925 = vsub.s32 0, %v924
      %v926 = vrot.slane %v921, %v925
      %v928 = vpack.i.b16 %v736, %v736
      %v930 = vlaneseq
      %v931 = vshrl.u32 %v930, 7
      %v932 = vsub.s32 0, %v931
      %v933 = vrot.slane %v928, %v932
      %v935 = vpack.i.b16 %v719, %v719
      %v937 = vlaneseq
      %v938 = vshrl.u32 %v937, 7
      %v939 = vsub.s32 0, %v938
      %v940 = vrot.slane %v935, %v939
      %v942 = vpack.i.b16 %v733, %v733
      %v944 = vlaneseq
      %v945 = vshrl.u32 %v944, 7
      %v946 = vsub.s32 0, %v945
      %v947 = vrot.slane %v942, %v946
      %v949 = vpack.i.b16 %v735, %v735
      %v951 = vlaneseq
      %v952 = vshrl.u32 %v951, 7
      %v953 = vsub.s32 0, %v952
      %v954 = vrot.slane %v949, %v953
      %v956 = vpack.i.b16 %v737, %v737
      %v958 = vlaneseq
      %v959 = vshrl.u32 %v958, 7
      %v960 = vsub.s32 0, %v959
      %v961 = vrot.slane %v956, %v960
      %v962 = vmul.bf16 %v533, %v744
      %v963 = vmul.bf16 %v468, %v751
      %v964 = vmul.bf16 %v469, %v758
      %v965 = vmul.bf16 %v470, %v765
      %v966 = vmul.bf16 %v471, %v772
      %v967 = vmul.bf16 %v472, %v779
      %v968 = vmul.bf16 %v473, %v786
      %v969 = vmul.bf16 %v474, %v793
      %v970 = vmul.bf16 %v475, %v800
      %v971 = vmul.bf16 %v476, %v807
      %v972 = vmul.bf16 %v477, %v814
      %v973 = vmul.bf16 %v478, %v821
      %v974 = vmul.bf16 %v479, %v828
      %v975 = vmul.bf16 %v480, %v835
      %v976 = vmul.bf16 %v481, %v842
      %v977 = vmul.bf16 %v482, %v849
      %v978 = vmul.bf16 %v483, %v856
      %v979 = vmul.bf16 %v484, %v863
      %v980 = vmul.bf16 %v485, %v870
      %v981 = vmul.bf16 %v486, %v877
      %v982 = vmul.bf16 %v487, %v884
      %v983 = vmul.bf16 %v488, %v891
      %v984 = vmul.bf16 %v489, %v898
      %v985 = vmul.bf16 %v490, %v905
      %v986 = vmul.bf16 %v491, %v912
      %v987 = vmul.bf16 %v492, %v919
      %v988 = vmul.bf16 %v493, %v926
      %v989 = vmul.bf16 %v494, %v933
      %v990 = vmul.bf16 %v495, %v940
      %v991 = vmul.bf16 %v496, %v947
      %v992 = vmul.bf16 %v497, %v954
      %v993 = vmul.bf16 %v498, %v961
      %v994 = vshrl.u32 %v565, 16
      %v995 = vpack.i.b16 %v994, %v994
      %v997 = vlaneseq
      %v998 = vshrl.u32 %v997, 7
      %v999 = vsub.s32 0, %v998
      %v1000 = vrot.slane %v995, %v999
      %v1001 = vshrl.u32 %v579, 16
      %v1002 = vpack.i.b16 %v1001, %v1001
      %v1004 = vlaneseq
      %v1005 = vshrl.u32 %v1004, 7
      %v1006 = vsub.s32 0, %v1005
      %v1007 = vrot.slane %v1002, %v1006
      %v1008 = vshrl.u32 %v587, 16
      %v1009 = vpack.i.b16 %v1008, %v1008
      %v1011 = vlaneseq
      %v1012 = vshrl.u32 %v1011, 7
      %v1013 = vsub.s32 0, %v1012
      %v1014 = vrot.slane %v1009, %v1013
      %v1015 = vshrl.u32 %v589, 16
      %v1016 = vpack.i.b16 %v1015, %v1015
      %v1018 = vlaneseq
      %v1019 = vshrl.u32 %v1018, 7
      %v1020 = vsub.s32 0, %v1019
      %v1021 = vrot.slane %v1016, %v1020
      %v1022 = vshrl.u32 %v572, 16
      %v1023 = vpack.i.b16 %v1022, %v1022
      %v1025 = vlaneseq
      %v1026 = vshrl.u32 %v1025, 7
      %v1027 = vsub.s32 0, %v1026
      %v1028 = vrot.slane %v1023, %v1027
      %v1029 = vshrl.u32 %v586, 16
      %v1030 = vpack.i.b16 %v1029, %v1029
      %v1032 = vlaneseq
      %v1033 = vshrl.u32 %v1032, 7
      %v1034 = vsub.s32 0, %v1033
      %v1035 = vrot.slane %v1030, %v1034
      %v1036 = vshrl.u32 %v588, 16
      %v1037 = vpack.i.b16 %v1036, %v1036
      %v1039 = vlaneseq
      %v1040 = vshrl.u32 %v1039, 7
      %v1041 = vsub.s32 0, %v1040
      %v1042 = vrot.slane %v1037, %v1041
      %v1043 = vshrl.u32 %v590, 16
      %v1044 = vpack.i.b16 %v1043, %v1043
      %v1046 = vlaneseq
      %v1047 = vshrl.u32 %v1046, 7
      %v1048 = vsub.s32 0, %v1047
      %v1049 = vrot.slane %v1044, %v1048
      %v1050 = vshrl.u32 %v614, 16
      %v1051 = vpack.i.b16 %v1050, %v1050
      %v1053 = vlaneseq
      %v1054 = vshrl.u32 %v1053, 7
      %v1055 = vsub.s32 0, %v1054
      %v1056 = vrot.slane %v1051, %v1055
      %v1057 = vshrl.u32 %v628, 16
      %v1058 = vpack.i.b16 %v1057, %v1057
      %v1060 = vlaneseq
      %v1061 = vshrl.u32 %v1060, 7
      %v1062 = vsub.s32 0, %v1061
      %v1063 = vrot.slane %v1058, %v1062
      %v1064 = vshrl.u32 %v636, 16
      %v1065 = vpack.i.b16 %v1064, %v1064
      %v1067 = vlaneseq
      %v1068 = vshrl.u32 %v1067, 7
      %v1069 = vsub.s32 0, %v1068
      %v1070 = vrot.slane %v1065, %v1069
      %v1071 = vshrl.u32 %v638, 16
      %v1072 = vpack.i.b16 %v1071, %v1071
      %v1074 = vlaneseq
      %v1075 = vshrl.u32 %v1074, 7
      %v1076 = vsub.s32 0, %v1075
      %v1077 = vrot.slane %v1072, %v1076
      %v1078 = vshrl.u32 %v621, 16
      %v1079 = vpack.i.b16 %v1078, %v1078
      %v1081 = vlaneseq
      %v1082 = vshrl.u32 %v1081, 7
      %v1083 = vsub.s32 0, %v1082
      %v1084 = vrot.slane %v1079, %v1083
      %v1085 = vshrl.u32 %v635, 16
      %v1086 = vpack.i.b16 %v1085, %v1085
      %v1088 = vlaneseq
      %v1089 = vshrl.u32 %v1088, 7
      %v1090 = vsub.s32 0, %v1089
      %v1091 = vrot.slane %v1086, %v1090
      %v1092 = vshrl.u32 %v637, 16
      %v1093 = vpack.i.b16 %v1092, %v1092
      %v1095 = vlaneseq
      %v1096 = vshrl.u32 %v1095, 7
      %v1097 = vsub.s32 0, %v1096
      %v1098 = vrot.slane %v1093, %v1097
      %v1099 = vshrl.u32 %v639, 16
      %v1100 = vpack.i.b16 %v1099, %v1099
      %v1102 = vlaneseq
      %v1103 = vshrl.u32 %v1102, 7
      %v1104 = vsub.s32 0, %v1103
      %v1105 = vrot.slane %v1100, %v1104
      %v1106 = vshrl.u32 %v663, 16
      %v1107 = vpack.i.b16 %v1106, %v1106
      %v1109 = vlaneseq
      %v1110 = vshrl.u32 %v1109, 7
      %v1111 = vsub.s32 0, %v1110
      %v1112 = vrot.slane %v1107, %v1111
      %v1113 = vshrl.u32 %v677, 16
      %v1114 = vpack.i.b16 %v1113, %v1113
      %v1116 = vlaneseq
      %v1117 = vshrl.u32 %v1116, 7
      %v1118 = vsub.s32 0, %v1117
      %v1119 = vrot.slane %v1114, %v1118
      %v1120 = vshrl.u32 %v685, 16
      %v1121 = vpack.i.b16 %v1120, %v1120
      %v1123 = vlaneseq
      %v1124 = vshrl.u32 %v1123, 7
      %v1125 = vsub.s32 0, %v1124
      %v1126 = vrot.slane %v1121, %v1125
      %v1127 = vshrl.u32 %v687, 16
      %v1128 = vpack.i.b16 %v1127, %v1127
      %v1130 = vlaneseq
      %v1131 = vshrl.u32 %v1130, 7
      %v1132 = vsub.s32 0, %v1131
      %v1133 = vrot.slane %v1128, %v1132
      %v1134 = vshrl.u32 %v670, 16
      %v1135 = vpack.i.b16 %v1134, %v1134
      %v1137 = vlaneseq
      %v1138 = vshrl.u32 %v1137, 7
      %v1139 = vsub.s32 0, %v1138
      %v1140 = vrot.slane %v1135, %v1139
      %v1141 = vshrl.u32 %v684, 16
      %v1142 = vpack.i.b16 %v1141, %v1141
      %v1144 = vlaneseq
      %v1145 = vshrl.u32 %v1144, 7
      %v1146 = vsub.s32 0, %v1145
      %v1147 = vrot.slane %v1142, %v1146
      %v1148 = vshrl.u32 %v686, 16
      %v1149 = vpack.i.b16 %v1148, %v1148
      %v1151 = vlaneseq
      %v1152 = vshrl.u32 %v1151, 7
      %v1153 = vsub.s32 0, %v1152
      %v1154 = vrot.slane %v1149, %v1153
      %v1155 = vshrl.u32 %v688, 16
      %v1156 = vpack.i.b16 %v1155, %v1155
      %v1158 = vlaneseq
      %v1159 = vshrl.u32 %v1158, 7
      %v1160 = vsub.s32 0, %v1159
      %v1161 = vrot.slane %v1156, %v1160
      %v1162 = vshrl.u32 %v712, 16
      %v1163 = vpack.i.b16 %v1162, %v1162
      %v1165 = vlaneseq
      %v1166 = vshrl.u32 %v1165, 7
      %v1167 = vsub.s32 0, %v1166
      %v1168 = vrot.slane %v1163, %v1167
      %v1169 = vshrl.u32 %v726, 16
      %v1170 = vpack.i.b16 %v1169, %v1169
      %v1172 = vlaneseq
      %v1173 = vshrl.u32 %v1172, 7
      %v1174 = vsub.s32 0, %v1173
      %v1175 = vrot.slane %v1170, %v1174
      %v1176 = vshrl.u32 %v734, 16
      %v1177 = vpack.i.b16 %v1176, %v1176
      %v1179 = vlaneseq
      %v1180 = vshrl.u32 %v1179, 7
      %v1181 = vsub.s32 0, %v1180
      %v1182 = vrot.slane %v1177, %v1181
      %v1183 = vshrl.u32 %v736, 16
      %v1184 = vpack.i.b16 %v1183, %v1183
      %v1186 = vlaneseq
      %v1187 = vshrl.u32 %v1186, 7
      %v1188 = vsub.s32 0, %v1187
      %v1189 = vrot.slane %v1184, %v1188
      %v1190 = vshrl.u32 %v719, 16
      %v1191 = vpack.i.b16 %v1190, %v1190
      %v1193 = vlaneseq
      %v1194 = vshrl.u32 %v1193, 7
      %v1195 = vsub.s32 0, %v1194
      %v1196 = vrot.slane %v1191, %v1195
      %v1197 = vshrl.u32 %v733, 16
      %v1198 = vpack.i.b16 %v1197, %v1197
      %v1200 = vlaneseq
      %v1201 = vshrl.u32 %v1200, 7
      %v1202 = vsub.s32 0, %v1201
      %v1203 = vrot.slane %v1198, %v1202
      %v1204 = vshrl.u32 %v735, 16
      %v1205 = vpack.i.b16 %v1204, %v1204
      %v1207 = vlaneseq
      %v1208 = vshrl.u32 %v1207, 7
      %v1209 = vsub.s32 0, %v1208
      %v1210 = vrot.slane %v1205, %v1209
      %v1211 = vshrl.u32 %v737, 16
      %v1212 = vpack.i.b16 %v1211, %v1211
      %v1214 = vlaneseq
      %v1215 = vshrl.u32 %v1214, 7
      %v1216 = vsub.s32 0, %v1215
      %v1217 = vrot.slane %v1212, %v1216
      %1250 = vrot.lane.b32.xlu0 %v1000, 2
      %v1251 = vpop.permute.xlu0 %1250
      %1252 = vrot.lane.b32.xlu0 %v1007, 2
      %v1253 = vpop.permute.xlu0 %1252
      %1254 = vrot.lane.b32.xlu0 %v1014, 2
      %v1255 = vpop.permute.xlu0 %1254
      %1256 = vrot.lane.b32.xlu0 %v1021, 2
      %v1257 = vpop.permute.xlu0 %1256
      %1258 = vrot.lane.b32.xlu0 %v1028, 2
      %v1259 = vpop.permute.xlu0 %1258
      %1260 = vrot.lane.b32.xlu0 %v1035, 2
      %v1261 = vpop.permute.xlu0 %1260
      %1262 = vrot.lane.b32.xlu0 %v1042, 2
      %v1263 = vpop.permute.xlu0 %1262
      %1264 = vrot.lane.b32.xlu0 %v1049, 2
      %v1265 = vpop.permute.xlu0 %1264
      %1266 = vrot.lane.b32.xlu0 %v1056, 2
      %v1267 = vpop.permute.xlu0 %1266
      %1268 = vrot.lane.b32.xlu0 %v1063, 2
      %v1269 = vpop.permute.xlu0 %1268
      %1270 = vrot.lane.b32.xlu0 %v1070, 2
      %v1271 = vpop.permute.xlu0 %1270
      %1272 = vrot.lane.b32.xlu0 %v1077, 2
      %v1273 = vpop.permute.xlu0 %1272
      %1274 = vrot.lane.b32.xlu0 %v1084, 2
      %v1275 = vpop.permute.xlu0 %1274
      %1276 = vrot.lane.b32.xlu0 %v1091, 2
      %v1277 = vpop.permute.xlu0 %1276
      %1278 = vrot.lane.b32.xlu0 %v1098, 2
      %v1279 = vpop.permute.xlu0 %1278
      %1280 = vrot.lane.b32.xlu0 %v1105, 2
      %v1281 = vpop.permute.xlu0 %1280
      %1282 = vrot.lane.b32.xlu0 %v1112, 2
      %v1283 = vpop.permute.xlu0 %1282
      %1284 = vrot.lane.b32.xlu0 %v1119, 2
      %v1285 = vpop.permute.xlu0 %1284
      %1286 = vrot.lane.b32.xlu0 %v1126, 2
      %v1287 = vpop.permute.xlu0 %1286
      %1288 = vrot.lane.b32.xlu0 %v1133, 2
      %v1289 = vpop.permute.xlu0 %1288
      %1290 = vrot.lane.b32.xlu0 %v1140, 2
      %v1291 = vpop.permute.xlu0 %1290
      %1292 = vrot.lane.b32.xlu0 %v1147, 2
      %v1293 = vpop.permute.xlu0 %1292
      %1294 = vrot.lane.b32.xlu0 %v1154, 2
      %v1295 = vpop.permute.xlu0 %1294
      %1296 = vrot.lane.b32.xlu0 %v1161, 2
      %v1297 = vpop.permute.xlu0 %1296
      %1298 = vrot.lane.b32.xlu0 %v1168, 2
      %v1299 = vpop.permute.xlu0 %1298
      %1300 = vrot.lane.b32.xlu0 %v1175, 2
      %v1301 = vpop.permute.xlu0 %1300
      %1302 = vrot.lane.b32.xlu0 %v1182, 2
      %v1303 = vpop.permute.xlu0 %1302
      %1304 = vrot.lane.b32.xlu0 %v1189, 2
      %v1305 = vpop.permute.xlu0 %1304
      %1306 = vrot.lane.b32.xlu0 %v1196, 2
      %v1307 = vpop.permute.xlu0 %1306
      %1308 = vrot.lane.b32.xlu0 %v1203, 2
      %v1309 = vpop.permute.xlu0 %1308
      %1310 = vrot.lane.b32.xlu0 %v1210, 2
      %v1311 = vpop.permute.xlu0 %1310
      %1312 = vrot.lane.b32.xlu0 %v1217, 2
      %v1313 = vpop.permute.xlu0 %1312
      %vm1314 = vcmask 15360
      %v1315 = vsel %vm1314, %v1251, %v1253
      %v1316 = vsel %vm1314, %v1253, %v1255
      %v1317 = vsel %vm1314, %v1255, %v1257
      %v1318 = vsel %vm1314, %v1257, %v1259
      %v1319 = vsel %vm1314, %v1259, %v1261
      %v1320 = vsel %vm1314, %v1261, %v1263
      %v1321 = vsel %vm1314, %v1263, %v1265
      %v1322 = vsel %vm1314, %v1265, %v1267
      %v1323 = vsel %vm1314, %v1267, %v1269
      %v1324 = vsel %vm1314, %v1269, %v1271
      %v1325 = vsel %vm1314, %v1271, %v1273
      %v1326 = vsel %vm1314, %v1273, %v1275
      %v1327 = vsel %vm1314, %v1275, %v1277
      %v1328 = vsel %vm1314, %v1277, %v1279
      %v1329 = vsel %vm1314, %v1279, %v1281
      %v1330 = vsel %vm1314, %v1281, %v1283
      %v1331 = vsel %vm1314, %v1283, %v1285
      %v1332 = vsel %vm1314, %v1285, %v1287
      %v1333 = vsel %vm1314, %v1287, %v1289
      %v1334 = vsel %vm1314, %v1289, %v1291
      %v1335 = vsel %vm1314, %v1291, %v1293
      %v1336 = vsel %vm1314, %v1293, %v1295
      %v1337 = vsel %vm1314, %v1295, %v1297
      %v1338 = vsel %vm1314, %v1297, %v1299
      %v1339 = vsel %vm1314, %v1299, %v1301
      %v1340 = vsel %vm1314, %v1301, %v1303
      %v1341 = vsel %vm1314, %v1303, %v1305
      %v1342 = vsel %vm1314, %v1305, %v1307
      %v1343 = vsel %vm1314, %v1307, %v1309
      %v1344 = vsel %vm1314, %v1309, %v1311
      %v1345 = vsel %vm1314, %v1311, %v1313
      %v1379 = vmul.bf16 %v533, %v1251
      %v1380 = vmul.bf16 %v468, %v1315
      %v1381 = vmul.bf16 %v469, %v1316
      %v1382 = vmul.bf16 %v470, %v1317
      %v1383 = vmul.bf16 %v471, %v1318
      %v1384 = vmul.bf16 %v472, %v1319
      %v1385 = vmul.bf16 %v473, %v1320
      %v1386 = vmul.bf16 %v474, %v1321
      %v1387 = vmul.bf16 %v475, %v1322
      %v1388 = vmul.bf16 %v476, %v1323
      %v1389 = vmul.bf16 %v477, %v1324
      %v1390 = vmul.bf16 %v478, %v1325
      %v1391 = vmul.bf16 %v479, %v1326
      %v1392 = vmul.bf16 %v480, %v1327
      %v1393 = vmul.bf16 %v481, %v1328
      %v1394 = vmul.bf16 %v482, %v1329
      %v1395 = vmul.bf16 %v483, %v1330
      %v1396 = vmul.bf16 %v484, %v1331
      %v1397 = vmul.bf16 %v485, %v1332
      %v1398 = vmul.bf16 %v486, %v1333
      %v1399 = vmul.bf16 %v487, %v1334
      %v1400 = vmul.bf16 %v488, %v1335
      %v1401 = vmul.bf16 %v489, %v1336
      %v1402 = vmul.bf16 %v490, %v1337
      %v1403 = vmul.bf16 %v491, %v1338
      %v1404 = vmul.bf16 %v492, %v1339
      %v1405 = vmul.bf16 %v493, %v1340
      %v1406 = vmul.bf16 %v494, %v1341
      %v1407 = vmul.bf16 %v495, %v1342
      %v1408 = vmul.bf16 %v496, %v1343
      %v1409 = vmul.bf16 %v497, %v1344
      %v1410 = vmul.bf16 %v498, %v1345
      %v1411 = vmul.bf16 %v536, %v1313
      %1444 = vrot.lane.b32.xlu0 %v744, 64
      %v1445 = vpop.permute.xlu0 %1444
      %1446 = vrot.lane.b32.xlu0 %v751, 64
      %v1447 = vpop.permute.xlu0 %1446
      %1448 = vrot.lane.b32.xlu0 %v758, 64
      %v1449 = vpop.permute.xlu0 %1448
      %1450 = vrot.lane.b32.xlu0 %v765, 64
      %v1451 = vpop.permute.xlu0 %1450
      %1452 = vrot.lane.b32.xlu0 %v772, 64
      %v1453 = vpop.permute.xlu0 %1452
      %1454 = vrot.lane.b32.xlu0 %v779, 64
      %v1455 = vpop.permute.xlu0 %1454
      %1456 = vrot.lane.b32.xlu0 %v786, 64
      %v1457 = vpop.permute.xlu0 %1456
      %1458 = vrot.lane.b32.xlu0 %v793, 64
      %v1459 = vpop.permute.xlu0 %1458
      %1460 = vrot.lane.b32.xlu0 %v800, 64
      %v1461 = vpop.permute.xlu0 %1460
      %1462 = vrot.lane.b32.xlu0 %v807, 64
      %v1463 = vpop.permute.xlu0 %1462
      %1464 = vrot.lane.b32.xlu0 %v814, 64
      %v1465 = vpop.permute.xlu0 %1464
      %1466 = vrot.lane.b32.xlu0 %v821, 64
      %v1467 = vpop.permute.xlu0 %1466
      %1468 = vrot.lane.b32.xlu0 %v828, 64
      %v1469 = vpop.permute.xlu0 %1468
      %1470 = vrot.lane.b32.xlu0 %v835, 64
      %v1471 = vpop.permute.xlu0 %1470
      %1472 = vrot.lane.b32.xlu0 %v842, 64
      %v1473 = vpop.permute.xlu0 %1472
      %1474 = vrot.lane.b32.xlu0 %v849, 64
      %v1475 = vpop.permute.xlu0 %1474
      %1476 = vrot.lane.b32.xlu0 %v856, 64
      %v1477 = vpop.permute.xlu0 %1476
      %1478 = vrot.lane.b32.xlu0 %v863, 64
      %v1479 = vpop.permute.xlu0 %1478
      %1480 = vrot.lane.b32.xlu0 %v870, 64
      %v1481 = vpop.permute.xlu0 %1480
      %1482 = vrot.lane.b32.xlu0 %v877, 64
      %v1483 = vpop.permute.xlu0 %1482
      %1484 = vrot.lane.b32.xlu0 %v884, 64
      %v1485 = vpop.permute.xlu0 %1484
      %1486 = vrot.lane.b32.xlu0 %v891, 64
      %v1487 = vpop.permute.xlu0 %1486
      %1488 = vrot.lane.b32.xlu0 %v898, 64
      %v1489 = vpop.permute.xlu0 %1488
      %1490 = vrot.lane.b32.xlu0 %v905, 64
      %v1491 = vpop.permute.xlu0 %1490
      %1492 = vrot.lane.b32.xlu0 %v912, 64
      %v1493 = vpop.permute.xlu0 %1492
      %1494 = vrot.lane.b32.xlu0 %v919, 64
      %v1495 = vpop.permute.xlu0 %1494
      %1496 = vrot.lane.b32.xlu0 %v926, 64
      %v1497 = vpop.permute.xlu0 %1496
      %1498 = vrot.lane.b32.xlu0 %v933, 64
      %v1499 = vpop.permute.xlu0 %1498
      %1500 = vrot.lane.b32.xlu0 %v940, 64
      %v1501 = vpop.permute.xlu0 %1500
      %1502 = vrot.lane.b32.xlu0 %v947, 64
      %v1503 = vpop.permute.xlu0 %1502
      %1504 = vrot.lane.b32.xlu0 %v954, 64
      %v1505 = vpop.permute.xlu0 %1504
      %1506 = vrot.lane.b32.xlu0 %v961, 64
      %v1507 = vpop.permute.xlu0 %1506
      %vm1508 = vcmask 523264
      %v1509 = vsel %vm1508, %v1445, %v1447
      %v1510 = vsel %vm1508, %v1447, %v1449
      %v1511 = vsel %vm1508, %v1449, %v1451
      %v1512 = vsel %vm1508, %v1451, %v1453
      %v1513 = vsel %vm1508, %v1453, %v1455
      %v1514 = vsel %vm1508, %v1455, %v1457
      %v1515 = vsel %vm1508, %v1457, %v1459
      %v1516 = vsel %vm1508, %v1459, %v1461
      %v1517 = vsel %vm1508, %v1461, %v1463
      %v1518 = vsel %vm1508, %v1463, %v1465
      %v1519 = vsel %vm1508, %v1465, %v1467
      %v1520 = vsel %vm1508, %v1467, %v1469
      %v1521 = vsel %vm1508, %v1469, %v1471
      %v1522 = vsel %vm1508, %v1471, %v1473
      %v1523 = vsel %vm1508, %v1473, %v1475
      %v1524 = vsel %vm1508, %v1475, %v1477
      %v1525 = vsel %vm1508, %v1477, %v1479
      %v1526 = vsel %vm1508, %v1479, %v1481
      %v1527 = vsel %vm1508, %v1481, %v1483
      %v1528 = vsel %vm1508, %v1483, %v1485
      %v1529 = vsel %vm1508, %v1485, %v1487
      %v1530 = vsel %vm1508, %v1487, %v1489
      %v1531 = vsel %vm1508, %v1489, %v1491
      %v1532 = vsel %vm1508, %v1491, %v1493
      %v1533 = vsel %vm1508, %v1493, %v1495
      %v1534 = vsel %vm1508, %v1495, %v1497
      %v1535 = vsel %vm1508, %v1497, %v1499
      %v1536 = vsel %vm1508, %v1499, %v1501
      %v1537 = vsel %vm1508, %v1501, %v1503
      %v1538 = vsel %vm1508, %v1503, %v1505
      %v1539 = vsel %vm1508, %v1505, %v1507
      %v1573 = vmul.bf16 %v533, %v1445
      %v1574 = vmul.bf16 %v468, %v1509
      %v1575 = vmul.bf16 %v469, %v1510
      %v1576 = vmul.bf16 %v470, %v1511
      %v1577 = vmul.bf16 %v471, %v1512
      %v1578 = vmul.bf16 %v472, %v1513
      %v1579 = vmul.bf16 %v473, %v1514
      %v1580 = vmul.bf16 %v474, %v1515
      %v1581 = vmul.bf16 %v475, %v1516
      %v1582 = vmul.bf16 %v476, %v1517
      %v1583 = vmul.bf16 %v477, %v1518
      %v1584 = vmul.bf16 %v478, %v1519
      %v1585 = vmul.bf16 %v479, %v1520
      %v1586 = vmul.bf16 %v480, %v1521
      %v1587 = vmul.bf16 %v481, %v1522
      %v1588 = vmul.bf16 %v482, %v1523
      %v1589 = vmul.bf16 %v483, %v1524
      %v1590 = vmul.bf16 %v484, %v1525
      %v1591 = vmul.bf16 %v485, %v1526
      %v1592 = vmul.bf16 %v486, %v1527
      %v1593 = vmul.bf16 %v487, %v1528
      %v1594 = vmul.bf16 %v488, %v1529
      %v1595 = vmul.bf16 %v489, %v1530
      %v1596 = vmul.bf16 %v490, %v1531
      %v1597 = vmul.bf16 %v491, %v1532
      %v1598 = vmul.bf16 %v492, %v1533
      %v1599 = vmul.bf16 %v493, %v1534
      %v1600 = vmul.bf16 %v494, %v1535
      %v1601 = vmul.bf16 %v495, %v1536
      %v1602 = vmul.bf16 %v496, %v1537
      %v1603 = vmul.bf16 %v497, %v1538
      %v1604 = vmul.bf16 %v498, %v1539
      %v1605 = vmul.bf16 %v536, %v1507
      %1606 = vrot.lane.b32.xlu0 %v1000, 66
      %v1607 = vpop.permute.xlu0 %1606
      %1608 = vrot.lane.b32.xlu0 %v1007, 66
      %v1609 = vpop.permute.xlu0 %1608
      %1610 = vrot.lane.b32.xlu0 %v1014, 66
      %v1611 = vpop.permute.xlu0 %1610
      %1612 = vrot.lane.b32.xlu0 %v1021, 66
      %v1613 = vpop.permute.xlu0 %1612
      %1614 = vrot.lane.b32.xlu0 %v1028, 66
      %v1615 = vpop.permute.xlu0 %1614
      %1616 = vrot.lane.b32.xlu0 %v1035, 66
      %v1617 = vpop.permute.xlu0 %1616
      %1618 = vrot.lane.b32.xlu0 %v1042, 66
      %v1619 = vpop.permute.xlu0 %1618
      %1620 = vrot.lane.b32.xlu0 %v1049, 66
      %v1621 = vpop.permute.xlu0 %1620
      %1622 = vrot.lane.b32.xlu0 %v1056, 66
      %v1623 = vpop.permute.xlu0 %1622
      %1624 = vrot.lane.b32.xlu0 %v1063, 66
      %v1625 = vpop.permute.xlu0 %1624
      %1626 = vrot.lane.b32.xlu0 %v1070, 66
      %v1627 = vpop.permute.xlu0 %1626
      %1628 = vrot.lane.b32.xlu0 %v1077, 66
      %v1629 = vpop.permute.xlu0 %1628
      %1630 = vrot.lane.b32.xlu0 %v1084, 66
      %v1631 = vpop.permute.xlu0 %1630
      %1632 = vrot.lane.b32.xlu0 %v1091, 66
      %v1633 = vpop.permute.xlu0 %1632
      %1634 = vrot.lane.b32.xlu0 %v1098, 66
      %v1635 = vpop.permute.xlu0 %1634
      %1636 = vrot.lane.b32.xlu0 %v1105, 66
      %v1637 = vpop.permute.xlu0 %1636
      %1638 = vrot.lane.b32.xlu0 %v1112, 66
      %v1639 = vpop.permute.xlu0 %1638
      %1640 = vrot.lane.b32.xlu0 %v1119, 66
      %v1641 = vpop.permute.xlu0 %1640
      %1642 = vrot.lane.b32.xlu0 %v1126, 66
      %v1643 = vpop.permute.xlu0 %1642
      %1644 = vrot.lane.b32.xlu0 %v1133, 66
      %v1645 = vpop.permute.xlu0 %1644
      %1646 = vrot.lane.b32.xlu0 %v1140, 66
      %v1647 = vpop.permute.xlu0 %1646
      %1648 = vrot.lane.b32.xlu0 %v1147, 66
      %v1649 = vpop.permute.xlu0 %1648
      %1650 = vrot.lane.b32.xlu0 %v1154, 66
      %v1651 = vpop.permute.xlu0 %1650
      %1652 = vrot.lane.b32.xlu0 %v1161, 66
      %v1653 = vpop.permute.xlu0 %1652
      %1654 = vrot.lane.b32.xlu0 %v1168, 66
      %v1655 = vpop.permute.xlu0 %1654
      %1656 = vrot.lane.b32.xlu0 %v1175, 66
      %v1657 = vpop.permute.xlu0 %1656
      %1658 = vrot.lane.b32.xlu0 %v1182, 66
      %v1659 = vpop.permute.xlu0 %1658
      %1660 = vrot.lane.b32.xlu0 %v1189, 66
      %v1661 = vpop.permute.xlu0 %1660
      %1662 = vrot.lane.b32.xlu0 %v1196, 66
      %v1663 = vpop.permute.xlu0 %1662
      %1664 = vrot.lane.b32.xlu0 %v1203, 66
      %v1665 = vpop.permute.xlu0 %1664
      %1666 = vrot.lane.b32.xlu0 %v1210, 66
      %v1667 = vpop.permute.xlu0 %1666
      %1668 = vrot.lane.b32.xlu0 %v1217, 66
      %v1669 = vpop.permute.xlu0 %1668
      %vm1670 = vcmask 539648
      %v1671 = vsel %vm1670, %v1607, %v1609
      %v1672 = vsel %vm1670, %v1609, %v1611
      %v1673 = vsel %vm1670, %v1611, %v1613
      %v1674 = vsel %vm1670, %v1613, %v1615
      %v1675 = vsel %vm1670, %v1615, %v1617
      %v1676 = vsel %vm1670, %v1617, %v1619
      %v1677 = vsel %vm1670, %v1619, %v1621
      %v1678 = vsel %vm1670, %v1621, %v1623
      %v1679 = vsel %vm1670, %v1623, %v1625
      %v1680 = vsel %vm1670, %v1625, %v1627
      %v1681 = vsel %vm1670, %v1627, %v1629
      %v1682 = vsel %vm1670, %v1629, %v1631
      %v1683 = vsel %vm1670, %v1631, %v1633
      %v1684 = vsel %vm1670, %v1633, %v1635
      %v1685 = vsel %vm1670, %v1635, %v1637
      %v1686 = vsel %vm1670, %v1637, %v1639
      %v1687 = vsel %vm1670, %v1639, %v1641
      %v1688 = vsel %vm1670, %v1641, %v1643
      %v1689 = vsel %vm1670, %v1643, %v1645
      %v1690 = vsel %vm1670, %v1645, %v1647
      %v1691 = vsel %vm1670, %v1647, %v1649
      %v1692 = vsel %vm1670, %v1649, %v1651
      %v1693 = vsel %vm1670, %v1651, %v1653
      %v1694 = vsel %vm1670, %v1653, %v1655
      %v1695 = vsel %vm1670, %v1655, %v1657
      %v1696 = vsel %vm1670, %v1657, %v1659
      %v1697 = vsel %vm1670, %v1659, %v1661
      %v1698 = vsel %vm1670, %v1661, %v1663
      %v1699 = vsel %vm1670, %v1663, %v1665
      %v1700 = vsel %vm1670, %v1665, %v1667
      %v1701 = vsel %vm1670, %v1667, %v1669
      %v1735 = vmul.bf16 %v533, %v1607
      %v1736 = vmul.bf16 %v468, %v1671
      %v1737 = vmul.bf16 %v469, %v1672
      %v1738 = vmul.bf16 %v470, %v1673
      %v1739 = vmul.bf16 %v471, %v1674
      %v1740 = vmul.bf16 %v472, %v1675
      %v1741 = vmul.bf16 %v473, %v1676
      %v1742 = vmul.bf16 %v474, %v1677
      %v1743 = vmul.bf16 %v475, %v1678
      %v1744 = vmul.bf16 %v476, %v1679
      %v1745 = vmul.bf16 %v477, %v1680
      %v1746 = vmul.bf16 %v478, %v1681
      %v1747 = vmul.bf16 %v479, %v1682
      %v1748 = vmul.bf16 %v480, %v1683
      %v1749 = vmul.bf16 %v481, %v1684
      %v1750 = vmul.bf16 %v482, %v1685
      %v1751 = vmul.bf16 %v483, %v1686
      %v1752 = vmul.bf16 %v484, %v1687
      %v1753 = vmul.bf16 %v485, %v1688
      %v1754 = vmul.bf16 %v486, %v1689
      %v1755 = vmul.bf16 %v487, %v1690
      %v1756 = vmul.bf16 %v488, %v1691
      %v1757 = vmul.bf16 %v489, %v1692
      %v1758 = vmul.bf16 %v490, %v1693
      %v1759 = vmul.bf16 %v491, %v1694
      %v1760 = vmul.bf16 %v492, %v1695
      %v1761 = vmul.bf16 %v493, %v1696
      %v1762 = vmul.bf16 %v494, %v1697
      %v1763 = vmul.bf16 %v495, %v1698
      %v1764 = vmul.bf16 %v496, %v1699
      %v1765 = vmul.bf16 %v497, %v1700
      %v1766 = vmul.bf16 %v498, %v1701
      %v1767 = vmul.bf16 %v536, %v1669
      %v1768 = vmul.bf16 %v468, %v744
      %v1769 = vmul.bf16 %v469, %v751
      %v1770 = vmul.bf16 %v470, %v758
      %v1771 = vmul.bf16 %v471, %v765
      %v1772 = vmul.bf16 %v472, %v772
      %v1773 = vmul.bf16 %v473, %v779
      %v1774 = vmul.bf16 %v474, %v786
      %v1775 = vmul.bf16 %v475, %v793
      %v1776 = vmul.bf16 %v476, %v800
      %v1777 = vmul.bf16 %v477, %v807
      %v1778 = vmul.bf16 %v478, %v814
      %v1779 = vmul.bf16 %v479, %v821
      %v1780 = vmul.bf16 %v480, %v828
      %v1781 = vmul.bf16 %v481, %v835
      %v1782 = vmul.bf16 %v482, %v842
      %v1783 = vmul.bf16 %v483, %v849
      %v1784 = vmul.bf16 %v484, %v856
      %v1785 = vmul.bf16 %v485, %v863
      %v1786 = vmul.bf16 %v486, %v870
      %v1787 = vmul.bf16 %v487, %v877
      %v1788 = vmul.bf16 %v488, %v884
      %v1789 = vmul.bf16 %v489, %v891
      %v1790 = vmul.bf16 %v490, %v898
      %v1791 = vmul.bf16 %v491, %v905
      %v1792 = vmul.bf16 %v492, %v912
      %v1793 = vmul.bf16 %v493, %v919
      %v1794 = vmul.bf16 %v494, %v926
      %v1795 = vmul.bf16 %v495, %v933
      %v1796 = vmul.bf16 %v496, %v940
      %v1797 = vmul.bf16 %v497, %v947
      %v1798 = vmul.bf16 %v498, %v954
      %v1799 = vmul.bf16 %v536, %v961
      %v1800 = vmul.bf16 %v468, %v1251
      %v1801 = vmul.bf16 %v469, %v1315
      %v1802 = vmul.bf16 %v470, %v1316
      %v1803 = vmul.bf16 %v471, %v1317
      %v1804 = vmul.bf16 %v472, %v1318
      %v1805 = vmul.bf16 %v473, %v1319
      %v1806 = vmul.bf16 %v474, %v1320
      %v1807 = vmul.bf16 %v475, %v1321
      %v1808 = vmul.bf16 %v476, %v1322
      %v1809 = vmul.bf16 %v477, %v1323
      %v1810 = vmul.bf16 %v478, %v1324
      %v1811 = vmul.bf16 %v479, %v1325
      %v1812 = vmul.bf16 %v480, %v1326
      %v1813 = vmul.bf16 %v481, %v1327
      %v1814 = vmul.bf16 %v482, %v1328
      %v1815 = vmul.bf16 %v483, %v1329
      %v1816 = vmul.bf16 %v484, %v1330
      %v1817 = vmul.bf16 %v485, %v1331
      %v1818 = vmul.bf16 %v486, %v1332
      %v1819 = vmul.bf16 %v487, %v1333
      %v1820 = vmul.bf16 %v488, %v1334
      %v1821 = vmul.bf16 %v489, %v1335
      %v1822 = vmul.bf16 %v490, %v1336
      %v1823 = vmul.bf16 %v491, %v1337
      %v1824 = vmul.bf16 %v492, %v1338
      %v1825 = vmul.bf16 %v493, %v1339
      %v1826 = vmul.bf16 %v494, %v1340
      %v1827 = vmul.bf16 %v495, %v1341
      %v1828 = vmul.bf16 %v496, %v1342
      %v1829 = vmul.bf16 %v497, %v1343
      %v1830 = vmul.bf16 %v498, %v1344
      %v1831 = vmul.bf16 %v536, %v1345
      %v1832 = vmul.bf16 %v1313, 0
      %v1835 = vrot.slane %v533, 4
      %v1836 = vrot.slane %v468, 4
      %v1837 = vrot.slane %v469, 4
      %v1838 = vrot.slane %v470, 4
      %v1839 = vrot.slane %v471, 4
      %v1840 = vrot.slane %v472, 4
      %v1841 = vrot.slane %v473, 4
      %v1842 = vrot.slane %v474, 4
      %v1843 = vrot.slane %v475, 4
      %v1844 = vrot.slane %v476, 4
      %v1845 = vrot.slane %v477, 4
      %v1846 = vrot.slane %v478, 4
      %v1847 = vrot.slane %v479, 4
      %v1848 = vrot.slane %v480, 4
      %v1849 = vrot.slane %v481, 4
      %v1850 = vrot.slane %v482, 4
      %v1851 = vrot.slane %v483, 4
      %v1852 = vrot.slane %v484, 4
      %v1853 = vrot.slane %v485, 4
      %v1854 = vrot.slane %v486, 4
      %v1855 = vrot.slane %v487, 4
      %v1856 = vrot.slane %v488, 4
      %v1857 = vrot.slane %v489, 4
      %v1858 = vrot.slane %v490, 4
      %v1859 = vrot.slane %v491, 4
      %v1860 = vrot.slane %v492, 4
      %v1861 = vrot.slane %v493, 4
      %v1862 = vrot.slane %v494, 4
      %v1863 = vrot.slane %v495, 4
      %v1864 = vrot.slane %v496, 4
      %v1865 = vrot.slane %v497, 4
      %v1866 = vrot.slane %v498, 4
      %v1867 = vrot.slane %v536, 4
      %1868 = vrot.lane.b32.xlu0 %v1835, 127
      %v1869 = vpop.permute.xlu0 %1868
      %1870 = vrot.lane.b32.xlu0 %v1836, 127
      %v1871 = vpop.permute.xlu0 %1870
      %1872 = vrot.lane.b32.xlu0 %v1837, 127
      %v1873 = vpop.permute.xlu0 %1872
      %1874 = vrot.lane.b32.xlu0 %v1838, 127
      %v1875 = vpop.permute.xlu0 %1874
      %1876 = vrot.lane.b32.xlu0 %v1839, 127
      %v1877 = vpop.permute.xlu0 %1876
      %1878 = vrot.lane.b32.xlu0 %v1840, 127
      %v1879 = vpop.permute.xlu0 %1878
      %1880 = vrot.lane.b32.xlu0 %v1841, 127
      %v1881 = vpop.permute.xlu0 %1880
      %1882 = vrot.lane.b32.xlu0 %v1842, 127
      %v1883 = vpop.permute.xlu0 %1882
      %1884 = vrot.lane.b32.xlu0 %v1843, 127
      %v1885 = vpop.permute.xlu0 %1884
      %1886 = vrot.lane.b32.xlu0 %v1844, 127
      %v1887 = vpop.permute.xlu0 %1886
      %1888 = vrot.lane.b32.xlu0 %v1845, 127
      %v1889 = vpop.permute.xlu0 %1888
      %1890 = vrot.lane.b32.xlu0 %v1846, 127
      %v1891 = vpop.permute.xlu0 %1890
      %1892 = vrot.lane.b32.xlu0 %v1847, 127
      %v1893 = vpop.permute.xlu0 %1892
      %1894 = vrot.lane.b32.xlu0 %v1848, 127
      %v1895 = vpop.permute.xlu0 %1894
      %1896 = vrot.lane.b32.xlu0 %v1849, 127
      %v1897 = vpop.permute.xlu0 %1896
      %1898 = vrot.lane.b32.xlu0 %v1850, 127
      %v1899 = vpop.permute.xlu0 %1898
      %1900 = vrot.lane.b32.xlu0 %v1851, 127
      %v1901 = vpop.permute.xlu0 %1900
      %1902 = vrot.lane.b32.xlu0 %v1852, 127
      %v1903 = vpop.permute.xlu0 %1902
      %1904 = vrot.lane.b32.xlu0 %v1853, 127
      %v1905 = vpop.permute.xlu0 %1904
      %1906 = vrot.lane.b32.xlu0 %v1854, 127
      %v1907 = vpop.permute.xlu0 %1906
      %1908 = vrot.lane.b32.xlu0 %v1855, 127
      %v1909 = vpop.permute.xlu0 %1908
      %1910 = vrot.lane.b32.xlu0 %v1856, 127
      %v1911 = vpop.permute.xlu0 %1910
      %1912 = vrot.lane.b32.xlu0 %v1857, 127
      %v1913 = vpop.permute.xlu0 %1912
      %1914 = vrot.lane.b32.xlu0 %v1858, 127
      %v1915 = vpop.permute.xlu0 %1914
      %1916 = vrot.lane.b32.xlu0 %v1859, 127
      %v1917 = vpop.permute.xlu0 %1916
      %1918 = vrot.lane.b32.xlu0 %v1860, 127
      %v1919 = vpop.permute.xlu0 %1918
      %1920 = vrot.lane.b32.xlu0 %v1861, 127
      %v1921 = vpop.permute.xlu0 %1920
      %1922 = vrot.lane.b32.xlu0 %v1862, 127
      %v1923 = vpop.permute.xlu0 %1922
      %1924 = vrot.lane.b32.xlu0 %v1863, 127
      %v1925 = vpop.permute.xlu0 %1924
      %1926 = vrot.lane.b32.xlu0 %v1864, 127
      %v1927 = vpop.permute.xlu0 %1926
      %1928 = vrot.lane.b32.xlu0 %v1865, 127
      %v1929 = vpop.permute.xlu0 %1928
      %1930 = vrot.lane.b32.xlu0 %v1866, 127
      %v1931 = vpop.permute.xlu0 %1930
      %1932 = vrot.lane.b32.xlu0 %v1867, 127
      %v1933 = vpop.permute.xlu0 %1932
      %vm1934 = vcmask 1039360
      %v1935 = vsel %vm1934, %v1869, %v1871
      %v1936 = vsel %vm1934, %v1871, %v1873
      %v1937 = vsel %vm1934, %v1873, %v1875
      %v1938 = vsel %vm1934, %v1875, %v1877
      %v1939 = vsel %vm1934, %v1877, %v1879
      %v1940 = vsel %vm1934, %v1879, %v1881
      %v1941 = vsel %vm1934, %v1881, %v1883
      %v1942 = vsel %vm1934, %v1883, %v1885
      %v1943 = vsel %vm1934, %v1885, %v1887
      %v1944 = vsel %vm1934, %v1887, %v1889
      %v1945 = vsel %vm1934, %v1889, %v1891
      %v1946 = vsel %vm1934, %v1891, %v1893
      %v1947 = vsel %vm1934, %v1893, %v1895
      %v1948 = vsel %vm1934, %v1895, %v1897
      %v1949 = vsel %vm1934, %v1897, %v1899
      %v1950 = vsel %vm1934, %v1899, %v1901
      %v1951 = vsel %vm1934, %v1901, %v1903
      %v1952 = vsel %vm1934, %v1903, %v1905
      %v1953 = vsel %vm1934, %v1905, %v1907
      %v1954 = vsel %vm1934, %v1907, %v1909
      %v1955 = vsel %vm1934, %v1909, %v1911
      %v1956 = vsel %vm1934, %v1911, %v1913
      %v1957 = vsel %vm1934, %v1913, %v1915
      %v1958 = vsel %vm1934, %v1915, %v1917
      %v1959 = vsel %vm1934, %v1917, %v1919
      %v1960 = vsel %vm1934, %v1919, %v1921
      %v1961 = vsel %vm1934, %v1921, %v1923
      %v1962 = vsel %vm1934, %v1923, %v1925
      %v1963 = vsel %vm1934, %v1925, %v1927
      %v1964 = vsel %vm1934, %v1927, %v1929
      %v1965 = vsel %vm1934, %v1929, %v1931
      %v1966 = vsel %vm1934, %v1931, %v1933
      %2000 = vrot.lane.b32.xlu0 %v1379, 126
      %v2001 = vpop.permute.xlu0 %2000
      %2002 = vrot.lane.b32.xlu0 %v1380, 126
      %v2003 = vpop.permute.xlu0 %2002
      %2004 = vrot.lane.b32.xlu0 %v1381, 126
      %v2005 = vpop.permute.xlu0 %2004
      %2006 = vrot.lane.b32.xlu0 %v1382, 126
      %v2007 = vpop.permute.xlu0 %2006
      %2008 = vrot.lane.b32.xlu0 %v1383, 126
      %v2009 = vpop.permute.xlu0 %2008
      %2010 = vrot.lane.b32.xlu0 %v1384, 126
      %v2011 = vpop.permute.xlu0 %2010
      %2012 = vrot.lane.b32.xlu0 %v1385, 126
      %v2013 = vpop.permute.xlu0 %2012
      %2014 = vrot.lane.b32.xlu0 %v1386, 126
      %v2015 = vpop.permute.xlu0 %2014
      %2016 = vrot.lane.b32.xlu0 %v1387, 126
      %v2017 = vpop.permute.xlu0 %2016
      %2018 = vrot.lane.b32.xlu0 %v1388, 126
      %v2019 = vpop.permute.xlu0 %2018
      %2020 = vrot.lane.b32.xlu0 %v1389, 126
      %v2021 = vpop.permute.xlu0 %2020
      %2022 = vrot.lane.b32.xlu0 %v1390, 126
      %v2023 = vpop.permute.xlu0 %2022
      %2024 = vrot.lane.b32.xlu0 %v1391, 126
      %v2025 = vpop.permute.xlu0 %2024
      %2026 = vrot.lane.b32.xlu0 %v1392, 126
      %v2027 = vpop.permute.xlu0 %2026
      %2028 = vrot.lane.b32.xlu0 %v1393, 126
      %v2029 = vpop.permute.xlu0 %2028
      %2030 = vrot.lane.b32.xlu0 %v1394, 126
      %v2031 = vpop.permute.xlu0 %2030
      %2032 = vrot.lane.b32.xlu0 %v1395, 126
      %v2033 = vpop.permute.xlu0 %2032
      %2034 = vrot.lane.b32.xlu0 %v1396, 126
      %v2035 = vpop.permute.xlu0 %2034
      %2036 = vrot.lane.b32.xlu0 %v1397, 126
      %v2037 = vpop.permute.xlu0 %2036
      %2038 = vrot.lane.b32.xlu0 %v1398, 126
      %v2039 = vpop.permute.xlu0 %2038
      %2040 = vrot.lane.b32.xlu0 %v1399, 126
      %v2041 = vpop.permute.xlu0 %2040
      %2042 = vrot.lane.b32.xlu0 %v1400, 126
      %v2043 = vpop.permute.xlu0 %2042
      %2044 = vrot.lane.b32.xlu0 %v1401, 126
      %v2045 = vpop.permute.xlu0 %2044
      %2046 = vrot.lane.b32.xlu0 %v1402, 126
      %v2047 = vpop.permute.xlu0 %2046
      %2048 = vrot.lane.b32.xlu0 %v1403, 126
      %v2049 = vpop.permute.xlu0 %2048
      %2050 = vrot.lane.b32.xlu0 %v1404, 126
      %v2051 = vpop.permute.xlu0 %2050
      %2052 = vrot.lane.b32.xlu0 %v1405, 126
      %v2053 = vpop.permute.xlu0 %2052
      %2054 = vrot.lane.b32.xlu0 %v1406, 126
      %v2055 = vpop.permute.xlu0 %2054
      %2056 = vrot.lane.b32.xlu0 %v1407, 126
      %v2057 = vpop.permute.xlu0 %2056
      %2058 = vrot.lane.b32.xlu0 %v1408, 126
      %v2059 = vpop.permute.xlu0 %2058
      %2060 = vrot.lane.b32.xlu0 %v1409, 126
      %v2061 = vpop.permute.xlu0 %2060
      %2062 = vrot.lane.b32.xlu0 %v1410, 126
      %v2063 = vpop.permute.xlu0 %2062
      %2064 = vrot.lane.b32.xlu0 %v1411, 126
      %v2065 = vpop.permute.xlu0 %2064
      %vm2066 = vcmask 1031168
      %v2067 = vsel %vm2066, %v2001, %v2003
      %v2068 = vsel %vm2066, %v2003, %v2005
      %v2069 = vsel %vm2066, %v2005, %v2007
      %v2070 = vsel %vm2066, %v2007, %v2009
      %v2071 = vsel %vm2066, %v2009, %v2011
      %v2072 = vsel %vm2066, %v2011, %v2013
      %v2073 = vsel %vm2066, %v2013, %v2015
      %v2074 = vsel %vm2066, %v2015, %v2017
      %v2075 = vsel %vm2066, %v2017, %v2019
      %v2076 = vsel %vm2066, %v2019, %v2021
      %v2077 = vsel %vm2066, %v2021, %v2023
      %v2078 = vsel %vm2066, %v2023, %v2025
      %v2079 = vsel %vm2066, %v2025, %v2027
      %v2080 = vsel %vm2066, %v2027, %v2029
      %v2081 = vsel %vm2066, %v2029, %v2031
      %v2082 = vsel %vm2066, %v2031, %v2033
      %v2083 = vsel %vm2066, %v2033, %v2035
      %v2084 = vsel %vm2066, %v2035, %v2037
      %v2085 = vsel %vm2066, %v2037, %v2039
      %v2086 = vsel %vm2066, %v2039, %v2041
      %v2087 = vsel %vm2066, %v2041, %v2043
      %v2088 = vsel %vm2066, %v2043, %v2045
      %v2089 = vsel %vm2066, %v2045, %v2047
      %v2090 = vsel %vm2066, %v2047, %v2049
      %v2091 = vsel %vm2066, %v2049, %v2051
      %v2092 = vsel %vm2066, %v2051, %v2053
      %v2093 = vsel %vm2066, %v2053, %v2055
      %v2094 = vsel %vm2066, %v2055, %v2057
      %v2095 = vsel %vm2066, %v2057, %v2059
      %v2096 = vsel %vm2066, %v2059, %v2061
      %v2097 = vsel %vm2066, %v2061, %v2063
      %v2098 = vsel %vm2066, %v2063, %v2065
      %v2132 = vrot.slane %v1573, 4
      %v2133 = vrot.slane %v1574, 4
      %v2134 = vrot.slane %v1575, 4
      %v2135 = vrot.slane %v1576, 4
      %v2136 = vrot.slane %v1577, 4
      %v2137 = vrot.slane %v1578, 4
      %v2138 = vrot.slane %v1579, 4
      %v2139 = vrot.slane %v1580, 4
      %v2140 = vrot.slane %v1581, 4
      %v2141 = vrot.slane %v1582, 4
      %v2142 = vrot.slane %v1583, 4
      %v2143 = vrot.slane %v1584, 4
      %v2144 = vrot.slane %v1585, 4
      %v2145 = vrot.slane %v1586, 4
      %v2146 = vrot.slane %v1587, 4
      %v2147 = vrot.slane %v1588, 4
      %v2148 = vrot.slane %v1589, 4
      %v2149 = vrot.slane %v1590, 4
      %v2150 = vrot.slane %v1591, 4
      %v2151 = vrot.slane %v1592, 4
      %v2152 = vrot.slane %v1593, 4
      %v2153 = vrot.slane %v1594, 4
      %v2154 = vrot.slane %v1595, 4
      %v2155 = vrot.slane %v1596, 4
      %v2156 = vrot.slane %v1597, 4
      %v2157 = vrot.slane %v1598, 4
      %v2158 = vrot.slane %v1599, 4
      %v2159 = vrot.slane %v1600, 4
      %v2160 = vrot.slane %v1601, 4
      %v2161 = vrot.slane %v1602, 4
      %v2162 = vrot.slane %v1603, 4
      %v2163 = vrot.slane %v1604, 4
      %v2164 = vrot.slane %v1605, 4
      %2165 = vrot.lane.b32.xlu0 %v2132, 64
      %v2166 = vpop.permute.xlu0 %2165
      %2167 = vrot.lane.b32.xlu0 %v2133, 64
      %v2168 = vpop.permute.xlu0 %2167
      %2169 = vrot.lane.b32.xlu0 %v2134, 64
      %v2170 = vpop.permute.xlu0 %2169
      %2171 = vrot.lane.b32.xlu0 %v2135, 64
      %v2172 = vpop.permute.xlu0 %2171
      %2173 = vrot.lane.b32.xlu0 %v2136, 64
      %v2174 = vpop.permute.xlu0 %2173
      %2175 = vrot.lane.b32.xlu0 %v2137, 64
      %v2176 = vpop.permute.xlu0 %2175
      %2177 = vrot.lane.b32.xlu0 %v2138, 64
      %v2178 = vpop.permute.xlu0 %2177
      %2179 = vrot.lane.b32.xlu0 %v2139, 64
      %v2180 = vpop.permute.xlu0 %2179
      %2181 = vrot.lane.b32.xlu0 %v2140, 64
      %v2182 = vpop.permute.xlu0 %2181
      %2183 = vrot.lane.b32.xlu0 %v2141, 64
      %v2184 = vpop.permute.xlu0 %2183
      %2185 = vrot.lane.b32.xlu0 %v2142, 64
      %v2186 = vpop.permute.xlu0 %2185
      %2187 = vrot.lane.b32.xlu0 %v2143, 64
      %v2188 = vpop.permute.xlu0 %2187
      %2189 = vrot.lane.b32.xlu0 %v2144, 64
      %v2190 = vpop.permute.xlu0 %2189
      %2191 = vrot.lane.b32.xlu0 %v2145, 64
      %v2192 = vpop.permute.xlu0 %2191
      %2193 = vrot.lane.b32.xlu0 %v2146, 64
      %v2194 = vpop.permute.xlu0 %2193
      %2195 = vrot.lane.b32.xlu0 %v2147, 64
      %v2196 = vpop.permute.xlu0 %2195
      %2197 = vrot.lane.b32.xlu0 %v2148, 64
      %v2198 = vpop.permute.xlu0 %2197
      %2199 = vrot.lane.b32.xlu0 %v2149, 64
      %v2200 = vpop.permute.xlu0 %2199
      %2201 = vrot.lane.b32.xlu0 %v2150, 64
      %v2202 = vpop.permute.xlu0 %2201
      %2203 = vrot.lane.b32.xlu0 %v2151, 64
      %v2204 = vpop.permute.xlu0 %2203
      %2205 = vrot.lane.b32.xlu0 %v2152, 64
      %v2206 = vpop.permute.xlu0 %2205
      %2207 = vrot.lane.b32.xlu0 %v2153, 64
      %v2208 = vpop.permute.xlu0 %2207
      %2209 = vrot.lane.b32.xlu0 %v2154, 64
      %v2210 = vpop.permute.xlu0 %2209
      %2211 = vrot.lane.b32.xlu0 %v2155, 64
      %v2212 = vpop.permute.xlu0 %2211
      %2213 = vrot.lane.b32.xlu0 %v2156, 64
      %v2214 = vpop.permute.xlu0 %2213
      %2215 = vrot.lane.b32.xlu0 %v2157, 64
      %v2216 = vpop.permute.xlu0 %2215
      %2217 = vrot.lane.b32.xlu0 %v2158, 64
      %v2218 = vpop.permute.xlu0 %2217
      %2219 = vrot.lane.b32.xlu0 %v2159, 64
      %v2220 = vpop.permute.xlu0 %2219
      %2221 = vrot.lane.b32.xlu0 %v2160, 64
      %v2222 = vpop.permute.xlu0 %2221
      %2223 = vrot.lane.b32.xlu0 %v2161, 64
      %v2224 = vpop.permute.xlu0 %2223
      %2225 = vrot.lane.b32.xlu0 %v2162, 64
      %v2226 = vpop.permute.xlu0 %2225
      %2227 = vrot.lane.b32.xlu0 %v2163, 64
      %v2228 = vpop.permute.xlu0 %2227
      %2229 = vrot.lane.b32.xlu0 %v2164, 64
      %v2230 = vpop.permute.xlu0 %2229
      %v2231 = vsel %vm1508, %v2166, %v2168
      %v2232 = vsel %vm1508, %v2168, %v2170
      %v2233 = vsel %vm1508, %v2170, %v2172
      %v2234 = vsel %vm1508, %v2172, %v2174
      %v2235 = vsel %vm1508, %v2174, %v2176
      %v2236 = vsel %vm1508, %v2176, %v2178
      %v2237 = vsel %vm1508, %v2178, %v2180
      %v2238 = vsel %vm1508, %v2180, %v2182
      %v2239 = vsel %vm1508, %v2182, %v2184
      %v2240 = vsel %vm1508, %v2184, %v2186
      %v2241 = vsel %vm1508, %v2186, %v2188
      %v2242 = vsel %vm1508, %v2188, %v2190
      %v2243 = vsel %vm1508, %v2190, %v2192
      %v2244 = vsel %vm1508, %v2192, %v2194
      %v2245 = vsel %vm1508, %v2194, %v2196
      %v2246 = vsel %vm1508, %v2196, %v2198
      %v2247 = vsel %vm1508, %v2198, %v2200
      %v2248 = vsel %vm1508, %v2200, %v2202
      %v2249 = vsel %vm1508, %v2202, %v2204
      %v2250 = vsel %vm1508, %v2204, %v2206
      %v2251 = vsel %vm1508, %v2206, %v2208
      %v2252 = vsel %vm1508, %v2208, %v2210
      %v2253 = vsel %vm1508, %v2210, %v2212
      %v2254 = vsel %vm1508, %v2212, %v2214
      %v2255 = vsel %vm1508, %v2214, %v2216
      %v2256 = vsel %vm1508, %v2216, %v2218
      %v2257 = vsel %vm1508, %v2218, %v2220
      %v2258 = vsel %vm1508, %v2220, %v2222
      %v2259 = vsel %vm1508, %v2222, %v2224
      %v2260 = vsel %vm1508, %v2224, %v2226
      %v2261 = vsel %vm1508, %v2226, %v2228
      %v2262 = vsel %vm1508, %v2228, %v2230
      %2263 = vrot.lane.b32.xlu0 %v533, 63
      %v2264 = vpop.permute.xlu0 %2263
      %2265 = vrot.lane.b32.xlu0 %v468, 63
      %v2266 = vpop.permute.xlu0 %2265
      %2267 = vrot.lane.b32.xlu0 %v469, 63
      %v2268 = vpop.permute.xlu0 %2267
      %2269 = vrot.lane.b32.xlu0 %v470, 63
      %v2270 = vpop.permute.xlu0 %2269
      %2271 = vrot.lane.b32.xlu0 %v471, 63
      %v2272 = vpop.permute.xlu0 %2271
      %2273 = vrot.lane.b32.xlu0 %v472, 63
      %v2274 = vpop.permute.xlu0 %2273
      %2275 = vrot.lane.b32.xlu0 %v473, 63
      %v2276 = vpop.permute.xlu0 %2275
      %2277 = vrot.lane.b32.xlu0 %v474, 63
      %v2278 = vpop.permute.xlu0 %2277
      %2279 = vrot.lane.b32.xlu0 %v475, 63
      %v2280 = vpop.permute.xlu0 %2279
      %2281 = vrot.lane.b32.xlu0 %v476, 63
      %v2282 = vpop.permute.xlu0 %2281
      %2283 = vrot.lane.b32.xlu0 %v477, 63
      %v2284 = vpop.permute.xlu0 %2283
      %2285 = vrot.lane.b32.xlu0 %v478, 63
      %v2286 = vpop.permute.xlu0 %2285
      %2287 = vrot.lane.b32.xlu0 %v479, 63
      %v2288 = vpop.permute.xlu0 %2287
      %2289 = vrot.lane.b32.xlu0 %v480, 63
      %v2290 = vpop.permute.xlu0 %2289
      %2291 = vrot.lane.b32.xlu0 %v481, 63
      %v2292 = vpop.permute.xlu0 %2291
      %2293 = vrot.lane.b32.xlu0 %v482, 63
      %v2294 = vpop.permute.xlu0 %2293
      %2295 = vrot.lane.b32.xlu0 %v483, 63
      %v2296 = vpop.permute.xlu0 %2295
      %2297 = vrot.lane.b32.xlu0 %v484, 63
      %v2298 = vpop.permute.xlu0 %2297
      %2299 = vrot.lane.b32.xlu0 %v485, 63
      %v2300 = vpop.permute.xlu0 %2299
      %2301 = vrot.lane.b32.xlu0 %v486, 63
      %v2302 = vpop.permute.xlu0 %2301
      %2303 = vrot.lane.b32.xlu0 %v487, 63
      %v2304 = vpop.permute.xlu0 %2303
      %2305 = vrot.lane.b32.xlu0 %v488, 63
      %v2306 = vpop.permute.xlu0 %2305
      %2307 = vrot.lane.b32.xlu0 %v489, 63
      %v2308 = vpop.permute.xlu0 %2307
      %2309 = vrot.lane.b32.xlu0 %v490, 63
      %v2310 = vpop.permute.xlu0 %2309
      %2311 = vrot.lane.b32.xlu0 %v491, 63
      %v2312 = vpop.permute.xlu0 %2311
      %2313 = vrot.lane.b32.xlu0 %v492, 63
      %v2314 = vpop.permute.xlu0 %2313
      %2315 = vrot.lane.b32.xlu0 %v493, 63
      %v2316 = vpop.permute.xlu0 %2315
      %2317 = vrot.lane.b32.xlu0 %v494, 63
      %v2318 = vpop.permute.xlu0 %2317
      %2319 = vrot.lane.b32.xlu0 %v495, 63
      %v2320 = vpop.permute.xlu0 %2319
      %2321 = vrot.lane.b32.xlu0 %v496, 63
      %v2322 = vpop.permute.xlu0 %2321
      %2323 = vrot.lane.b32.xlu0 %v497, 63
      %v2324 = vpop.permute.xlu0 %2323
      %2325 = vrot.lane.b32.xlu0 %v498, 63
      %v2326 = vpop.permute.xlu0 %2325
      %2327 = vrot.lane.b32.xlu0 %v536, 63
      %v2328 = vpop.permute.xlu0 %2327
      %vm2329 = vcmask 515072
      %v2330 = vsel %vm2329, %v2264, %v2266
      %v2331 = vsel %vm2329, %v2266, %v2268
      %v2332 = vsel %vm2329, %v2268, %v2270
      %v2333 = vsel %vm2329, %v2270, %v2272
      %v2334 = vsel %vm2329, %v2272, %v2274
      %v2335 = vsel %vm2329, %v2274, %v2276
      %v2336 = vsel %vm2329, %v2276, %v2278
      %v2337 = vsel %vm2329, %v2278, %v2280
      %v2338 = vsel %vm2329, %v2280, %v2282
      %v2339 = vsel %vm2329, %v2282, %v2284
      %v2340 = vsel %vm2329, %v2284, %v2286
      %v2341 = vsel %vm2329, %v2286, %v2288
      %v2342 = vsel %vm2329, %v2288, %v2290
      %v2343 = vsel %vm2329, %v2290, %v2292
      %v2344 = vsel %vm2329, %v2292, %v2294
      %v2345 = vsel %vm2329, %v2294, %v2296
      %v2346 = vsel %vm2329, %v2296, %v2298
      %v2347 = vsel %vm2329, %v2298, %v2300
      %v2348 = vsel %vm2329, %v2300, %v2302
      %v2349 = vsel %vm2329, %v2302, %v2304
      %v2350 = vsel %vm2329, %v2304, %v2306
      %v2351 = vsel %vm2329, %v2306, %v2308
      %v2352 = vsel %vm2329, %v2308, %v2310
      %v2353 = vsel %vm2329, %v2310, %v2312
      %v2354 = vsel %vm2329, %v2312, %v2314
      %v2355 = vsel %vm2329, %v2314, %v2316
      %v2356 = vsel %vm2329, %v2316, %v2318
      %v2357 = vsel %vm2329, %v2318, %v2320
      %v2358 = vsel %vm2329, %v2320, %v2322
      %v2359 = vsel %vm2329, %v2322, %v2324
      %v2360 = vsel %vm2329, %v2324, %v2326
      %v2361 = vsel %vm2329, %v2326, %v2328
      %v2395 = vrot.slane %v1735, 4
      %v2396 = vrot.slane %v1736, 4
      %v2397 = vrot.slane %v1737, 4
      %v2398 = vrot.slane %v1738, 4
      %v2399 = vrot.slane %v1739, 4
      %v2400 = vrot.slane %v1740, 4
      %v2401 = vrot.slane %v1741, 4
      %v2402 = vrot.slane %v1742, 4
      %v2403 = vrot.slane %v1743, 4
      %v2404 = vrot.slane %v1744, 4
      %v2405 = vrot.slane %v1745, 4
      %v2406 = vrot.slane %v1746, 4
      %v2407 = vrot.slane %v1747, 4
      %v2408 = vrot.slane %v1748, 4
      %v2409 = vrot.slane %v1749, 4
      %v2410 = vrot.slane %v1750, 4
      %v2411 = vrot.slane %v1751, 4
      %v2412 = vrot.slane %v1752, 4
      %v2413 = vrot.slane %v1753, 4
      %v2414 = vrot.slane %v1754, 4
      %v2415 = vrot.slane %v1755, 4
      %v2416 = vrot.slane %v1756, 4
      %v2417 = vrot.slane %v1757, 4
      %v2418 = vrot.slane %v1758, 4
      %v2419 = vrot.slane %v1759, 4
      %v2420 = vrot.slane %v1760, 4
      %v2421 = vrot.slane %v1761, 4
      %v2422 = vrot.slane %v1762, 4
      %v2423 = vrot.slane %v1763, 4
      %v2424 = vrot.slane %v1764, 4
      %v2425 = vrot.slane %v1765, 4
      %v2426 = vrot.slane %v1766, 4
      %v2427 = vrot.slane %v1767, 4
      %2428 = vrot.lane.b32.xlu0 %v2395, 62
      %v2429 = vpop.permute.xlu0 %2428
      %2430 = vrot.lane.b32.xlu0 %v2396, 62
      %v2431 = vpop.permute.xlu0 %2430
      %2432 = vrot.lane.b32.xlu0 %v2397, 62
      %v2433 = vpop.permute.xlu0 %2432
      %2434 = vrot.lane.b32.xlu0 %v2398, 62
      %v2435 = vpop.permute.xlu0 %2434
      %2436 = vrot.lane.b32.xlu0 %v2399, 62
      %v2437 = vpop.permute.xlu0 %2436
      %2438 = vrot.lane.b32.xlu0 %v2400, 62
      %v2439 = vpop.permute.xlu0 %2438
      %2440 = vrot.lane.b32.xlu0 %v2401, 62
      %v2441 = vpop.permute.xlu0 %2440
      %2442 = vrot.lane.b32.xlu0 %v2402, 62
      %v2443 = vpop.permute.xlu0 %2442
      %2444 = vrot.lane.b32.xlu0 %v2403, 62
      %v2445 = vpop.permute.xlu0 %2444
      %2446 = vrot.lane.b32.xlu0 %v2404, 62
      %v2447 = vpop.permute.xlu0 %2446
      %2448 = vrot.lane.b32.xlu0 %v2405, 62
      %v2449 = vpop.permute.xlu0 %2448
      %2450 = vrot.lane.b32.xlu0 %v2406, 62
      %v2451 = vpop.permute.xlu0 %2450
      %2452 = vrot.lane.b32.xlu0 %v2407, 62
      %v2453 = vpop.permute.xlu0 %2452
      %2454 = vrot.lane.b32.xlu0 %v2408, 62
      %v2455 = vpop.permute.xlu0 %2454
      %2456 = vrot.lane.b32.xlu0 %v2409, 62
      %v2457 = vpop.permute.xlu0 %2456
      %2458 = vrot.lane.b32.xlu0 %v2410, 62
      %v2459 = vpop.permute.xlu0 %2458
      %2460 = vrot.lane.b32.xlu0 %v2411, 62
      %v2461 = vpop.permute.xlu0 %2460
      %2462 = vrot.lane.b32.xlu0 %v2412, 62
      %v2463 = vpop.permute.xlu0 %2462
      %2464 = vrot.lane.b32.xlu0 %v2413, 62
      %v2465 = vpop.permute.xlu0 %2464
      %2466 = vrot.lane.b32.xlu0 %v2414, 62
      %v2467 = vpop.permute.xlu0 %2466
      %2468 = vrot.lane.b32.xlu0 %v2415, 62
      %v2469 = vpop.permute.xlu0 %2468
      %2470 = vrot.lane.b32.xlu0 %v2416, 62
      %v2471 = vpop.permute.xlu0 %2470
      %2472 = vrot.lane.b32.xlu0 %v2417, 62
      %v2473 = vpop.permute.xlu0 %2472
      %2474 = vrot.lane.b32.xlu0 %v2418, 62
      %v2475 = vpop.permute.xlu0 %2474
      %2476 = vrot.lane.b32.xlu0 %v2419, 62
      %v2477 = vpop.permute.xlu0 %2476
      %2478 = vrot.lane.b32.xlu0 %v2420, 62
      %v2479 = vpop.permute.xlu0 %2478
      %2480 = vrot.lane.b32.xlu0 %v2421, 62
      %v2481 = vpop.permute.xlu0 %2480
      %2482 = vrot.lane.b32.xlu0 %v2422, 62
      %v2483 = vpop.permute.xlu0 %2482
      %2484 = vrot.lane.b32.xlu0 %v2423, 62
      %v2485 = vpop.permute.xlu0 %2484
      %2486 = vrot.lane.b32.xlu0 %v2424, 62
      %v2487 = vpop.permute.xlu0 %2486
      %2488 = vrot.lane.b32.xlu0 %v2425, 62
      %v2489 = vpop.permute.xlu0 %2488
      %2490 = vrot.lane.b32.xlu0 %v2426, 62
      %v2491 = vpop.permute.xlu0 %2490
      %2492 = vrot.lane.b32.xlu0 %v2427, 62
      %v2493 = vpop.permute.xlu0 %2492
      %vm2494 = vcmask 506880
      %v2495 = vsel %vm2494, %v2429, %v2431
      %v2496 = vsel %vm2494, %v2431, %v2433
      %v2497 = vsel %vm2494, %v2433, %v2435
      %v2498 = vsel %vm2494, %v2435, %v2437
      %v2499 = vsel %vm2494, %v2437, %v2439
      %v2500 = vsel %vm2494, %v2439, %v2441
      %v2501 = vsel %vm2494, %v2441, %v2443
      %v2502 = vsel %vm2494, %v2443, %v2445
      %v2503 = vsel %vm2494, %v2445, %v2447
      %v2504 = vsel %vm2494, %v2447, %v2449
      %v2505 = vsel %vm2494, %v2449, %v2451
      %v2506 = vsel %vm2494, %v2451, %v2453
      %v2507 = vsel %vm2494, %v2453, %v2455
      %v2508 = vsel %vm2494, %v2455, %v2457
      %v2509 = vsel %vm2494, %v2457, %v2459
      %v2510 = vsel %vm2494, %v2459, %v2461
      %v2511 = vsel %vm2494, %v2461, %v2463
      %v2512 = vsel %vm2494, %v2463, %v2465
      %v2513 = vsel %vm2494, %v2465, %v2467
      %v2514 = vsel %vm2494, %v2467, %v2469
      %v2515 = vsel %vm2494, %v2469, %v2471
      %v2516 = vsel %vm2494, %v2471, %v2473
      %v2517 = vsel %vm2494, %v2473, %v2475
      %v2518 = vsel %vm2494, %v2475, %v2477
      %v2519 = vsel %vm2494, %v2477, %v2479
      %v2520 = vsel %vm2494, %v2479, %v2481
      %v2521 = vsel %vm2494, %v2481, %v2483
      %v2522 = vsel %vm2494, %v2483, %v2485
      %v2523 = vsel %vm2494, %v2485, %v2487
      %v2524 = vsel %vm2494, %v2487, %v2489
      %v2525 = vsel %vm2494, %v2489, %v2491
      %v2526 = vsel %vm2494, %v2491, %v2493
      %v2528 = vrot.slane 0, 4
      %2529 = vrot.lane.b32.xlu0 %v2528, 127
      %v2530 = vpop.permute.xlu0 %2529
      %v2531 = vsel %vm1934, %v1933, %v2530
      %2565 = vrot.lane.b32.xlu0 %v1800, 126
      %v2566 = vpop.permute.xlu0 %2565
      %2567 = vrot.lane.b32.xlu0 %v1801, 126
      %v2568 = vpop.permute.xlu0 %2567
      %2569 = vrot.lane.b32.xlu0 %v1802, 126
      %v2570 = vpop.permute.xlu0 %2569
      %2571 = vrot.lane.b32.xlu0 %v1803, 126
      %v2572 = vpop.permute.xlu0 %2571
      %2573 = vrot.lane.b32.xlu0 %v1804, 126
      %v2574 = vpop.permute.xlu0 %2573
      %2575 = vrot.lane.b32.xlu0 %v1805, 126
      %v2576 = vpop.permute.xlu0 %2575
      %2577 = vrot.lane.b32.xlu0 %v1806, 126
      %v2578 = vpop.permute.xlu0 %2577
      %2579 = vrot.lane.b32.xlu0 %v1807, 126
      %v2580 = vpop.permute.xlu0 %2579
      %2581 = vrot.lane.b32.xlu0 %v1808, 126
      %v2582 = vpop.permute.xlu0 %2581
      %2583 = vrot.lane.b32.xlu0 %v1809, 126
      %v2584 = vpop.permute.xlu0 %2583
      %2585 = vrot.lane.b32.xlu0 %v1810, 126
      %v2586 = vpop.permute.xlu0 %2585
      %2587 = vrot.lane.b32.xlu0 %v1811, 126
      %v2588 = vpop.permute.xlu0 %2587
      %2589 = vrot.lane.b32.xlu0 %v1812, 126
      %v2590 = vpop.permute.xlu0 %2589
      %2591 = vrot.lane.b32.xlu0 %v1813, 126
      %v2592 = vpop.permute.xlu0 %2591
      %2593 = vrot.lane.b32.xlu0 %v1814, 126
      %v2594 = vpop.permute.xlu0 %2593
      %2595 = vrot.lane.b32.xlu0 %v1815, 126
      %v2596 = vpop.permute.xlu0 %2595
      %2597 = vrot.lane.b32.xlu0 %v1816, 126
      %v2598 = vpop.permute.xlu0 %2597
      %2599 = vrot.lane.b32.xlu0 %v1817, 126
      %v2600 = vpop.permute.xlu0 %2599
      %2601 = vrot.lane.b32.xlu0 %v1818, 126
      %v2602 = vpop.permute.xlu0 %2601
      %2603 = vrot.lane.b32.xlu0 %v1819, 126
      %v2604 = vpop.permute.xlu0 %2603
      %2605 = vrot.lane.b32.xlu0 %v1820, 126
      %v2606 = vpop.permute.xlu0 %2605
      %2607 = vrot.lane.b32.xlu0 %v1821, 126
      %v2608 = vpop.permute.xlu0 %2607
      %2609 = vrot.lane.b32.xlu0 %v1822, 126
      %v2610 = vpop.permute.xlu0 %2609
      %2611 = vrot.lane.b32.xlu0 %v1823, 126
      %v2612 = vpop.permute.xlu0 %2611
      %2613 = vrot.lane.b32.xlu0 %v1824, 126
      %v2614 = vpop.permute.xlu0 %2613
      %2615 = vrot.lane.b32.xlu0 %v1825, 126
      %v2616 = vpop.permute.xlu0 %2615
      %2617 = vrot.lane.b32.xlu0 %v1826, 126
      %v2618 = vpop.permute.xlu0 %2617
      %2619 = vrot.lane.b32.xlu0 %v1827, 126
      %v2620 = vpop.permute.xlu0 %2619
      %2621 = vrot.lane.b32.xlu0 %v1828, 126
      %v2622 = vpop.permute.xlu0 %2621
      %2623 = vrot.lane.b32.xlu0 %v1829, 126
      %v2624 = vpop.permute.xlu0 %2623
      %2625 = vrot.lane.b32.xlu0 %v1830, 126
      %v2626 = vpop.permute.xlu0 %2625
      %2627 = vrot.lane.b32.xlu0 %v1831, 126
      %v2628 = vpop.permute.xlu0 %2627
      %2629 = vrot.lane.b32.xlu0 %v1832, 126
      %v2630 = vpop.permute.xlu0 %2629
      %v2631 = vsel %vm2066, %v2566, %v2568
      %v2632 = vsel %vm2066, %v2568, %v2570
      %v2633 = vsel %vm2066, %v2570, %v2572
      %v2634 = vsel %vm2066, %v2572, %v2574
      %v2635 = vsel %vm2066, %v2574, %v2576
      %v2636 = vsel %vm2066, %v2576, %v2578
      %v2637 = vsel %vm2066, %v2578, %v2580
      %v2638 = vsel %vm2066, %v2580, %v2582
      %v2639 = vsel %vm2066, %v2582, %v2584
      %v2640 = vsel %vm2066, %v2584, %v2586
      %v2641 = vsel %vm2066, %v2586, %v2588
      %v2642 = vsel %vm2066, %v2588, %v2590
      %v2643 = vsel %vm2066, %v2590, %v2592
      %v2644 = vsel %vm2066, %v2592, %v2594
      %v2645 = vsel %vm2066, %v2594, %v2596
      %v2646 = vsel %vm2066, %v2596, %v2598
      %v2647 = vsel %vm2066, %v2598, %v2600
      %v2648 = vsel %vm2066, %v2600, %v2602
      %v2649 = vsel %vm2066, %v2602, %v2604
      %v2650 = vsel %vm2066, %v2604, %v2606
      %v2651 = vsel %vm2066, %v2606, %v2608
      %v2652 = vsel %vm2066, %v2608, %v2610
      %v2653 = vsel %vm2066, %v2610, %v2612
      %v2654 = vsel %vm2066, %v2612, %v2614
      %v2655 = vsel %vm2066, %v2614, %v2616
      %v2656 = vsel %vm2066, %v2616, %v2618
      %v2657 = vsel %vm2066, %v2618, %v2620
      %v2658 = vsel %vm2066, %v2620, %v2622
      %v2659 = vsel %vm2066, %v2622, %v2624
      %v2660 = vsel %vm2066, %v2624, %v2626
      %v2661 = vsel %vm2066, %v2626, %v2628
      %v2662 = vsel %vm2066, %v2628, %v2630
      %vm2663 = vcmask 1043456
      %v2666 = vsel %vm2663, %v962, %v1935
      %v2670 = vsel %vm2663, %v963, %v1936
      %v2674 = vsel %vm2663, %v964, %v1937
      %v2678 = vsel %vm2663, %v965, %v1938
      %v2682 = vsel %vm2663, %v966, %v1939
      %v2686 = vsel %vm2663, %v967, %v1940
      %v2690 = vsel %vm2663, %v968, %v1941
      %v2694 = vsel %vm2663, %v969, %v1942
      %v2698 = vsel %vm2663, %v970, %v1943
      %v2702 = vsel %vm2663, %v971, %v1944
      %v2706 = vsel %vm2663, %v972, %v1945
      %v2710 = vsel %vm2663, %v973, %v1946
      %v2714 = vsel %vm2663, %v974, %v1947
      %v2718 = vsel %vm2663, %v975, %v1948
      %v2722 = vsel %vm2663, %v976, %v1949
      %v2726 = vsel %vm2663, %v977, %v1950
      %v2730 = vsel %vm2663, %v978, %v1951
      %v2734 = vsel %vm2663, %v979, %v1952
      %v2738 = vsel %vm2663, %v980, %v1953
      %v2742 = vsel %vm2663, %v981, %v1954
      %v2746 = vsel %vm2663, %v982, %v1955
      %v2750 = vsel %vm2663, %v983, %v1956
      %v2754 = vsel %vm2663, %v984, %v1957
      %v2758 = vsel %vm2663, %v985, %v1958
      %v2762 = vsel %vm2663, %v986, %v1959
      %v2766 = vsel %vm2663, %v987, %v1960
      %v2770 = vsel %vm2663, %v988, %v1961
      %v2774 = vsel %vm2663, %v989, %v1962
      %v2778 = vsel %vm2663, %v990, %v1963
      %v2782 = vsel %vm2663, %v991, %v1964
      %v2786 = vsel %vm2663, %v992, %v1965
      %v2790 = vsel %vm2663, %v993, %v1966
      %v2794 = vsel %vm2663, %v2067, %v2231
      %v2798 = vsel %vm2663, %v2068, %v2232
      %v2802 = vsel %vm2663, %v2069, %v2233
      %v2806 = vsel %vm2663, %v2070, %v2234
      %v2810 = vsel %vm2663, %v2071, %v2235
      %v2814 = vsel %vm2663, %v2072, %v2236
      %v2818 = vsel %vm2663, %v2073, %v2237
      %v2822 = vsel %vm2663, %v2074, %v2238
      %v2826 = vsel %vm2663, %v2075, %v2239
      %v2830 = vsel %vm2663, %v2076, %v2240
      %v2834 = vsel %vm2663, %v2077, %v2241
      %v2838 = vsel %vm2663, %v2078, %v2242
      %v2842 = vsel %vm2663, %v2079, %v2243
      %v2846 = vsel %vm2663, %v2080, %v2244
      %v2850 = vsel %vm2663, %v2081, %v2245
      %v2854 = vsel %vm2663, %v2082, %v2246
      %v2858 = vsel %vm2663, %v2083, %v2247
      %v2862 = vsel %vm2663, %v2084, %v2248
      %v2866 = vsel %vm2663, %v2085, %v2249
      %v2870 = vsel %vm2663, %v2086, %v2250
      %v2874 = vsel %vm2663, %v2087, %v2251
      %v2878 = vsel %vm2663, %v2088, %v2252
      %v2882 = vsel %vm2663, %v2089, %v2253
      %v2886 = vsel %vm2663, %v2090, %v2254
      %v2890 = vsel %vm2663, %v2091, %v2255
      %v2894 = vsel %vm2663, %v2092, %v2256
      %v2898 = vsel %vm2663, %v2093, %v2257
      %v2902 = vsel %vm2663, %v2094, %v2258
      %v2906 = vsel %vm2663, %v2095, %v2259
      %v2910 = vsel %vm2663, %v2096, %v2260
      %v2914 = vsel %vm2663, %v2097, %v2261
      %v2918 = vsel %vm2663, %v2098, %v2262
      %v2922 = vsel %vm2663, %v2330, %v2495
      %v2926 = vsel %vm2663, %v2331, %v2496
      %v2930 = vsel %vm2663, %v2332, %v2497
      %v2934 = vsel %vm2663, %v2333, %v2498
      %v2938 = vsel %vm2663, %v2334, %v2499
      %v2942 = vsel %vm2663, %v2335, %v2500
      %v2946 = vsel %vm2663, %v2336, %v2501
      %v2950 = vsel %vm2663, %v2337, %v2502
      %v2954 = vsel %vm2663, %v2338, %v2503
      %v2958 = vsel %vm2663, %v2339, %v2504
      %v2962 = vsel %vm2663, %v2340, %v2505
      %v2966 = vsel %vm2663, %v2341, %v2506
      %v2970 = vsel %vm2663, %v2342, %v2507
      %v2974 = vsel %vm2663, %v2343, %v2508
      %v2978 = vsel %vm2663, %v2344, %v2509
      %v2982 = vsel %vm2663, %v2345, %v2510
      %v2986 = vsel %vm2663, %v2346, %v2511
      %v2990 = vsel %vm2663, %v2347, %v2512
      %v2994 = vsel %vm2663, %v2348, %v2513
      %v2998 = vsel %vm2663, %v2349, %v2514
      %v3002 = vsel %vm2663, %v2350, %v2515
      %v3006 = vsel %vm2663, %v2351, %v2516
      %v3010 = vsel %vm2663, %v2352, %v2517
      %v3014 = vsel %vm2663, %v2353, %v2518
      %v3018 = vsel %vm2663, %v2354, %v2519
      %v3022 = vsel %vm2663, %v2355, %v2520
      %v3026 = vsel %vm2663, %v2356, %v2521
      %v3030 = vsel %vm2663, %v2357, %v2522
      %v3034 = vsel %vm2663, %v2358, %v2523
      %v3038 = vsel %vm2663, %v2359, %v2524
      %v3042 = vsel %vm2663, %v2360, %v2525
      %v3046 = vsel %vm2663, %v2361, %v2526
      %v3049 = vsel %vm2663, %v1768, %v1936
      %v3052 = vsel %vm2663, %v1769, %v1937
      %v3055 = vsel %vm2663, %v1770, %v1938
      %v3058 = vsel %vm2663, %v1771, %v1939
      %v3061 = vsel %vm2663, %v1772, %v1940
      %v3064 = vsel %vm2663, %v1773, %v1941
      %v3067 = vsel %vm2663, %v1774, %v1942
      %v3070 = vsel %vm2663, %v1775, %v1943
      %v3073 = vsel %vm2663, %v1776, %v1944
      %v3076 = vsel %vm2663, %v1777, %v1945
      %v3079 = vsel %vm2663, %v1778, %v1946
      %v3082 = vsel %vm2663, %v1779, %v1947
      %v3085 = vsel %vm2663, %v1780, %v1948
      %v3088 = vsel %vm2663, %v1781, %v1949
      %v3091 = vsel %vm2663, %v1782, %v1950
      %v3094 = vsel %vm2663, %v1783, %v1951
      %v3097 = vsel %vm2663, %v1784, %v1952
      %v3100 = vsel %vm2663, %v1785, %v1953
      %v3103 = vsel %vm2663, %v1786, %v1954
      %v3106 = vsel %vm2663, %v1787, %v1955
      %v3109 = vsel %vm2663, %v1788, %v1956
      %v3112 = vsel %vm2663, %v1789, %v1957
      %v3115 = vsel %vm2663, %v1790, %v1958
      %v3118 = vsel %vm2663, %v1791, %v1959
      %v3121 = vsel %vm2663, %v1792, %v1960
      %v3124 = vsel %vm2663, %v1793, %v1961
      %v3127 = vsel %vm2663, %v1794, %v1962
      %v3130 = vsel %vm2663, %v1795, %v1963
      %v3133 = vsel %vm2663, %v1796, %v1964
      %v3136 = vsel %vm2663, %v1797, %v1965
      %v3139 = vsel %vm2663, %v1798, %v1966
      %v3143 = vsel %vm2663, %v1799, %v2531
      %3146 = vset.pattern.permute.xlu0 9
      %3147 = vperm.xlu0 %3146, %v336
      %v3148 = vpop.permute.xlu0 %3147
      %vm3150 = vcmask 588800
      %v3152 = vsel %vm3150, %v338, 0
      %v3155 = vsel %vm2663, %v2631, 0
      %v3158 = vsel %vm2663, %v2632, 0
      %v3161 = vsel %vm2663, %v2633, 0
      %v3164 = vsel %vm2663, %v2634, 0
      %v3167 = vsel %vm2663, %v2635, 0
      %v3170 = vsel %vm2663, %v2636, 0
      %v3173 = vsel %vm2663, %v2637, 0
      %v3176 = vsel %vm2663, %v2638, 0
      %v3179 = vsel %vm2663, %v2639, 0
      %v3182 = vsel %vm2663, %v2640, 0
      %v3185 = vsel %vm2663, %v2641, 0
      %v3188 = vsel %vm2663, %v2642, 0
      %v3191 = vsel %vm2663, %v2643, 0
      %v3194 = vsel %vm2663, %v2644, 0
      %v3197 = vsel %vm2663, %v2645, 0
      %v3200 = vsel %vm2663, %v2646, 0
      %v3203 = vsel %vm2663, %v2647, 0
      %v3206 = vsel %vm2663, %v2648, 0
      %v3209 = vsel %vm2663, %v2649, 0
      %v3212 = vsel %vm2663, %v2650, 0
      %v3215 = vsel %vm2663, %v2651, 0
      %v3218 = vsel %vm2663, %v2652, 0
      %v3221 = vsel %vm2663, %v2653, 0
      %v3224 = vsel %vm2663, %v2654, 0
      %v3227 = vsel %vm2663, %v2655, 0
      %v3230 = vsel %vm2663, %v2656, 0
      %v3233 = vsel %vm2663, %v2657, 0
      %v3236 = vsel %vm2663, %v2658, 0
      %v3239 = vsel %vm2663, %v2659, 0
      %v3242 = vsel %vm2663, %v2660, 0
      %v3245 = vsel %vm2663, %v2661, 0
      %v3248 = vsel %vm2663, %v2662, 0
      %3250 = vmatprep.subr.bf16.mxu0 %v2670
      %3251 = vmatpush1.bf16.msra.mxu0 %v2666
      %3252 = vmatprep.subr.bf16.mxu0 %v2798
      %3253 = vmatpush1.bf16.msra.mxu0 %v2794
      %3254 = vmatprep.subr.bf16.mxu0 %v2926
      %3255 = vmatpush1.bf16.msra.mxu0 %v2922
      %3256 = vmatprep.subr.bf16.mxu0 %v3052
      %3257 = vmatpush1.bf16.msra.mxu0 %v3049
      %3258 = vmatprep.subr.bf16.mxu0 %v3158
      %3259 = vmatpush1.bf16.msra.mxu0 %v3155
      %3260 = vmatprep.subr.bf16.mxu0 0
      %3261 = vmatpush1.bf16.msra.mxu0 0
      %3262 = vmatprep.subr.bf16.mxu0 0
      %3263 = vmatpush1.bf16.msra.mxu0 0
      %3264 = vmatprep.subr.bf16.mxu0 0
      %3265 = vmatpush1.bf16.msra.mxu0 0
      %3266 = vmatprep.subr.bf16.mxu0 0
      %3267 = vmatpush1.bf16.msra.mxu0 0
      %3268 = vmatprep.subr.bf16.mxu0 0
      %3269 = vmatpush1.bf16.msra.mxu0 0
      %3270 = vmatprep.subr.bf16.mxu0 0
      %3271 = vmatpush1.bf16.msra.mxu0 0
      %3272 = vmatprep.subr.bf16.mxu0 0
      %3273 = vmatpush1.bf16.msra.mxu0 0
      %3274 = vmatprep.subr.bf16.mxu0 0
      %3275 = vmatpush1.bf16.msra.mxu0 0
      %3276 = vmatprep.subr.bf16.mxu0 0
      %3277 = vmatpush1.bf16.msra.mxu0 0
      %3278 = vmatprep.subr.bf16.mxu0 0
      %3279 = vmatpush1.bf16.msra.mxu0 0
      %3280 = vmatprep.subr.bf16.mxu0 0
      %3281 = vmatpush1.bf16.msra.mxu0 0
      %3282 = vmatprep.mubr.bf16.mxu0 0
      %3283 = vmatmul.mubr.bf16.gmra.mrb[0].mxu0 %v3152
      %v3284 = vpop.f32.mrb[0].mxu0
      %v3285 = vadd.f32 %v3148, %v3284
      %v3286 = vpop.f32.mrb[0].mxu0
      %v3287 = vadd.f32 %v3148, %v3286
      %v3288 = vpop.f32.mrb[0].mxu0
      %v3289 = vpop.f32.mrb[0].mxu0
      %3290 = vdwg.mxu0
      %3291 = vmatprep.subr.bf16.mxu0 %v2678
      %3292 = vmatpush1.bf16.msra.mxu0 %v2674
      %3293 = vmatprep.subr.bf16.mxu0 %v2806
      %3294 = vmatpush1.bf16.msra.mxu0 %v2802
      %3295 = vmatprep.subr.bf16.mxu0 %v2934
      %3296 = vmatpush1.bf16.msra.mxu0 %v2930
      %3297 = vmatprep.subr.bf16.mxu0 %v3058
      %3298 = vmatpush1.bf16.msra.mxu0 %v3055
      %3299 = vmatprep.subr.bf16.mxu0 %v3164
      %3300 = vmatpush1.bf16.msra.mxu0 %v3161
      %3301 = vmatprep.subr.bf16.mxu0 0
      %3302 = vmatpush1.bf16.msra.mxu0 0
      %3303 = vmatprep.subr.bf16.mxu0 0
      %3304 = vmatpush1.bf16.msra.mxu0 0
      %3305 = vmatprep.subr.bf16.mxu0 0
      %3306 = vmatpush1.bf16.msra.mxu0 0
      %3307 = vmatprep.subr.bf16.mxu0 0
      %3308 = vmatpush1.bf16.msra.mxu0 0
      %3309 = vmatprep.subr.bf16.mxu0 0
      %3310 = vmatpush1.bf16.msra.mxu0 0
      %3311 = vmatprep.subr.bf16.mxu0 0
      %3312 = vmatpush1.bf16.msra.mxu0 0
      %3313 = vmatprep.subr.bf16.mxu0 0
      %3314 = vmatpush1.bf16.msra.mxu0 0
      %3315 = vmatprep.subr.bf16.mxu0 0
      %3316 = vmatpush1.bf16.msra.mxu0 0
      %3317 = vmatprep.subr.bf16.mxu0 0
      %3318 = vmatpush1.bf16.msra.mxu0 0
      %3319 = vmatprep.subr.bf16.mxu0 0
      %3320 = vmatpush1.bf16.msra.mxu0 0
      %3321 = vmatprep.subr.bf16.mxu0 0
      %3322 = vmatpush1.bf16.msra.mxu0 0
      %3323 = vmatprep.mubr.bf16.mxu0 0
      %3324 = vmatmul.mubr.bf16.gmra.mrb[0].mxu0 %v3152
      %v3325 = vpop.f32.mrb[0].mxu0
      %v3326 = vadd.f32 %v3148, %v3325
      %v3327 = vpop.f32.mrb[0].mxu0
      %v3328 = vadd.f32 %v3148, %v3327
      %v3329 = vpop.f32.mrb[0].mxu0
      %v3330 = vpop.f32.mrb[0].mxu0
      %3331 = vdwg.mxu0
      %3332 = vmatprep.subr.bf16.mxu0 %v2686
      %3333 = vmatpush1.bf16.msra.mxu0 %v2682
      %3334 = vmatprep.subr.bf16.mxu0 %v2814
      %3335 = vmatpush1.bf16.msra.mxu0 %v2810
      %3336 = vmatprep.subr.bf16.mxu0 %v2942
      %3337 = vmatpush1.bf16.msra.mxu0 %v2938
      %3338 = vmatprep.subr.bf16.mxu0 %v3064
      %3339 = vmatpush1.bf16.msra.mxu0 %v3061
      %3340 = vmatprep.subr.bf16.mxu0 %v3170
      %3341 = vmatpush1.bf16.msra.mxu0 %v3167
      %3342 = vmatprep.subr.bf16.mxu0 0
      %3343 = vmatpush1.bf16.msra.mxu0 0
      %3344 = vmatprep.subr.bf16.mxu0 0
      %3345 = vmatpush1.bf16.msra.mxu0 0
      %3346 = vmatprep.subr.bf16.mxu0 0
      %3347 = vmatpush1.bf16.msra.mxu0 0
      %3348 = vmatprep.subr.bf16.mxu0 0
      %3349 = vmatpush1.bf16.msra.mxu0 0
      %3350 = vmatprep.subr.bf16.mxu0 0
      %3351 = vmatpush1.bf16.msra.mxu0 0
      %3352 = vmatprep.subr.bf16.mxu0 0
      %3353 = vmatpush1.bf16.msra.mxu0 0
      %3354 = vmatprep.subr.bf16.mxu0 0
      %3355 = vmatpush1.bf16.msra.mxu0 0
      %3356 = vmatprep.subr.bf16.mxu0 0
      %3357 = vmatpush1.bf16.msra.mxu0 0
      %3358 = vmatprep.subr.bf16.mxu0 0
      %3359 = vmatpush1.bf16.msra.mxu0 0
      %3360 = vmatprep.subr.bf16.mxu0 0
      %3361 = vmatpush1.bf16.msra.mxu0 0
      %3362 = vmatprep.subr.bf16.mxu0 0
      %3363 = vmatpush1.bf16.msra.mxu0 0
      %3364 = vmatprep.mubr.bf16.mxu0 0
      %3365 = vmatmul.mubr.bf16.gmra.mrb[0].mxu0 %v3152
      %v3366 = vpop.f32.mrb[0].mxu0
      %v3367 = vadd.f32 %v3148, %v3366
      %v3368 = vpop.f32.mrb[0].mxu0
      %v3369 = vadd.f32 %v3148, %v3368
      %v3370 = vpop.f32.mrb[0].mxu0
      %v3371 = vpop.f32.mrb[0].mxu0
      %3372 = vdwg.mxu0
      %3373 = vmatprep.subr.bf16.mxu0 %v2694
      %3374 = vmatpush1.bf16.msra.mxu0 %v2690
      %3375 = vmatprep.subr.bf16.mxu0 %v2822
      %3376 = vmatpush1.bf16.msra.mxu0 %v2818
      %3377 = vmatprep.subr.bf16.mxu0 %v2950
      %3378 = vmatpush1.bf16.msra.mxu0 %v2946
      %3379 = vmatprep.subr.bf16.mxu0 %v3070
      %3380 = vmatpush1.bf16.msra.mxu0 %v3067
      %3381 = vmatprep.subr.bf16.mxu0 %v3176
      %3382 = vmatpush1.bf16.msra.mxu0 %v3173
      %3383 = vmatprep.subr.bf16.mxu0 0
      %3384 = vmatpush1.bf16.msra.mxu0 0
      %3385 = vmatprep.subr.bf16.mxu0 0
      %3386 = vmatpush1.bf16.msra.mxu0 0
      %3387 = vmatprep.subr.bf16.mxu0 0
      %3388 = vmatpush1.bf16.msra.mxu0 0
      %3389 = vmatprep.subr.bf16.mxu0 0
      %3390 = vmatpush1.bf16.msra.mxu0 0
      %3391 = vmatprep.subr.bf16.mxu0 0
      %3392 = vmatpush1.bf16.msra.mxu0 0
      %3393 = vmatprep.subr.bf16.mxu0 0
      %3394 = vmatpush1.bf16.msra.mxu0 0
      %3395 = vmatprep.subr.bf16.mxu0 0
      %3396 = vmatpush1.bf16.msra.mxu0 0
      %3397 = vmatprep.subr.bf16.mxu0 0
      %3398 = vmatpush1.bf16.msra.mxu0 0
      %3399 = vmatprep.subr.bf16.mxu0 0
      %3400 = vmatpush1.bf16.msra.mxu0 0
      %3401 = vmatprep.subr.bf16.mxu0 0
      %3402 = vmatpush1.bf16.msra.mxu0 0
      %3403 = vmatprep.subr.bf16.mxu0 0
      %3404 = vmatpush1.bf16.msra.mxu0 0
      %3405 = vmatprep.mubr.bf16.mxu0 0
      %3406 = vmatmul.mubr.bf16.gmra.mrb[0].mxu0 %v3152
      %v3407 = vpop.f32.mrb[0].mxu0
      %v3408 = vadd.f32 %v3148, %v3407
      %v3409 = vpop.f32.mrb[0].mxu0
      %v3410 = vadd.f32 %v3148, %v3409
      %v3411 = vpop.f32.mrb[0].mxu0
      %v3412 = vpop.f32.mrb[0].mxu0
      %3413 = vdwg.mxu0
      %3414 = vmatprep.subr.bf16.mxu0 %v2702
      %3415 = vmatpush1.bf16.msra.mxu0 %v2698
      %3416 = vmatprep.subr.bf16.mxu0 %v2830
      %3417 = vmatpush1.bf16.msra.mxu0 %v2826
      %3418 = vmatprep.subr.bf16.mxu0 %v2958
      %3419 = vmatpush1.bf16.msra.mxu0 %v2954
      %3420 = vmatprep.subr.bf16.mxu0 %v3076
      %3421 = vmatpush1.bf16.msra.mxu0 %v3073
      %3422 = vmatprep.subr.bf16.mxu0 %v3182
      %3423 = vmatpush1.bf16.msra.mxu0 %v3179
      %3424 = vmatprep.subr.bf16.mxu0 0
      %3425 = vmatpush1.bf16.msra.mxu0 0
      %3426 = vmatprep.subr.bf16.mxu0 0
      %3427 = vmatpush1.bf16.msra.mxu0 0
      %3428 = vmatprep.subr.bf16.mxu0 0
      %3429 = vmatpush1.bf16.msra.mxu0 0
      %3430 = vmatprep.subr.bf16.mxu0 0
      %3431 = vmatpush1.bf16.msra.mxu0 0
      %3432 = vmatprep.subr.bf16.mxu0 0
      %3433 = vmatpush1.bf16.msra.mxu0 0
      %3434 = vmatprep.subr.bf16.mxu0 0
      %3435 = vmatpush1.bf16.msra.mxu0 0
      %3436 = vmatprep.subr.bf16.mxu0 0
      %3437 = vmatpush1.bf16.msra.mxu0 0
      %3438 = vmatprep.subr.bf16.mxu0 0
      %3439 = vmatpush1.bf16.msra.mxu0 0
      %3440 = vmatprep.subr.bf16.mxu0 0
      %3441 = vmatpush1.bf16.msra.mxu0 0
      %3442 = vmatprep.subr.bf16.mxu0 0
      %3443 = vmatpush1.bf16.msra.mxu0 0
      %3444 = vmatprep.subr.bf16.mxu0 0
      %3445 = vmatpush1.bf16.msra.mxu0 0
      %3446 = vmatprep.mubr.bf16.mxu0 0
      %3447 = vmatmul.mubr.bf16.gmra.mrb[0].mxu0 %v3152
      %v3448 = vpop.f32.mrb[0].mxu0
      %v3449 = vadd.f32 %v3148, %v3448
      %v3450 = vpop.f32.mrb[0].mxu0
      %v3451 = vadd.f32 %v3148, %v3450
      %v3452 = vpop.f32.mrb[0].mxu0
      %v3453 = vpop.f32.mrb[0].mxu0
      %3454 = vdwg.mxu0
      %3455 = vmatprep.subr.bf16.mxu0 %v2710
      %3456 = vmatpush1.bf16.msra.mxu0 %v2706
      %3457 = vmatprep.subr.bf16.mxu0 %v2838
      %3458 = vmatpush1.bf16.msra.mxu0 %v2834
      %3459 = vmatprep.subr.bf16.mxu0 %v2966
      %3460 = vmatpush1.bf16.msra.mxu0 %v2962
      %3461 = vmatprep.subr.bf16.mxu0 %v3082
      %3462 = vmatpush1.bf16.msra.mxu0 %v3079
      %3463 = vmatprep.subr.bf16.mxu0 %v3188
      %3464 = vmatpush1.bf16.msra.mxu0 %v3185
      %3465 = vmatprep.subr.bf16.mxu0 0
      %3466 = vmatpush1.bf16.msra.mxu0 0
      %3467 = vmatprep.subr.bf16.mxu0 0
      %3468 = vmatpush1.bf16.msra.mxu0 0
      %3469 = vmatprep.subr.bf16.mxu0 0
      %3470 = vmatpush1.bf16.msra.mxu0 0
      %3471 = vmatprep.subr.bf16.mxu0 0
      %3472 = vmatpush1.bf16.msra.mxu0 0
      %3473 = vmatprep.subr.bf16.mxu0 0
      %3474 = vmatpush1.bf16.msra.mxu0 0
      %3475 = vmatprep.subr.bf16.mxu0 0
      %3476 = vmatpush1.bf16.msra.mxu0 0
      %3477 = vmatprep.subr.bf16.mxu0 0
      %3478 = vmatpush1.bf16.msra.mxu0 0
      %3479 = vmatprep.subr.bf16.mxu0 0
      %3480 = vmatpush1.bf16.msra.mxu0 0
      %3481 = vmatprep.subr.bf16.mxu0 0
      %3482 = vmatpush1.bf16.msra.mxu0 0
      %3483 = vmatprep.subr.bf16.mxu0 0
      %3484 = vmatpush1.bf16.msra.mxu0 0
      %3485 = vmatprep.subr.bf16.mxu0 0
      %3486 = vmatpush1.bf16.msra.mxu0 0
      %3487 = vmatprep.mubr.bf16.mxu0 0
      %3488 = vmatmul.mubr.bf16.gmra.mrb[0].mxu0 %v3152
      %v3489 = vpop.f32.mrb[0].mxu0
      %v3490 = vadd.f32 %v3148, %v3489
      %v3491 = vpop.f32.mrb[0].mxu0
      %v3492 = vadd.f32 %v3148, %v3491
      %v3493 = vpop.f32.mrb[0].mxu0
      %v3494 = vpop.f32.mrb[0].mxu0
      %3495 = vdwg.mxu0
      %3496 = vmatprep.subr.bf16.mxu0 %v2718
      %3497 = vmatpush1.bf16.msra.mxu0 %v2714
      %3498 = vmatprep.subr.bf16.mxu0 %v2846
      %3499 = vmatpush1.bf16.msra.mxu0 %v2842
      %3500 = vmatprep.subr.bf16.mxu0 %v2974
      %3501 = vmatpush1.bf16.msra.mxu0 %v2970
      %3502 = vmatprep.subr.bf16.mxu0 %v3088
      %3503 = vmatpush1.bf16.msra.mxu0 %v3085
      %3504 = vmatprep.subr.bf16.mxu0 %v3194
      %3505 = vmatpush1.bf16.msra.mxu0 %v3191
      %3506 = vmatprep.subr.bf16.mxu0 0
      %3507 = vmatpush1.bf16.msra.mxu0 0
      %3508 = vmatprep.subr.bf16.mxu0 0
      %3509 = vmatpush1.bf16.msra.mxu0 0
      %3510 = vmatprep.subr.bf16.mxu0 0
      %3511 = vmatpush1.bf16.msra.mxu0 0
      %3512 = vmatprep.subr.bf16.mxu0 0
      %3513 = vmatpush1.bf16.msra.mxu0 0
      %3514 = vmatprep.subr.bf16.mxu0 0
      %3515 = vmatpush1.bf16.msra.mxu0 0
      %3516 = vmatprep.subr.bf16.mxu0 0
      %3517 = vmatpush1.bf16.msra.mxu0 0
      %3518 = vmatprep.subr.bf16.mxu0 0
      %3519 = vmatpush1.bf16.msra.mxu0 0
      %3520 = vmatprep.subr.bf16.mxu0 0
      %3521 = vmatpush1.bf16.msra.mxu0 0
      %3522 = vmatprep.subr.bf16.mxu0 0
      %3523 = vmatpush1.bf16.msra.mxu0 0
      %3524 = vmatprep.subr.bf16.mxu0 0
      %3525 = vmatpush1.bf16.msra.mxu0 0
      %3526 = vmatprep.subr.bf16.mxu0 0
      %3527 = vmatpush1.bf16.msra.mxu0 0
      %3528 = vmatprep.mubr.bf16.mxu0 0
      %3529 = vmatmul.mubr.bf16.gmra.mrb[0].mxu0 %v3152
      %v3530 = vpop.f32.mrb[0].mxu0
      %v3531 = vadd.f32 %v3148, %v3530
      %v3532 = vpop.f32.mrb[0].mxu0
      %v3533 = vadd.f32 %v3148, %v3532
      %v3534 = vpop.f32.mrb[0].mxu0
      %v3535 = vpop.f32.mrb[0].mxu0
      %3536 = vdwg.mxu0
      %3537 = vmatprep.subr.bf16.mxu0 %v2726
      %3538 = vmatpush1.bf16.msra.mxu0 %v2722
      %3539 = vmatprep.subr.bf16.mxu0 %v2854
      %3540 = vmatpush1.bf16.msra.mxu0 %v2850
      %3541 = vmatprep.subr.bf16.mxu0 %v2982
      %3542 = vmatpush1.bf16.msra.mxu0 %v2978
      %3543 = vmatprep.subr.bf16.mxu0 %v3094
      %3544 = vmatpush1.bf16.msra.mxu0 %v3091
      %3545 = vmatprep.subr.bf16.mxu0 %v3200
      %3546 = vmatpush1.bf16.msra.mxu0 %v3197
      %3547 = vmatprep.subr.bf16.mxu0 0
      %3548 = vmatpush1.bf16.msra.mxu0 0
      %3549 = vmatprep.subr.bf16.mxu0 0
      %3550 = vmatpush1.bf16.msra.mxu0 0
      %3551 = vmatprep.subr.bf16.mxu0 0
      %3552 = vmatpush1.bf16.msra.mxu0 0
      %3553 = vmatprep.subr.bf16.mxu0 0
      %3554 = vmatpush1.bf16.msra.mxu0 0
      %3555 = vmatprep.subr.bf16.mxu0 0
      %3556 = vmatpush1.bf16.msra.mxu0 0
      %3557 = vmatprep.subr.bf16.mxu0 0
      %3558 = vmatpush1.bf16.msra.mxu0 0
      %3559 = vmatprep.subr.bf16.mxu0 0
      %3560 = vmatpush1.bf16.msra.mxu0 0
      %3561 = vmatprep.subr.bf16.mxu0 0
      %3562 = vmatpush1.bf16.msra.mxu0 0
      %3563 = vmatprep.subr.bf16.mxu0 0
      %3564 = vmatpush1.bf16.msra.mxu0 0
      %3565 = vmatprep.subr.bf16.mxu0 0
      %3566 = vmatpush1.bf16.msra.mxu0 0
      %3567 = vmatprep.subr.bf16.mxu0 0
      %3568 = vmatpush1.bf16.msra.mxu0 0
      %3569 = vmatprep.mubr.bf16.mxu0 0
      %3570 = vmatmul.mubr.bf16.gmra.mrb[0].mxu0 %v3152
      %v3571 = vpop.f32.mrb[0].mxu0
      %v3572 = vadd.f32 %v3148, %v3571
      %v3573 = vpop.f32.mrb[0].mxu0
      %v3574 = vadd.f32 %v3148, %v3573
      %v3575 = vpop.f32.mrb[0].mxu0
      %v3576 = vpop.f32.mrb[0].mxu0
      %3577 = vdwg.mxu0
      %3578 = vmatprep.subr.bf16.mxu0 %v2734
      %3579 = vmatpush1.bf16.msra.mxu0 %v2730
      %3580 = vmatprep.subr.bf16.mxu0 %v2862
      %3581 = vmatpush1.bf16.msra.mxu0 %v2858
      %3582 = vmatprep.subr.bf16.mxu0 %v2990
      %3583 = vmatpush1.bf16.msra.mxu0 %v2986
      %3584 = vmatprep.subr.bf16.mxu0 %v3100
      %3585 = vmatpush1.bf16.msra.mxu0 %v3097
      %3586 = vmatprep.subr.bf16.mxu0 %v3206
      %3587 = vmatpush1.bf16.msra.mxu0 %v3203
      %3588 = vmatprep.subr.bf16.mxu0 0
      %3589 = vmatpush1.bf16.msra.mxu0 0
      %3590 = vmatprep.subr.bf16.mxu0 0
      %3591 = vmatpush1.bf16.msra.mxu0 0
      %3592 = vmatprep.subr.bf16.mxu0 0
      %3593 = vmatpush1.bf16.msra.mxu0 0
      %3594 = vmatprep.subr.bf16.mxu0 0
      %3595 = vmatpush1.bf16.msra.mxu0 0
      %3596 = vmatprep.subr.bf16.mxu0 0
      %3597 = vmatpush1.bf16.msra.mxu0 0
      %3598 = vmatprep.subr.bf16.mxu0 0
      %3599 = vmatpush1.bf16.msra.mxu0 0
      %3600 = vmatprep.subr.bf16.mxu0 0
      %3601 = vmatpush1.bf16.msra.mxu0 0
      %3602 = vmatprep.subr.bf16.mxu0 0
      %3603 = vmatpush1.bf16.msra.mxu0 0
      %3604 = vmatprep.subr.bf16.mxu0 0
      %3605 = vmatpush1.bf16.msra.mxu0 0
      %3606 = vmatprep.subr.bf16.mxu0 0
      %3607 = vmatpush1.bf16.msra.mxu0 0
      %3608 = vmatprep.subr.bf16.mxu0 0
      %3609 = vmatpush1.bf16.msra.mxu0 0
      %3610 = vmatprep.mubr.bf16.mxu0 0
      %3611 = vmatmul.mubr.bf16.gmra.mrb[0].mxu0 %v3152
      %v3612 = vpop.f32.mrb[0].mxu0
      %v3613 = vadd.f32 %v3148, %v3612
      %v3614 = vpop.f32.mrb[0].mxu0
      %v3615 = vadd.f32 %v3148, %v3614
      %v3616 = vpop.f32.mrb[0].mxu0
      %v3617 = vpop.f32.mrb[0].mxu0
      %3618 = vdwg.mxu0
      %3619 = vmatprep.subr.bf16.mxu0 %v2742
      %3620 = vmatpush1.bf16.msra.mxu0 %v2738
      %3621 = vmatprep.subr.bf16.mxu0 %v2870
      %3622 = vmatpush1.bf16.msra.mxu0 %v2866
      %3623 = vmatprep.subr.bf16.mxu0 %v2998
      %3624 = vmatpush1.bf16.msra.mxu0 %v2994
      %3625 = vmatprep.subr.bf16.mxu0 %v3106
      %3626 = vmatpush1.bf16.msra.mxu0 %v3103
      %3627 = vmatprep.subr.bf16.mxu0 %v3212
      %3628 = vmatpush1.bf16.msra.mxu0 %v3209
      %3629 = vmatprep.subr.bf16.mxu0 0
      %3630 = vmatpush1.bf16.msra.mxu0 0
      %3631 = vmatprep.subr.bf16.mxu0 0
      %3632 = vmatpush1.bf16.msra.mxu0 0
      %3633 = vmatprep.subr.bf16.mxu0 0
      %3634 = vmatpush1.bf16.msra.mxu0 0
      %3635 = vmatprep.subr.bf16.mxu0 0
      %3636 = vmatpush1.bf16.msra.mxu0 0
      %3637 = vmatprep.subr.bf16.mxu0 0
      %3638 = vmatpush1.bf16.msra.mxu0 0
      %3639 = vmatprep.subr.bf16.mxu0 0
      %3640 = vmatpush1.bf16.msra.mxu0 0
      %3641 = vmatprep.subr.bf16.mxu0 0
      %3642 = vmatpush1.bf16.msra.mxu0 0
      %3643 = vmatprep.subr.bf16.mxu0 0
      %3644 = vmatpush1.bf16.msra.mxu0 0
      %3645 = vmatprep.subr.bf16.mxu0 0
      %3646 = vmatpush1.bf16.msra.mxu0 0
      %3647 = vmatprep.subr.bf16.mxu0 0
      %3648 = vmatpush1.bf16.msra.mxu0 0
      %3649 = vmatprep.subr.bf16.mxu0 0
      %3650 = vmatpush1.bf16.msra.mxu0 0
      %3651 = vmatprep.mubr.bf16.mxu0 0
      %3652 = vmatmul.mubr.bf16.gmra.mrb[0].mxu0 %v3152
      %v3653 = vpop.f32.mrb[0].mxu0
      %v3654 = vadd.f32 %v3148, %v3653
      %v3655 = vpop.f32.mrb[0].mxu0
      %v3656 = vadd.f32 %v3148, %v3655
      %v3657 = vpop.f32.mrb[0].mxu0
      %v3658 = vpop.f32.mrb[0].mxu0
      %3659 = vdwg.mxu0
      %3660 = vmatprep.subr.bf16.mxu0 %v2750
      %3661 = vmatpush1.bf16.msra.mxu0 %v2746
      %3662 = vmatprep.subr.bf16.mxu0 %v2878
      %3663 = vmatpush1.bf16.msra.mxu0 %v2874
      %3664 = vmatprep.subr.bf16.mxu0 %v3006
      %3665 = vmatpush1.bf16.msra.mxu0 %v3002
      %3666 = vmatprep.subr.bf16.mxu0 %v3112
      %3667 = vmatpush1.bf16.msra.mxu0 %v3109
      %3668 = vmatprep.subr.bf16.mxu0 %v3218
      %3669 = vmatpush1.bf16.msra.mxu0 %v3215
      %3670 = vmatprep.subr.bf16.mxu0 0
      %3671 = vmatpush1.bf16.msra.mxu0 0
      %3672 = vmatprep.subr.bf16.mxu0 0
      %3673 = vmatpush1.bf16.msra.mxu0 0
      %3674 = vmatprep.subr.bf16.mxu0 0
      %3675 = vmatpush1.bf16.msra.mxu0 0
      %3676 = vmatprep.subr.bf16.mxu0 0
      %3677 = vmatpush1.bf16.msra.mxu0 0
      %3678 = vmatprep.subr.bf16.mxu0 0
      %3679 = vmatpush1.bf16.msra.mxu0 0
      %3680 = vmatprep.subr.bf16.mxu0 0
      %3681 = vmatpush1.bf16.msra.mxu0 0
      %3682 = vmatprep.subr.bf16.mxu0 0
      %3683 = vmatpush1.bf16.msra.mxu0 0
      %3684 = vmatprep.subr.bf16.mxu0 0
      %3685 = vmatpush1.bf16.msra.mxu0 0
      %3686 = vmatprep.subr.bf16.mxu0 0
      %3687 = vmatpush1.bf16.msra.mxu0 0
      %3688 = vmatprep.subr.bf16.mxu0 0
      %3689 = vmatpush1.bf16.msra.mxu0 0
      %3690 = vmatprep.subr.bf16.mxu0 0
      %3691 = vmatpush1.bf16.msra.mxu0 0
      %3692 = vmatprep.mubr.bf16.mxu0 0
      %3693 = vmatmul.mubr.bf16.gmra.mrb[0].mxu0 %v3152
      %v3694 = vpop.f32.mrb[0].mxu0
      %v3695 = vadd.f32 %v3148, %v3694
      %v3696 = vpop.f32.mrb[0].mxu0
      %v3697 = vadd.f32 %v3148, %v3696
      %v3698 = vpop.f32.mrb[0].mxu0
      %v3699 = vpop.f32.mrb[0].mxu0
      %3700 = vdwg.mxu0
      %3701 = vmatprep.subr.bf16.mxu0 %v2758
      %3702 = vmatpush1.bf16.msra.mxu0 %v2754
      %3703 = vmatprep.subr.bf16.mxu0 %v2886
      %3704 = vmatpush1.bf16.msra.mxu0 %v2882
      %3705 = vmatprep.subr.bf16.mxu0 %v3014
      %3706 = vmatpush1.bf16.msra.mxu0 %v3010
      %3707 = vmatprep.subr.bf16.mxu0 %v3118
      %3708 = vmatpush1.bf16.msra.mxu0 %v3115
      %3709 = vmatprep.subr.bf16.mxu0 %v3224
      %3710 = vmatpush1.bf16.msra.mxu0 %v3221
      %3711 = vmatprep.subr.bf16.mxu0 0
      %3712 = vmatpush1.bf16.msra.mxu0 0
      %3713 = vmatprep.subr.bf16.mxu0 0
      %3714 = vmatpush1.bf16.msra.mxu0 0
      %3715 = vmatprep.subr.bf16.mxu0 0
      %3716 = vmatpush1.bf16.msra.mxu0 0
      %3717 = vmatprep.subr.bf16.mxu0 0
      %3718 = vmatpush1.bf16.msra.mxu0 0
      %3719 = vmatprep.subr.bf16.mxu0 0
      %3720 = vmatpush1.bf16.msra.mxu0 0
      %3721 = vmatprep.subr.bf16.mxu0 0
      %3722 = vmatpush1.bf16.msra.mxu0 0
      %3723 = vmatprep.subr.bf16.mxu0 0
      %3724 = vmatpush1.bf16.msra.mxu0 0
      %3725 = vmatprep.subr.bf16.mxu0 0
      %3726 = vmatpush1.bf16.msra.mxu0 0
      %3727 = vmatprep.subr.bf16.mxu0 0
      %3728 = vmatpush1.bf16.msra.mxu0 0
      %3729 = vmatprep.subr.bf16.mxu0 0
      %3730 = vmatpush1.bf16.msra.mxu0 0
      %3731 = vmatprep.subr.bf16.mxu0 0
      %3732 = vmatpush1.bf16.msra.mxu0 0
      %3733 = vmatprep.mubr.bf16.mxu0 0
      %3734 = vmatmul.mubr.bf16.gmra.mrb[0].mxu0 %v3152
      %v3735 = vpop.f32.mrb[0].mxu0
      %v3736 = vadd.f32 %v3148, %v3735
      %v3737 = vpop.f32.mrb[0].mxu0
      %v3738 = vadd.f32 %v3148, %v3737
      %v3739 = vpop.f32.mrb[0].mxu0
      %v3740 = vpop.f32.mrb[0].mxu0
      %3741 = vdwg.mxu0
      %3742 = vmatprep.subr.bf16.mxu0 %v2766
      %3743 = vmatpush1.bf16.msra.mxu0 %v2762
      %3744 = vmatprep.subr.bf16.mxu0 %v2894
      %3745 = vmatpush1.bf16.msra.mxu0 %v2890
      %3746 = vmatprep.subr.bf16.mxu0 %v3022
      %3747 = vmatpush1.bf16.msra.mxu0 %v3018
      %3748 = vmatprep.subr.bf16.mxu0 %v3124
      %3749 = vmatpush1.bf16.msra.mxu0 %v3121
      %3750 = vmatprep.subr.bf16.mxu0 %v3230
      %3751 = vmatpush1.bf16.msra.mxu0 %v3227
      %3752 = vmatprep.subr.bf16.mxu0 0
      %3753 = vmatpush1.bf16.msra.mxu0 0
      %3754 = vmatprep.subr.bf16.mxu0 0
      %3755 = vmatpush1.bf16.msra.mxu0 0
      %3756 = vmatprep.subr.bf16.mxu0 0
      %3757 = vmatpush1.bf16.msra.mxu0 0
      %3758 = vmatprep.subr.bf16.mxu0 0
      %3759 = vmatpush1.bf16.msra.mxu0 0
      %3760 = vmatprep.subr.bf16.mxu0 0
      %3761 = vmatpush1.bf16.msra.mxu0 0
      %3762 = vmatprep.subr.bf16.mxu0 0
      %3763 = vmatpush1.bf16.msra.mxu0 0
      %3764 = vmatprep.subr.bf16.mxu0 0
      %3765 = vmatpush1.bf16.msra.mxu0 0
      %3766 = vmatprep.subr.bf16.mxu0 0
      %3767 = vmatpush1.bf16.msra.mxu0 0
      %3768 = vmatprep.subr.bf16.mxu0 0
      %3769 = vmatpush1.bf16.msra.mxu0 0
      %3770 = vmatprep.subr.bf16.mxu0 0
      %3771 = vmatpush1.bf16.msra.mxu0 0
      %3772 = vmatprep.subr.bf16.mxu0 0
      %3773 = vmatpush1.bf16.msra.mxu0 0
      %3774 = vmatprep.mubr.bf16.mxu0 0
      %3775 = vmatmul.mubr.bf16.gmra.mrb[0].mxu0 %v3152
      %v3776 = vpop.f32.mrb[0].mxu0
      %v3777 = vadd.f32 %v3148, %v3776
      %v3778 = vpop.f32.mrb[0].mxu0
      %v3779 = vadd.f32 %v3148, %v3778
      %v3780 = vpop.f32.mrb[0].mxu0
      %v3781 = vpop.f32.mrb[0].mxu0
      %3782 = vdwg.mxu0
      %3783 = vmatprep.subr.bf16.mxu0 %v2774
      %3784 = vmatpush1.bf16.msra.mxu0 %v2770
      %3785 = vmatprep.subr.bf16.mxu0 %v2902
      %3786 = vmatpush1.bf16.msra.mxu0 %v2898
      %3787 = vmatprep.subr.bf16.mxu0 %v3030
      %3788 = vmatpush1.bf16.msra.mxu0 %v3026
      %3789 = vmatprep.subr.bf16.mxu0 %v3130
      %3790 = vmatpush1.bf16.msra.mxu0 %v3127
      %3791 = vmatprep.subr.bf16.mxu0 %v3236
      %3792 = vmatpush1.bf16.msra.mxu0 %v3233
      %3793 = vmatprep.subr.bf16.mxu0 0
      %3794 = vmatpush1.bf16.msra.mxu0 0
      %3795 = vmatprep.subr.bf16.mxu0 0
      %3796 = vmatpush1.bf16.msra.mxu0 0
      %3797 = vmatprep.subr.bf16.mxu0 0
      %3798 = vmatpush1.bf16.msra.mxu0 0
      %3799 = vmatprep.subr.bf16.mxu0 0
      %3800 = vmatpush1.bf16.msra.mxu0 0
      %3801 = vmatprep.subr.bf16.mxu0 0
      %3802 = vmatpush1.bf16.msra.mxu0 0
      %3803 = vmatprep.subr.bf16.mxu0 0
      %3804 = vmatpush1.bf16.msra.mxu0 0
      %3805 = vmatprep.subr.bf16.mxu0 0
      %3806 = vmatpush1.bf16.msra.mxu0 0
      %3807 = vmatprep.subr.bf16.mxu0 0
      %3808 = vmatpush1.bf16.msra.mxu0 0
      %3809 = vmatprep.subr.bf16.mxu0 0
      %3810 = vmatpush1.bf16.msra.mxu0 0
      %3811 = vmatprep.subr.bf16.mxu0 0
      %3812 = vmatpush1.bf16.msra.mxu0 0
      %3813 = vmatprep.subr.bf16.mxu0 0
      %3814 = vmatpush1.bf16.msra.mxu0 0
      %3815 = vmatprep.mubr.bf16.mxu0 0
      %3816 = vmatmul.mubr.bf16.gmra.mrb[0].mxu0 %v3152
      %v3817 = vpop.f32.mrb[0].mxu0
      %v3818 = vadd.f32 %v3148, %v3817
      %v3819 = vpop.f32.mrb[0].mxu0
      %v3820 = vadd.f32 %v3148, %v3819
      %v3821 = vpop.f32.mrb[0].mxu0
      %v3822 = vpop.f32.mrb[0].mxu0
      %3823 = vdwg.mxu0
      %3824 = vmatprep.subr.bf16.mxu0 %v2782
      %3825 = vmatpush1.bf16.msra.mxu0 %v2778
      %3826 = vmatprep.subr.bf16.mxu0 %v2910
      %3827 = vmatpush1.bf16.msra.mxu0 %v2906
      %3828 = vmatprep.subr.bf16.mxu0 %v3038
      %3829 = vmatpush1.bf16.msra.mxu0 %v3034
      %3830 = vmatprep.subr.bf16.mxu0 %v3136
      %3831 = vmatpush1.bf16.msra.mxu0 %v3133
      %3832 = vmatprep.subr.bf16.mxu0 %v3242
      %3833 = vmatpush1.bf16.msra.mxu0 %v3239
      %3834 = vmatprep.subr.bf16.mxu0 0
      %3835 = vmatpush1.bf16.msra.mxu0 0
      %3836 = vmatprep.subr.bf16.mxu0 0
      %3837 = vmatpush1.bf16.msra.mxu0 0
      %3838 = vmatprep.subr.bf16.mxu0 0
      %3839 = vmatpush1.bf16.msra.mxu0 0
      %3840 = vmatprep.subr.bf16.mxu0 0
      %3841 = vmatpush1.bf16.msra.mxu0 0
      %3842 = vmatprep.subr.bf16.mxu0 0
      %3843 = vmatpush1.bf16.msra.mxu0 0
      %3844 = vmatprep.subr.bf16.mxu0 0
      %3845 = vmatpush1.bf16.msra.mxu0 0
      %3846 = vmatprep.subr.bf16.mxu0 0
      %3847 = vmatpush1.bf16.msra.mxu0 0
      %3848 = vmatprep.subr.bf16.mxu0 0
      %3849 = vmatpush1.bf16.msra.mxu0 0
      %3850 = vmatprep.subr.bf16.mxu0 0
      %3851 = vmatpush1.bf16.msra.mxu0 0
      %3852 = vmatprep.subr.bf16.mxu0 0
      %3853 = vmatpush1.bf16.msra.mxu0 0
      %3854 = vmatprep.subr.bf16.mxu0 0
      %3855 = vmatpush1.bf16.msra.mxu0 0
      %3856 = vmatprep.mubr.bf16.mxu0 0
      %3857 = vmatmul.mubr.bf16.gmra.mrb[0].mxu0 %v3152
      %v3858 = vpop.f32.mrb[0].mxu0
      %v3859 = vadd.f32 %v3148, %v3858
      %v3860 = vpop.f32.mrb[0].mxu0
      %v3861 = vadd.f32 %v3148, %v3860
      %v3862 = vpop.f32.mrb[0].mxu0
      %v3863 = vpop.f32.mrb[0].mxu0
      %3864 = vdwg.mxu0
      %3865 = vmatprep.subr.bf16.mxu0 %v2790
      %3866 = vmatpush1.bf16.msra.mxu0 %v2786
      %3867 = vmatprep.subr.bf16.mxu0 %v2918
      %3868 = vmatpush1.bf16.msra.mxu0 %v2914
      %3869 = vmatprep.subr.bf16.mxu0 %v3046
      %3870 = vmatpush1.bf16.msra.mxu0 %v3042
      %3871 = vmatprep.subr.bf16.mxu0 %v3143
      %3872 = vmatpush1.bf16.msra.mxu0 %v3139
      %3873 = vmatprep.subr.bf16.mxu0 %v3248
      %3874 = vmatpush1.bf16.msra.mxu0 %v3245
      %3875 = vmatprep.subr.bf16.mxu0 0
      %3876 = vmatpush1.bf16.msra.mxu0 0
      %3877 = vmatprep.subr.bf16.mxu0 0
      %3878 = vmatpush1.bf16.msra.mxu0 0
      %3879 = vmatprep.subr.bf16.mxu0 0
      %3880 = vmatpush1.bf16.msra.mxu0 0
      %3881 = vmatprep.subr.bf16.mxu0 0
      %3882 = vmatpush1.bf16.msra.mxu0 0
      %3883 = vmatprep.subr.bf16.mxu0 0
      %3884 = vmatpush1.bf16.msra.mxu0 0
      %3885 = vmatprep.subr.bf16.mxu0 0
      %3886 = vmatpush1.bf16.msra.mxu0 0
      %3887 = vmatprep.subr.bf16.mxu0 0
      %3888 = vmatpush1.bf16.msra.mxu0 0
      %3889 = vmatprep.subr.bf16.mxu0 0
      %3890 = vmatpush1.bf16.msra.mxu0 0
      %3891 = vmatprep.subr.bf16.mxu0 0
      %3892 = vmatpush1.bf16.msra.mxu0 0
      %3893 = vmatprep.subr.bf16.mxu0 0
      %3894 = vmatpush1.bf16.msra.mxu0 0
      %3895 = vmatprep.subr.bf16.mxu0 0
      %3896 = vmatpush1.bf16.msra.mxu0 0
      %3897 = vmatprep.mubr.bf16.mxu0 0
      %3898 = vmatmul.mubr.bf16.gmra.mrb[0].mxu0 %v3152
      %v3899 = vpop.f32.mrb[0].mxu0
      %v3900 = vadd.f32 %v3148, %v3899
      %v3901 = vpop.f32.mrb[0].mxu0
      %v3902 = vadd.f32 %v3148, %v3901
      %v3903 = vpop.f32.mrb[0].mxu0
      %v3904 = vpop.f32.mrb[0].mxu0
      %3905 = vdwg.mxu0
      %v3906 = vld [vmem:[%s3] sm:$0xff]
      %v3907 = vadd.f32 %v3285, %v3287
      %v3908 = vadd.f32 %v3907, %v3326
      %v3909 = vadd.f32 %v3908, %v3328
      %v3910 = vadd.f32 %v3909, %v3367
      %v3911 = vadd.f32 %v3910, %v3369
      %v3912 = vadd.f32 %v3911, %v3408
      %v3913 = vadd.f32 %v3912, %v3410
      %v3914 = vadd.f32 %v3913, %v3449
      %v3915 = vadd.f32 %v3914, %v3451
      %v3916 = vadd.f32 %v3915, %v3490
      %v3917 = vadd.f32 %v3916, %v3492
      %v3918 = vadd.f32 %v3917, %v3531
      %v3919 = vadd.f32 %v3918, %v3533
      %v3920 = vadd.f32 %v3919, %v3572
      %v3921 = vadd.f32 %v3920, %v3574
      %v3922 = vadd.f32 %v3921, %v3613
      %v3923 = vadd.f32 %v3922, %v3615
      %v3924 = vadd.f32 %v3923, %v3654
      %v3925 = vadd.f32 %v3924, %v3656
      %v3926 = vadd.f32 %v3925, %v3695
      %v3927 = vadd.f32 %v3926, %v3697
      %v3928 = vadd.f32 %v3927, %v3736
      %v3929 = vadd.f32 %v3928, %v3738
      %v3930 = vadd.f32 %v3929, %v3777
      %v3931 = vadd.f32 %v3930, %v3779
      %v3932 = vadd.f32 %v3931, %v3818
      %v3933 = vadd.f32 %v3932, %v3820
      %v3934 = vadd.f32 %v3933, %v3859
      %v3935 = vadd.f32 %v3934, %v3861
      %v3936 = vadd.f32 %v3935, %v3900
      %v3937 = vadd.f32 %v3936, %v3902
      %3938 = vadd.xlane.f32.xlu0 %v3937
      %v3939 = vpop.xlane.xlu0 %3938
      %v3940 = vrot.slane %v3939, 4
      %v3941 = vadd.f32 %v3939, %v3940
      %v3942 = vrot.slane %v3941, 2
      %v3943 = vadd.f32 %v3941, %v3942
      %v3944 = vrot.slane %v3943, 1
      %v3945 = vadd.f32 %v3943, %v3944
      %s3946 = vtos %v3945
      %v3947 = vmul.f32 %v3285, %v3285
      %v3948 = vmul.f32 %v3287, %v3287
      %v3949 = vmul.f32 %v3326, %v3326
      %v3950 = vmul.f32 %v3328, %v3328
      %v3951 = vmul.f32 %v3367, %v3367
      %v3952 = vmul.f32 %v3369, %v3369
      %v3953 = vmul.f32 %v3408, %v3408
      %v3954 = vmul.f32 %v3410, %v3410
      %v3955 = vmul.f32 %v3449, %v3449
      %v3956 = vmul.f32 %v3451, %v3451
      %v3957 = vmul.f32 %v3490, %v3490
      %v3958 = vmul.f32 %v3492, %v3492
      %v3959 = vmul.f32 %v3531, %v3531
      %v3960 = vmul.f32 %v3533, %v3533
      %v3961 = vmul.f32 %v3572, %v3572
      %v3962 = vmul.f32 %v3574, %v3574
      %v3963 = vmul.f32 %v3613, %v3613
      %v3964 = vmul.f32 %v3615, %v3615
      %v3965 = vmul.f32 %v3654, %v3654
      %v3966 = vmul.f32 %v3656, %v3656
      %v3967 = vmul.f32 %v3695, %v3695
      %v3968 = vmul.f32 %v3697, %v3697
      %v3969 = vmul.f32 %v3736, %v3736
      %v3970 = vmul.f32 %v3738, %v3738
      %v3971 = vmul.f32 %v3777, %v3777
      %v3972 = vmul.f32 %v3779, %v3779
      %v3973 = vmul.f32 %v3818, %v3818
      %v3974 = vmul.f32 %v3820, %v3820
      %v3975 = vmul.f32 %v3859, %v3859
      %v3976 = vmul.f32 %v3861, %v3861
      %v3977 = vmul.f32 %v3900, %v3900
      %v3978 = vmul.f32 %v3902, %v3902
      %v3979 = vadd.f32 %v3947, %v3948
      %v3980 = vadd.f32 %v3979, %v3949
      %v3981 = vadd.f32 %v3980, %v3950
      %v3982 = vadd.f32 %v3981, %v3951
      %v3983 = vadd.f32 %v3982, %v3952
      %v3984 = vadd.f32 %v3983, %v3953
      %v3985 = vadd.f32 %v3984, %v3954
      %v3986 = vadd.f32 %v3985, %v3955
      %v3987 = vadd.f32 %v3986, %v3956
      %v3988 = vadd.f32 %v3987, %v3957
      %v3989 = vadd.f32 %v3988, %v3958
      %v3990 = vadd.f32 %v3989, %v3959
      %v3991 = vadd.f32 %v3990, %v3960
      %v3992 = vadd.f32 %v3991, %v3961
      %v3993 = vadd.f32 %v3992, %v3962
      %v3994 = vadd.f32 %v3993, %v3963
      %v3995 = vadd.f32 %v3994, %v3964
      %v3996 = vadd.f32 %v3995, %v3965
      %v3997 = vadd.f32 %v3996, %v3966
      %v3998 = vadd.f32 %v3997, %v3967
      %v3999 = vadd.f32 %v3998, %v3968
      %v4000 = vadd.f32 %v3999, %v3969
      %v4001 = vadd.f32 %v4000, %v3970
      %v4002 = vadd.f32 %v4001, %v3971
      %v4003 = vadd.f32 %v4002, %v3972
      %v4004 = vadd.f32 %v4003, %v3973
      %v4005 = vadd.f32 %v4004, %v3974
      %v4006 = vadd.f32 %v4005, %v3975
      %v4007 = vadd.f32 %v4006, %v3976
      %v4008 = vadd.f32 %v4007, %v3977
      %v4009 = vadd.f32 %v4008, %v3978
      %4010 = vadd.xlane.f32.xlu0 %v4009
      %v4011 = vpop.xlane.xlu0 %4010
      %v4012 = vrot.slane %v4011, 4
      %v4013 = vadd.f32 %v4011, %v4012
      %v4014 = vrot.slane %v4013, 2
      %v4015 = vadd.f32 %v4013, %v4014
      %v4016 = vrot.slane %v4015, 1
      %v4017 = vadd.f32 %v4015, %v4016
      %s4018 = vtos %v4017
      %v4019 = vrcp.pop 32768.0
      %s4020 = vtos %v4019
      %s4021 = smul.f32 %s3946, %s4020
      %v4022 = vrcp.pop 32768.0
      %s4023 = vtos %v4022
      %s4024 = smul.f32 %s4018, %s4023
      %s4025 = smul.f32 %s4021, %s4021
      %s4026 = ssub.f32 %s4024, %s4025
      %s4027 = sadd.f32 %s4026, 1e-05
      %v4028 = vstv %s4027
      %v4029 = vrsqrt.pop %v4028
      %s4030 = vtos %v4029
      %v4031 = vstv %s4030
      %v4032 = vmul.f32 %v3906, %v4031
      %v4033 = vstv %s4021
      %v4034 = vmul.f32 %v4033, %v4032
      %4036 = vrot.lane.b32.xlu0 %v4034, 1
      %v4037 = vpop.permute.xlu0 %4036
      %v4039 = vsub.f32 %v3906, %v4037
      %4041 = vset.pattern.permute.xlu0 4
      %4042 = vperm.xlu0 %4041, %v4032
      %v4043 = vpop.permute.xlu0 %4042
      %v4045 = vmul.f32 %v3285, %v4043
      %v4046 = vmul.f32 %v3287, %v4043
      %v4047 = vmul.f32 %v3326, %v4043
      %v4048 = vmul.f32 %v3328, %v4043
      %v4049 = vmul.f32 %v3367, %v4043
      %v4050 = vmul.f32 %v3369, %v4043
      %v4051 = vmul.f32 %v3408, %v4043
      %v4052 = vmul.f32 %v3410, %v4043
      %v4053 = vmul.f32 %v3449, %v4043
      %v4054 = vmul.f32 %v3451, %v4043
      %v4055 = vmul.f32 %v3490, %v4043
      %v4056 = vmul.f32 %v3492, %v4043
      %v4057 = vmul.f32 %v3531, %v4043
      %v4058 = vmul.f32 %v3533, %v4043
      %v4059 = vmul.f32 %v3572, %v4043
      %v4060 = vmul.f32 %v3574, %v4043
      %v4061 = vmul.f32 %v3613, %v4043
      %v4062 = vmul.f32 %v3615, %v4043
      %v4063 = vmul.f32 %v3654, %v4043
      %v4064 = vmul.f32 %v3656, %v4043
      %v4065 = vmul.f32 %v3695, %v4043
      %v4066 = vmul.f32 %v3697, %v4043
      %v4067 = vmul.f32 %v3736, %v4043
      %v4068 = vmul.f32 %v3738, %v4043
      %v4069 = vmul.f32 %v3777, %v4043
      %v4070 = vmul.f32 %v3779, %v4043
      %v4071 = vmul.f32 %v3818, %v4043
      %v4072 = vmul.f32 %v3820, %v4043
      %v4073 = vmul.f32 %v3859, %v4043
      %v4074 = vmul.f32 %v3861, %v4043
      %v4075 = vmul.f32 %v3900, %v4043
      %v4076 = vmul.f32 %v3902, %v4043
      %4078 = vset.pattern.permute.xlu0 5
      %4079 = vperm.xlu0 %4078, %v4039
      %v4080 = vpop.permute.xlu0 %4079
      %v4082 = vadd.f32 %v4045, %v4080
      %v4083 = vadd.f32 %v4046, %v4080
      %v4084 = vadd.f32 %v4047, %v4080
      %v4085 = vadd.f32 %v4048, %v4080
      %v4086 = vadd.f32 %v4049, %v4080
      %v4087 = vadd.f32 %v4050, %v4080
      %v4088 = vadd.f32 %v4051, %v4080
      %v4089 = vadd.f32 %v4052, %v4080
      %v4090 = vadd.f32 %v4053, %v4080
      %v4091 = vadd.f32 %v4054, %v4080
      %v4092 = vadd.f32 %v4055, %v4080
      %v4093 = vadd.f32 %v4056, %v4080
      %v4094 = vadd.f32 %v4057, %v4080
      %v4095 = vadd.f32 %v4058, %v4080
      %v4096 = vadd.f32 %v4059, %v4080
      %v4097 = vadd.f32 %v4060, %v4080
      %v4098 = vadd.f32 %v4061, %v4080
      %v4099 = vadd.f32 %v4062, %v4080
      %v4100 = vadd.f32 %v4063, %v4080
      %v4101 = vadd.f32 %v4064, %v4080
      %v4102 = vadd.f32 %v4065, %v4080
      %v4103 = vadd.f32 %v4066, %v4080
      %v4104 = vadd.f32 %v4067, %v4080
      %v4105 = vadd.f32 %v4068, %v4080
      %v4106 = vadd.f32 %v4069, %v4080
      %v4107 = vadd.f32 %v4070, %v4080
      %v4108 = vadd.f32 %v4071, %v4080
      %v4109 = vadd.f32 %v4072, %v4080
      %v4110 = vadd.f32 %v4073, %v4080
      %v4111 = vadd.f32 %v4074, %v4080
      %v4112 = vadd.f32 %v4075, %v4080
      %v4113 = vadd.f32 %v4076, %v4080
      %v4114 = vadd.f32 %v4082, 3.0
      %v4115 = vadd.f32 %v4083, 3.0
      %v4116 = vadd.f32 %v4084, 3.0
      %v4117 = vadd.f32 %v4085, 3.0
      %v4118 = vadd.f32 %v4086, 3.0
      %v4119 = vadd.f32 %v4087, 3.0
      %v4120 = vadd.f32 %v4088, 3.0
      %v4121 = vadd.f32 %v4089, 3.0
      %v4122 = vadd.f32 %v4090, 3.0
      %v4123 = vadd.f32 %v4091, 3.0
      %v4124 = vadd.f32 %v4092, 3.0
      %v4125 = vadd.f32 %v4093, 3.0
      %v4126 = vadd.f32 %v4094, 3.0
      %v4127 = vadd.f32 %v4095, 3.0
      %v4128 = vadd.f32 %v4096, 3.0
      %v4129 = vadd.f32 %v4097, 3.0
      %v4130 = vadd.f32 %v4098, 3.0
      %v4131 = vadd.f32 %v4099, 3.0
      %v4132 = vadd.f32 %v4100, 3.0
      %v4133 = vadd.f32 %v4101, 3.0
      %v4134 = vadd.f32 %v4102, 3.0
      %v4135 = vadd.f32 %v4103, 3.0
      %v4136 = vadd.f32 %v4104, 3.0
      %v4137 = vadd.f32 %v4105, 3.0
      %v4138 = vadd.f32 %v4106, 3.0
      %v4139 = vadd.f32 %v4107, 3.0
      %v4140 = vadd.f32 %v4108, 3.0
      %v4141 = vadd.f32 %v4109, 3.0
      %v4142 = vadd.f32 %v4110, 3.0
      %v4143 = vadd.f32 %v4111, 3.0
      %v4144 = vadd.f32 %v4112, 3.0
      %v4145 = vadd.f32 %v4113, 3.0
      %v4146 = vmax.f32 %v4114, 0.0
      %v4147 = vmax.f32 %v4115, 0.0
      %v4148 = vmax.f32 %v4116, 0.0
      %v4149 = vmax.f32 %v4117, 0.0
      %v4150 = vmax.f32 %v4118, 0.0
      %v4151 = vmax.f32 %v4119, 0.0
      %v4152 = vmax.f32 %v4120, 0.0
      %v4153 = vmax.f32 %v4121, 0.0
      %v4154 = vmax.f32 %v4122, 0.0
      %v4155 = vmax.f32 %v4123, 0.0
      %v4156 = vmax.f32 %v4124, 0.0
      %v4157 = vmax.f32 %v4125, 0.0
      %v4158 = vmax.f32 %v4126, 0.0
      %v4159 = vmax.f32 %v4127, 0.0
      %v4160 = vmax.f32 %v4128, 0.0
      %v4161 = vmax.f32 %v4129, 0.0
      %v4162 = vmax.f32 %v4130, 0.0
      %v4163 = vmax.f32 %v4131, 0.0
      %v4164 = vmax.f32 %v4132, 0.0
      %v4165 = vmax.f32 %v4133, 0.0
      %v4166 = vmax.f32 %v4134, 0.0
      %v4167 = vmax.f32 %v4135, 0.0
      %v4168 = vmax.f32 %v4136, 0.0
      %v4169 = vmax.f32 %v4137, 0.0
      %v4170 = vmax.f32 %v4138, 0.0
      %v4171 = vmax.f32 %v4139, 0.0
      %v4172 = vmax.f32 %v4140, 0.0
      %v4173 = vmax.f32 %v4141, 0.0
      %v4174 = vmax.f32 %v4142, 0.0
      %v4175 = vmax.f32 %v4143, 0.0
      %v4176 = vmax.f32 %v4144, 0.0
      %v4177 = vmax.f32 %v4145, 0.0
      %v4178 = vmin.f32 %v4146, 6.0
      %v4179 = vmin.f32 %v4147, 6.0
      %v4180 = vmin.f32 %v4148, 6.0
      %v4181 = vmin.f32 %v4149, 6.0
      %v4182 = vmin.f32 %v4150, 6.0
      %v4183 = vmin.f32 %v4151, 6.0
      %v4184 = vmin.f32 %v4152, 6.0
      %v4185 = vmin.f32 %v4153, 6.0
      %v4186 = vmin.f32 %v4154, 6.0
      %v4187 = vmin.f32 %v4155, 6.0
      %v4188 = vmin.f32 %v4156, 6.0
      %v4189 = vmin.f32 %v4157, 6.0
      %v4190 = vmin.f32 %v4158, 6.0
      %v4191 = vmin.f32 %v4159, 6.0
      %v4192 = vmin.f32 %v4160, 6.0
      %v4193 = vmin.f32 %v4161, 6.0
      %v4194 = vmin.f32 %v4162, 6.0
      %v4195 = vmin.f32 %v4163, 6.0
      %v4196 = vmin.f32 %v4164, 6.0
      %v4197 = vmin.f32 %v4165, 6.0
      %v4198 = vmin.f32 %v4166, 6.0
      %v4199 = vmin.f32 %v4167, 6.0
      %v4200 = vmin.f32 %v4168, 6.0
      %v4201 = vmin.f32 %v4169, 6.0
      %v4202 = vmin.f32 %v4170, 6.0
      %v4203 = vmin.f32 %v4171, 6.0
      %v4204 = vmin.f32 %v4172, 6.0
      %v4205 = vmin.f32 %v4173, 6.0
      %v4206 = vmin.f32 %v4174, 6.0
      %v4207 = vmin.f32 %v4175, 6.0
      %v4208 = vmin.f32 %v4176, 6.0
      %v4209 = vmin.f32 %v4177, 6.0
      %v4210 = vmul.f32 %v4082, %v4178
      %v4211 = vmul.f32 %v4083, %v4179
      %v4212 = vmul.f32 %v4084, %v4180
      %v4213 = vmul.f32 %v4085, %v4181
      %v4214 = vmul.f32 %v4086, %v4182
      %v4215 = vmul.f32 %v4087, %v4183
      %v4216 = vmul.f32 %v4088, %v4184
      %v4217 = vmul.f32 %v4089, %v4185
      %v4218 = vmul.f32 %v4090, %v4186
      %v4219 = vmul.f32 %v4091, %v4187
      %v4220 = vmul.f32 %v4092, %v4188
      %v4221 = vmul.f32 %v4093, %v4189
      %v4222 = vmul.f32 %v4094, %v4190
      %v4223 = vmul.f32 %v4095, %v4191
      %v4224 = vmul.f32 %v4096, %v4192
      %v4225 = vmul.f32 %v4097, %v4193
      %v4226 = vmul.f32 %v4098, %v4194
      %v4227 = vmul.f32 %v4099, %v4195
      %v4228 = vmul.f32 %v4100, %v4196
      %v4229 = vmul.f32 %v4101, %v4197
      %v4230 = vmul.f32 %v4102, %v4198
      %v4231 = vmul.f32 %v4103, %v4199
      %v4232 = vmul.f32 %v4104, %v4200
      %v4233 = vmul.f32 %v4105, %v4201
      %v4234 = vmul.f32 %v4106, %v4202
      %v4235 = vmul.f32 %v4107, %v4203
      %v4236 = vmul.f32 %v4108, %v4204
      %v4237 = vmul.f32 %v4109, %v4205
      %v4238 = vmul.f32 %v4110, %v4206
      %v4239 = vmul.f32 %v4111, %v4207
      %v4240 = vmul.f32 %v4112, %v4208
      %v4241 = vmul.f32 %v4113, %v4209
      %v4242 = vmul.f32 %v4210, 0.16666667
      %v4243 = vmul.f32 %v4211, 0.16666667
      %v4244 = vmul.f32 %v4212, 0.16666667
      %v4245 = vmul.f32 %v4213, 0.16666667
      %v4246 = vmul.f32 %v4214, 0.16666667
      %v4247 = vmul.f32 %v4215, 0.16666667
      %v4248 = vmul.f32 %v4216, 0.16666667
      %v4249 = vmul.f32 %v4217, 0.16666667
      %v4250 = vmul.f32 %v4218, 0.16666667
      %v4251 = vmul.f32 %v4219, 0.16666667
      %v4252 = vmul.f32 %v4220, 0.16666667
      %v4253 = vmul.f32 %v4221, 0.16666667
      %v4254 = vmul.f32 %v4222, 0.16666667
      %v4255 = vmul.f32 %v4223, 0.16666667
      %v4256 = vmul.f32 %v4224, 0.16666667
      %v4257 = vmul.f32 %v4225, 0.16666667
      %v4258 = vmul.f32 %v4226, 0.16666667
      %v4259 = vmul.f32 %v4227, 0.16666667
      %v4260 = vmul.f32 %v4228, 0.16666667
      %v4261 = vmul.f32 %v4229, 0.16666667
      %v4262 = vmul.f32 %v4230, 0.16666667
      %v4263 = vmul.f32 %v4231, 0.16666667
      %v4264 = vmul.f32 %v4232, 0.16666667
      %v4265 = vmul.f32 %v4233, 0.16666667
      %v4266 = vmul.f32 %v4234, 0.16666667
      %v4267 = vmul.f32 %v4235, 0.16666667
      %v4268 = vmul.f32 %v4236, 0.16666667
      %v4269 = vmul.f32 %v4237, 0.16666667
      %v4270 = vmul.f32 %v4238, 0.16666667
      %v4271 = vmul.f32 %v4239, 0.16666667
      %v4272 = vmul.f32 %v4240, 0.16666667
      %v4273 = vmul.f32 %v4241, 0.16666667
      %v4274 = vld [vmem:[%s5] sm:$0xf]
      %v4275 = vpack.c.bf16 %v4242, %v4242
      %v4276 = vpack.c.bf16 %v4243, %v4243
      %v4277 = vpack.c.bf16 %v4244, %v4244
      %v4278 = vpack.c.bf16 %v4245, %v4245
      %v4279 = vpack.c.bf16 %v4246, %v4246
      %v4280 = vpack.c.bf16 %v4247, %v4247
      %v4281 = vpack.c.bf16 %v4248, %v4248
      %v4282 = vpack.c.bf16 %v4249, %v4249
      %v4283 = vpack.c.bf16 %v4250, %v4250
      %v4284 = vpack.c.bf16 %v4251, %v4251
      %v4285 = vpack.c.bf16 %v4252, %v4252
      %v4286 = vpack.c.bf16 %v4253, %v4253
      %v4287 = vpack.c.bf16 %v4254, %v4254
      %v4288 = vpack.c.bf16 %v4255, %v4255
      %v4289 = vpack.c.bf16 %v4256, %v4256
      %v4290 = vpack.c.bf16 %v4257, %v4257
      %v4291 = vpack.c.bf16 %v4258, %v4258
      %v4292 = vpack.c.bf16 %v4259, %v4259
      %v4293 = vpack.c.bf16 %v4260, %v4260
      %v4294 = vpack.c.bf16 %v4261, %v4261
      %v4295 = vpack.c.bf16 %v4262, %v4262
      %v4296 = vpack.c.bf16 %v4263, %v4263
      %v4297 = vpack.c.bf16 %v4264, %v4264
      %v4298 = vpack.c.bf16 %v4265, %v4265
      %v4299 = vpack.c.bf16 %v4266, %v4266
      %v4300 = vpack.c.bf16 %v4267, %v4267
      %v4301 = vpack.c.bf16 %v4268, %v4268
      %v4302 = vpack.c.bf16 %v4269, %v4269
      %v4303 = vpack.c.bf16 %v4270, %v4270
      %v4304 = vpack.c.bf16 %v4271, %v4271
      %v4305 = vpack.c.bf16 %v4272, %v4272
      %v4306 = vpack.c.bf16 %v4273, %v4273
      %4339 = vrot.lane.b32.xlu0 %v4275, 65
      %v4340 = vpop.permute.xlu0 %4339
      %4341 = vrot.lane.b32.xlu0 %v4276, 65
      %v4342 = vpop.permute.xlu0 %4341
      %4343 = vrot.lane.b32.xlu0 %v4277, 65
      %v4344 = vpop.permute.xlu0 %4343
      %4345 = vrot.lane.b32.xlu0 %v4278, 65
      %v4346 = vpop.permute.xlu0 %4345
      %4347 = vrot.lane.b32.xlu0 %v4279, 65
      %v4348 = vpop.permute.xlu0 %4347
      %4349 = vrot.lane.b32.xlu0 %v4280, 65
      %v4350 = vpop.permute.xlu0 %4349
      %4351 = vrot.lane.b32.xlu0 %v4281, 65
      %v4352 = vpop.permute.xlu0 %4351
      %4353 = vrot.lane.b32.xlu0 %v4282, 65
      %v4354 = vpop.permute.xlu0 %4353
      %4355 = vrot.lane.b32.xlu0 %v4283, 65
      %v4356 = vpop.permute.xlu0 %4355
      %4357 = vrot.lane.b32.xlu0 %v4284, 65
      %v4358 = vpop.permute.xlu0 %4357
      %4359 = vrot.lane.b32.xlu0 %v4285, 65
      %v4360 = vpop.permute.xlu0 %4359
      %4361 = vrot.lane.b32.xlu0 %v4286, 65
      %v4362 = vpop.permute.xlu0 %4361
      %4363 = vrot.lane.b32.xlu0 %v4287, 65
      %v4364 = vpop.permute.xlu0 %4363
      %4365 = vrot.lane.b32.xlu0 %v4288, 65
      %v4366 = vpop.permute.xlu0 %4365
      %4367 = vrot.lane.b32.xlu0 %v4289, 65
      %v4368 = vpop.permute.xlu0 %4367
      %4369 = vrot.lane.b32.xlu0 %v4290, 65
      %v4370 = vpop.permute.xlu0 %4369
      %4371 = vrot.lane.b32.xlu0 %v4291, 65
      %v4372 = vpop.permute.xlu0 %4371
      %4373 = vrot.lane.b32.xlu0 %v4292, 65
      %v4374 = vpop.permute.xlu0 %4373
      %4375 = vrot.lane.b32.xlu0 %v4293, 65
      %v4376 = vpop.permute.xlu0 %4375
      %4377 = vrot.lane.b32.xlu0 %v4294, 65
      %v4378 = vpop.permute.xlu0 %4377
      %4379 = vrot.lane.b32.xlu0 %v4295, 65
      %v4380 = vpop.permute.xlu0 %4379
      %4381 = vrot.lane.b32.xlu0 %v4296, 65
      %v4382 = vpop.permute.xlu0 %4381
      %4383 = vrot.lane.b32.xlu0 %v4297, 65
      %v4384 = vpop.permute.xlu0 %4383
      %4385 = vrot.lane.b32.xlu0 %v4298, 65
      %v4386 = vpop.permute.xlu0 %4385
      %4387 = vrot.lane.b32.xlu0 %v4299, 65
      %v4388 = vpop.permute.xlu0 %4387
      %4389 = vrot.lane.b32.xlu0 %v4300, 65
      %v4390 = vpop.permute.xlu0 %4389
      %4391 = vrot.lane.b32.xlu0 %v4301, 65
      %v4392 = vpop.permute.xlu0 %4391
      %4393 = vrot.lane.b32.xlu0 %v4302, 65
      %v4394 = vpop.permute.xlu0 %4393
      %4395 = vrot.lane.b32.xlu0 %v4303, 65
      %v4396 = vpop.permute.xlu0 %4395
      %4397 = vrot.lane.b32.xlu0 %v4304, 65
      %v4398 = vpop.permute.xlu0 %4397
      %4399 = vrot.lane.b32.xlu0 %v4305, 65
      %v4400 = vpop.permute.xlu0 %4399
      %4401 = vrot.lane.b32.xlu0 %v4306, 65
      %v4402 = vpop.permute.xlu0 %4401
      %v4403 = vsel %vm467, %v4340, %v4342
      %v4404 = vsel %vm467, %v4342, %v4344
      %v4405 = vsel %vm467, %v4344, %v4346
      %v4406 = vsel %vm467, %v4346, %v4348
      %v4407 = vsel %vm467, %v4348, %v4350
      %v4408 = vsel %vm467, %v4350, %v4352
      %v4409 = vsel %vm467, %v4352, %v4354
      %v4410 = vsel %vm467, %v4354, %v4356
      %v4411 = vsel %vm467, %v4356, %v4358
      %v4412 = vsel %vm467, %v4358, %v4360
      %v4413 = vsel %vm467, %v4360, %v4362
      %v4414 = vsel %vm467, %v4362, %v4364
      %v4415 = vsel %vm467, %v4364, %v4366
      %v4416 = vsel %vm467, %v4366, %v4368
      %v4417 = vsel %vm467, %v4368, %v4370
      %v4418 = vsel %vm467, %v4370, %v4372
      %v4419 = vsel %vm467, %v4372, %v4374
      %v4420 = vsel %vm467, %v4374, %v4376
      %v4421 = vsel %vm467, %v4376, %v4378
      %v4422 = vsel %vm467, %v4378, %v4380
      %v4423 = vsel %vm467, %v4380, %v4382
      %v4424 = vsel %vm467, %v4382, %v4384
      %v4425 = vsel %vm467, %v4384, %v4386
      %v4426 = vsel %vm467, %v4386, %v4388
      %v4427 = vsel %vm467, %v4388, %v4390
      %v4428 = vsel %vm467, %v4390, %v4392
      %v4429 = vsel %vm467, %v4392, %v4394
      %v4430 = vsel %vm467, %v4394, %v4396
      %v4431 = vsel %vm467, %v4396, %v4398
      %v4432 = vsel %vm467, %v4398, %v4400
      %v4433 = vsel %vm467, %v4400, %v4402
      %v4466 = vsel %vm530, 0, %v4340
      %v4469 = vsel %vm530, %v4402, 0
      %v4471 = vmul.bf16 %v4466, %v744
      %v4472 = vmul.bf16 %v4403, %v751
      %v4473 = vmul.bf16 %v4404, %v758
      %v4474 = vmul.bf16 %v4405, %v765
      %v4475 = vmul.bf16 %v4406, %v772
      %v4476 = vmul.bf16 %v4407, %v779
      %v4477 = vmul.bf16 %v4408, %v786
      %v4478 = vmul.bf16 %v4409, %v793
      %v4479 = vmul.bf16 %v4410, %v800
      %v4480 = vmul.bf16 %v4411, %v807
      %v4481 = vmul.bf16 %v4412, %v814
      %v4482 = vmul.bf16 %v4413, %v821
      %v4483 = vmul.bf16 %v4414, %v828
      %v4484 = vmul.bf16 %v4415, %v835
      %v4485 = vmul.bf16 %v4416, %v842
      %v4486 = vmul.bf16 %v4417, %v849
      %v4487 = vmul.bf16 %v4418, %v856
      %v4488 = vmul.bf16 %v4419, %v863
      %v4489 = vmul.bf16 %v4420, %v870
      %v4490 = vmul.bf16 %v4421, %v877
      %v4491 = vmul.bf16 %v4422, %v884
      %v4492 = vmul.bf16 %v4423, %v891
      %v4493 = vmul.bf16 %v4424, %v898
      %v4494 = vmul.bf16 %v4425, %v905
      %v4495 = vmul.bf16 %v4426, %v912
      %v4496 = vmul.bf16 %v4427, %v919
      %v4497 = vmul.bf16 %v4428, %v926
      %v4498 = vmul.bf16 %v4429, %v933
      %v4499 = vmul.bf16 %v4430, %v940
      %v4500 = vmul.bf16 %v4431, %v947
      %v4501 = vmul.bf16 %v4432, %v954
      %v4502 = vmul.bf16 %v4433, %v961
      %v4503 = vmul.bf16 %v4466, %v1251
      %v4504 = vmul.bf16 %v4403, %v1315
      %v4505 = vmul.bf16 %v4404, %v1316
      %v4506 = vmul.bf16 %v4405, %v1317
      %v4507 = vmul.bf16 %v4406, %v1318
      %v4508 = vmul.bf16 %v4407, %v1319
      %v4509 = vmul.bf16 %v4408, %v1320
      %v4510 = vmul.bf16 %v4409, %v1321
      %v4511 = vmul.bf16 %v4410, %v1322
      %v4512 = vmul.bf16 %v4411, %v1323
      %v4513 = vmul.bf16 %v4412, %v1324
      %v4514 = vmul.bf16 %v4413, %v1325
      %v4515 = vmul.bf16 %v4414, %v1326
      %v4516 = vmul.bf16 %v4415, %v1327
      %v4517 = vmul.bf16 %v4416, %v1328
      %v4518 = vmul.bf16 %v4417, %v1329
      %v4519 = vmul.bf16 %v4418, %v1330
      %v4520 = vmul.bf16 %v4419, %v1331
      %v4521 = vmul.bf16 %v4420, %v1332
      %v4522 = vmul.bf16 %v4421, %v1333
      %v4523 = vmul.bf16 %v4422, %v1334
      %v4524 = vmul.bf16 %v4423, %v1335
      %v4525 = vmul.bf16 %v4424, %v1336
      %v4526 = vmul.bf16 %v4425, %v1337
      %v4527 = vmul.bf16 %v4426, %v1338
      %v4528 = vmul.bf16 %v4427, %v1339
      %v4529 = vmul.bf16 %v4428, %v1340
      %v4530 = vmul.bf16 %v4429, %v1341
      %v4531 = vmul.bf16 %v4430, %v1342
      %v4532 = vmul.bf16 %v4431, %v1343
      %v4533 = vmul.bf16 %v4432, %v1344
      %v4534 = vmul.bf16 %v4433, %v1345
      %v4535 = vmul.bf16 %v4469, %v1313
      %v4536 = vmul.bf16 %v4466, %v1445
      %v4537 = vmul.bf16 %v4403, %v1509
      %v4538 = vmul.bf16 %v4404, %v1510
      %v4539 = vmul.bf16 %v4405, %v1511
      %v4540 = vmul.bf16 %v4406, %v1512
      %v4541 = vmul.bf16 %v4407, %v1513
      %v4542 = vmul.bf16 %v4408, %v1514
      %v4543 = vmul.bf16 %v4409, %v1515
      %v4544 = vmul.bf16 %v4410, %v1516
      %v4545 = vmul.bf16 %v4411, %v1517
      %v4546 = vmul.bf16 %v4412, %v1518
      %v4547 = vmul.bf16 %v4413, %v1519
      %v4548 = vmul.bf16 %v4414, %v1520
      %v4549 = vmul.bf16 %v4415, %v1521
      %v4550 = vmul.bf16 %v4416, %v1522
      %v4551 = vmul.bf16 %v4417, %v1523
      %v4552 = vmul.bf16 %v4418, %v1524
      %v4553 = vmul.bf16 %v4419, %v1525
      %v4554 = vmul.bf16 %v4420, %v1526
      %v4555 = vmul.bf16 %v4421, %v1527
      %v4556 = vmul.bf16 %v4422, %v1528
      %v4557 = vmul.bf16 %v4423, %v1529
      %v4558 = vmul.bf16 %v4424, %v1530
      %v4559 = vmul.bf16 %v4425, %v1531
      %v4560 = vmul.bf16 %v4426, %v1532
      %v4561 = vmul.bf16 %v4427, %v1533
      %v4562 = vmul.bf16 %v4428, %v1534
      %v4563 = vmul.bf16 %v4429, %v1535
      %v4564 = vmul.bf16 %v4430, %v1536
      %v4565 = vmul.bf16 %v4431, %v1537
      %v4566 = vmul.bf16 %v4432, %v1538
      %v4567 = vmul.bf16 %v4433, %v1539
      %v4568 = vmul.bf16 %v4469, %v1507
      %v4569 = vmul.bf16 %v4466, %v1607
      %v4570 = vmul.bf16 %v4403, %v1671
      %v4571 = vmul.bf16 %v4404, %v1672
      %v4572 = vmul.bf16 %v4405, %v1673
      %v4573 = vmul.bf16 %v4406, %v1674
      %v4574 = vmul.bf16 %v4407, %v1675
      %v4575 = vmul.bf16 %v4408, %v1676
      %v4576 = vmul.bf16 %v4409, %v1677
      %v4577 = vmul.bf16 %v4410, %v1678
      %v4578 = vmul.bf16 %v4411, %v1679
      %v4579 = vmul.bf16 %v4412, %v1680
      %v4580 = vmul.bf16 %v4413, %v1681
      %v4581 = vmul.bf16 %v4414, %v1682
      %v4582 = vmul.bf16 %v4415, %v1683
      %v4583 = vmul.bf16 %v4416, %v1684
      %v4584 = vmul.bf16 %v4417, %v1685
      %v4585 = vmul.bf16 %v4418, %v1686
      %v4586 = vmul.bf16 %v4419, %v1687
      %v4587 = vmul.bf16 %v4420, %v1688
      %v4588 = vmul.bf16 %v4421, %v1689
      %v4589 = vmul.bf16 %v4422, %v1690
      %v4590 = vmul.bf16 %v4423, %v1691
      %v4591 = vmul.bf16 %v4424, %v1692
      %v4592 = vmul.bf16 %v4425, %v1693
      %v4593 = vmul.bf16 %v4426, %v1694
      %v4594 = vmul.bf16 %v4427, %v1695
      %v4595 = vmul.bf16 %v4428, %v1696
      %v4596 = vmul.bf16 %v4429, %v1697
      %v4597 = vmul.bf16 %v4430, %v1698
      %v4598 = vmul.bf16 %v4431, %v1699
      %v4599 = vmul.bf16 %v4432, %v1700
      %v4600 = vmul.bf16 %v4433, %v1701
      %v4601 = vmul.bf16 %v4469, %v1669
      %v4602 = vmul.bf16 %v4403, %v744
      %v4603 = vmul.bf16 %v4404, %v751
      %v4604 = vmul.bf16 %v4405, %v758
      %v4605 = vmul.bf16 %v4406, %v765
      %v4606 = vmul.bf16 %v4407, %v772
      %v4607 = vmul.bf16 %v4408, %v779
      %v4608 = vmul.bf16 %v4409, %v786
      %v4609 = vmul.bf16 %v4410, %v793
      %v4610 = vmul.bf16 %v4411, %v800
      %v4611 = vmul.bf16 %v4412, %v807
      %v4612 = vmul.bf16 %v4413, %v814
      %v4613 = vmul.bf16 %v4414, %v821
      %v4614 = vmul.bf16 %v4415, %v828
      %v4615 = vmul.bf16 %v4416, %v835
      %v4616 = vmul.bf16 %v4417, %v842
      %v4617 = vmul.bf16 %v4418, %v849
      %v4618 = vmul.bf16 %v4419, %v856
      %v4619 = vmul.bf16 %v4420, %v863
      %v4620 = vmul.bf16 %v4421, %v870
      %v4621 = vmul.bf16 %v4422, %v877
      %v4622 = vmul.bf16 %v4423, %v884
      %v4623 = vmul.bf16 %v4424, %v891
      %v4624 = vmul.bf16 %v4425, %v898
      %v4625 = vmul.bf16 %v4426, %v905
      %v4626 = vmul.bf16 %v4427, %v912
      %v4627 = vmul.bf16 %v4428, %v919
      %v4628 = vmul.bf16 %v4429, %v926
      %v4629 = vmul.bf16 %v4430, %v933
      %v4630 = vmul.bf16 %v4431, %v940
      %v4631 = vmul.bf16 %v4432, %v947
      %v4632 = vmul.bf16 %v4433, %v954
      %v4633 = vmul.bf16 %v4469, %v961
      %v4634 = vmul.bf16 %v4403, %v1251
      %v4635 = vmul.bf16 %v4404, %v1315
      %v4636 = vmul.bf16 %v4405, %v1316
      %v4637 = vmul.bf16 %v4406, %v1317
      %v4638 = vmul.bf16 %v4407, %v1318
      %v4639 = vmul.bf16 %v4408, %v1319
      %v4640 = vmul.bf16 %v4409, %v1320
      %v4641 = vmul.bf16 %v4410, %v1321
      %v4642 = vmul.bf16 %v4411, %v1322
      %v4643 = vmul.bf16 %v4412, %v1323
      %v4644 = vmul.bf16 %v4413, %v1324
      %v4645 = vmul.bf16 %v4414, %v1325
      %v4646 = vmul.bf16 %v4415, %v1326
      %v4647 = vmul.bf16 %v4416, %v1327
      %v4648 = vmul.bf16 %v4417, %v1328
      %v4649 = vmul.bf16 %v4418, %v1329
      %v4650 = vmul.bf16 %v4419, %v1330
      %v4651 = vmul.bf16 %v4420, %v1331
      %v4652 = vmul.bf16 %v4421, %v1332
      %v4653 = vmul.bf16 %v4422, %v1333
      %v4654 = vmul.bf16 %v4423, %v1334
      %v4655 = vmul.bf16 %v4424, %v1335
      %v4656 = vmul.bf16 %v4425, %v1336
      %v4657 = vmul.bf16 %v4426, %v1337
      %v4658 = vmul.bf16 %v4427, %v1338
      %v4659 = vmul.bf16 %v4428, %v1339
      %v4660 = vmul.bf16 %v4429, %v1340
      %v4661 = vmul.bf16 %v4430, %v1341
      %v4662 = vmul.bf16 %v4431, %v1342
      %v4663 = vmul.bf16 %v4432, %v1343
      %v4664 = vmul.bf16 %v4433, %v1344
      %v4665 = vmul.bf16 %v4469, %v1345
      %v4668 = vrot.slane %v4466, 4
      %v4669 = vrot.slane %v4403, 4
      %v4670 = vrot.slane %v4404, 4
      %v4671 = vrot.slane %v4405, 4
      %v4672 = vrot.slane %v4406, 4
      %v4673 = vrot.slane %v4407, 4
      %v4674 = vrot.slane %v4408, 4
      %v4675 = vrot.slane %v4409, 4
      %v4676 = vrot.slane %v4410, 4
      %v4677 = vrot.slane %v4411, 4
      %v4678 = vrot.slane %v4412, 4
      %v4679 = vrot.slane %v4413, 4
      %v4680 = vrot.slane %v4414, 4
      %v4681 = vrot.slane %v4415, 4
      %v4682 = vrot.slane %v4416, 4
      %v4683 = vrot.slane %v4417, 4
      %v4684 = vrot.slane %v4418, 4
      %v4685 = vrot.slane %v4419, 4
      %v4686 = vrot.slane %v4420, 4
      %v4687 = vrot.slane %v4421, 4
      %v4688 = vrot.slane %v4422, 4
      %v4689 = vrot.slane %v4423, 4
      %v4690 = vrot.slane %v4424, 4
      %v4691 = vrot.slane %v4425, 4
      %v4692 = vrot.slane %v4426, 4
      %v4693 = vrot.slane %v4427, 4
      %v4694 = vrot.slane %v4428, 4
      %v4695 = vrot.slane %v4429, 4
      %v4696 = vrot.slane %v4430, 4
      %v4697 = vrot.slane %v4431, 4
      %v4698 = vrot.slane %v4432, 4
      %v4699 = vrot.slane %v4433, 4
      %v4700 = vrot.slane %v4469, 4
      %4701 = vrot.lane.b32.xlu0 %v4668, 127
      %v4702 = vpop.permute.xlu0 %4701
      %4703 = vrot.lane.b32.xlu0 %v4669, 127
      %v4704 = vpop.permute.xlu0 %4703
      %4705 = vrot.lane.b32.xlu0 %v4670, 127
      %v4706 = vpop.permute.xlu0 %4705
      %4707 = vrot.lane.b32.xlu0 %v4671, 127
      %v4708 = vpop.permute.xlu0 %4707
      %4709 = vrot.lane.b32.xlu0 %v4672, 127
      %v4710 = vpop.permute.xlu0 %4709
      %4711 = vrot.lane.b32.xlu0 %v4673, 127
      %v4712 = vpop.permute.xlu0 %4711
      %4713 = vrot.lane.b32.xlu0 %v4674, 127
      %v4714 = vpop.permute.xlu0 %4713
      %4715 = vrot.lane.b32.xlu0 %v4675, 127
      %v4716 = vpop.permute.xlu0 %4715
      %4717 = vrot.lane.b32.xlu0 %v4676, 127
      %v4718 = vpop.permute.xlu0 %4717
      %4719 = vrot.lane.b32.xlu0 %v4677, 127
      %v4720 = vpop.permute.xlu0 %4719
      %4721 = vrot.lane.b32.xlu0 %v4678, 127
      %v4722 = vpop.permute.xlu0 %4721
      %4723 = vrot.lane.b32.xlu0 %v4679, 127
      %v4724 = vpop.permute.xlu0 %4723
      %4725 = vrot.lane.b32.xlu0 %v4680, 127
      %v4726 = vpop.permute.xlu0 %4725
      %4727 = vrot.lane.b32.xlu0 %v4681, 127
      %v4728 = vpop.permute.xlu0 %4727
      %4729 = vrot.lane.b32.xlu0 %v4682, 127
      %v4730 = vpop.permute.xlu0 %4729
      %4731 = vrot.lane.b32.xlu0 %v4683, 127
      %v4732 = vpop.permute.xlu0 %4731
      %4733 = vrot.lane.b32.xlu0 %v4684, 127
      %v4734 = vpop.permute.xlu0 %4733
      %4735 = vrot.lane.b32.xlu0 %v4685, 127
      %v4736 = vpop.permute.xlu0 %4735
      %4737 = vrot.lane.b32.xlu0 %v4686, 127
      %v4738 = vpop.permute.xlu0 %4737
      %4739 = vrot.lane.b32.xlu0 %v4687, 127
      %v4740 = vpop.permute.xlu0 %4739
      %4741 = vrot.lane.b32.xlu0 %v4688, 127
      %v4742 = vpop.permute.xlu0 %4741
      %4743 = vrot.lane.b32.xlu0 %v4689, 127
      %v4744 = vpop.permute.xlu0 %4743
      %4745 = vrot.lane.b32.xlu0 %v4690, 127
      %v4746 = vpop.permute.xlu0 %4745
      %4747 = vrot.lane.b32.xlu0 %v4691, 127
      %v4748 = vpop.permute.xlu0 %4747
      %4749 = vrot.lane.b32.xlu0 %v4692, 127
      %v4750 = vpop.permute.xlu0 %4749
      %4751 = vrot.lane.b32.xlu0 %v4693, 127
      %v4752 = vpop.permute.xlu0 %4751
      %4753 = vrot.lane.b32.xlu0 %v4694, 127
      %v4754 = vpop.permute.xlu0 %4753
      %4755 = vrot.lane.b32.xlu0 %v4695, 127
      %v4756 = vpop.permute.xlu0 %4755
      %4757 = vrot.lane.b32.xlu0 %v4696, 127
      %v4758 = vpop.permute.xlu0 %4757
      %4759 = vrot.lane.b32.xlu0 %v4697, 127
      %v4760 = vpop.permute.xlu0 %4759
      %4761 = vrot.lane.b32.xlu0 %v4698, 127
      %v4762 = vpop.permute.xlu0 %4761
      %4763 = vrot.lane.b32.xlu0 %v4699, 127
      %v4764 = vpop.permute.xlu0 %4763
      %4765 = vrot.lane.b32.xlu0 %v4700, 127
      %v4766 = vpop.permute.xlu0 %4765
      %v4767 = vsel %vm1934, %v4702, %v4704
      %v4768 = vsel %vm1934, %v4704, %v4706
      %v4769 = vsel %vm1934, %v4706, %v4708
      %v4770 = vsel %vm1934, %v4708, %v4710
      %v4771 = vsel %vm1934, %v4710, %v4712
      %v4772 = vsel %vm1934, %v4712, %v4714
      %v4773 = vsel %vm1934, %v4714, %v4716
      %v4774 = vsel %vm1934, %v4716, %v4718
      %v4775 = vsel %vm1934, %v4718, %v4720
      %v4776 = vsel %vm1934, %v4720, %v4722
      %v4777 = vsel %vm1934, %v4722, %v4724
      %v4778 = vsel %vm1934, %v4724, %v4726
      %v4779 = vsel %vm1934, %v4726, %v4728
      %v4780 = vsel %vm1934, %v4728, %v4730
      %v4781 = vsel %vm1934, %v4730, %v4732
      %v4782 = vsel %vm1934, %v4732, %v4734
      %v4783 = vsel %vm1934, %v4734, %v4736
      %v4784 = vsel %vm1934, %v4736, %v4738
      %v4785 = vsel %vm1934, %v4738, %v4740
      %v4786 = vsel %vm1934, %v4740, %v4742
      %v4787 = vsel %vm1934, %v4742, %v4744
      %v4788 = vsel %vm1934, %v4744, %v4746
      %v4789 = vsel %vm1934, %v4746, %v4748
      %v4790 = vsel %vm1934, %v4748, %v4750
      %v4791 = vsel %vm1934, %v4750, %v4752
      %v4792 = vsel %vm1934, %v4752, %v4754
      %v4793 = vsel %vm1934, %v4754, %v4756
      %v4794 = vsel %vm1934, %v4756, %v4758
      %v4795 = vsel %vm1934, %v4758, %v4760
      %v4796 = vsel %vm1934, %v4760, %v4762
      %v4797 = vsel %vm1934, %v4762, %v4764
      %v4798 = vsel %vm1934, %v4764, %v4766
      %4832 = vrot.lane.b32.xlu0 %v4503, 126
      %v4833 = vpop.permute.xlu0 %4832
      %4834 = vrot.lane.b32.xlu0 %v4504, 126
      %v4835 = vpop.permute.xlu0 %4834
      %4836 = vrot.lane.b32.xlu0 %v4505, 126
      %v4837 = vpop.permute.xlu0 %4836
      %4838 = vrot.lane.b32.xlu0 %v4506, 126
      %v4839 = vpop.permute.xlu0 %4838
      %4840 = vrot.lane.b32.xlu0 %v4507, 126
      %v4841 = vpop.permute.xlu0 %4840
      %4842 = vrot.lane.b32.xlu0 %v4508, 126
      %v4843 = vpop.permute.xlu0 %4842
      %4844 = vrot.lane.b32.xlu0 %v4509, 126
      %v4845 = vpop.permute.xlu0 %4844
      %4846 = vrot.lane.b32.xlu0 %v4510, 126
      %v4847 = vpop.permute.xlu0 %4846
      %4848 = vrot.lane.b32.xlu0 %v4511, 126
      %v4849 = vpop.permute.xlu0 %4848
      %4850 = vrot.lane.b32.xlu0 %v4512, 126
      %v4851 = vpop.permute.xlu0 %4850
      %4852 = vrot.lane.b32.xlu0 %v4513, 126
      %v4853 = vpop.permute.xlu0 %4852
      %4854 = vrot.lane.b32.xlu0 %v4514, 126
      %v4855 = vpop.permute.xlu0 %4854
      %4856 = vrot.lane.b32.xlu0 %v4515, 126
      %v4857 = vpop.permute.xlu0 %4856
      %4858 = vrot.lane.b32.xlu0 %v4516, 126
      %v4859 = vpop.permute.xlu0 %4858
      %4860 = vrot.lane.b32.xlu0 %v4517, 126
      %v4861 = vpop.permute.xlu0 %4860
      %4862 = vrot.lane.b32.xlu0 %v4518, 126
      %v4863 = vpop.permute.xlu0 %4862
      %4864 = vrot.lane.b32.xlu0 %v4519, 126
      %v4865 = vpop.permute.xlu0 %4864
      %4866 = vrot.lane.b32.xlu0 %v4520, 126
      %v4867 = vpop.permute.xlu0 %4866
      %4868 = vrot.lane.b32.xlu0 %v4521, 126
      %v4869 = vpop.permute.xlu0 %4868
      %4870 = vrot.lane.b32.xlu0 %v4522, 126
      %v4871 = vpop.permute.xlu0 %4870
      %4872 = vrot.lane.b32.xlu0 %v4523, 126
      %v4873 = vpop.permute.xlu0 %4872
      %4874 = vrot.lane.b32.xlu0 %v4524, 126
      %v4875 = vpop.permute.xlu0 %4874
      %4876 = vrot.lane.b32.xlu0 %v4525, 126
      %v4877 = vpop.permute.xlu0 %4876
      %4878 = vrot.lane.b32.xlu0 %v4526, 126
      %v4879 = vpop.permute.xlu0 %4878
      %4880 = vrot.lane.b32.xlu0 %v4527, 126
      %v4881 = vpop.permute.xlu0 %4880
      %4882 = vrot.lane.b32.xlu0 %v4528, 126
      %v4883 = vpop.permute.xlu0 %4882
      %4884 = vrot.lane.b32.xlu0 %v4529, 126
      %v4885 = vpop.permute.xlu0 %4884
      %4886 = vrot.lane.b32.xlu0 %v4530, 126
      %v4887 = vpop.permute.xlu0 %4886
      %4888 = vrot.lane.b32.xlu0 %v4531, 126
      %v4889 = vpop.permute.xlu0 %4888
      %4890 = vrot.lane.b32.xlu0 %v4532, 126
      %v4891 = vpop.permute.xlu0 %4890
      %4892 = vrot.lane.b32.xlu0 %v4533, 126
      %v4893 = vpop.permute.xlu0 %4892
      %4894 = vrot.lane.b32.xlu0 %v4534, 126
      %v4895 = vpop.permute.xlu0 %4894
      %4896 = vrot.lane.b32.xlu0 %v4535, 126
      %v4897 = vpop.permute.xlu0 %4896
      %v4898 = vsel %vm2066, %v4833, %v4835
      %v4899 = vsel %vm2066, %v4835, %v4837
      %v4900 = vsel %vm2066, %v4837, %v4839
      %v4901 = vsel %vm2066, %v4839, %v4841
      %v4902 = vsel %vm2066, %v4841, %v4843
      %v4903 = vsel %vm2066, %v4843, %v4845
      %v4904 = vsel %vm2066, %v4845, %v4847
      %v4905 = vsel %vm2066, %v4847, %v4849
      %v4906 = vsel %vm2066, %v4849, %v4851
      %v4907 = vsel %vm2066, %v4851, %v4853
      %v4908 = vsel %vm2066, %v4853, %v4855
      %v4909 = vsel %vm2066, %v4855, %v4857
      %v4910 = vsel %vm2066, %v4857, %v4859
      %v4911 = vsel %vm2066, %v4859, %v4861
      %v4912 = vsel %vm2066, %v4861, %v4863
      %v4913 = vsel %vm2066, %v4863, %v4865
      %v4914 = vsel %vm2066, %v4865, %v4867
      %v4915 = vsel %vm2066, %v4867, %v4869
      %v4916 = vsel %vm2066, %v4869, %v4871
      %v4917 = vsel %vm2066, %v4871, %v4873
      %v4918 = vsel %vm2066, %v4873, %v4875
      %v4919 = vsel %vm2066, %v4875, %v4877
      %v4920 = vsel %vm2066, %v4877, %v4879
      %v4921 = vsel %vm2066, %v4879, %v4881
      %v4922 = vsel %vm2066, %v4881, %v4883
      %v4923 = vsel %vm2066, %v4883, %v4885
      %v4924 = vsel %vm2066, %v4885, %v4887
      %v4925 = vsel %vm2066, %v4887, %v4889
      %v4926 = vsel %vm2066, %v4889, %v4891
      %v4927 = vsel %vm2066, %v4891, %v4893
      %v4928 = vsel %vm2066, %v4893, %v4895
      %v4929 = vsel %vm2066, %v4895, %v4897
      %v4963 = vrot.slane %v4536, 4
      %v4964 = vrot.slane %v4537, 4
      %v4965 = vrot.slane %v4538, 4
      %v4966 = vrot.slane %v4539, 4
      %v4967 = vrot.slane %v4540, 4
      %v4968 = vrot.slane %v4541, 4
      %v4969 = vrot.slane %v4542, 4
      %v4970 = vrot.slane %v4543, 4
      %v4971 = vrot.slane %v4544, 4
      %v4972 = vrot.slane %v4545, 4
      %v4973 = vrot.slane %v4546, 4
      %v4974 = vrot.slane %v4547, 4
      %v4975 = vrot.slane %v4548, 4
      %v4976 = vrot.slane %v4549, 4
      %v4977 = vrot.slane %v4550, 4
      %v4978 = vrot.slane %v4551, 4
      %v4979 = vrot.slane %v4552, 4
      %v4980 = vrot.slane %v4553, 4
      %v4981 = vrot.slane %v4554, 4
      %v4982 = vrot.slane %v4555, 4
      %v4983 = vrot.slane %v4556, 4
      %v4984 = vrot.slane %v4557, 4
      %v4985 = vrot.slane %v4558, 4
      %v4986 = vrot.slane %v4559, 4
      %v4987 = vrot.slane %v4560, 4
      %v4988 = vrot.slane %v4561, 4
      %v4989 = vrot.slane %v4562, 4
      %v4990 = vrot.slane %v4563, 4
      %v4991 = vrot.slane %v4564, 4
      %v4992 = vrot.slane %v4565, 4
      %v4993 = vrot.slane %v4566, 4
      %v4994 = vrot.slane %v4567, 4
      %v4995 = vrot.slane %v4568, 4
      %4996 = vrot.lane.b32.xlu0 %v4963, 64
      %v4997 = vpop.permute.xlu0 %4996
      %4998 = vrot.lane.b32.xlu0 %v4964, 64
      %v4999 = vpop.permute.xlu0 %4998
      %5000 = vrot.lane.b32.xlu0 %v4965, 64
      %v5001 = vpop.permute.xlu0 %5000
      %5002 = vrot.lane.b32.xlu0 %v4966, 64
      %v5003 = vpop.permute.xlu0 %5002
      %5004 = vrot.lane.b32.xlu0 %v4967, 64
      %v5005 = vpop.permute.xlu0 %5004
      %5006 = vrot.lane.b32.xlu0 %v4968, 64
      %v5007 = vpop.permute.xlu0 %5006
      %5008 = vrot.lane.b32.xlu0 %v4969, 64
      %v5009 = vpop.permute.xlu0 %5008
      %5010 = vrot.lane.b32.xlu0 %v4970, 64
      %v5011 = vpop.permute.xlu0 %5010
      %5012 = vrot.lane.b32.xlu0 %v4971, 64
      %v5013 = vpop.permute.xlu0 %5012
      %5014 = vrot.lane.b32.xlu0 %v4972, 64
      %v5015 = vpop.permute.xlu0 %5014
      %5016 = vrot.lane.b32.xlu0 %v4973, 64
      %v5017 = vpop.permute.xlu0 %5016
      %5018 = vrot.lane.b32.xlu0 %v4974, 64
      %v5019 = vpop.permute.xlu0 %5018
      %5020 = vrot.lane.b32.xlu0 %v4975, 64
      %v5021 = vpop.permute.xlu0 %5020
      %5022 = vrot.lane.b32.xlu0 %v4976, 64
      %v5023 = vpop.permute.xlu0 %5022
      %5024 = vrot.lane.b32.xlu0 %v4977, 64
      %v5025 = vpop.permute.xlu0 %5024
      %5026 = vrot.lane.b32.xlu0 %v4978, 64
      %v5027 = vpop.permute.xlu0 %5026
      %5028 = vrot.lane.b32.xlu0 %v4979, 64
      %v5029 = vpop.permute.xlu0 %5028
      %5030 = vrot.lane.b32.xlu0 %v4980, 64
      %v5031 = vpop.permute.xlu0 %5030
      %5032 = vrot.lane.b32.xlu0 %v4981, 64
      %v5033 = vpop.permute.xlu0 %5032
      %5034 = vrot.lane.b32.xlu0 %v4982, 64
      %v5035 = vpop.permute.xlu0 %5034
      %5036 = vrot.lane.b32.xlu0 %v4983, 64
      %v5037 = vpop.permute.xlu0 %5036
      %5038 = vrot.lane.b32.xlu0 %v4984, 64
      %v5039 = vpop.permute.xlu0 %5038
      %5040 = vrot.lane.b32.xlu0 %v4985, 64
      %v5041 = vpop.permute.xlu0 %5040
      %5042 = vrot.lane.b32.xlu0 %v4986, 64
      %v5043 = vpop.permute.xlu0 %5042
      %5044 = vrot.lane.b32.xlu0 %v4987, 64
      %v5045 = vpop.permute.xlu0 %5044
      %5046 = vrot.lane.b32.xlu0 %v4988, 64
      %v5047 = vpop.permute.xlu0 %5046
      %5048 = vrot.lane.b32.xlu0 %v4989, 64
      %v5049 = vpop.permute.xlu0 %5048
      %5050 = vrot.lane.b32.xlu0 %v4990, 64
      %v5051 = vpop.permute.xlu0 %5050
      %5052 = vrot.lane.b32.xlu0 %v4991, 64
      %v5053 = vpop.permute.xlu0 %5052
      %5054 = vrot.lane.b32.xlu0 %v4992, 64
      %v5055 = vpop.permute.xlu0 %5054
      %5056 = vrot.lane.b32.xlu0 %v4993, 64
      %v5057 = vpop.permute.xlu0 %5056
      %5058 = vrot.lane.b32.xlu0 %v4994, 64
      %v5059 = vpop.permute.xlu0 %5058
      %5060 = vrot.lane.b32.xlu0 %v4995, 64
      %v5061 = vpop.permute.xlu0 %5060
      %v5062 = vsel %vm1508, %v4997, %v4999
      %v5063 = vsel %vm1508, %v4999, %v5001
      %v5064 = vsel %vm1508, %v5001, %v5003
      %v5065 = vsel %vm1508, %v5003, %v5005
      %v5066 = vsel %vm1508, %v5005, %v5007
      %v5067 = vsel %vm1508, %v5007, %v5009
      %v5068 = vsel %vm1508, %v5009, %v5011
      %v5069 = vsel %vm1508, %v5011, %v5013
      %v5070 = vsel %vm1508, %v5013, %v5015
      %v5071 = vsel %vm1508, %v5015, %v5017
      %v5072 = vsel %vm1508, %v5017, %v5019
      %v5073 = vsel %vm1508, %v5019, %v5021
      %v5074 = vsel %vm1508, %v5021, %v5023
      %v5075 = vsel %vm1508, %v5023, %v5025
      %v5076 = vsel %vm1508, %v5025, %v5027
      %v5077 = vsel %vm1508, %v5027, %v5029
      %v5078 = vsel %vm1508, %v5029, %v5031
      %v5079 = vsel %vm1508, %v5031, %v5033
      %v5080 = vsel %vm1508, %v5033, %v5035
      %v5081 = vsel %vm1508, %v5035, %v5037
      %v5082 = vsel %vm1508, %v5037, %v5039
      %v5083 = vsel %vm1508, %v5039, %v5041
      %v5084 = vsel %vm1508, %v5041, %v5043
      %v5085 = vsel %vm1508, %v5043, %v5045
      %v5086 = vsel %vm1508, %v5045, %v5047
      %v5087 = vsel %vm1508, %v5047, %v5049
      %v5088 = vsel %vm1508, %v5049, %v5051
      %v5089 = vsel %vm1508, %v5051, %v5053
      %v5090 = vsel %vm1508, %v5053, %v5055
      %v5091 = vsel %vm1508, %v5055, %v5057
      %v5092 = vsel %vm1508, %v5057, %v5059
      %v5093 = vsel %vm1508, %v5059, %v5061
      %5094 = vrot.lane.b32.xlu0 %v4466, 63
      %v5095 = vpop.permute.xlu0 %5094
      %5096 = vrot.lane.b32.xlu0 %v4403, 63
      %v5097 = vpop.permute.xlu0 %5096
      %5098 = vrot.lane.b32.xlu0 %v4404, 63
      %v5099 = vpop.permute.xlu0 %5098
      %5100 = vrot.lane.b32.xlu0 %v4405, 63
      %v5101 = vpop.permute.xlu0 %5100
      %5102 = vrot.lane.b32.xlu0 %v4406, 63
      %v5103 = vpop.permute.xlu0 %5102
      %5104 = vrot.lane.b32.xlu0 %v4407, 63
      %v5105 = vpop.permute.xlu0 %5104
      %5106 = vrot.lane.b32.xlu0 %v4408, 63
      %v5107 = vpop.permute.xlu0 %5106
      %5108 = vrot.lane.b32.xlu0 %v4409, 63
      %v5109 = vpop.permute.xlu0 %5108
      %5110 = vrot.lane.b32.xlu0 %v4410, 63
      %v5111 = vpop.permute.xlu0 %5110
      %5112 = vrot.lane.b32.xlu0 %v4411, 63
      %v5113 = vpop.permute.xlu0 %5112
      %5114 = vrot.lane.b32.xlu0 %v4412, 63
      %v5115 = vpop.permute.xlu0 %5114
      %5116 = vrot.lane.b32.xlu0 %v4413, 63
      %v5117 = vpop.permute.xlu0 %5116
      %5118 = vrot.lane.b32.xlu0 %v4414, 63
      %v5119 = vpop.permute.xlu0 %5118
      %5120 = vrot.lane.b32.xlu0 %v4415, 63
      %v5121 = vpop.permute.xlu0 %5120
      %5122 = vrot.lane.b32.xlu0 %v4416, 63
      %v5123 = vpop.permute.xlu0 %5122
      %5124 = vrot.lane.b32.xlu0 %v4417, 63
      %v5125 = vpop.permute.xlu0 %5124
      %5126 = vrot.lane.b32.xlu0 %v4418, 63
      %v5127 = vpop.permute.xlu0 %5126
      %5128 = vrot.lane.b32.xlu0 %v4419, 63
      %v5129 = vpop.permute.xlu0 %5128
      %5130 = vrot.lane.b32.xlu0 %v4420, 63
      %v5131 = vpop.permute.xlu0 %5130
      %5132 = vrot.lane.b32.xlu0 %v4421, 63
      %v5133 = vpop.permute.xlu0 %5132
      %5134 = vrot.lane.b32.xlu0 %v4422, 63
      %v5135 = vpop.permute.xlu0 %5134
      %5136 = vrot.lane.b32.xlu0 %v4423, 63
      %v5137 = vpop.permute.xlu0 %5136
      %5138 = vrot.lane.b32.xlu0 %v4424, 63
      %v5139 = vpop.permute.xlu0 %5138
      %5140 = vrot.lane.b32.xlu0 %v4425, 63
      %v5141 = vpop.permute.xlu0 %5140
      %5142 = vrot.lane.b32.xlu0 %v4426, 63
      %v5143 = vpop.permute.xlu0 %5142
      %5144 = vrot.lane.b32.xlu0 %v4427, 63
      %v5145 = vpop.permute.xlu0 %5144
      %5146 = vrot.lane.b32.xlu0 %v4428, 63
      %v5147 = vpop.permute.xlu0 %5146
      %5148 = vrot.lane.b32.xlu0 %v4429, 63
      %v5149 = vpop.permute.xlu0 %5148
      %5150 = vrot.lane.b32.xlu0 %v4430, 63
      %v5151 = vpop.permute.xlu0 %5150
      %5152 = vrot.lane.b32.xlu0 %v4431, 63
      %v5153 = vpop.permute.xlu0 %5152
      %5154 = vrot.lane.b32.xlu0 %v4432, 63
      %v5155 = vpop.permute.xlu0 %5154
      %5156 = vrot.lane.b32.xlu0 %v4433, 63
      %v5157 = vpop.permute.xlu0 %5156
      %5158 = vrot.lane.b32.xlu0 %v4469, 63
      %v5159 = vpop.permute.xlu0 %5158
      %v5160 = vsel %vm2329, %v5095, %v5097
      %v5161 = vsel %vm2329, %v5097, %v5099
      %v5162 = vsel %vm2329, %v5099, %v5101
      %v5163 = vsel %vm2329, %v5101, %v5103
      %v5164 = vsel %vm2329, %v5103, %v5105
      %v5165 = vsel %vm2329, %v5105, %v5107
      %v5166 = vsel %vm2329, %v5107, %v5109
      %v5167 = vsel %vm2329, %v5109, %v5111
      %v5168 = vsel %vm2329, %v5111, %v5113
      %v5169 = vsel %vm2329, %v5113, %v5115
      %v5170 = vsel %vm2329, %v5115, %v5117
      %v5171 = vsel %vm2329, %v5117, %v5119
      %v5172 = vsel %vm2329, %v5119, %v5121
      %v5173 = vsel %vm2329, %v5121, %v5123
      %v5174 = vsel %vm2329, %v5123, %v5125
      %v5175 = vsel %vm2329, %v5125, %v5127
      %v5176 = vsel %vm2329, %v5127, %v5129
      %v5177 = vsel %vm2329, %v5129, %v5131
      %v5178 = vsel %vm2329, %v5131, %v5133
      %v5179 = vsel %vm2329, %v5133, %v5135
      %v5180 = vsel %vm2329, %v5135, %v5137
      %v5181 = vsel %vm2329, %v5137, %v5139
      %v5182 = vsel %vm2329, %v5139, %v5141
      %v5183 = vsel %vm2329, %v5141, %v5143
      %v5184 = vsel %vm2329, %v5143, %v5145
      %v5185 = vsel %vm2329, %v5145, %v5147
      %v5186 = vsel %vm2329, %v5147, %v5149
      %v5187 = vsel %vm2329, %v5149, %v5151
      %v5188 = vsel %vm2329, %v5151, %v5153
      %v5189 = vsel %vm2329, %v5153, %v5155
      %v5190 = vsel %vm2329, %v5155, %v5157
      %v5191 = vsel %vm2329, %v5157, %v5159
      %v5225 = vrot.slane %v4569, 4
      %v5226 = vrot.slane %v4570, 4
      %v5227 = vrot.slane %v4571, 4
      %v5228 = vrot.slane %v4572, 4
      %v5229 = vrot.slane %v4573, 4
      %v5230 = vrot.slane %v4574, 4
      %v5231 = vrot.slane %v4575, 4
      %v5232 = vrot.slane %v4576, 4
      %v5233 = vrot.slane %v4577, 4
      %v5234 = vrot.slane %v4578, 4
      %v5235 = vrot.slane %v4579, 4
      %v5236 = vrot.slane %v4580, 4
      %v5237 = vrot.slane %v4581, 4
      %v5238 = vrot.slane %v4582, 4
      %v5239 = vrot.slane %v4583, 4
      %v5240 = vrot.slane %v4584, 4
      %v5241 = vrot.slane %v4585, 4
      %v5242 = vrot.slane %v4586, 4
      %v5243 = vrot.slane %v4587, 4
      %v5244 = vrot.slane %v4588, 4
      %v5245 = vrot.slane %v4589, 4
      %v5246 = vrot.slane %v4590, 4
      %v5247 = vrot.slane %v4591, 4
      %v5248 = vrot.slane %v4592, 4
      %v5249 = vrot.slane %v4593, 4
      %v5250 = vrot.slane %v4594, 4
      %v5251 = vrot.slane %v4595, 4
      %v5252 = vrot.slane %v4596, 4
      %v5253 = vrot.slane %v4597, 4
      %v5254 = vrot.slane %v4598, 4
      %v5255 = vrot.slane %v4599, 4
      %v5256 = vrot.slane %v4600, 4
      %v5257 = vrot.slane %v4601, 4
      %5258 = vrot.lane.b32.xlu0 %v5225, 62
      %v5259 = vpop.permute.xlu0 %5258
      %5260 = vrot.lane.b32.xlu0 %v5226, 62
      %v5261 = vpop.permute.xlu0 %5260
      %5262 = vrot.lane.b32.xlu0 %v5227, 62
      %v5263 = vpop.permute.xlu0 %5262
      %5264 = vrot.lane.b32.xlu0 %v5228, 62
      %v5265 = vpop.permute.xlu0 %5264
      %5266 = vrot.lane.b32.xlu0 %v5229, 62
      %v5267 = vpop.permute.xlu0 %5266
      %5268 = vrot.lane.b32.xlu0 %v5230, 62
      %v5269 = vpop.permute.xlu0 %5268
      %5270 = vrot.lane.b32.xlu0 %v5231, 62
      %v5271 = vpop.permute.xlu0 %5270
      %5272 = vrot.lane.b32.xlu0 %v5232, 62
      %v5273 = vpop.permute.xlu0 %5272
      %5274 = vrot.lane.b32.xlu0 %v5233, 62
      %v5275 = vpop.permute.xlu0 %5274
      %5276 = vrot.lane.b32.xlu0 %v5234, 62
      %v5277 = vpop.permute.xlu0 %5276
      %5278 = vrot.lane.b32.xlu0 %v5235, 62
      %v5279 = vpop.permute.xlu0 %5278
      %5280 = vrot.lane.b32.xlu0 %v5236, 62
      %v5281 = vpop.permute.xlu0 %5280
      %5282 = vrot.lane.b32.xlu0 %v5237, 62
      %v5283 = vpop.permute.xlu0 %5282
      %5284 = vrot.lane.b32.xlu0 %v5238, 62
      %v5285 = vpop.permute.xlu0 %5284
      %5286 = vrot.lane.b32.xlu0 %v5239, 62
      %v5287 = vpop.permute.xlu0 %5286
      %5288 = vrot.lane.b32.xlu0 %v5240, 62
      %v5289 = vpop.permute.xlu0 %5288
      %5290 = vrot.lane.b32.xlu0 %v5241, 62
      %v5291 = vpop.permute.xlu0 %5290
      %5292 = vrot.lane.b32.xlu0 %v5242, 62
      %v5293 = vpop.permute.xlu0 %5292
      %5294 = vrot.lane.b32.xlu0 %v5243, 62
      %v5295 = vpop.permute.xlu0 %5294
      %5296 = vrot.lane.b32.xlu0 %v5244, 62
      %v5297 = vpop.permute.xlu0 %5296
      %5298 = vrot.lane.b32.xlu0 %v5245, 62
      %v5299 = vpop.permute.xlu0 %5298
      %5300 = vrot.lane.b32.xlu0 %v5246, 62
      %v5301 = vpop.permute.xlu0 %5300
      %5302 = vrot.lane.b32.xlu0 %v5247, 62
      %v5303 = vpop.permute.xlu0 %5302
      %5304 = vrot.lane.b32.xlu0 %v5248, 62
      %v5305 = vpop.permute.xlu0 %5304
      %5306 = vrot.lane.b32.xlu0 %v5249, 62
      %v5307 = vpop.permute.xlu0 %5306
      %5308 = vrot.lane.b32.xlu0 %v5250, 62
      %v5309 = vpop.permute.xlu0 %5308
      %5310 = vrot.lane.b32.xlu0 %v5251, 62
      %v5311 = vpop.permute.xlu0 %5310
      %5312 = vrot.lane.b32.xlu0 %v5252, 62
      %v5313 = vpop.permute.xlu0 %5312
      %5314 = vrot.lane.b32.xlu0 %v5253, 62
      %v5315 = vpop.permute.xlu0 %5314
      %5316 = vrot.lane.b32.xlu0 %v5254, 62
      %v5317 = vpop.permute.xlu0 %5316
      %5318 = vrot.lane.b32.xlu0 %v5255, 62
      %v5319 = vpop.permute.xlu0 %5318
      %5320 = vrot.lane.b32.xlu0 %v5256, 62
      %v5321 = vpop.permute.xlu0 %5320
      %5322 = vrot.lane.b32.xlu0 %v5257, 62
      %v5323 = vpop.permute.xlu0 %5322
      %v5324 = vsel %vm2494, %v5259, %v5261
      %v5325 = vsel %vm2494, %v5261, %v5263
      %v5326 = vsel %vm2494, %v5263, %v5265
      %v5327 = vsel %vm2494, %v5265, %v5267
      %v5328 = vsel %vm2494, %v5267, %v5269
      %v5329 = vsel %vm2494, %v5269, %v5271
      %v5330 = vsel %vm2494, %v5271, %v5273
      %v5331 = vsel %vm2494, %v5273, %v5275
      %v5332 = vsel %vm2494, %v5275, %v5277
      %v5333 = vsel %vm2494, %v5277, %v5279
      %v5334 = vsel %vm2494, %v5279, %v5281
      %v5335 = vsel %vm2494, %v5281, %v5283
      %v5336 = vsel %vm2494, %v5283, %v5285
      %v5337 = vsel %vm2494, %v5285, %v5287
      %v5338 = vsel %vm2494, %v5287, %v5289
      %v5339 = vsel %vm2494, %v5289, %v5291
      %v5340 = vsel %vm2494, %v5291, %v5293
      %v5341 = vsel %vm2494, %v5293, %v5295
      %v5342 = vsel %vm2494, %v5295, %v5297
      %v5343 = vsel %vm2494, %v5297, %v5299
      %v5344 = vsel %vm2494, %v5299, %v5301
      %v5345 = vsel %vm2494, %v5301, %v5303
      %v5346 = vsel %vm2494, %v5303, %v5305
      %v5347 = vsel %vm2494, %v5305, %v5307
      %v5348 = vsel %vm2494, %v5307, %v5309
      %v5349 = vsel %vm2494, %v5309, %v5311
      %v5350 = vsel %vm2494, %v5311, %v5313
      %v5351 = vsel %vm2494, %v5313, %v5315
      %v5352 = vsel %vm2494, %v5315, %v5317
      %v5353 = vsel %vm2494, %v5317, %v5319
      %v5354 = vsel %vm2494, %v5319, %v5321
      %v5355 = vsel %vm2494, %v5321, %v5323
      %v5356 = vsel %vm1934, %v4766, %v2530
      %5389 = vrot.lane.b32.xlu0 %v4634, 126
      %v5390 = vpop.permute.xlu0 %5389
      %5391 = vrot.lane.b32.xlu0 %v4635, 126
      %v5392 = vpop.permute.xlu0 %5391
      %5393 = vrot.lane.b32.xlu0 %v4636, 126
      %v5394 = vpop.permute.xlu0 %5393
      %5395 = vrot.lane.b32.xlu0 %v4637, 126
      %v5396 = vpop.permute.xlu0 %5395
      %5397 = vrot.lane.b32.xlu0 %v4638, 126
      %v5398 = vpop.permute.xlu0 %5397
      %5399 = vrot.lane.b32.xlu0 %v4639, 126
      %v5400 = vpop.permute.xlu0 %5399
      %5401 = vrot.lane.b32.xlu0 %v4640, 126
      %v5402 = vpop.permute.xlu0 %5401
      %5403 = vrot.lane.b32.xlu0 %v4641, 126
      %v5404 = vpop.permute.xlu0 %5403
      %5405 = vrot.lane.b32.xlu0 %v4642, 126
      %v5406 = vpop.permute.xlu0 %5405
      %5407 = vrot.lane.b32.xlu0 %v4643, 126
      %v5408 = vpop.permute.xlu0 %5407
      %5409 = vrot.lane.b32.xlu0 %v4644, 126
      %v5410 = vpop.permute.xlu0 %5409
      %5411 = vrot.lane.b32.xlu0 %v4645, 126
      %v5412 = vpop.permute.xlu0 %5411
      %5413 = vrot.lane.b32.xlu0 %v4646, 126
      %v5414 = vpop.permute.xlu0 %5413
      %5415 = vrot.lane.b32.xlu0 %v4647, 126
      %v5416 = vpop.permute.xlu0 %5415
      %5417 = vrot.lane.b32.xlu0 %v4648, 126
      %v5418 = vpop.permute.xlu0 %5417
      %5419 = vrot.lane.b32.xlu0 %v4649, 126
      %v5420 = vpop.permute.xlu0 %5419
      %5421 = vrot.lane.b32.xlu0 %v4650, 126
      %v5422 = vpop.permute.xlu0 %5421
      %5423 = vrot.lane.b32.xlu0 %v4651, 126
      %v5424 = vpop.permute.xlu0 %5423
      %5425 = vrot.lane.b32.xlu0 %v4652, 126
      %v5426 = vpop.permute.xlu0 %5425
      %5427 = vrot.lane.b32.xlu0 %v4653, 126
      %v5428 = vpop.permute.xlu0 %5427
      %5429 = vrot.lane.b32.xlu0 %v4654, 126
      %v5430 = vpop.permute.xlu0 %5429
      %5431 = vrot.lane.b32.xlu0 %v4655, 126
      %v5432 = vpop.permute.xlu0 %5431
      %5433 = vrot.lane.b32.xlu0 %v4656, 126
      %v5434 = vpop.permute.xlu0 %5433
      %5435 = vrot.lane.b32.xlu0 %v4657, 126
      %v5436 = vpop.permute.xlu0 %5435
      %5437 = vrot.lane.b32.xlu0 %v4658, 126
      %v5438 = vpop.permute.xlu0 %5437
      %5439 = vrot.lane.b32.xlu0 %v4659, 126
      %v5440 = vpop.permute.xlu0 %5439
      %5441 = vrot.lane.b32.xlu0 %v4660, 126
      %v5442 = vpop.permute.xlu0 %5441
      %5443 = vrot.lane.b32.xlu0 %v4661, 126
      %v5444 = vpop.permute.xlu0 %5443
      %5445 = vrot.lane.b32.xlu0 %v4662, 126
      %v5446 = vpop.permute.xlu0 %5445
      %5447 = vrot.lane.b32.xlu0 %v4663, 126
      %v5448 = vpop.permute.xlu0 %5447
      %5449 = vrot.lane.b32.xlu0 %v4664, 126
      %v5450 = vpop.permute.xlu0 %5449
      %5451 = vrot.lane.b32.xlu0 %v4665, 126
      %v5452 = vpop.permute.xlu0 %5451
      %v5453 = vsel %vm2066, %v5390, %v5392
      %v5454 = vsel %vm2066, %v5392, %v5394
      %v5455 = vsel %vm2066, %v5394, %v5396
      %v5456 = vsel %vm2066, %v5396, %v5398
      %v5457 = vsel %vm2066, %v5398, %v5400
      %v5458 = vsel %vm2066, %v5400, %v5402
      %v5459 = vsel %vm2066, %v5402, %v5404
      %v5460 = vsel %vm2066, %v5404, %v5406
      %v5461 = vsel %vm2066, %v5406, %v5408
      %v5462 = vsel %vm2066, %v5408, %v5410
      %v5463 = vsel %vm2066, %v5410, %v5412
      %v5464 = vsel %vm2066, %v5412, %v5414
      %v5465 = vsel %vm2066, %v5414, %v5416
      %v5466 = vsel %vm2066, %v5416, %v5418
      %v5467 = vsel %vm2066, %v5418, %v5420
      %v5468 = vsel %vm2066, %v5420, %v5422
      %v5469 = vsel %vm2066, %v5422, %v5424
      %v5470 = vsel %vm2066, %v5424, %v5426
      %v5471 = vsel %vm2066, %v5426, %v5428
      %v5472 = vsel %vm2066, %v5428, %v5430
      %v5473 = vsel %vm2066, %v5430, %v5432
      %v5474 = vsel %vm2066, %v5432, %v5434
      %v5475 = vsel %vm2066, %v5434, %v5436
      %v5476 = vsel %vm2066, %v5436, %v5438
      %v5477 = vsel %vm2066, %v5438, %v5440
      %v5478 = vsel %vm2066, %v5440, %v5442
      %v5479 = vsel %vm2066, %v5442, %v5444
      %v5480 = vsel %vm2066, %v5444, %v5446
      %v5481 = vsel %vm2066, %v5446, %v5448
      %v5482 = vsel %vm2066, %v5448, %v5450
      %v5483 = vsel %vm2066, %v5450, %v5452
      %v5484 = vsel %vm2066, %v5452, %v2630
      %v5487 = vsel %vm2663, %v4471, %v4767
      %v5491 = vsel %vm2663, %v4472, %v4768
      %v5495 = vsel %vm2663, %v4473, %v4769
      %v5499 = vsel %vm2663, %v4474, %v4770
      %v5503 = vsel %vm2663, %v4475, %v4771
      %v5507 = vsel %vm2663, %v4476, %v4772
      %v5511 = vsel %vm2663, %v4477, %v4773
      %v5515 = vsel %vm2663, %v4478, %v4774
      %v5519 = vsel %vm2663, %v4479, %v4775
      %v5523 = vsel %vm2663, %v4480, %v4776
      %v5527 = vsel %vm2663, %v4481, %v4777
      %v5531 = vsel %vm2663, %v4482, %v4778
      %v5535 = vsel %vm2663, %v4483, %v4779
      %v5539 = vsel %vm2663, %v4484, %v4780
      %v5543 = vsel %vm2663, %v4485, %v4781
      %v5547 = vsel %vm2663, %v4486, %v4782
      %v5551 = vsel %vm2663, %v4487, %v4783
      %v5555 = vsel %vm2663, %v4488, %v4784
      %v5559 = vsel %vm2663, %v4489, %v4785
      %v5563 = vsel %vm2663, %v4490, %v4786
      %v5567 = vsel %vm2663, %v4491, %v4787
      %v5571 = vsel %vm2663, %v4492, %v4788
      %v5575 = vsel %vm2663, %v4493, %v4789
      %v5579 = vsel %vm2663, %v4494, %v4790
      %v5583 = vsel %vm2663, %v4495, %v4791
      %v5587 = vsel %vm2663, %v4496, %v4792
      %v5591 = vsel %vm2663, %v4497, %v4793
      %v5595 = vsel %vm2663, %v4498, %v4794
      %v5599 = vsel %vm2663, %v4499, %v4795
      %v5603 = vsel %vm2663, %v4500, %v4796
      %v5607 = vsel %vm2663, %v4501, %v4797
      %v5611 = vsel %vm2663, %v4502, %v4798
      %v5615 = vsel %vm2663, %v4898, %v5062
      %v5619 = vsel %vm2663, %v4899, %v5063
      %v5623 = vsel %vm2663, %v4900, %v5064
      %v5627 = vsel %vm2663, %v4901, %v5065
      %v5631 = vsel %vm2663, %v4902, %v5066
      %v5635 = vsel %vm2663, %v4903, %v5067
      %v5639 = vsel %vm2663, %v4904, %v5068
      %v5643 = vsel %vm2663, %v4905, %v5069
      %v5647 = vsel %vm2663, %v4906, %v5070
      %v5651 = vsel %vm2663, %v4907, %v5071
      %v5655 = vsel %vm2663, %v4908, %v5072
      %v5659 = vsel %vm2663, %v4909, %v5073
      %v5663 = vsel %vm2663, %v4910, %v5074
      %v5667 = vsel %vm2663, %v4911, %v5075
      %v5671 = vsel %vm2663, %v4912, %v5076
      %v5675 = vsel %vm2663, %v4913, %v5077
      %v5679 = vsel %vm2663, %v4914, %v5078
      %v5683 = vsel %vm2663, %v4915, %v5079
      %v5687 = vsel %vm2663, %v4916, %v5080
      %v5691 = vsel %vm2663, %v4917, %v5081
      %v5695 = vsel %vm2663, %v4918, %v5082
      %v5699 = vsel %vm2663, %v4919, %v5083
      %v5703 = vsel %vm2663, %v4920, %v5084
      %v5707 = vsel %vm2663, %v4921, %v5085
      %v5711 = vsel %vm2663, %v4922, %v5086
      %v5715 = vsel %vm2663, %v4923, %v5087
      %v5719 = vsel %vm2663, %v4924, %v5088
      %v5723 = vsel %vm2663, %v4925, %v5089
      %v5727 = vsel %vm2663, %v4926, %v5090
      %v5731 = vsel %vm2663, %v4927, %v5091
      %v5735 = vsel %vm2663, %v4928, %v5092
      %v5739 = vsel %vm2663, %v4929, %v5093
      %v5743 = vsel %vm2663, %v5160, %v5324
      %v5747 = vsel %vm2663, %v5161, %v5325
      %v5751 = vsel %vm2663, %v5162, %v5326
      %v5755 = vsel %vm2663, %v5163, %v5327
      %v5759 = vsel %vm2663, %v5164, %v5328
      %v5763 = vsel %vm2663, %v5165, %v5329
      %v5767 = vsel %vm2663, %v5166, %v5330
      %v5771 = vsel %vm2663, %v5167, %v5331
      %v5775 = vsel %vm2663, %v5168, %v5332
      %v5779 = vsel %vm2663, %v5169, %v5333
      %v5783 = vsel %vm2663, %v5170, %v5334
      %v5787 = vsel %vm2663, %v5171, %v5335
      %v5791 = vsel %vm2663, %v5172, %v5336
      %v5795 = vsel %vm2663, %v5173, %v5337
      %v5799 = vsel %vm2663, %v5174, %v5338
      %v5803 = vsel %vm2663, %v5175, %v5339
      %v5807 = vsel %vm2663, %v5176, %v5340
      %v5811 = vsel %vm2663, %v5177, %v5341
      %v5815 = vsel %vm2663, %v5178, %v5342
      %v5819 = vsel %vm2663, %v5179, %v5343
      %v5823 = vsel %vm2663, %v5180, %v5344
      %v5827 = vsel %vm2663, %v5181, %v5345
      %v5831 = vsel %vm2663, %v5182, %v5346
      %v5835 = vsel %vm2663, %v5183, %v5347
      %v5839 = vsel %vm2663, %v5184, %v5348
      %v5843 = vsel %vm2663, %v5185, %v5349
      %v5847 = vsel %vm2663, %v5186, %v5350
      %v5851 = vsel %vm2663, %v5187, %v5351
      %v5855 = vsel %vm2663, %v5188, %v5352
      %v5859 = vsel %vm2663, %v5189, %v5353
      %v5863 = vsel %vm2663, %v5190, %v5354
      %v5867 = vsel %vm2663, %v5191, %v5355
      %v5870 = vsel %vm2663, %v4602, %v4768
      %v5873 = vsel %vm2663, %v4603, %v4769
      %v5876 = vsel %vm2663, %v4604, %v4770
      %v5879 = vsel %vm2663, %v4605, %v4771
      %v5882 = vsel %vm2663, %v4606, %v4772
      %v5885 = vsel %vm2663, %v4607, %v4773
      %v5888 = vsel %vm2663, %v4608, %v4774
      %v5891 = vsel %vm2663, %v4609, %v4775
      %v5894 = vsel %vm2663, %v4610, %v4776
      %v5897 = vsel %vm2663, %v4611, %v4777
      %v5900 = vsel %vm2663, %v4612, %v4778
      %v5903 = vsel %vm2663, %v4613, %v4779
      %v5906 = vsel %vm2663, %v4614, %v4780
      %v5909 = vsel %vm2663, %v4615, %v4781
      %v5912 = vsel %vm2663, %v4616, %v4782
      %v5915 = vsel %vm2663, %v4617, %v4783
      %v5918 = vsel %vm2663, %v4618, %v4784
      %v5921 = vsel %vm2663, %v4619, %v4785
      %v5924 = vsel %vm2663, %v4620, %v4786
      %v5927 = vsel %vm2663, %v4621, %v4787
      %v5930 = vsel %vm2663, %v4622, %v4788
      %v5933 = vsel %vm2663, %v4623, %v4789
      %v5936 = vsel %vm2663, %v4624, %v4790
      %v5939 = vsel %vm2663, %v4625, %v4791
      %v5942 = vsel %vm2663, %v4626, %v4792
      %v5945 = vsel %vm2663, %v4627, %v4793
      %v5948 = vsel %vm2663, %v4628, %v4794
      %v5951 = vsel %vm2663, %v4629, %v4795
      %v5954 = vsel %vm2663, %v4630, %v4796
      %v5957 = vsel %vm2663, %v4631, %v4797
      %v5960 = vsel %vm2663, %v4632, %v4798
      %v5964 = vsel %vm2663, %v4633, %v5356
      %5966 = vset.pattern.permute.xlu0 10
      %5967 = vperm.xlu0 %5966, %v336
      %v5968 = vpop.permute.xlu0 %5967
      %v5971 = vsel %vm3150, %v4274, 0
      %v5974 = vsel %vm2663, %v5453, 0
      %v5977 = vsel %vm2663, %v5454, 0
      %v5980 = vsel %vm2663, %v5455, 0
      %v5983 = vsel %vm2663, %v5456, 0
      %v5986 = vsel %vm2663, %v5457, 0
      %v5989 = vsel %vm2663, %v5458, 0
      %v5992 = vsel %vm2663, %v5459, 0
      %v5995 = vsel %vm2663, %v5460, 0
      %v5998 = vsel %vm2663, %v5461, 0
      %v6001 = vsel %vm2663, %v5462, 0
      %v6004 = vsel %vm2663, %v5463, 0
      %v6007 = vsel %vm2663, %v5464, 0
      %v6010 = vsel %vm2663, %v5465, 0
      %v6013 = vsel %vm2663, %v5466, 0
      %v6016 = vsel %vm2663, %v5467, 0
      %v6019 = vsel %vm2663, %v5468, 0
      %v6022 = vsel %vm2663, %v5469, 0
      %v6025 = vsel %vm2663, %v5470, 0
      %v6028 = vsel %vm2663, %v5471, 0
      %v6031 = vsel %vm2663, %v5472, 0
      %v6034 = vsel %vm2663, %v5473, 0
      %v6037 = vsel %vm2663, %v5474, 0
      %v6040 = vsel %vm2663, %v5475, 0
      %v6043 = vsel %vm2663, %v5476, 0
      %v6046 = vsel %vm2663, %v5477, 0
      %v6049 = vsel %vm2663, %v5478, 0
      %v6052 = vsel %vm2663, %v5479, 0
      %v6055 = vsel %vm2663, %v5480, 0
      %v6058 = vsel %vm2663, %v5481, 0
      %v6061 = vsel %vm2663, %v5482, 0
      %v6064 = vsel %vm2663, %v5483, 0
      %v6067 = vsel %vm2663, %v5484, 0
      %6069 = vmatprep.subr.bf16.mxu0 %v5491
      %6070 = vmatpush1.bf16.msra.mxu0 %v5487
      %6071 = vmatprep.subr.bf16.mxu0 %v5619
      %6072 = vmatpush1.bf16.msra.mxu0 %v5615
      %6073 = vmatprep.subr.bf16.mxu0 %v5747
      %6074 = vmatpush1.bf16.msra.mxu0 %v5743
      %6075 = vmatprep.subr.bf16.mxu0 %v5873
      %6076 = vmatpush1.bf16.msra.mxu0 %v5870
      %6077 = vmatprep.subr.bf16.mxu0 %v5977
      %6078 = vmatpush1.bf16.msra.mxu0 %v5974
      %6079 = vmatprep.subr.bf16.mxu0 0
      %6080 = vmatpush1.bf16.msra.mxu0 0
      %6081 = vmatprep.subr.bf16.mxu0 0
      %6082 = vmatpush1.bf16.msra.mxu0 0
      %6083 = vmatprep.subr.bf16.mxu0 0
      %6084 = vmatpush1.bf16.msra.mxu0 0
      %6085 = vmatprep.subr.bf16.mxu0 0
      %6086 = vmatpush1.bf16.msra.mxu0 0
      %6087 = vmatprep.subr.bf16.mxu0 0
      %6088 = vmatpush1.bf16.msra.mxu0 0
      %6089 = vmatprep.subr.bf16.mxu0 0
      %6090 = vmatpush1.bf16.msra.mxu0 0
      %6091 = vmatprep.subr.bf16.mxu0 0
      %6092 = vmatpush1.bf16.msra.mxu0 0
      %6093 = vmatprep.subr.bf16.mxu0 0
      %6094 = vmatpush1.bf16.msra.mxu0 0
      %6095 = vmatprep.subr.bf16.mxu0 0
      %6096 = vmatpush1.bf16.msra.mxu0 0
      %6097 = vmatprep.subr.bf16.mxu0 0
      %6098 = vmatpush1.bf16.msra.mxu0 0
      %6099 = vmatprep.subr.bf16.mxu0 0
      %6100 = vmatpush1.bf16.msra.mxu0 0
      %6101 = vmatprep.mubr.bf16.mxu0 0
      %6102 = vmatmul.mubr.bf16.gmra.mrb[0].mxu0 %v5971
      %v6103 = vpop.f32.mrb[0].mxu0
      %v6104 = vadd.f32 %v5968, %v6103
      %v6105 = vpop.f32.mrb[0].mxu0
      %v6106 = vadd.f32 %v5968, %v6105
      %v6107 = vpop.f32.mrb[0].mxu0
      %v6108 = vpop.f32.mrb[0].mxu0
      %6109 = vdwg.mxu0
      %6110 = vmatprep.subr.bf16.mxu0 %v5499
      %6111 = vmatpush1.bf16.msra.mxu0 %v5495
      %6112 = vmatprep.subr.bf16.mxu0 %v5627
      %6113 = vmatpush1.bf16.msra.mxu0 %v5623
      %6114 = vmatprep.subr.bf16.mxu0 %v5755
      %6115 = vmatpush1.bf16.msra.mxu0 %v5751
      %6116 = vmatprep.subr.bf16.mxu0 %v5879
      %6117 = vmatpush1.bf16.msra.mxu0 %v5876
      %6118 = vmatprep.subr.bf16.mxu0 %v5983
      %6119 = vmatpush1.bf16.msra.mxu0 %v5980
      %6120 = vmatprep.subr.bf16.mxu0 0
      %6121 = vmatpush1.bf16.msra.mxu0 0
      %6122 = vmatprep.subr.bf16.mxu0 0
      %6123 = vmatpush1.bf16.msra.mxu0 0
      %6124 = vmatprep.subr.bf16.mxu0 0
      %6125 = vmatpush1.bf16.msra.mxu0 0
      %6126 = vmatprep.subr.bf16.mxu0 0
      %6127 = vmatpush1.bf16.msra.mxu0 0
      %6128 = vmatprep.subr.bf16.mxu0 0
      %6129 = vmatpush1.bf16.msra.mxu0 0
      %6130 = vmatprep.subr.bf16.mxu0 0
      %6131 = vmatpush1.bf16.msra.mxu0 0
      %6132 = vmatprep.subr.bf16.mxu0 0
      %6133 = vmatpush1.bf16.msra.mxu0 0
      %6134 = vmatprep.subr.bf16.mxu0 0
      %6135 = vmatpush1.bf16.msra.mxu0 0
      %6136 = vmatprep.subr.bf16.mxu0 0
      %6137 = vmatpush1.bf16.msra.mxu0 0
      %6138 = vmatprep.subr.bf16.mxu0 0
      %6139 = vmatpush1.bf16.msra.mxu0 0
      %6140 = vmatprep.subr.bf16.mxu0 0
      %6141 = vmatpush1.bf16.msra.mxu0 0
      %6142 = vmatprep.mubr.bf16.mxu0 0
      %6143 = vmatmul.mubr.bf16.gmra.mrb[0].mxu0 %v5971
      %v6144 = vpop.f32.mrb[0].mxu0
      %v6145 = vadd.f32 %v5968, %v6144
      %v6146 = vpop.f32.mrb[0].mxu0
      %v6147 = vadd.f32 %v5968, %v6146
      %v6148 = vpop.f32.mrb[0].mxu0
      %v6149 = vpop.f32.mrb[0].mxu0
      %6150 = vdwg.mxu0
      %6151 = vmatprep.subr.bf16.mxu0 %v5507
      %6152 = vmatpush1.bf16.msra.mxu0 %v5503
      %6153 = vmatprep.subr.bf16.mxu0 %v5635
      %6154 = vmatpush1.bf16.msra.mxu0 %v5631
      %6155 = vmatprep.subr.bf16.mxu0 %v5763
      %6156 = vmatpush1.bf16.msra.mxu0 %v5759
      %6157 = vmatprep.subr.bf16.mxu0 %v5885
      %6158 = vmatpush1.bf16.msra.mxu0 %v5882
      %6159 = vmatprep.subr.bf16.mxu0 %v5989
      %6160 = vmatpush1.bf16.msra.mxu0 %v5986
      %6161 = vmatprep.subr.bf16.mxu0 0
      %6162 = vmatpush1.bf16.msra.mxu0 0
      %6163 = vmatprep.subr.bf16.mxu0 0
      %6164 = vmatpush1.bf16.msra.mxu0 0
      %6165 = vmatprep.subr.bf16.mxu0 0
      %6166 = vmatpush1.bf16.msra.mxu0 0
      %6167 = vmatprep.subr.bf16.mxu0 0
      %6168 = vmatpush1.bf16.msra.mxu0 0
      %6169 = vmatprep.subr.bf16.mxu0 0
      %6170 = vmatpush1.bf16.msra.mxu0 0
      %6171 = vmatprep.subr.bf16.mxu0 0
      %6172 = vmatpush1.bf16.msra.mxu0 0
      %6173 = vmatprep.subr.bf16.mxu0 0
      %6174 = vmatpush1.bf16.msra.mxu0 0
      %6175 = vmatprep.subr.bf16.mxu0 0
      %6176 = vmatpush1.bf16.msra.mxu0 0
      %6177 = vmatprep.subr.bf16.mxu0 0
      %6178 = vmatpush1.bf16.msra.mxu0 0
      %6179 = vmatprep.subr.bf16.mxu0 0
      %6180 = vmatpush1.bf16.msra.mxu0 0
      %6181 = vmatprep.subr.bf16.mxu0 0
      %6182 = vmatpush1.bf16.msra.mxu0 0
      %6183 = vmatprep.mubr.bf16.mxu0 0
      %6184 = vmatmul.mubr.bf16.gmra.mrb[0].mxu0 %v5971
      %v6185 = vpop.f32.mrb[0].mxu0
      %v6186 = vadd.f32 %v5968, %v6185
      %v6187 = vpop.f32.mrb[0].mxu0
      %v6188 = vadd.f32 %v5968, %v6187
      %v6189 = vpop.f32.mrb[0].mxu0
      %v6190 = vpop.f32.mrb[0].mxu0
      %6191 = vdwg.mxu0
      %6192 = vmatprep.subr.bf16.mxu0 %v5515
      %6193 = vmatpush1.bf16.msra.mxu0 %v5511
      %6194 = vmatprep.subr.bf16.mxu0 %v5643
      %6195 = vmatpush1.bf16.msra.mxu0 %v5639
      %6196 = vmatprep.subr.bf16.mxu0 %v5771
      %6197 = vmatpush1.bf16.msra.mxu0 %v5767
      %6198 = vmatprep.subr.bf16.mxu0 %v5891
      %6199 = vmatpush1.bf16.msra.mxu0 %v5888
      %6200 = vmatprep.subr.bf16.mxu0 %v5995
      %6201 = vmatpush1.bf16.msra.mxu0 %v5992
      %6202 = vmatprep.subr.bf16.mxu0 0
      %6203 = vmatpush1.bf16.msra.mxu0 0
      %6204 = vmatprep.subr.bf16.mxu0 0
      %6205 = vmatpush1.bf16.msra.mxu0 0
      %6206 = vmatprep.subr.bf16.mxu0 0
      %6207 = vmatpush1.bf16.msra.mxu0 0
      %6208 = vmatprep.subr.bf16.mxu0 0
      %6209 = vmatpush1.bf16.msra.mxu0 0
      %6210 = vmatprep.subr.bf16.mxu0 0
      %6211 = vmatpush1.bf16.msra.mxu0 0
      %6212 = vmatprep.subr.bf16.mxu0 0
      %6213 = vmatpush1.bf16.msra.mxu0 0
      %6214 = vmatprep.subr.bf16.mxu0 0
      %6215 = vmatpush1.bf16.msra.mxu0 0
      %6216 = vmatprep.subr.bf16.mxu0 0
      %6217 = vmatpush1.bf16.msra.mxu0 0
      %6218 = vmatprep.subr.bf16.mxu0 0
      %6219 = vmatpush1.bf16.msra.mxu0 0
      %6220 = vmatprep.subr.bf16.mxu0 0
      %6221 = vmatpush1.bf16.msra.mxu0 0
      %6222 = vmatprep.subr.bf16.mxu0 0
      %6223 = vmatpush1.bf16.msra.mxu0 0
      %6224 = vmatprep.mubr.bf16.mxu0 0
      %6225 = vmatmul.mubr.bf16.gmra.mrb[0].mxu0 %v5971
      %v6226 = vpop.f32.mrb[0].mxu0
      %v6227 = vadd.f32 %v5968, %v6226
      %v6228 = vpop.f32.mrb[0].mxu0
      %v6229 = vadd.f32 %v5968, %v6228
      %v6230 = vpop.f32.mrb[0].mxu0
      %v6231 = vpop.f32.mrb[0].mxu0
      %6232 = vdwg.mxu0
      %6233 = vmatprep.subr.bf16.mxu0 %v5523
      %6234 = vmatpush1.bf16.msra.mxu0 %v5519
      %6235 = vmatprep.subr.bf16.mxu0 %v5651
      %6236 = vmatpush1.bf16.msra.mxu0 %v5647
      %6237 = vmatprep.subr.bf16.mxu0 %v5779
      %6238 = vmatpush1.bf16.msra.mxu0 %v5775
      %6239 = vmatprep.subr.bf16.mxu0 %v5897
      %6240 = vmatpush1.bf16.msra.mxu0 %v5894
      %6241 = vmatprep.subr.bf16.mxu0 %v6001
      %6242 = vmatpush1.bf16.msra.mxu0 %v5998
      %6243 = vmatprep.subr.bf16.mxu0 0
      %6244 = vmatpush1.bf16.msra.mxu0 0
      %6245 = vmatprep.subr.bf16.mxu0 0
      %6246 = vmatpush1.bf16.msra.mxu0 0
      %6247 = vmatprep.subr.bf16.mxu0 0
      %6248 = vmatpush1.bf16.msra.mxu0 0
      %6249 = vmatprep.subr.bf16.mxu0 0
      %6250 = vmatpush1.bf16.msra.mxu0 0
      %6251 = vmatprep.subr.bf16.mxu0 0
      %6252 = vmatpush1.bf16.msra.mxu0 0
      %6253 = vmatprep.subr.bf16.mxu0 0
      %6254 = vmatpush1.bf16.msra.mxu0 0
      %6255 = vmatprep.subr.bf16.mxu0 0
      %6256 = vmatpush1.bf16.msra.mxu0 0
      %6257 = vmatprep.subr.bf16.mxu0 0
      %6258 = vmatpush1.bf16.msra.mxu0 0
      %6259 = vmatprep.subr.bf16.mxu0 0
      %6260 = vmatpush1.bf16.msra.mxu0 0
      %6261 = vmatprep.subr.bf16.mxu0 0
      %6262 = vmatpush1.bf16.msra.mxu0 0
      %6263 = vmatprep.subr.bf16.mxu0 0
      %6264 = vmatpush1.bf16.msra.mxu0 0
      %6265 = vmatprep.mubr.bf16.mxu0 0
      %6266 = vmatmul.mubr.bf16.gmra.mrb[0].mxu0 %v5971
      %v6267 = vpop.f32.mrb[0].mxu0
      %v6268 = vadd.f32 %v5968, %v6267
      %v6269 = vpop.f32.mrb[0].mxu0
      %v6270 = vadd.f32 %v5968, %v6269
      %v6271 = vpop.f32.mrb[0].mxu0
      %v6272 = vpop.f32.mrb[0].mxu0
      %6273 = vdwg.mxu0
      %6274 = vmatprep.subr.bf16.mxu0 %v5531
      %6275 = vmatpush1.bf16.msra.mxu0 %v5527
      %6276 = vmatprep.subr.bf16.mxu0 %v5659
      %6277 = vmatpush1.bf16.msra.mxu0 %v5655
      %6278 = vmatprep.subr.bf16.mxu0 %v5787
      %6279 = vmatpush1.bf16.msra.mxu0 %v5783
      %6280 = vmatprep.subr.bf16.mxu0 %v5903
      %6281 = vmatpush1.bf16.msra.mxu0 %v5900
      %6282 = vmatprep.subr.bf16.mxu0 %v6007
      %6283 = vmatpush1.bf16.msra.mxu0 %v6004
      %6284 = vmatprep.subr.bf16.mxu0 0
      %6285 = vmatpush1.bf16.msra.mxu0 0
      %6286 = vmatprep.subr.bf16.mxu0 0
      %6287 = vmatpush1.bf16.msra.mxu0 0
      %6288 = vmatprep.subr.bf16.mxu0 0
      %6289 = vmatpush1.bf16.msra.mxu0 0
      %6290 = vmatprep.subr.bf16.mxu0 0
      %6291 = vmatpush1.bf16.msra.mxu0 0
      %6292 = vmatprep.subr.bf16.mxu0 0
      %6293 = vmatpush1.bf16.msra.mxu0 0
      %6294 = vmatprep.subr.bf16.mxu0 0
      %6295 = vmatpush1.bf16.msra.mxu0 0
      %6296 = vmatprep.subr.bf16.mxu0 0
      %6297 = vmatpush1.bf16.msra.mxu0 0
      %6298 = vmatprep.subr.bf16.mxu0 0
      %6299 = vmatpush1.bf16.msra.mxu0 0
      %6300 = vmatprep.subr.bf16.mxu0 0
      %6301 = vmatpush1.bf16.msra.mxu0 0
      %6302 = vmatprep.subr.bf16.mxu0 0
      %6303 = vmatpush1.bf16.msra.mxu0 0
      %6304 = vmatprep.subr.bf16.mxu0 0
      %6305 = vmatpush1.bf16.msra.mxu0 0
      %6306 = vmatprep.mubr.bf16.mxu0 0
      %6307 = vmatmul.mubr.bf16.gmra.mrb[0].mxu0 %v5971
      %v6308 = vpop.f32.mrb[0].mxu0
      %v6309 = vadd.f32 %v5968, %v6308
      %v6310 = vpop.f32.mrb[0].mxu0
      %v6311 = vadd.f32 %v5968, %v6310
      %v6312 = vpop.f32.mrb[0].mxu0
      %v6313 = vpop.f32.mrb[0].mxu0
      %6314 = vdwg.mxu0
      %6315 = vmatprep.subr.bf16.mxu0 %v5539
      %6316 = vmatpush1.bf16.msra.mxu0 %v5535
      %6317 = vmatprep.subr.bf16.mxu0 %v5667
      %6318 = vmatpush1.bf16.msra.mxu0 %v5663
      %6319 = vmatprep.subr.bf16.mxu0 %v5795
      %6320 = vmatpush1.bf16.msra.mxu0 %v5791
      %6321 = vmatprep.subr.bf16.mxu0 %v5909
      %6322 = vmatpush1.bf16.msra.mxu0 %v5906
      %6323 = vmatprep.subr.bf16.mxu0 %v6013
      %6324 = vmatpush1.bf16.msra.mxu0 %v6010
      %6325 = vmatprep.subr.bf16.mxu0 0
      %6326 = vmatpush1.bf16.msra.mxu0 0
      %6327 = vmatprep.subr.bf16.mxu0 0
      %6328 = vmatpush1.bf16.msra.mxu0 0
      %6329 = vmatprep.subr.bf16.mxu0 0
      %6330 = vmatpush1.bf16.msra.mxu0 0
      %6331 = vmatprep.subr.bf16.mxu0 0
      %6332 = vmatpush1.bf16.msra.mxu0 0
      %6333 = vmatprep.subr.bf16.mxu0 0
      %6334 = vmatpush1.bf16.msra.mxu0 0
      %6335 = vmatprep.subr.bf16.mxu0 0
      %6336 = vmatpush1.bf16.msra.mxu0 0
      %6337 = vmatprep.subr.bf16.mxu0 0
      %6338 = vmatpush1.bf16.msra.mxu0 0
      %6339 = vmatprep.subr.bf16.mxu0 0
      %6340 = vmatpush1.bf16.msra.mxu0 0
      %6341 = vmatprep.subr.bf16.mxu0 0
      %6342 = vmatpush1.bf16.msra.mxu0 0
      %6343 = vmatprep.subr.bf16.mxu0 0
      %6344 = vmatpush1.bf16.msra.mxu0 0
      %6345 = vmatprep.subr.bf16.mxu0 0
      %6346 = vmatpush1.bf16.msra.mxu0 0
      %6347 = vmatprep.mubr.bf16.mxu0 0
      %6348 = vmatmul.mubr.bf16.gmra.mrb[0].mxu0 %v5971
      %v6349 = vpop.f32.mrb[0].mxu0
      %v6350 = vadd.f32 %v5968, %v6349
      %v6351 = vpop.f32.mrb[0].mxu0
      %v6352 = vadd.f32 %v5968, %v6351
      %v6353 = vpop.f32.mrb[0].mxu0
      %v6354 = vpop.f32.mrb[0].mxu0
      %6355 = vdwg.mxu0
      %6356 = vmatprep.subr.bf16.mxu0 %v5547
      %6357 = vmatpush1.bf16.msra.mxu0 %v5543
      %6358 = vmatprep.subr.bf16.mxu0 %v5675
      %6359 = vmatpush1.bf16.msra.mxu0 %v5671
      %6360 = vmatprep.subr.bf16.mxu0 %v5803
      %6361 = vmatpush1.bf16.msra.mxu0 %v5799
      %6362 = vmatprep.subr.bf16.mxu0 %v5915
      %6363 = vmatpush1.bf16.msra.mxu0 %v5912
      %6364 = vmatprep.subr.bf16.mxu0 %v6019
      %6365 = vmatpush1.bf16.msra.mxu0 %v6016
      %6366 = vmatprep.subr.bf16.mxu0 0
      %6367 = vmatpush1.bf16.msra.mxu0 0
      %6368 = vmatprep.subr.bf16.mxu0 0
      %6369 = vmatpush1.bf16.msra.mxu0 0
      %6370 = vmatprep.subr.bf16.mxu0 0
      %6371 = vmatpush1.bf16.msra.mxu0 0
      %6372 = vmatprep.subr.bf16.mxu0 0
      %6373 = vmatpush1.bf16.msra.mxu0 0
      %6374 = vmatprep.subr.bf16.mxu0 0
      %6375 = vmatpush1.bf16.msra.mxu0 0
      %6376 = vmatprep.subr.bf16.mxu0 0
      %6377 = vmatpush1.bf16.msra.mxu0 0
      %6378 = vmatprep.subr.bf16.mxu0 0
      %6379 = vmatpush1.bf16.msra.mxu0 0
      %6380 = vmatprep.subr.bf16.mxu0 0
      %6381 = vmatpush1.bf16.msra.mxu0 0
      %6382 = vmatprep.subr.bf16.mxu0 0
      %6383 = vmatpush1.bf16.msra.mxu0 0
      %6384 = vmatprep.subr.bf16.mxu0 0
      %6385 = vmatpush1.bf16.msra.mxu0 0
      %6386 = vmatprep.subr.bf16.mxu0 0
      %6387 = vmatpush1.bf16.msra.mxu0 0
      %6388 = vmatprep.mubr.bf16.mxu0 0
      %6389 = vmatmul.mubr.bf16.gmra.mrb[0].mxu0 %v5971
      %v6390 = vpop.f32.mrb[0].mxu0
      %v6391 = vadd.f32 %v5968, %v6390
      %v6392 = vpop.f32.mrb[0].mxu0
      %v6393 = vadd.f32 %v5968, %v6392
      %v6394 = vpop.f32.mrb[0].mxu0
      %v6395 = vpop.f32.mrb[0].mxu0
      %6396 = vdwg.mxu0
      %6397 = vmatprep.subr.bf16.mxu0 %v5555
      %6398 = vmatpush1.bf16.msra.mxu0 %v5551
      %6399 = vmatprep.subr.bf16.mxu0 %v5683
      %6400 = vmatpush1.bf16.msra.mxu0 %v5679
      %6401 = vmatprep.subr.bf16.mxu0 %v5811
      %6402 = vmatpush1.bf16.msra.mxu0 %v5807
      %6403 = vmatprep.subr.bf16.mxu0 %v5921
      %6404 = vmatpush1.bf16.msra.mxu0 %v5918
      %6405 = vmatprep.subr.bf16.mxu0 %v6025
      %6406 = vmatpush1.bf16.msra.mxu0 %v6022
      %6407 = vmatprep.subr.bf16.mxu0 0
      %6408 = vmatpush1.bf16.msra.mxu0 0
      %6409 = vmatprep.subr.bf16.mxu0 0
      %6410 = vmatpush1.bf16.msra.mxu0 0
      %6411 = vmatprep.subr.bf16.mxu0 0
      %6412 = vmatpush1.bf16.msra.mxu0 0
      %6413 = vmatprep.subr.bf16.mxu0 0
      %6414 = vmatpush1.bf16.msra.mxu0 0
      %6415 = vmatprep.subr.bf16.mxu0 0
      %6416 = vmatpush1.bf16.msra.mxu0 0
      %6417 = vmatprep.subr.bf16.mxu0 0
      %6418 = vmatpush1.bf16.msra.mxu0 0
      %6419 = vmatprep.subr.bf16.mxu0 0
      %6420 = vmatpush1.bf16.msra.mxu0 0
      %6421 = vmatprep.subr.bf16.mxu0 0
      %6422 = vmatpush1.bf16.msra.mxu0 0
      %6423 = vmatprep.subr.bf16.mxu0 0
      %6424 = vmatpush1.bf16.msra.mxu0 0
      %6425 = vmatprep.subr.bf16.mxu0 0
      %6426 = vmatpush1.bf16.msra.mxu0 0
      %6427 = vmatprep.subr.bf16.mxu0 0
      %6428 = vmatpush1.bf16.msra.mxu0 0
      %6429 = vmatprep.mubr.bf16.mxu0 0
      %6430 = vmatmul.mubr.bf16.gmra.mrb[0].mxu0 %v5971
      %v6431 = vpop.f32.mrb[0].mxu0
      %v6432 = vadd.f32 %v5968, %v6431
      %v6433 = vpop.f32.mrb[0].mxu0
      %v6434 = vadd.f32 %v5968, %v6433
      %v6435 = vpop.f32.mrb[0].mxu0
      %v6436 = vpop.f32.mrb[0].mxu0
      %6437 = vdwg.mxu0
      %6438 = vmatprep.subr.bf16.mxu0 %v5563
      %6439 = vmatpush1.bf16.msra.mxu0 %v5559
      %6440 = vmatprep.subr.bf16.mxu0 %v5691
      %6441 = vmatpush1.bf16.msra.mxu0 %v5687
      %6442 = vmatprep.subr.bf16.mxu0 %v5819
      %6443 = vmatpush1.bf16.msra.mxu0 %v5815
      %6444 = vmatprep.subr.bf16.mxu0 %v5927
      %6445 = vmatpush1.bf16.msra.mxu0 %v5924
      %6446 = vmatprep.subr.bf16.mxu0 %v6031
      %6447 = vmatpush1.bf16.msra.mxu0 %v6028
      %6448 = vmatprep.subr.bf16.mxu0 0
      %6449 = vmatpush1.bf16.msra.mxu0 0
      %6450 = vmatprep.subr.bf16.mxu0 0
      %6451 = vmatpush1.bf16.msra.mxu0 0
      %6452 = vmatprep.subr.bf16.mxu0 0
      %6453 = vmatpush1.bf16.msra.mxu0 0
      %6454 = vmatprep.subr.bf16.mxu0 0
      %6455 = vmatpush1.bf16.msra.mxu0 0
      %6456 = vmatprep.subr.bf16.mxu0 0
      %6457 = vmatpush1.bf16.msra.mxu0 0
      %6458 = vmatprep.subr.bf16.mxu0 0
      %6459 = vmatpush1.bf16.msra.mxu0 0
      %6460 = vmatprep.subr.bf16.mxu0 0
      %6461 = vmatpush1.bf16.msra.mxu0 0
      %6462 = vmatprep.subr.bf16.mxu0 0
      %6463 = vmatpush1.bf16.msra.mxu0 0
      %6464 = vmatprep.subr.bf16.mxu0 0
      %6465 = vmatpush1.bf16.msra.mxu0 0
      %6466 = vmatprep.subr.bf16.mxu0 0
      %6467 = vmatpush1.bf16.msra.mxu0 0
      %6468 = vmatprep.subr.bf16.mxu0 0
      %6469 = vmatpush1.bf16.msra.mxu0 0
      %6470 = vmatprep.mubr.bf16.mxu0 0
      %6471 = vmatmul.mubr.bf16.gmra.mrb[0].mxu0 %v5971
      %v6472 = vpop.f32.mrb[0].mxu0
      %v6473 = vadd.f32 %v5968, %v6472
      %v6474 = vpop.f32.mrb[0].mxu0
      %v6475 = vadd.f32 %v5968, %v6474
      %v6476 = vpop.f32.mrb[0].mxu0
      %v6477 = vpop.f32.mrb[0].mxu0
      %6478 = vdwg.mxu0
      %6479 = vmatprep.subr.bf16.mxu0 %v5571
      %6480 = vmatpush1.bf16.msra.mxu0 %v5567
      %6481 = vmatprep.subr.bf16.mxu0 %v5699
      %6482 = vmatpush1.bf16.msra.mxu0 %v5695
      %6483 = vmatprep.subr.bf16.mxu0 %v5827
      %6484 = vmatpush1.bf16.msra.mxu0 %v5823
      %6485 = vmatprep.subr.bf16.mxu0 %v5933
      %6486 = vmatpush1.bf16.msra.mxu0 %v5930
      %6487 = vmatprep.subr.bf16.mxu0 %v6037
      %6488 = vmatpush1.bf16.msra.mxu0 %v6034
      %6489 = vmatprep.subr.bf16.mxu0 0
      %6490 = vmatpush1.bf16.msra.mxu0 0
      %6491 = vmatprep.subr.bf16.mxu0 0
      %6492 = vmatpush1.bf16.msra.mxu0 0
      %6493 = vmatprep.subr.bf16.mxu0 0
      %6494 = vmatpush1.bf16.msra.mxu0 0
      %6495 = vmatprep.subr.bf16.mxu0 0
      %6496 = vmatpush1.bf16.msra.mxu0 0
      %6497 = vmatprep.subr.bf16.mxu0 0
      %6498 = vmatpush1.bf16.msra.mxu0 0
      %6499 = vmatprep.subr.bf16.mxu0 0
      %6500 = vmatpush1.bf16.msra.mxu0 0
      %6501 = vmatprep.subr.bf16.mxu0 0
      %6502 = vmatpush1.bf16.msra.mxu0 0
      %6503 = vmatprep.subr.bf16.mxu0 0
      %6504 = vmatpush1.bf16.msra.mxu0 0
      %6505 = vmatprep.subr.bf16.mxu0 0
      %6506 = vmatpush1.bf16.msra.mxu0 0
      %6507 = vmatprep.subr.bf16.mxu0 0
      %6508 = vmatpush1.bf16.msra.mxu0 0
      %6509 = vmatprep.subr.bf16.mxu0 0
      %6510 = vmatpush1.bf16.msra.mxu0 0
      %6511 = vmatprep.mubr.bf16.mxu0 0
      %6512 = vmatmul.mubr.bf16.gmra.mrb[0].mxu0 %v5971
      %v6513 = vpop.f32.mrb[0].mxu0
      %v6514 = vadd.f32 %v5968, %v6513
      %v6515 = vpop.f32.mrb[0].mxu0
      %v6516 = vadd.f32 %v5968, %v6515
      %v6517 = vpop.f32.mrb[0].mxu0
      %v6518 = vpop.f32.mrb[0].mxu0
      %6519 = vdwg.mxu0
      %6520 = vmatprep.subr.bf16.mxu0 %v5579
      %6521 = vmatpush1.bf16.msra.mxu0 %v5575
      %6522 = vmatprep.subr.bf16.mxu0 %v5707
      %6523 = vmatpush1.bf16.msra.mxu0 %v5703
      %6524 = vmatprep.subr.bf16.mxu0 %v5835
      %6525 = vmatpush1.bf16.msra.mxu0 %v5831
      %6526 = vmatprep.subr.bf16.mxu0 %v5939
      %6527 = vmatpush1.bf16.msra.mxu0 %v5936
      %6528 = vmatprep.subr.bf16.mxu0 %v6043
      %6529 = vmatpush1.bf16.msra.mxu0 %v6040
      %6530 = vmatprep.subr.bf16.mxu0 0
      %6531 = vmatpush1.bf16.msra.mxu0 0
      %6532 = vmatprep.subr.bf16.mxu0 0
      %6533 = vmatpush1.bf16.msra.mxu0 0
      %6534 = vmatprep.subr.bf16.mxu0 0
      %6535 = vmatpush1.bf16.msra.mxu0 0
      %6536 = vmatprep.subr.bf16.mxu0 0
      %6537 = vmatpush1.bf16.msra.mxu0 0
      %6538 = vmatprep.subr.bf16.mxu0 0
      %6539 = vmatpush1.bf16.msra.mxu0 0
      %6540 = vmatprep.subr.bf16.mxu0 0
      %6541 = vmatpush1.bf16.msra.mxu0 0
      %6542 = vmatprep.subr.bf16.mxu0 0
      %6543 = vmatpush1.bf16.msra.mxu0 0
      %6544 = vmatprep.subr.bf16.mxu0 0
      %6545 = vmatpush1.bf16.msra.mxu0 0
      %6546 = vmatprep.subr.bf16.mxu0 0
      %6547 = vmatpush1.bf16.msra.mxu0 0
      %6548 = vmatprep.subr.bf16.mxu0 0
      %6549 = vmatpush1.bf16.msra.mxu0 0
      %6550 = vmatprep.subr.bf16.mxu0 0
      %6551 = vmatpush1.bf16.msra.mxu0 0
      %6552 = vmatprep.mubr.bf16.mxu0 0
      %6553 = vmatmul.mubr.bf16.gmra.mrb[0].mxu0 %v5971
      %v6554 = vpop.f32.mrb[0].mxu0
      %v6555 = vadd.f32 %v5968, %v6554
      %v6556 = vpop.f32.mrb[0].mxu0
      %v6557 = vadd.f32 %v5968, %v6556
      %v6558 = vpop.f32.mrb[0].mxu0
      %v6559 = vpop.f32.mrb[0].mxu0
      %6560 = vdwg.mxu0
      %6561 = vmatprep.subr.bf16.mxu0 %v5587
      %6562 = vmatpush1.bf16.msra.mxu0 %v5583
      %6563 = vmatprep.subr.bf16.mxu0 %v5715
      %6564 = vmatpush1.bf16.msra.mxu0 %v5711
      %6565 = vmatprep.subr.bf16.mxu0 %v5843
      %6566 = vmatpush1.bf16.msra.mxu0 %v5839
      %6567 = vmatprep.subr.bf16.mxu0 %v5945
      %6568 = vmatpush1.bf16.msra.mxu0 %v5942
      %6569 = vmatprep.subr.bf16.mxu0 %v6049
      %6570 = vmatpush1.bf16.msra.mxu0 %v6046
      %6571 = vmatprep.subr.bf16.mxu0 0
      %6572 = vmatpush1.bf16.msra.mxu0 0
      %6573 = vmatprep.subr.bf16.mxu0 0
      %6574 = vmatpush1.bf16.msra.mxu0 0
      %6575 = vmatprep.subr.bf16.mxu0 0
      %6576 = vmatpush1.bf16.msra.mxu0 0
      %6577 = vmatprep.subr.bf16.mxu0 0
      %6578 = vmatpush1.bf16.msra.mxu0 0
      %6579 = vmatprep.subr.bf16.mxu0 0
      %6580 = vmatpush1.bf16.msra.mxu0 0
      %6581 = vmatprep.subr.bf16.mxu0 0
      %6582 = vmatpush1.bf16.msra.mxu0 0
      %6583 = vmatprep.subr.bf16.mxu0 0
      %6584 = vmatpush1.bf16.msra.mxu0 0
      %6585 = vmatprep.subr.bf16.mxu0 0
      %6586 = vmatpush1.bf16.msra.mxu0 0
      %6587 = vmatprep.subr.bf16.mxu0 0
      %6588 = vmatpush1.bf16.msra.mxu0 0
      %6589 = vmatprep.subr.bf16.mxu0 0
      %6590 = vmatpush1.bf16.msra.mxu0 0
      %6591 = vmatprep.subr.bf16.mxu0 0
      %6592 = vmatpush1.bf16.msra.mxu0 0
      %6593 = vmatprep.mubr.bf16.mxu0 0
      %6594 = vmatmul.mubr.bf16.gmra.mrb[0].mxu0 %v5971
      %v6595 = vpop.f32.mrb[0].mxu0
      %v6596 = vadd.f32 %v5968, %v6595
      %v6597 = vpop.f32.mrb[0].mxu0
      %v6598 = vadd.f32 %v5968, %v6597
      %v6599 = vpop.f32.mrb[0].mxu0
      %v6600 = vpop.f32.mrb[0].mxu0
      %6601 = vdwg.mxu0
      %6602 = vmatprep.subr.bf16.mxu0 %v5595
      %6603 = vmatpush1.bf16.msra.mxu0 %v5591
      %6604 = vmatprep.subr.bf16.mxu0 %v5723
      %6605 = vmatpush1.bf16.msra.mxu0 %v5719
      %6606 = vmatprep.subr.bf16.mxu0 %v5851
      %6607 = vmatpush1.bf16.msra.mxu0 %v5847
      %6608 = vmatprep.subr.bf16.mxu0 %v5951
      %6609 = vmatpush1.bf16.msra.mxu0 %v5948
      %6610 = vmatprep.subr.bf16.mxu0 %v6055
      %6611 = vmatpush1.bf16.msra.mxu0 %v6052
      %6612 = vmatprep.subr.bf16.mxu0 0
      %6613 = vmatpush1.bf16.msra.mxu0 0
      %6614 = vmatprep.subr.bf16.mxu0 0
      %6615 = vmatpush1.bf16.msra.mxu0 0
      %6616 = vmatprep.subr.bf16.mxu0 0
      %6617 = vmatpush1.bf16.msra.mxu0 0
      %6618 = vmatprep.subr.bf16.mxu0 0
      %6619 = vmatpush1.bf16.msra.mxu0 0
      %6620 = vmatprep.subr.bf16.mxu0 0
      %6621 = vmatpush1.bf16.msra.mxu0 0
      %6622 = vmatprep.subr.bf16.mxu0 0
      %6623 = vmatpush1.bf16.msra.mxu0 0
      %6624 = vmatprep.subr.bf16.mxu0 0
      %6625 = vmatpush1.bf16.msra.mxu0 0
      %6626 = vmatprep.subr.bf16.mxu0 0
      %6627 = vmatpush1.bf16.msra.mxu0 0
      %6628 = vmatprep.subr.bf16.mxu0 0
      %6629 = vmatpush1.bf16.msra.mxu0 0
      %6630 = vmatprep.subr.bf16.mxu0 0
      %6631 = vmatpush1.bf16.msra.mxu0 0
      %6632 = vmatprep.subr.bf16.mxu0 0
      %6633 = vmatpush1.bf16.msra.mxu0 0
      %6634 = vmatprep.mubr.bf16.mxu0 0
      %6635 = vmatmul.mubr.bf16.gmra.mrb[0].mxu0 %v5971
      %v6636 = vpop.f32.mrb[0].mxu0
      %v6637 = vadd.f32 %v5968, %v6636
      %v6638 = vpop.f32.mrb[0].mxu0
      %v6639 = vadd.f32 %v5968, %v6638
      %v6640 = vpop.f32.mrb[0].mxu0
      %v6641 = vpop.f32.mrb[0].mxu0
      %6642 = vdwg.mxu0
      %6643 = vmatprep.subr.bf16.mxu0 %v5603
      %6644 = vmatpush1.bf16.msra.mxu0 %v5599
      %6645 = vmatprep.subr.bf16.mxu0 %v5731
      %6646 = vmatpush1.bf16.msra.mxu0 %v5727
      %6647 = vmatprep.subr.bf16.mxu0 %v5859
      %6648 = vmatpush1.bf16.msra.mxu0 %v5855
      %6649 = vmatprep.subr.bf16.mxu0 %v5957
      %6650 = vmatpush1.bf16.msra.mxu0 %v5954
      %6651 = vmatprep.subr.bf16.mxu0 %v6061
      %6652 = vmatpush1.bf16.msra.mxu0 %v6058
      %6653 = vmatprep.subr.bf16.mxu0 0
      %6654 = vmatpush1.bf16.msra.mxu0 0
      %6655 = vmatprep.subr.bf16.mxu0 0
      %6656 = vmatpush1.bf16.msra.mxu0 0
      %6657 = vmatprep.subr.bf16.mxu0 0
      %6658 = vmatpush1.bf16.msra.mxu0 0
      %6659 = vmatprep.subr.bf16.mxu0 0
      %6660 = vmatpush1.bf16.msra.mxu0 0
      %6661 = vmatprep.subr.bf16.mxu0 0
      %6662 = vmatpush1.bf16.msra.mxu0 0
      %6663 = vmatprep.subr.bf16.mxu0 0
      %6664 = vmatpush1.bf16.msra.mxu0 0
      %6665 = vmatprep.subr.bf16.mxu0 0
      %6666 = vmatpush1.bf16.msra.mxu0 0
      %6667 = vmatprep.subr.bf16.mxu0 0
      %6668 = vmatpush1.bf16.msra.mxu0 0
      %6669 = vmatprep.subr.bf16.mxu0 0
      %6670 = vmatpush1.bf16.msra.mxu0 0
      %6671 = vmatprep.subr.bf16.mxu0 0
      %6672 = vmatpush1.bf16.msra.mxu0 0
      %6673 = vmatprep.subr.bf16.mxu0 0
      %6674 = vmatpush1.bf16.msra.mxu0 0
      %6675 = vmatprep.mubr.bf16.mxu0 0
      %6676 = vmatmul.mubr.bf16.gmra.mrb[0].mxu0 %v5971
      %v6677 = vpop.f32.mrb[0].mxu0
      %v6678 = vadd.f32 %v5968, %v6677
      %v6679 = vpop.f32.mrb[0].mxu0
      %v6680 = vadd.f32 %v5968, %v6679
      %v6681 = vpop.f32.mrb[0].mxu0
      %v6682 = vpop.f32.mrb[0].mxu0
      %6683 = vdwg.mxu0
      %6684 = vmatprep.subr.bf16.mxu0 %v5611
      %6685 = vmatpush1.bf16.msra.mxu0 %v5607
      %6686 = vmatprep.subr.bf16.mxu0 %v5739
      %6687 = vmatpush1.bf16.msra.mxu0 %v5735
      %6688 = vmatprep.subr.bf16.mxu0 %v5867
      %6689 = vmatpush1.bf16.msra.mxu0 %v5863
      %6690 = vmatprep.subr.bf16.mxu0 %v5964
      %6691 = vmatpush1.bf16.msra.mxu0 %v5960
      %6692 = vmatprep.subr.bf16.mxu0 %v6067
      %6693 = vmatpush1.bf16.msra.mxu0 %v6064
      %6694 = vmatprep.subr.bf16.mxu0 0
      %6695 = vmatpush1.bf16.msra.mxu0 0
      %6696 = vmatprep.subr.bf16.mxu0 0
      %6697 = vmatpush1.bf16.msra.mxu0 0
      %6698 = vmatprep.subr.bf16.mxu0 0
      %6699 = vmatpush1.bf16.msra.mxu0 0
      %6700 = vmatprep.subr.bf16.mxu0 0
      %6701 = vmatpush1.bf16.msra.mxu0 0
      %6702 = vmatprep.subr.bf16.mxu0 0
      %6703 = vmatpush1.bf16.msra.mxu0 0
      %6704 = vmatprep.subr.bf16.mxu0 0
      %6705 = vmatpush1.bf16.msra.mxu0 0
      %6706 = vmatprep.subr.bf16.mxu0 0
      %6707 = vmatpush1.bf16.msra.mxu0 0
      %6708 = vmatprep.subr.bf16.mxu0 0
      %6709 = vmatpush1.bf16.msra.mxu0 0
      %6710 = vmatprep.subr.bf16.mxu0 0
      %6711 = vmatpush1.bf16.msra.mxu0 0
      %6712 = vmatprep.subr.bf16.mxu0 0
      %6713 = vmatpush1.bf16.msra.mxu0 0
      %6714 = vmatprep.subr.bf16.mxu0 0
      %6715 = vmatpush1.bf16.msra.mxu0 0
      %6716 = vmatprep.mubr.bf16.mxu0 0
      %6717 = vmatmul.mubr.bf16.gmra.mrb[0].mxu0 %v5971
      %v6718 = vpop.f32.mrb[0].mxu0
      %v6719 = vadd.f32 %v5968, %v6718
      %v6720 = vpop.f32.mrb[0].mxu0
      %v6721 = vadd.f32 %v5968, %v6720
      %v6722 = vpop.f32.mrb[0].mxu0
      %v6723 = vpop.f32.mrb[0].mxu0
      %6724 = vdwg.mxu0
      %v6725 = vadd.f32 %v6104, %v6106
      %v6726 = vadd.f32 %v6725, %v6145
      %v6727 = vadd.f32 %v6726, %v6147
      %v6728 = vadd.f32 %v6727, %v6186
      %v6729 = vadd.f32 %v6728, %v6188
      %v6730 = vadd.f32 %v6729, %v6227
      %v6731 = vadd.f32 %v6730, %v6229
      %v6732 = vadd.f32 %v6731, %v6268
      %v6733 = vadd.f32 %v6732, %v6270
      %v6734 = vadd.f32 %v6733, %v6309
      %v6735 = vadd.f32 %v6734, %v6311
      %v6736 = vadd.f32 %v6735, %v6350
      %v6737 = vadd.f32 %v6736, %v6352
      %v6738 = vadd.f32 %v6737, %v6391
      %v6739 = vadd.f32 %v6738, %v6393
      %v6740 = vadd.f32 %v6739, %v6432
      %v6741 = vadd.f32 %v6740, %v6434
      %v6742 = vadd.f32 %v6741, %v6473
      %v6743 = vadd.f32 %v6742, %v6475
      %v6744 = vadd.f32 %v6743, %v6514
      %v6745 = vadd.f32 %v6744, %v6516
      %v6746 = vadd.f32 %v6745, %v6555
      %v6747 = vadd.f32 %v6746, %v6557
      %v6748 = vadd.f32 %v6747, %v6596
      %v6749 = vadd.f32 %v6748, %v6598
      %v6750 = vadd.f32 %v6749, %v6637
      %v6751 = vadd.f32 %v6750, %v6639
      %v6752 = vadd.f32 %v6751, %v6678
      %v6753 = vadd.f32 %v6752, %v6680
      %v6754 = vadd.f32 %v6753, %v6719
      %v6755 = vadd.f32 %v6754, %v6721
      %6756 = vadd.xlane.f32.xlu0 %v6755
      %v6757 = vpop.xlane.xlu0 %6756
      %v6758 = vrot.slane %v6757, 4
      %v6759 = vadd.f32 %v6757, %v6758
      %v6760 = vrot.slane %v6759, 2
      %v6761 = vadd.f32 %v6759, %v6760
      %v6762 = vrot.slane %v6761, 1
      %v6763 = vadd.f32 %v6761, %v6762
      %s6764 = vtos %v6763
      %v6765 = vmul.f32 %v6104, %v6104
      %v6766 = vmul.f32 %v6106, %v6106
      %v6767 = vmul.f32 %v6145, %v6145
      %v6768 = vmul.f32 %v6147, %v6147
      %v6769 = vmul.f32 %v6186, %v6186
      %v6770 = vmul.f32 %v6188, %v6188
      %v6771 = vmul.f32 %v6227, %v6227
      %v6772 = vmul.f32 %v6229, %v6229
      %v6773 = vmul.f32 %v6268, %v6268
      %v6774 = vmul.f32 %v6270, %v6270
      %v6775 = vmul.f32 %v6309, %v6309
      %v6776 = vmul.f32 %v6311, %v6311
      %v6777 = vmul.f32 %v6350, %v6350
      %v6778 = vmul.f32 %v6352, %v6352
      %v6779 = vmul.f32 %v6391, %v6391
      %v6780 = vmul.f32 %v6393, %v6393
      %v6781 = vmul.f32 %v6432, %v6432
      %v6782 = vmul.f32 %v6434, %v6434
      %v6783 = vmul.f32 %v6473, %v6473
      %v6784 = vmul.f32 %v6475, %v6475
      %v6785 = vmul.f32 %v6514, %v6514
      %v6786 = vmul.f32 %v6516, %v6516
      %v6787 = vmul.f32 %v6555, %v6555
      %v6788 = vmul.f32 %v6557, %v6557
      %v6789 = vmul.f32 %v6596, %v6596
      %v6790 = vmul.f32 %v6598, %v6598
      %v6791 = vmul.f32 %v6637, %v6637
      %v6792 = vmul.f32 %v6639, %v6639
      %v6793 = vmul.f32 %v6678, %v6678
      %v6794 = vmul.f32 %v6680, %v6680
      %v6795 = vmul.f32 %v6719, %v6719
      %v6796 = vmul.f32 %v6721, %v6721
      %v6797 = vadd.f32 %v6765, %v6766
      %v6798 = vadd.f32 %v6797, %v6767
      %v6799 = vadd.f32 %v6798, %v6768
      %v6800 = vadd.f32 %v6799, %v6769
      %v6801 = vadd.f32 %v6800, %v6770
      %v6802 = vadd.f32 %v6801, %v6771
      %v6803 = vadd.f32 %v6802, %v6772
      %v6804 = vadd.f32 %v6803, %v6773
      %v6805 = vadd.f32 %v6804, %v6774
      %v6806 = vadd.f32 %v6805, %v6775
      %v6807 = vadd.f32 %v6806, %v6776
      %v6808 = vadd.f32 %v6807, %v6777
      %v6809 = vadd.f32 %v6808, %v6778
      %v6810 = vadd.f32 %v6809, %v6779
      %v6811 = vadd.f32 %v6810, %v6780
      %v6812 = vadd.f32 %v6811, %v6781
      %v6813 = vadd.f32 %v6812, %v6782
      %v6814 = vadd.f32 %v6813, %v6783
      %v6815 = vadd.f32 %v6814, %v6784
      %v6816 = vadd.f32 %v6815, %v6785
      %v6817 = vadd.f32 %v6816, %v6786
      %v6818 = vadd.f32 %v6817, %v6787
      %v6819 = vadd.f32 %v6818, %v6788
      %v6820 = vadd.f32 %v6819, %v6789
      %v6821 = vadd.f32 %v6820, %v6790
      %v6822 = vadd.f32 %v6821, %v6791
      %v6823 = vadd.f32 %v6822, %v6792
      %v6824 = vadd.f32 %v6823, %v6793
      %v6825 = vadd.f32 %v6824, %v6794
      %v6826 = vadd.f32 %v6825, %v6795
      %v6827 = vadd.f32 %v6826, %v6796
      %6828 = vadd.xlane.f32.xlu0 %v6827
      %v6829 = vpop.xlane.xlu0 %6828
      %v6830 = vrot.slane %v6829, 4
      %v6831 = vadd.f32 %v6829, %v6830
      %v6832 = vrot.slane %v6831, 2
      %v6833 = vadd.f32 %v6831, %v6832
      %v6834 = vrot.slane %v6833, 1
      %v6835 = vadd.f32 %v6833, %v6834
      %s6836 = vtos %v6835
      %v6837 = vrcp.pop 32768.0
      %s6838 = vtos %v6837
      %s6839 = smul.f32 %s6764, %s6838
      %v6840 = vrcp.pop 32768.0
      %s6841 = vtos %v6840
      %s6842 = smul.f32 %s6836, %s6841
      %s6843 = smul.f32 %s6839, %s6839
      %s6844 = ssub.f32 %s6842, %s6843
      %s6845 = sadd.f32 %s6844, 1e-05
      %v6846 = vstv %s6845
      %v6847 = vrsqrt.pop %v6846
      %s6848 = vtos %v6847
      %v6849 = vstv %s6848
      %v6850 = vmul.f32 %v3906, %v6849
      %v6851 = vstv %s6839
      %v6852 = vmul.f32 %v6851, %v6850
      %6854 = vrot.lane.b32.xlu0 %v6852, 1
      %v6855 = vpop.permute.xlu0 %6854
      %v6857 = vsub.f32 %v3906, %v6855
      %6859 = vset.pattern.permute.xlu0 6
      %6860 = vperm.xlu0 %6859, %v6850
      %v6861 = vpop.permute.xlu0 %6860
      %v6863 = vmul.f32 %v6104, %v6861
      %v6864 = vmul.f32 %v6106, %v6861
      %v6865 = vmul.f32 %v6145, %v6861
      %v6866 = vmul.f32 %v6147, %v6861
      %v6867 = vmul.f32 %v6186, %v6861
      %v6868 = vmul.f32 %v6188, %v6861
      %v6869 = vmul.f32 %v6227, %v6861
      %v6870 = vmul.f32 %v6229, %v6861
      %v6871 = vmul.f32 %v6268, %v6861
      %v6872 = vmul.f32 %v6270, %v6861
      %v6873 = vmul.f32 %v6309, %v6861
      %v6874 = vmul.f32 %v6311, %v6861
      %v6875 = vmul.f32 %v6350, %v6861
      %v6876 = vmul.f32 %v6352, %v6861
      %v6877 = vmul.f32 %v6391, %v6861
      %v6878 = vmul.f32 %v6393, %v6861
      %v6879 = vmul.f32 %v6432, %v6861
      %v6880 = vmul.f32 %v6434, %v6861
      %v6881 = vmul.f32 %v6473, %v6861
      %v6882 = vmul.f32 %v6475, %v6861
      %v6883 = vmul.f32 %v6514, %v6861
      %v6884 = vmul.f32 %v6516, %v6861
      %v6885 = vmul.f32 %v6555, %v6861
      %v6886 = vmul.f32 %v6557, %v6861
      %v6887 = vmul.f32 %v6596, %v6861
      %v6888 = vmul.f32 %v6598, %v6861
      %v6889 = vmul.f32 %v6637, %v6861
      %v6890 = vmul.f32 %v6639, %v6861
      %v6891 = vmul.f32 %v6678, %v6861
      %v6892 = vmul.f32 %v6680, %v6861
      %v6893 = vmul.f32 %v6719, %v6861
      %v6894 = vmul.f32 %v6721, %v6861
      %6896 = vset.pattern.permute.xlu0 7
      %6897 = vperm.xlu0 %6896, %v6857
      %v6898 = vpop.permute.xlu0 %6897
      %v6900 = vadd.f32 %v6863, %v6898
      %v6901 = vadd.f32 %v6864, %v6898
      %v6902 = vadd.f32 %v6865, %v6898
      %v6903 = vadd.f32 %v6866, %v6898
      %v6904 = vadd.f32 %v6867, %v6898
      %v6905 = vadd.f32 %v6868, %v6898
      %v6906 = vadd.f32 %v6869, %v6898
      %v6907 = vadd.f32 %v6870, %v6898
      %v6908 = vadd.f32 %v6871, %v6898
      %v6909 = vadd.f32 %v6872, %v6898
      %v6910 = vadd.f32 %v6873, %v6898
      %v6911 = vadd.f32 %v6874, %v6898
      %v6912 = vadd.f32 %v6875, %v6898
      %v6913 = vadd.f32 %v6876, %v6898
      %v6914 = vadd.f32 %v6877, %v6898
      %v6915 = vadd.f32 %v6878, %v6898
      %v6916 = vadd.f32 %v6879, %v6898
      %v6917 = vadd.f32 %v6880, %v6898
      %v6918 = vadd.f32 %v6881, %v6898
      %v6919 = vadd.f32 %v6882, %v6898
      %v6920 = vadd.f32 %v6883, %v6898
      %v6921 = vadd.f32 %v6884, %v6898
      %v6922 = vadd.f32 %v6885, %v6898
      %v6923 = vadd.f32 %v6886, %v6898
      %v6924 = vadd.f32 %v6887, %v6898
      %v6925 = vadd.f32 %v6888, %v6898
      %v6926 = vadd.f32 %v6889, %v6898
      %v6927 = vadd.f32 %v6890, %v6898
      %v6928 = vadd.f32 %v6891, %v6898
      %v6929 = vadd.f32 %v6892, %v6898
      %v6930 = vadd.f32 %v6893, %v6898
      %v6931 = vadd.f32 %v6894, %v6898
      %v6932 = vadd.f32 %v6900, 3.0
      %v6933 = vadd.f32 %v6901, 3.0
      %v6934 = vadd.f32 %v6902, 3.0
      %v6935 = vadd.f32 %v6903, 3.0
      %v6936 = vadd.f32 %v6904, 3.0
      %v6937 = vadd.f32 %v6905, 3.0
      %v6938 = vadd.f32 %v6906, 3.0
      %v6939 = vadd.f32 %v6907, 3.0
      %v6940 = vadd.f32 %v6908, 3.0
      %v6941 = vadd.f32 %v6909, 3.0
      %v6942 = vadd.f32 %v6910, 3.0
      %v6943 = vadd.f32 %v6911, 3.0
      %v6944 = vadd.f32 %v6912, 3.0
      %v6945 = vadd.f32 %v6913, 3.0
      %v6946 = vadd.f32 %v6914, 3.0
      %v6947 = vadd.f32 %v6915, 3.0
      %v6948 = vadd.f32 %v6916, 3.0
      %v6949 = vadd.f32 %v6917, 3.0
      %v6950 = vadd.f32 %v6918, 3.0
      %v6951 = vadd.f32 %v6919, 3.0
      %v6952 = vadd.f32 %v6920, 3.0
      %v6953 = vadd.f32 %v6921, 3.0
      %v6954 = vadd.f32 %v6922, 3.0
      %v6955 = vadd.f32 %v6923, 3.0
      %v6956 = vadd.f32 %v6924, 3.0
      %v6957 = vadd.f32 %v6925, 3.0
      %v6958 = vadd.f32 %v6926, 3.0
      %v6959 = vadd.f32 %v6927, 3.0
      %v6960 = vadd.f32 %v6928, 3.0
      %v6961 = vadd.f32 %v6929, 3.0
      %v6962 = vadd.f32 %v6930, 3.0
      %v6963 = vadd.f32 %v6931, 3.0
      %v6964 = vmax.f32 %v6932, 0.0
      %v6965 = vmax.f32 %v6933, 0.0
      %v6966 = vmax.f32 %v6934, 0.0
      %v6967 = vmax.f32 %v6935, 0.0
      %v6968 = vmax.f32 %v6936, 0.0
      %v6969 = vmax.f32 %v6937, 0.0
      %v6970 = vmax.f32 %v6938, 0.0
      %v6971 = vmax.f32 %v6939, 0.0
      %v6972 = vmax.f32 %v6940, 0.0
      %v6973 = vmax.f32 %v6941, 0.0
      %v6974 = vmax.f32 %v6942, 0.0
      %v6975 = vmax.f32 %v6943, 0.0
      %v6976 = vmax.f32 %v6944, 0.0
      %v6977 = vmax.f32 %v6945, 0.0
      %v6978 = vmax.f32 %v6946, 0.0
      %v6979 = vmax.f32 %v6947, 0.0
      %v6980 = vmax.f32 %v6948, 0.0
      %v6981 = vmax.f32 %v6949, 0.0
      %v6982 = vmax.f32 %v6950, 0.0
      %v6983 = vmax.f32 %v6951, 0.0
      %v6984 = vmax.f32 %v6952, 0.0
      %v6985 = vmax.f32 %v6953, 0.0
      %v6986 = vmax.f32 %v6954, 0.0
      %v6987 = vmax.f32 %v6955, 0.0
      %v6988 = vmax.f32 %v6956, 0.0
      %v6989 = vmax.f32 %v6957, 0.0
      %v6990 = vmax.f32 %v6958, 0.0
      %v6991 = vmax.f32 %v6959, 0.0
      %v6992 = vmax.f32 %v6960, 0.0
      %v6993 = vmax.f32 %v6961, 0.0
      %v6994 = vmax.f32 %v6962, 0.0
      %v6995 = vmax.f32 %v6963, 0.0
      %v6996 = vmin.f32 %v6964, 6.0
      %v6997 = vmin.f32 %v6965, 6.0
      %v6998 = vmin.f32 %v6966, 6.0
      %v6999 = vmin.f32 %v6967, 6.0
      %v7000 = vmin.f32 %v6968, 6.0
      %v7001 = vmin.f32 %v6969, 6.0
      %v7002 = vmin.f32 %v6970, 6.0
      %v7003 = vmin.f32 %v6971, 6.0
      %v7004 = vmin.f32 %v6972, 6.0
      %v7005 = vmin.f32 %v6973, 6.0
      %v7006 = vmin.f32 %v6974, 6.0
      %v7007 = vmin.f32 %v6975, 6.0
      %v7008 = vmin.f32 %v6976, 6.0
      %v7009 = vmin.f32 %v6977, 6.0
      %v7010 = vmin.f32 %v6978, 6.0
      %v7011 = vmin.f32 %v6979, 6.0
      %v7012 = vmin.f32 %v6980, 6.0
      %v7013 = vmin.f32 %v6981, 6.0
      %v7014 = vmin.f32 %v6982, 6.0
      %v7015 = vmin.f32 %v6983, 6.0
      %v7016 = vmin.f32 %v6984, 6.0
      %v7017 = vmin.f32 %v6985, 6.0
      %v7018 = vmin.f32 %v6986, 6.0
      %v7019 = vmin.f32 %v6987, 6.0
      %v7020 = vmin.f32 %v6988, 6.0
      %v7021 = vmin.f32 %v6989, 6.0
      %v7022 = vmin.f32 %v6990, 6.0
      %v7023 = vmin.f32 %v6991, 6.0
      %v7024 = vmin.f32 %v6992, 6.0
      %v7025 = vmin.f32 %v6993, 6.0
      %v7026 = vmin.f32 %v6994, 6.0
      %v7027 = vmin.f32 %v6995, 6.0
      %v7028 = vmul.f32 %v6900, %v6996
      %v7029 = vmul.f32 %v6901, %v6997
      %v7030 = vmul.f32 %v6902, %v6998
      %v7031 = vmul.f32 %v6903, %v6999
      %v7032 = vmul.f32 %v6904, %v7000
      %v7033 = vmul.f32 %v6905, %v7001
      %v7034 = vmul.f32 %v6906, %v7002
      %v7035 = vmul.f32 %v6907, %v7003
      %v7036 = vmul.f32 %v6908, %v7004
      %v7037 = vmul.f32 %v6909, %v7005
      %v7038 = vmul.f32 %v6910, %v7006
      %v7039 = vmul.f32 %v6911, %v7007
      %v7040 = vmul.f32 %v6912, %v7008
      %v7041 = vmul.f32 %v6913, %v7009
      %v7042 = vmul.f32 %v6914, %v7010
      %v7043 = vmul.f32 %v6915, %v7011
      %v7044 = vmul.f32 %v6916, %v7012
      %v7045 = vmul.f32 %v6917, %v7013
      %v7046 = vmul.f32 %v6918, %v7014
      %v7047 = vmul.f32 %v6919, %v7015
      %v7048 = vmul.f32 %v6920, %v7016
      %v7049 = vmul.f32 %v6921, %v7017
      %v7050 = vmul.f32 %v6922, %v7018
      %v7051 = vmul.f32 %v6923, %v7019
      %v7052 = vmul.f32 %v6924, %v7020
      %v7053 = vmul.f32 %v6925, %v7021
      %v7054 = vmul.f32 %v6926, %v7022
      %v7055 = vmul.f32 %v6927, %v7023
      %v7056 = vmul.f32 %v6928, %v7024
      %v7057 = vmul.f32 %v6929, %v7025
      %v7058 = vmul.f32 %v6930, %v7026
      %v7059 = vmul.f32 %v6931, %v7027
      %v7060 = vmul.f32 %v7028, 0.16666667
      %v7061 = vmul.f32 %v7029, 0.16666667
      %v7062 = vmul.f32 %v7030, 0.16666667
      %v7063 = vmul.f32 %v7031, 0.16666667
      %v7064 = vmul.f32 %v7032, 0.16666667
      %v7065 = vmul.f32 %v7033, 0.16666667
      %v7066 = vmul.f32 %v7034, 0.16666667
      %v7067 = vmul.f32 %v7035, 0.16666667
      %v7068 = vmul.f32 %v7036, 0.16666667
      %v7069 = vmul.f32 %v7037, 0.16666667
      %v7070 = vmul.f32 %v7038, 0.16666667
      %v7071 = vmul.f32 %v7039, 0.16666667
      %v7072 = vmul.f32 %v7040, 0.16666667
      %v7073 = vmul.f32 %v7041, 0.16666667
      %v7074 = vmul.f32 %v7042, 0.16666667
      %v7075 = vmul.f32 %v7043, 0.16666667
      %v7076 = vmul.f32 %v7044, 0.16666667
      %v7077 = vmul.f32 %v7045, 0.16666667
      %v7078 = vmul.f32 %v7046, 0.16666667
      %v7079 = vmul.f32 %v7047, 0.16666667
      %v7080 = vmul.f32 %v7048, 0.16666667
      %v7081 = vmul.f32 %v7049, 0.16666667
      %v7082 = vmul.f32 %v7050, 0.16666667
      %v7083 = vmul.f32 %v7051, 0.16666667
      %v7084 = vmul.f32 %v7052, 0.16666667
      %v7085 = vmul.f32 %v7053, 0.16666667
      %v7086 = vmul.f32 %v7054, 0.16666667
      %v7087 = vmul.f32 %v7055, 0.16666667
      %v7088 = vmul.f32 %v7056, 0.16666667
      %v7089 = vmul.f32 %v7057, 0.16666667
      %v7090 = vmul.f32 %v7058, 0.16666667
      %v7091 = vmul.f32 %v7059, 0.16666667
      %v7092 = vld [vmem:[%s6] sm:$0x3]
      %v7093 = vpack.c.bf16 %v7060, %v7060
      %v7094 = vpack.c.bf16 %v7061, %v7061
      %v7095 = vpack.c.bf16 %v7062, %v7062
      %v7096 = vpack.c.bf16 %v7063, %v7063
      %v7097 = vpack.c.bf16 %v7064, %v7064
      %v7098 = vpack.c.bf16 %v7065, %v7065
      %v7099 = vpack.c.bf16 %v7066, %v7066
      %v7100 = vpack.c.bf16 %v7067, %v7067
      %v7101 = vpack.c.bf16 %v7068, %v7068
      %v7102 = vpack.c.bf16 %v7069, %v7069
      %v7103 = vpack.c.bf16 %v7070, %v7070
      %v7104 = vpack.c.bf16 %v7071, %v7071
      %v7105 = vpack.c.bf16 %v7072, %v7072
      %v7106 = vpack.c.bf16 %v7073, %v7073
      %v7107 = vpack.c.bf16 %v7074, %v7074
      %v7108 = vpack.c.bf16 %v7075, %v7075
      %v7109 = vpack.c.bf16 %v7076, %v7076
      %v7110 = vpack.c.bf16 %v7077, %v7077
      %v7111 = vpack.c.bf16 %v7078, %v7078
      %v7112 = vpack.c.bf16 %v7079, %v7079
      %v7113 = vpack.c.bf16 %v7080, %v7080
      %v7114 = vpack.c.bf16 %v7081, %v7081
      %v7115 = vpack.c.bf16 %v7082, %v7082
      %v7116 = vpack.c.bf16 %v7083, %v7083
      %v7117 = vpack.c.bf16 %v7084, %v7084
      %v7118 = vpack.c.bf16 %v7085, %v7085
      %v7119 = vpack.c.bf16 %v7086, %v7086
      %v7120 = vpack.c.bf16 %v7087, %v7087
      %v7121 = vpack.c.bf16 %v7088, %v7088
      %v7122 = vpack.c.bf16 %v7089, %v7089
      %v7123 = vpack.c.bf16 %v7090, %v7090
      %v7124 = vpack.c.bf16 %v7091, %v7091
      %7126 = vset.pattern.permute.xlu0 11
      %7127 = vperm.xlu0 %7126, %v337
      %v7128 = vpop.permute.xlu0 %7127
      %vm7130 = vcmask 64512
      %v7132 = vsel %vm7130, %v7092, 0
      %v7135 = vsel %vm2663, %v7093, 0
      %v7138 = vsel %vm2663, %v7094, 0
      %v7141 = vsel %vm2663, %v7095, 0
      %v7144 = vsel %vm2663, %v7096, 0
      %v7147 = vsel %vm2663, %v7097, 0
      %v7150 = vsel %vm2663, %v7098, 0
      %v7153 = vsel %vm2663, %v7099, 0
      %v7156 = vsel %vm2663, %v7100, 0
      %v7159 = vsel %vm2663, %v7101, 0
      %v7162 = vsel %vm2663, %v7102, 0
      %v7165 = vsel %vm2663, %v7103, 0
      %v7168 = vsel %vm2663, %v7104, 0
      %v7171 = vsel %vm2663, %v7105, 0
      %v7174 = vsel %vm2663, %v7106, 0
      %v7177 = vsel %vm2663, %v7107, 0
      %v7180 = vsel %vm2663, %v7108, 0
      %v7183 = vsel %vm2663, %v7109, 0
      %v7186 = vsel %vm2663, %v7110, 0
      %v7189 = vsel %vm2663, %v7111, 0
      %v7192 = vsel %vm2663, %v7112, 0
      %v7195 = vsel %vm2663, %v7113, 0
      %v7198 = vsel %vm2663, %v7114, 0
      %v7201 = vsel %vm2663, %v7115, 0
      %v7204 = vsel %vm2663, %v7116, 0
      %v7207 = vsel %vm2663, %v7117, 0
      %v7210 = vsel %vm2663, %v7118, 0
      %v7213 = vsel %vm2663, %v7119, 0
      %v7216 = vsel %vm2663, %v7120, 0
      %v7219 = vsel %vm2663, %v7121, 0
      %v7222 = vsel %vm2663, %v7122, 0
      %v7225 = vsel %vm2663, %v7123, 0
      %v7228 = vsel %vm2663, %v7124, 0
      %7230 = vmatprep.subr.bf16.mxu0 %v7138
      %7231 = vmatpush1.bf16.msra.mxu0 %v7135
      %7232 = vmatprep.subr.bf16.mxu0 0
      %7233 = vmatpush1.bf16.msra.mxu0 0
      %7234 = vmatprep.subr.bf16.mxu0 0
      %7235 = vmatpush1.bf16.msra.mxu0 0
      %7236 = vmatprep.subr.bf16.mxu0 0
      %7237 = vmatpush1.bf16.msra.mxu0 0
      %7238 = vmatprep.subr.bf16.mxu0 0
      %7239 = vmatpush1.bf16.msra.mxu0 0
      %7240 = vmatprep.subr.bf16.mxu0 0
      %7241 = vmatpush1.bf16.msra.mxu0 0
      %7242 = vmatprep.subr.bf16.mxu0 0
      %7243 = vmatpush1.bf16.msra.mxu0 0
      %7244 = vmatprep.subr.bf16.mxu0 0
      %7245 = vmatpush1.bf16.msra.mxu0 0
      %7246 = vmatprep.subr.bf16.mxu0 0
      %7247 = vmatpush1.bf16.msra.mxu0 0
      %7248 = vmatprep.subr.bf16.mxu0 0
      %7249 = vmatpush1.bf16.msra.mxu0 0
      %7250 = vmatprep.subr.bf16.mxu0 0
      %7251 = vmatpush1.bf16.msra.mxu0 0
      %7252 = vmatprep.subr.bf16.mxu0 0
      %7253 = vmatpush1.bf16.msra.mxu0 0
      %7254 = vmatprep.subr.bf16.mxu0 0
      %7255 = vmatpush1.bf16.msra.mxu0 0
      %7256 = vmatprep.subr.bf16.mxu0 0
      %7257 = vmatpush1.bf16.msra.mxu0 0
      %7258 = vmatprep.subr.bf16.mxu0 0
      %7259 = vmatpush1.bf16.msra.mxu0 0
      %7260 = vmatprep.subr.bf16.mxu0 0
      %7261 = vmatpush1.bf16.msra.mxu0 0
      %7262 = vmatprep.mubr.bf16.mxu0 0
      %7263 = vmatmul.mubr.bf16.gmra.mrb[0].mxu0 %v7132
      %v7264 = vpop.f32.mrb[0].mxu0
      %v7265 = vadd.f32 %v7128, %v7264
      %v7266 = vpop.f32.mrb[0].mxu0
      %v7267 = vadd.f32 %v7128, %v7266
      %v7268 = vpop.f32.mrb[0].mxu0
      %v7269 = vpop.f32.mrb[0].mxu0
      %7270 = vdwg.mxu0
      %7271 = vmatprep.subr.bf16.mxu0 %v7144
      %7272 = vmatpush1.bf16.msra.mxu0 %v7141
      %7273 = vmatprep.subr.bf16.mxu0 0
      %7274 = vmatpush1.bf16.msra.mxu0 0
      %7275 = vmatprep.subr.bf16.mxu0 0
      %7276 = vmatpush1.bf16.msra.mxu0 0
      %7277 = vmatprep.subr.bf16.mxu0 0
      %7278 = vmatpush1.bf16.msra.mxu0 0
      %7279 = vmatprep.subr.bf16.mxu0 0
      %7280 = vmatpush1.bf16.msra.mxu0 0
      %7281 = vmatprep.subr.bf16.mxu0 0
      %7282 = vmatpush1.bf16.msra.mxu0 0
      %7283 = vmatprep.subr.bf16.mxu0 0
      %7284 = vmatpush1.bf16.msra.mxu0 0
      %7285 = vmatprep.subr.bf16.mxu0 0
      %7286 = vmatpush1.bf16.msra.mxu0 0
      %7287 = vmatprep.subr.bf16.mxu0 0
      %7288 = vmatpush1.bf16.msra.mxu0 0
      %7289 = vmatprep.subr.bf16.mxu0 0
      %7290 = vmatpush1.bf16.msra.mxu0 0
      %7291 = vmatprep.subr.bf16.mxu0 0
      %7292 = vmatpush1.bf16.msra.mxu0 0
      %7293 = vmatprep.subr.bf16.mxu0 0
      %7294 = vmatpush1.bf16.msra.mxu0 0
      %7295 = vmatprep.subr.bf16.mxu0 0
      %7296 = vmatpush1.bf16.msra.mxu0 0
      %7297 = vmatprep.subr.bf16.mxu0 0
      %7298 = vmatpush1.bf16.msra.mxu0 0
      %7299 = vmatprep.subr.bf16.mxu0 0
      %7300 = vmatpush1.bf16.msra.mxu0 0
      %7301 = vmatprep.subr.bf16.mxu0 0
      %7302 = vmatpush1.bf16.msra.mxu0 0
      %7303 = vmatprep.mubr.bf16.mxu0 0
      %7304 = vmatmul.mubr.bf16.gmra.mrb[0].mxu0 %v7132
      %v7305 = vpop.f32.mrb[0].mxu0
      %v7306 = vadd.f32 %v7128, %v7305
      %v7307 = vpop.f32.mrb[0].mxu0
      %v7308 = vadd.f32 %v7128, %v7307
      %v7309 = vpop.f32.mrb[0].mxu0
      %v7310 = vpop.f32.mrb[0].mxu0
      %7311 = vdwg.mxu0
      %7312 = vmatprep.subr.bf16.mxu0 %v7150
      %7313 = vmatpush1.bf16.msra.mxu0 %v7147
      %7314 = vmatprep.subr.bf16.mxu0 0
      %7315 = vmatpush1.bf16.msra.mxu0 0
      %7316 = vmatprep.subr.bf16.mxu0 0
      %7317 = vmatpush1.bf16.msra.mxu0 0
      %7318 = vmatprep.subr.bf16.mxu0 0
      %7319 = vmatpush1.bf16.msra.mxu0 0
      %7320 = vmatprep.subr.bf16.mxu0 0
      %7321 = vmatpush1.bf16.msra.mxu0 0
      %7322 = vmatprep.subr.bf16.mxu0 0
      %7323 = vmatpush1.bf16.msra.mxu0 0
      %7324 = vmatprep.subr.bf16.mxu0 0
      %7325 = vmatpush1.bf16.msra.mxu0 0
      %7326 = vmatprep.subr.bf16.mxu0 0
      %7327 = vmatpush1.bf16.msra.mxu0 0
      %7328 = vmatprep.subr.bf16.mxu0 0
      %7329 = vmatpush1.bf16.msra.mxu0 0
      %7330 = vmatprep.subr.bf16.mxu0 0
      %7331 = vmatpush1.bf16.msra.mxu0 0
      %7332 = vmatprep.subr.bf16.mxu0 0
      %7333 = vmatpush1.bf16.msra.mxu0 0
      %7334 = vmatprep.subr.bf16.mxu0 0
      %7335 = vmatpush1.bf16.msra.mxu0 0
      %7336 = vmatprep.subr.bf16.mxu0 0
      %7337 = vmatpush1.bf16.msra.mxu0 0
      %7338 = vmatprep.subr.bf16.mxu0 0
      %7339 = vmatpush1.bf16.msra.mxu0 0
      %7340 = vmatprep.subr.bf16.mxu0 0
      %7341 = vmatpush1.bf16.msra.mxu0 0
      %7342 = vmatprep.subr.bf16.mxu0 0
      %7343 = vmatpush1.bf16.msra.mxu0 0
      %7344 = vmatprep.mubr.bf16.mxu0 0
      %7345 = vmatmul.mubr.bf16.gmra.mrb[0].mxu0 %v7132
      %v7346 = vpop.f32.mrb[0].mxu0
      %v7347 = vadd.f32 %v7128, %v7346
      %v7348 = vpop.f32.mrb[0].mxu0
      %v7349 = vadd.f32 %v7128, %v7348
      %v7350 = vpop.f32.mrb[0].mxu0
      %v7351 = vpop.f32.mrb[0].mxu0
      %7352 = vdwg.mxu0
      %7353 = vmatprep.subr.bf16.mxu0 %v7156
      %7354 = vmatpush1.bf16.msra.mxu0 %v7153
      %7355 = vmatprep.subr.bf16.mxu0 0
      %7356 = vmatpush1.bf16.msra.mxu0 0
      %7357 = vmatprep.subr.bf16.mxu0 0
      %7358 = vmatpush1.bf16.msra.mxu0 0
      %7359 = vmatprep.subr.bf16.mxu0 0
      %7360 = vmatpush1.bf16.msra.mxu0 0
      %7361 = vmatprep.subr.bf16.mxu0 0
      %7362 = vmatpush1.bf16.msra.mxu0 0
      %7363 = vmatprep.subr.bf16.mxu0 0
      %7364 = vmatpush1.bf16.msra.mxu0 0
      %7365 = vmatprep.subr.bf16.mxu0 0
      %7366 = vmatpush1.bf16.msra.mxu0 0
      %7367 = vmatprep.subr.bf16.mxu0 0
      %7368 = vmatpush1.bf16.msra.mxu0 0
      %7369 = vmatprep.subr.bf16.mxu0 0
      %7370 = vmatpush1.bf16.msra.mxu0 0
      %7371 = vmatprep.subr.bf16.mxu0 0
      %7372 = vmatpush1.bf16.msra.mxu0 0
      %7373 = vmatprep.subr.bf16.mxu0 0
      %7374 = vmatpush1.bf16.msra.mxu0 0
      %7375 = vmatprep.subr.bf16.mxu0 0
      %7376 = vmatpush1.bf16.msra.mxu0 0
      %7377 = vmatprep.subr.bf16.mxu0 0
      %7378 = vmatpush1.bf16.msra.mxu0 0
      %7379 = vmatprep.subr.bf16.mxu0 0
      %7380 = vmatpush1.bf16.msra.mxu0 0
      %7381 = vmatprep.subr.bf16.mxu0 0
      %7382 = vmatpush1.bf16.msra.mxu0 0
      %7383 = vmatprep.subr.bf16.mxu0 0
      %7384 = vmatpush1.bf16.msra.mxu0 0
      %7385 = vmatprep.mubr.bf16.mxu0 0
      %7386 = vmatmul.mubr.bf16.gmra.mrb[0].mxu0 %v7132
      %v7387 = vpop.f32.mrb[0].mxu0
      %v7388 = vadd.f32 %v7128, %v7387
      %v7389 = vpop.f32.mrb[0].mxu0
      %v7390 = vadd.f32 %v7128, %v7389
      %v7391 = vpop.f32.mrb[0].mxu0
      %v7392 = vpop.f32.mrb[0].mxu0
      %7393 = vdwg.mxu0
      %7394 = vmatprep.subr.bf16.mxu0 %v7162
      %7395 = vmatpush1.bf16.msra.mxu0 %v7159
      %7396 = vmatprep.subr.bf16.mxu0 0
      %7397 = vmatpush1.bf16.msra.mxu0 0
      %7398 = vmatprep.subr.bf16.mxu0 0
      %7399 = vmatpush1.bf16.msra.mxu0 0
      %7400 = vmatprep.subr.bf16.mxu0 0
      %7401 = vmatpush1.bf16.msra.mxu0 0
      %7402 = vmatprep.subr.bf16.mxu0 0
      %7403 = vmatpush1.bf16.msra.mxu0 0
      %7404 = vmatprep.subr.bf16.mxu0 0
      %7405 = vmatpush1.bf16.msra.mxu0 0
      %7406 = vmatprep.subr.bf16.mxu0 0
      %7407 = vmatpush1.bf16.msra.mxu0 0
      %7408 = vmatprep.subr.bf16.mxu0 0
      %7409 = vmatpush1.bf16.msra.mxu0 0
      %7410 = vmatprep.subr.bf16.mxu0 0
      %7411 = vmatpush1.bf16.msra.mxu0 0
      %7412 = vmatprep.subr.bf16.mxu0 0
      %7413 = vmatpush1.bf16.msra.mxu0 0
      %7414 = vmatprep.subr.bf16.mxu0 0
      %7415 = vmatpush1.bf16.msra.mxu0 0
      %7416 = vmatprep.subr.bf16.mxu0 0
      %7417 = vmatpush1.bf16.msra.mxu0 0
      %7418 = vmatprep.subr.bf16.mxu0 0
      %7419 = vmatpush1.bf16.msra.mxu0 0
      %7420 = vmatprep.subr.bf16.mxu0 0
      %7421 = vmatpush1.bf16.msra.mxu0 0
      %7422 = vmatprep.subr.bf16.mxu0 0
      %7423 = vmatpush1.bf16.msra.mxu0 0
      %7424 = vmatprep.subr.bf16.mxu0 0
      %7425 = vmatpush1.bf16.msra.mxu0 0
      %7426 = vmatprep.mubr.bf16.mxu0 0
      %7427 = vmatmul.mubr.bf16.gmra.mrb[0].mxu0 %v7132
      %v7428 = vpop.f32.mrb[0].mxu0
      %v7429 = vadd.f32 %v7128, %v7428
      %v7430 = vpop.f32.mrb[0].mxu0
      %v7431 = vadd.f32 %v7128, %v7430
      %v7432 = vpop.f32.mrb[0].mxu0
      %v7433 = vpop.f32.mrb[0].mxu0
      %7434 = vdwg.mxu0
      %7435 = vmatprep.subr.bf16.mxu0 %v7168
      %7436 = vmatpush1.bf16.msra.mxu0 %v7165
      %7437 = vmatprep.subr.bf16.mxu0 0
      %7438 = vmatpush1.bf16.msra.mxu0 0
      %7439 = vmatprep.subr.bf16.mxu0 0
      %7440 = vmatpush1.bf16.msra.mxu0 0
      %7441 = vmatprep.subr.bf16.mxu0 0
      %7442 = vmatpush1.bf16.msra.mxu0 0
      %7443 = vmatprep.subr.bf16.mxu0 0
      %7444 = vmatpush1.bf16.msra.mxu0 0
      %7445 = vmatprep.subr.bf16.mxu0 0
      %7446 = vmatpush1.bf16.msra.mxu0 0
      %7447 = vmatprep.subr.bf16.mxu0 0
      %7448 = vmatpush1.bf16.msra.mxu0 0
      %7449 = vmatprep.subr.bf16.mxu0 0
      %7450 = vmatpush1.bf16.msra.mxu0 0
      %7451 = vmatprep.subr.bf16.mxu0 0
      %7452 = vmatpush1.bf16.msra.mxu0 0
      %7453 = vmatprep.subr.bf16.mxu0 0
      %7454 = vmatpush1.bf16.msra.mxu0 0
      %7455 = vmatprep.subr.bf16.mxu0 0
      %7456 = vmatpush1.bf16.msra.mxu0 0
      %7457 = vmatprep.subr.bf16.mxu0 0
      %7458 = vmatpush1.bf16.msra.mxu0 0
      %7459 = vmatprep.subr.bf16.mxu0 0
      %7460 = vmatpush1.bf16.msra.mxu0 0
      %7461 = vmatprep.subr.bf16.mxu0 0
      %7462 = vmatpush1.bf16.msra.mxu0 0
      %7463 = vmatprep.subr.bf16.mxu0 0
      %7464 = vmatpush1.bf16.msra.mxu0 0
      %7465 = vmatprep.subr.bf16.mxu0 0
      %7466 = vmatpush1.bf16.msra.mxu0 0
      %7467 = vmatprep.mubr.bf16.mxu0 0
      %7468 = vmatmul.mubr.bf16.gmra.mrb[0].mxu0 %v7132
      %v7469 = vpop.f32.mrb[0].mxu0
      %v7470 = vadd.f32 %v7128, %v7469
      %v7471 = vpop.f32.mrb[0].mxu0
      %v7472 = vadd.f32 %v7128, %v7471
      %v7473 = vpop.f32.mrb[0].mxu0
      %v7474 = vpop.f32.mrb[0].mxu0
      %7475 = vdwg.mxu0
      %7476 = vmatprep.subr.bf16.mxu0 %v7174
      %7477 = vmatpush1.bf16.msra.mxu0 %v7171
      %7478 = vmatprep.subr.bf16.mxu0 0
      %7479 = vmatpush1.bf16.msra.mxu0 0
      %7480 = vmatprep.subr.bf16.mxu0 0
      %7481 = vmatpush1.bf16.msra.mxu0 0
      %7482 = vmatprep.subr.bf16.mxu0 0
      %7483 = vmatpush1.bf16.msra.mxu0 0
      %7484 = vmatprep.subr.bf16.mxu0 0
      %7485 = vmatpush1.bf16.msra.mxu0 0
      %7486 = vmatprep.subr.bf16.mxu0 0
      %7487 = vmatpush1.bf16.msra.mxu0 0
      %7488 = vmatprep.subr.bf16.mxu0 0
      %7489 = vmatpush1.bf16.msra.mxu0 0
      %7490 = vmatprep.subr.bf16.mxu0 0
      %7491 = vmatpush1.bf16.msra.mxu0 0
      %7492 = vmatprep.subr.bf16.mxu0 0
      %7493 = vmatpush1.bf16.msra.mxu0 0
      %7494 = vmatprep.subr.bf16.mxu0 0
      %7495 = vmatpush1.bf16.msra.mxu0 0
      %7496 = vmatprep.subr.bf16.mxu0 0
      %7497 = vmatpush1.bf16.msra.mxu0 0
      %7498 = vmatprep.subr.bf16.mxu0 0
      %7499 = vmatpush1.bf16.msra.mxu0 0
      %7500 = vmatprep.subr.bf16.mxu0 0
      %7501 = vmatpush1.bf16.msra.mxu0 0
      %7502 = vmatprep.subr.bf16.mxu0 0
      %7503 = vmatpush1.bf16.msra.mxu0 0
      %7504 = vmatprep.subr.bf16.mxu0 0
      %7505 = vmatpush1.bf16.msra.mxu0 0
      %7506 = vmatprep.subr.bf16.mxu0 0
      %7507 = vmatpush1.bf16.msra.mxu0 0
      %7508 = vmatprep.mubr.bf16.mxu0 0
      %7509 = vmatmul.mubr.bf16.gmra.mrb[0].mxu0 %v7132
      %v7510 = vpop.f32.mrb[0].mxu0
      %v7511 = vadd.f32 %v7128, %v7510
      %v7512 = vpop.f32.mrb[0].mxu0
      %v7513 = vadd.f32 %v7128, %v7512
      %v7514 = vpop.f32.mrb[0].mxu0
      %v7515 = vpop.f32.mrb[0].mxu0
      %7516 = vdwg.mxu0
      %7517 = vmatprep.subr.bf16.mxu0 %v7180
      %7518 = vmatpush1.bf16.msra.mxu0 %v7177
      %7519 = vmatprep.subr.bf16.mxu0 0
      %7520 = vmatpush1.bf16.msra.mxu0 0
      %7521 = vmatprep.subr.bf16.mxu0 0
      %7522 = vmatpush1.bf16.msra.mxu0 0
      %7523 = vmatprep.subr.bf16.mxu0 0
      %7524 = vmatpush1.bf16.msra.mxu0 0
      %7525 = vmatprep.subr.bf16.mxu0 0
      %7526 = vmatpush1.bf16.msra.mxu0 0
      %7527 = vmatprep.subr.bf16.mxu0 0
      %7528 = vmatpush1.bf16.msra.mxu0 0
      %7529 = vmatprep.subr.bf16.mxu0 0
      %7530 = vmatpush1.bf16.msra.mxu0 0
      %7531 = vmatprep.subr.bf16.mxu0 0
      %7532 = vmatpush1.bf16.msra.mxu0 0
      %7533 = vmatprep.subr.bf16.mxu0 0
      %7534 = vmatpush1.bf16.msra.mxu0 0
      %7535 = vmatprep.subr.bf16.mxu0 0
      %7536 = vmatpush1.bf16.msra.mxu0 0
      %7537 = vmatprep.subr.bf16.mxu0 0
      %7538 = vmatpush1.bf16.msra.mxu0 0
      %7539 = vmatprep.subr.bf16.mxu0 0
      %7540 = vmatpush1.bf16.msra.mxu0 0
      %7541 = vmatprep.subr.bf16.mxu0 0
      %7542 = vmatpush1.bf16.msra.mxu0 0
      %7543 = vmatprep.subr.bf16.mxu0 0
      %7544 = vmatpush1.bf16.msra.mxu0 0
      %7545 = vmatprep.subr.bf16.mxu0 0
      %7546 = vmatpush1.bf16.msra.mxu0 0
      %7547 = vmatprep.subr.bf16.mxu0 0
      %7548 = vmatpush1.bf16.msra.mxu0 0
      %7549 = vmatprep.mubr.bf16.mxu0 0
      %7550 = vmatmul.mubr.bf16.gmra.mrb[0].mxu0 %v7132
      %v7551 = vpop.f32.mrb[0].mxu0
      %v7552 = vadd.f32 %v7128, %v7551
      %v7553 = vpop.f32.mrb[0].mxu0
      %v7554 = vadd.f32 %v7128, %v7553
      %v7555 = vpop.f32.mrb[0].mxu0
      %v7556 = vpop.f32.mrb[0].mxu0
      %7557 = vdwg.mxu0
      %7558 = vmatprep.subr.bf16.mxu0 %v7186
      %7559 = vmatpush1.bf16.msra.mxu0 %v7183
      %7560 = vmatprep.subr.bf16.mxu0 0
      %7561 = vmatpush1.bf16.msra.mxu0 0
      %7562 = vmatprep.subr.bf16.mxu0 0
      %7563 = vmatpush1.bf16.msra.mxu0 0
      %7564 = vmatprep.subr.bf16.mxu0 0
      %7565 = vmatpush1.bf16.msra.mxu0 0
      %7566 = vmatprep.subr.bf16.mxu0 0
      %7567 = vmatpush1.bf16.msra.mxu0 0
      %7568 = vmatprep.subr.bf16.mxu0 0
      %7569 = vmatpush1.bf16.msra.mxu0 0
      %7570 = vmatprep.subr.bf16.mxu0 0
      %7571 = vmatpush1.bf16.msra.mxu0 0
      %7572 = vmatprep.subr.bf16.mxu0 0
      %7573 = vmatpush1.bf16.msra.mxu0 0
      %7574 = vmatprep.subr.bf16.mxu0 0
      %7575 = vmatpush1.bf16.msra.mxu0 0
      %7576 = vmatprep.subr.bf16.mxu0 0
      %7577 = vmatpush1.bf16.msra.mxu0 0
      %7578 = vmatprep.subr.bf16.mxu0 0
      %7579 = vmatpush1.bf16.msra.mxu0 0
      %7580 = vmatprep.subr.bf16.mxu0 0
      %7581 = vmatpush1.bf16.msra.mxu0 0
      %7582 = vmatprep.subr.bf16.mxu0 0
      %7583 = vmatpush1.bf16.msra.mxu0 0
      %7584 = vmatprep.subr.bf16.mxu0 0
      %7585 = vmatpush1.bf16.msra.mxu0 0
      %7586 = vmatprep.subr.bf16.mxu0 0
      %7587 = vmatpush1.bf16.msra.mxu0 0
      %7588 = vmatprep.subr.bf16.mxu0 0
      %7589 = vmatpush1.bf16.msra.mxu0 0
      %7590 = vmatprep.mubr.bf16.mxu0 0
      %7591 = vmatmul.mubr.bf16.gmra.mrb[0].mxu0 %v7132
      %v7592 = vpop.f32.mrb[0].mxu0
      %v7593 = vadd.f32 %v7128, %v7592
      %v7594 = vpop.f32.mrb[0].mxu0
      %v7595 = vadd.f32 %v7128, %v7594
      %v7596 = vpop.f32.mrb[0].mxu0
      %v7597 = vpop.f32.mrb[0].mxu0
      %7598 = vdwg.mxu0
      %7599 = vmatprep.subr.bf16.mxu0 %v7192
      %7600 = vmatpush1.bf16.msra.mxu0 %v7189
      %7601 = vmatprep.subr.bf16.mxu0 0
      %7602 = vmatpush1.bf16.msra.mxu0 0
      %7603 = vmatprep.subr.bf16.mxu0 0
      %7604 = vmatpush1.bf16.msra.mxu0 0
      %7605 = vmatprep.subr.bf16.mxu0 0
      %7606 = vmatpush1.bf16.msra.mxu0 0
      %7607 = vmatprep.subr.bf16.mxu0 0
      %7608 = vmatpush1.bf16.msra.mxu0 0
      %7609 = vmatprep.subr.bf16.mxu0 0
      %7610 = vmatpush1.bf16.msra.mxu0 0
      %7611 = vmatprep.subr.bf16.mxu0 0
      %7612 = vmatpush1.bf16.msra.mxu0 0
      %7613 = vmatprep.subr.bf16.mxu0 0
      %7614 = vmatpush1.bf16.msra.mxu0 0
      %7615 = vmatprep.subr.bf16.mxu0 0
      %7616 = vmatpush1.bf16.msra.mxu0 0
      %7617 = vmatprep.subr.bf16.mxu0 0
      %7618 = vmatpush1.bf16.msra.mxu0 0
      %7619 = vmatprep.subr.bf16.mxu0 0
      %7620 = vmatpush1.bf16.msra.mxu0 0
      %7621 = vmatprep.subr.bf16.mxu0 0
      %7622 = vmatpush1.bf16.msra.mxu0 0
      %7623 = vmatprep.subr.bf16.mxu0 0
      %7624 = vmatpush1.bf16.msra.mxu0 0
      %7625 = vmatprep.subr.bf16.mxu0 0
      %7626 = vmatpush1.bf16.msra.mxu0 0
      %7627 = vmatprep.subr.bf16.mxu0 0
      %7628 = vmatpush1.bf16.msra.mxu0 0
      %7629 = vmatprep.subr.bf16.mxu0 0
      %7630 = vmatpush1.bf16.msra.mxu0 0
      %7631 = vmatprep.mubr.bf16.mxu0 0
      %7632 = vmatmul.mubr.bf16.gmra.mrb[0].mxu0 %v7132
      %v7633 = vpop.f32.mrb[0].mxu0
      %v7634 = vadd.f32 %v7128, %v7633
      %v7635 = vpop.f32.mrb[0].mxu0
      %v7636 = vadd.f32 %v7128, %v7635
      %v7637 = vpop.f32.mrb[0].mxu0
      %v7638 = vpop.f32.mrb[0].mxu0
      %7639 = vdwg.mxu0
      %7640 = vmatprep.subr.bf16.mxu0 %v7198
      %7641 = vmatpush1.bf16.msra.mxu0 %v7195
      %7642 = vmatprep.subr.bf16.mxu0 0
      %7643 = vmatpush1.bf16.msra.mxu0 0
      %7644 = vmatprep.subr.bf16.mxu0 0
      %7645 = vmatpush1.bf16.msra.mxu0 0
      %7646 = vmatprep.subr.bf16.mxu0 0
      %7647 = vmatpush1.bf16.msra.mxu0 0
      %7648 = vmatprep.subr.bf16.mxu0 0
      %7649 = vmatpush1.bf16.msra.mxu0 0
      %7650 = vmatprep.subr.bf16.mxu0 0
      %7651 = vmatpush1.bf16.msra.mxu0 0
      %7652 = vmatprep.subr.bf16.mxu0 0
      %7653 = vmatpush1.bf16.msra.mxu0 0
      %7654 = vmatprep.subr.bf16.mxu0 0
      %7655 = vmatpush1.bf16.msra.mxu0 0
      %7656 = vmatprep.subr.bf16.mxu0 0
      %7657 = vmatpush1.bf16.msra.mxu0 0
      %7658 = vmatprep.subr.bf16.mxu0 0
      %7659 = vmatpush1.bf16.msra.mxu0 0
      %7660 = vmatprep.subr.bf16.mxu0 0
      %7661 = vmatpush1.bf16.msra.mxu0 0
      %7662 = vmatprep.subr.bf16.mxu0 0
      %7663 = vmatpush1.bf16.msra.mxu0 0
      %7664 = vmatprep.subr.bf16.mxu0 0
      %7665 = vmatpush1.bf16.msra.mxu0 0
      %7666 = vmatprep.subr.bf16.mxu0 0
      %7667 = vmatpush1.bf16.msra.mxu0 0
      %7668 = vmatprep.subr.bf16.mxu0 0
      %7669 = vmatpush1.bf16.msra.mxu0 0
      %7670 = vmatprep.subr.bf16.mxu0 0
      %7671 = vmatpush1.bf16.msra.mxu0 0
      %7672 = vmatprep.mubr.bf16.mxu0 0
      %7673 = vmatmul.mubr.bf16.gmra.mrb[0].mxu0 %v7132
      %v7674 = vpop.f32.mrb[0].mxu0
      %v7675 = vadd.f32 %v7128, %v7674
      %v7676 = vpop.f32.mrb[0].mxu0
      %v7677 = vadd.f32 %v7128, %v7676
      %v7678 = vpop.f32.mrb[0].mxu0
      %v7679 = vpop.f32.mrb[0].mxu0
      %7680 = vdwg.mxu0
      %7681 = vmatprep.subr.bf16.mxu0 %v7204
      %7682 = vmatpush1.bf16.msra.mxu0 %v7201
      %7683 = vmatprep.subr.bf16.mxu0 0
      %7684 = vmatpush1.bf16.msra.mxu0 0
      %7685 = vmatprep.subr.bf16.mxu0 0
      %7686 = vmatpush1.bf16.msra.mxu0 0
      %7687 = vmatprep.subr.bf16.mxu0 0
      %7688 = vmatpush1.bf16.msra.mxu0 0
      %7689 = vmatprep.subr.bf16.mxu0 0
      %7690 = vmatpush1.bf16.msra.mxu0 0
      %7691 = vmatprep.subr.bf16.mxu0 0
      %7692 = vmatpush1.bf16.msra.mxu0 0
      %7693 = vmatprep.subr.bf16.mxu0 0
      %7694 = vmatpush1.bf16.msra.mxu0 0
      %7695 = vmatprep.subr.bf16.mxu0 0
      %7696 = vmatpush1.bf16.msra.mxu0 0
      %7697 = vmatprep.subr.bf16.mxu0 0
      %7698 = vmatpush1.bf16.msra.mxu0 0
      %7699 = vmatprep.subr.bf16.mxu0 0
      %7700 = vmatpush1.bf16.msra.mxu0 0
      %7701 = vmatprep.subr.bf16.mxu0 0
      %7702 = vmatpush1.bf16.msra.mxu0 0
      %7703 = vmatprep.subr.bf16.mxu0 0
      %7704 = vmatpush1.bf16.msra.mxu0 0
      %7705 = vmatprep.subr.bf16.mxu0 0
      %7706 = vmatpush1.bf16.msra.mxu0 0
      %7707 = vmatprep.subr.bf16.mxu0 0
      %7708 = vmatpush1.bf16.msra.mxu0 0
      %7709 = vmatprep.subr.bf16.mxu0 0
      %7710 = vmatpush1.bf16.msra.mxu0 0
      %7711 = vmatprep.subr.bf16.mxu0 0
      %7712 = vmatpush1.bf16.msra.mxu0 0
      %7713 = vmatprep.mubr.bf16.mxu0 0
      %7714 = vmatmul.mubr.bf16.gmra.mrb[0].mxu0 %v7132
      %v7715 = vpop.f32.mrb[0].mxu0
      %v7716 = vadd.f32 %v7128, %v7715
      %v7717 = vpop.f32.mrb[0].mxu0
      %v7718 = vadd.f32 %v7128, %v7717
      %v7719 = vpop.f32.mrb[0].mxu0
      %v7720 = vpop.f32.mrb[0].mxu0
      %7721 = vdwg.mxu0
      %7722 = vmatprep.subr.bf16.mxu0 %v7210
      %7723 = vmatpush1.bf16.msra.mxu0 %v7207
      %7724 = vmatprep.subr.bf16.mxu0 0
      %7725 = vmatpush1.bf16.msra.mxu0 0
      %7726 = vmatprep.subr.bf16.mxu0 0
      %7727 = vmatpush1.bf16.msra.mxu0 0
      %7728 = vmatprep.subr.bf16.mxu0 0
      %7729 = vmatpush1.bf16.msra.mxu0 0
      %7730 = vmatprep.subr.bf16.mxu0 0
      %7731 = vmatpush1.bf16.msra.mxu0 0
      %7732 = vmatprep.subr.bf16.mxu0 0
      %7733 = vmatpush1.bf16.msra.mxu0 0
      %7734 = vmatprep.subr.bf16.mxu0 0
      %7735 = vmatpush1.bf16.msra.mxu0 0
      %7736 = vmatprep.subr.bf16.mxu0 0
      %7737 = vmatpush1.bf16.msra.mxu0 0
      %7738 = vmatprep.subr.bf16.mxu0 0
      %7739 = vmatpush1.bf16.msra.mxu0 0
      %7740 = vmatprep.subr.bf16.mxu0 0
      %7741 = vmatpush1.bf16.msra.mxu0 0
      %7742 = vmatprep.subr.bf16.mxu0 0
      %7743 = vmatpush1.bf16.msra.mxu0 0
      %7744 = vmatprep.subr.bf16.mxu0 0
      %7745 = vmatpush1.bf16.msra.mxu0 0
      %7746 = vmatprep.subr.bf16.mxu0 0
      %7747 = vmatpush1.bf16.msra.mxu0 0
      %7748 = vmatprep.subr.bf16.mxu0 0
      %7749 = vmatpush1.bf16.msra.mxu0 0
      %7750 = vmatprep.subr.bf16.mxu0 0
      %7751 = vmatpush1.bf16.msra.mxu0 0
      %7752 = vmatprep.subr.bf16.mxu0 0
      %7753 = vmatpush1.bf16.msra.mxu0 0
      %7754 = vmatprep.mubr.bf16.mxu0 0
      %7755 = vmatmul.mubr.bf16.gmra.mrb[0].mxu0 %v7132
      %v7756 = vpop.f32.mrb[0].mxu0
      %v7757 = vadd.f32 %v7128, %v7756
      %v7758 = vpop.f32.mrb[0].mxu0
      %v7759 = vadd.f32 %v7128, %v7758
      %v7760 = vpop.f32.mrb[0].mxu0
      %v7761 = vpop.f32.mrb[0].mxu0
      %7762 = vdwg.mxu0
      %7763 = vmatprep.subr.bf16.mxu0 %v7216
      %7764 = vmatpush1.bf16.msra.mxu0 %v7213
      %7765 = vmatprep.subr.bf16.mxu0 0
      %7766 = vmatpush1.bf16.msra.mxu0 0
      %7767 = vmatprep.subr.bf16.mxu0 0
      %7768 = vmatpush1.bf16.msra.mxu0 0
      %7769 = vmatprep.subr.bf16.mxu0 0
      %7770 = vmatpush1.bf16.msra.mxu0 0
      %7771 = vmatprep.subr.bf16.mxu0 0
      %7772 = vmatpush1.bf16.msra.mxu0 0
      %7773 = vmatprep.subr.bf16.mxu0 0
      %7774 = vmatpush1.bf16.msra.mxu0 0
      %7775 = vmatprep.subr.bf16.mxu0 0
      %7776 = vmatpush1.bf16.msra.mxu0 0
      %7777 = vmatprep.subr.bf16.mxu0 0
      %7778 = vmatpush1.bf16.msra.mxu0 0
      %7779 = vmatprep.subr.bf16.mxu0 0
      %7780 = vmatpush1.bf16.msra.mxu0 0
      %7781 = vmatprep.subr.bf16.mxu0 0
      %7782 = vmatpush1.bf16.msra.mxu0 0
      %7783 = vmatprep.subr.bf16.mxu0 0
      %7784 = vmatpush1.bf16.msra.mxu0 0
      %7785 = vmatprep.subr.bf16.mxu0 0
      %7786 = vmatpush1.bf16.msra.mxu0 0
      %7787 = vmatprep.subr.bf16.mxu0 0
      %7788 = vmatpush1.bf16.msra.mxu0 0
      %7789 = vmatprep.subr.bf16.mxu0 0
      %7790 = vmatpush1.bf16.msra.mxu0 0
      %7791 = vmatprep.subr.bf16.mxu0 0
      %7792 = vmatpush1.bf16.msra.mxu0 0
      %7793 = vmatprep.subr.bf16.mxu0 0
      %7794 = vmatpush1.bf16.msra.mxu0 0
      %7795 = vmatprep.mubr.bf16.mxu0 0
      %7796 = vmatmul.mubr.bf16.gmra.mrb[0].mxu0 %v7132
      %v7797 = vpop.f32.mrb[0].mxu0
      %v7798 = vadd.f32 %v7128, %v7797
      %v7799 = vpop.f32.mrb[0].mxu0
      %v7800 = vadd.f32 %v7128, %v7799
      %v7801 = vpop.f32.mrb[0].mxu0
      %v7802 = vpop.f32.mrb[0].mxu0
      %7803 = vdwg.mxu0
      %7804 = vmatprep.subr.bf16.mxu0 %v7222
      %7805 = vmatpush1.bf16.msra.mxu0 %v7219
      %7806 = vmatprep.subr.bf16.mxu0 0
      %7807 = vmatpush1.bf16.msra.mxu0 0
      %7808 = vmatprep.subr.bf16.mxu0 0
      %7809 = vmatpush1.bf16.msra.mxu0 0
      %7810 = vmatprep.subr.bf16.mxu0 0
      %7811 = vmatpush1.bf16.msra.mxu0 0
      %7812 = vmatprep.subr.bf16.mxu0 0
      %7813 = vmatpush1.bf16.msra.mxu0 0
      %7814 = vmatprep.subr.bf16.mxu0 0
      %7815 = vmatpush1.bf16.msra.mxu0 0
      %7816 = vmatprep.subr.bf16.mxu0 0
      %7817 = vmatpush1.bf16.msra.mxu0 0
      %7818 = vmatprep.subr.bf16.mxu0 0
      %7819 = vmatpush1.bf16.msra.mxu0 0
      %7820 = vmatprep.subr.bf16.mxu0 0
      %7821 = vmatpush1.bf16.msra.mxu0 0
      %7822 = vmatprep.subr.bf16.mxu0 0
      %7823 = vmatpush1.bf16.msra.mxu0 0
      %7824 = vmatprep.subr.bf16.mxu0 0
      %7825 = vmatpush1.bf16.msra.mxu0 0
      %7826 = vmatprep.subr.bf16.mxu0 0
      %7827 = vmatpush1.bf16.msra.mxu0 0
      %7828 = vmatprep.subr.bf16.mxu0 0
      %7829 = vmatpush1.bf16.msra.mxu0 0
      %7830 = vmatprep.subr.bf16.mxu0 0
      %7831 = vmatpush1.bf16.msra.mxu0 0
      %7832 = vmatprep.subr.bf16.mxu0 0
      %7833 = vmatpush1.bf16.msra.mxu0 0
      %7834 = vmatprep.subr.bf16.mxu0 0
      %7835 = vmatpush1.bf16.msra.mxu0 0
      %7836 = vmatprep.mubr.bf16.mxu0 0
      %7837 = vmatmul.mubr.bf16.gmra.mrb[0].mxu0 %v7132
      %v7838 = vpop.f32.mrb[0].mxu0
      %v7839 = vadd.f32 %v7128, %v7838
      %v7840 = vpop.f32.mrb[0].mxu0
      %v7841 = vadd.f32 %v7128, %v7840
      %v7842 = vpop.f32.mrb[0].mxu0
      %v7843 = vpop.f32.mrb[0].mxu0
      %7844 = vdwg.mxu0
      %7845 = vmatprep.subr.bf16.mxu0 %v7228
      %7846 = vmatpush1.bf16.msra.mxu0 %v7225
      %7847 = vmatprep.subr.bf16.mxu0 0
      %7848 = vmatpush1.bf16.msra.mxu0 0
      %7849 = vmatprep.subr.bf16.mxu0 0
      %7850 = vmatpush1.bf16.msra.mxu0 0
      %7851 = vmatprep.subr.bf16.mxu0 0
      %7852 = vmatpush1.bf16.msra.mxu0 0
      %7853 = vmatprep.subr.bf16.mxu0 0
      %7854 = vmatpush1.bf16.msra.mxu0 0
      %7855 = vmatprep.subr.bf16.mxu0 0
      %7856 = vmatpush1.bf16.msra.mxu0 0
      %7857 = vmatprep.subr.bf16.mxu0 0
      %7858 = vmatpush1.bf16.msra.mxu0 0
      %7859 = vmatprep.subr.bf16.mxu0 0
      %7860 = vmatpush1.bf16.msra.mxu0 0
      %7861 = vmatprep.subr.bf16.mxu0 0
      %7862 = vmatpush1.bf16.msra.mxu0 0
      %7863 = vmatprep.subr.bf16.mxu0 0
      %7864 = vmatpush1.bf16.msra.mxu0 0
      %7865 = vmatprep.subr.bf16.mxu0 0
      %7866 = vmatpush1.bf16.msra.mxu0 0
      %7867 = vmatprep.subr.bf16.mxu0 0
      %7868 = vmatpush1.bf16.msra.mxu0 0
      %7869 = vmatprep.subr.bf16.mxu0 0
      %7870 = vmatpush1.bf16.msra.mxu0 0
      %7871 = vmatprep.subr.bf16.mxu0 0
      %7872 = vmatpush1.bf16.msra.mxu0 0
      %7873 = vmatprep.subr.bf16.mxu0 0
      %7874 = vmatpush1.bf16.msra.mxu0 0
      %7875 = vmatprep.subr.bf16.mxu0 0
      %7876 = vmatpush1.bf16.msra.mxu0 0
      %7877 = vmatprep.mubr.bf16.mxu0 0
      %7878 = vmatmul.mubr.bf16.gmra.mrb[0].mxu0 %v7132
      %v7879 = vpop.f32.mrb[0].mxu0
      %v7880 = vadd.f32 %v7128, %v7879
      %v7881 = vpop.f32.mrb[0].mxu0
      %v7882 = vadd.f32 %v7128, %v7881
      %v7883 = vpop.f32.mrb[0].mxu0
      %v7884 = vpop.f32.mrb[0].mxu0
      %7885 = vdwg.mxu0
      %v7886 = vld [vmem:[%s293] sm:$0xff]
      %v7887 = vld [vmem:[%s293 + $0x8] sm:$0xff]
      %v7888 = vld [vmem:[%s293 + $0x10] sm:$0xff]
      %v7889 = vld [vmem:[%s293 + $0x18] sm:$0xff]
      %v7890 = vld [vmem:[%s293 + $0x20] sm:$0xff]
      %v7891 = vld [vmem:[%s293 + $0x28] sm:$0xff]
      %v7892 = vld [vmem:[%s293 + $0x30] sm:$0xff]
      %v7893 = vld [vmem:[%s293 + $0x38] sm:$0xff]
      %v7894 = vld [vmem:[%s293 + $0x40] sm:$0xff]
      %v7895 = vld [vmem:[%s293 + $0x48] sm:$0xff]
      %v7896 = vld [vmem:[%s293 + $0x50] sm:$0xff]
      %v7897 = vld [vmem:[%s293 + $0x58] sm:$0xff]
      %v7898 = vld [vmem:[%s293 + $0x60] sm:$0xff]
      %v7899 = vld [vmem:[%s293 + $0x68] sm:$0xff]
      %v7900 = vld [vmem:[%s293 + $0x70] sm:$0xff]
      %v7901 = vld [vmem:[%s293 + $0x78] sm:$0xff]
      %v7918 = vcombine.high %v7886, %v7886
      %v7919 = vcombine.high %v7887, %v7887
      %v7920 = vcombine.high %v7888, %v7888
      %v7921 = vcombine.high %v7889, %v7889
      %v7922 = vcombine.high %v7890, %v7890
      %v7923 = vcombine.high %v7891, %v7891
      %v7924 = vcombine.high %v7892, %v7892
      %v7925 = vcombine.high %v7893, %v7893
      %v7926 = vcombine.high %v7894, %v7894
      %v7927 = vcombine.high %v7895, %v7895
      %v7928 = vcombine.high %v7896, %v7896
      %v7929 = vcombine.high %v7897, %v7897
      %v7930 = vcombine.high %v7898, %v7898
      %v7931 = vcombine.high %v7899, %v7899
      %v7932 = vcombine.high %v7900, %v7900
      %v7933 = vcombine.high %v7901, %v7901
      %v7950 = vadd.f32 %v7265, %v7886
      %v7951 = vadd.f32 %v7267, %v7918
      %v7952 = vadd.f32 %v7306, %v7887
      %v7953 = vadd.f32 %v7308, %v7919
      %v7954 = vadd.f32 %v7347, %v7888
      %v7955 = vadd.f32 %v7349, %v7920
      %v7956 = vadd.f32 %v7388, %v7889
      %v7957 = vadd.f32 %v7390, %v7921
      %v7958 = vadd.f32 %v7429, %v7890
      %v7959 = vadd.f32 %v7431, %v7922
      %v7960 = vadd.f32 %v7470, %v7891
      %v7961 = vadd.f32 %v7472, %v7923
      %v7962 = vadd.f32 %v7511, %v7892
      %v7963 = vadd.f32 %v7513, %v7924
      %v7964 = vadd.f32 %v7552, %v7893
      %v7965 = vadd.f32 %v7554, %v7925
      %v7966 = vadd.f32 %v7593, %v7894
      %v7967 = vadd.f32 %v7595, %v7926
      %v7968 = vadd.f32 %v7634, %v7895
      %v7969 = vadd.f32 %v7636, %v7927
      %v7970 = vadd.f32 %v7675, %v7896
      %v7971 = vadd.f32 %v7677, %v7928
      %v7972 = vadd.f32 %v7716, %v7897
      %v7973 = vadd.f32 %v7718, %v7929
      %v7974 = vadd.f32 %v7757, %v7898
      %v7975 = vadd.f32 %v7759, %v7930
      %v7976 = vadd.f32 %v7798, %v7899
      %v7977 = vadd.f32 %v7800, %v7931
      %v7978 = vadd.f32 %v7839, %v7900
      %v7979 = vadd.f32 %v7841, %v7932
      %v7980 = vadd.f32 %v7880, %v7901
      %v7981 = vadd.f32 %v7882, %v7933
      %v8014 = vcombine.low %v7950, %v7951
      %v8015 = vcombine.low %v7952, %v7953
      %v8016 = vcombine.low %v7954, %v7955
      %v8017 = vcombine.low %v7956, %v7957
      %v8018 = vcombine.low %v7958, %v7959
      %v8019 = vcombine.low %v7960, %v7961
      %v8020 = vcombine.low %v7962, %v7963
      %v8021 = vcombine.low %v7964, %v7965
      %v8022 = vcombine.low %v7966, %v7967
      %v8023 = vcombine.low %v7968, %v7969
      %v8024 = vcombine.low %v7970, %v7971
      %v8025 = vcombine.low %v7972, %v7973
      %v8026 = vcombine.low %v7974, %v7975
      %v8027 = vcombine.low %v7976, %v7977
      %v8028 = vcombine.low %v7978, %v7979
      %v8029 = vcombine.low %v7980, %v7981
      %8046 = vst [vmem:[%s298] sm:$0xff] %v8014
      %8047 = vst [vmem:[%s298 + $0x8] sm:$0xff] %v8015
      %8048 = vst [vmem:[%s298 + $0x10] sm:$0xff] %v8016
      %8049 = vst [vmem:[%s298 + $0x18] sm:$0xff] %v8017
      %8050 = vst [vmem:[%s298 + $0x20] sm:$0xff] %v8018
      %8051 = vst [vmem:[%s298 + $0x28] sm:$0xff] %v8019
      %8052 = vst [vmem:[%s298 + $0x30] sm:$0xff] %v8020
      %8053 = vst [vmem:[%s298 + $0x38] sm:$0xff] %v8021
      %8054 = vst [vmem:[%s298 + $0x40] sm:$0xff] %v8022
      %8055 = vst [vmem:[%s298 + $0x48] sm:$0xff] %v8023
      %8056 = vst [vmem:[%s298 + $0x50] sm:$0xff] %v8024
      %8057 = vst [vmem:[%s298 + $0x58] sm:$0xff] %v8025
      %8058 = vst [vmem:[%s298 + $0x60] sm:$0xff] %v8026
      %8059 = vst [vmem:[%s298 + $0x68] sm:$0xff] %v8027
      %8060 = vst [vmem:[%s298 + $0x70] sm:$0xff] %v8028
      %8061 = vst [vmem:[%s298 + $0x78] sm:$0xff] %v8029
      %p8062 = scmp.lt.s32.totalorder %s18, 1
      %s8063 = scalar_select %p8062, %s18, 1
      %s8064 = smul.addr %s8063, 32
      %s8065 = smul.addr %s8064, 4
      %s8066 = scalar_lea.vmem %s7, %s8065
      // Predicated region
      $region49: #{hopper_forward.7} parent=47 // pred_check
        %p8067 = pneg %p193
      $region50: #{hopper_forward.7} parent=47 // pred_check_branch
        %8069 = sbr.rel (%p8067) target = $region52
      $region51: #{hopper_forward.7} parent=47 // pred_region
        _
      $region52: #{hopper_forward.7} parent=47 // pred_fallthru
        _
    $region48: #{hopper_forward.7} parent=5 // pred_fallthru
      _
    %p8070 = scmp.le.s32.totalorder 2, %s13
    // Predicated region
    $region53: #{hopper_forward.7} parent=5 // pred_check
      %p8071 = pneg %p8070
    $region54: #{hopper_forward.7} parent=5 // pred_check_branch
      %8073 = sbr.rel (%p8071) target = $region56
    $region55: #{hopper_forward.7} parent=5 // pred_region
      %s8074 = ssub.s32 %s13, 2
      // Predicated region
      $region57: #{hopper_forward.7} parent=55 // pred_check
        %p8075 = pneg %p199
      $region58: #{hopper_forward.7} parent=55 // pred_check_branch
        %8077 = sbr.rel (%p8075) target = $region60
      $region59: #{hopper_forward.7} parent=55 // pred_region
        %p8078 = scmp.lt.s32.totalorder %s19, 1
        %s8079 = scalar_select %p8078, %s19, 1
        %s8080 = smul.addr %s8079, 32
        %s8081 = smul.addr %s8080, 4
        %s8082 = scalar_lea.vmem %s7, %s8081
      $region60: #{hopper_forward.7} parent=55 // pred_fallthru
        _
    $region56: #{hopper_forward.7} parent=5 // pred_fallthru
      _
  $region6: #{hopper_forward.7} parent=0 // loop_footer
    %s17 = sadd.s32 1, %s13
  $region7: #{hopper_forward.7} parent=0 // loop_footer_branch
    %12 = sbr.rel target = $region3
  $region8: #{hopper_forward.7} parent=0 // loop_exit
    _

</llo_original>
